<compile_context>
chip_gen: v7x
topology: tpu7x:2x2x1
jax: 0.10.0
libtpu: 0.0.40
codegen_flags: <defaults>
</compile_context>

<pallas_src>
import random

import jax
import jax.numpy as jnp
from jax import lax
from jax.experimental import pallas as pl
from jax.experimental.pallas import tpu as pltpu


def _round_up(x, m):
    return (x + m - 1) // m * m


_VMEM_LIMIT = 48 * 1024 * 1024  # explicit scoped-VMEM budget (fits all gens)


# ---------------------------------------------------------------------------
# In-kernel LSTM cell (two accumulated gate matmuls; PyTorch order i, f, g, o)
# ---------------------------------------------------------------------------


def _lstm_cell(x_bf16, h_prev, c_prev, w_ih_ref, w_hh_ref, b_ref, Hp):
    """x_bf16: [B, in_pad] bf16; h/c: [B, Hp] f32; weights bf16, bias f32."""
    gates = (jnp.dot(x_bf16, w_ih_ref[...],
                     preferred_element_type=jnp.float32)
             + jnp.dot(h_prev.astype(jnp.bfloat16), w_hh_ref[...],
                       preferred_element_type=jnp.float32)
             + b_ref[...])                                          # [B, 4Hp]
    i = jax.nn.sigmoid(gates[:, 0:Hp])
    f = jax.nn.sigmoid(gates[:, Hp:2 * Hp])
    g = jnp.tanh(gates[:, 2 * Hp:3 * Hp])
    o = jax.nn.sigmoid(gates[:, 3 * Hp:4 * Hp])
    c_new = f * c_prev + i * g
    h_new = o * jnp.tanh(c_new)
    return h_new, c_new                                             # f32


# ---------------------------------------------------------------------------
# Fused encoder kernel: single launch, unrolled time loop, resident weights
# ---------------------------------------------------------------------------


def _make_encoder_kernel(n_layers, hid_pad, seq_len):
    def kernel(x_ref, *args):
        # args: (w_ih_0, w_hh_0, b_0) ... (w_ih_{L-1}, w_hh_{L-1}, b_{L-1}),
        #       h_out, c_out, h_sc, c_sc
        w_ih = args[0:3 * n_layers:3]
        w_hh = args[1:3 * n_layers:3]
        b = args[2:3 * n_layers:3]
        h_out = args[3 * n_layers]
        c_out = args[3 * n_layers + 1]
        h_sc = args[3 * n_layers + 2]
        c_sc = args[3 * n_layers + 3]

        h_sc[...] = jnp.zeros_like(h_sc)
        c_sc[...] = jnp.zeros_like(c_sc)

        def step(t, carry):
            x = x_ref[t]                                            # [B, Ep] bf16
            for l in range(n_layers):
                h_new, c_new = _lstm_cell(x, h_sc[l], c_sc[l],
                                          w_ih[l], w_hh[l], b[l], hid_pad)
                h_sc[l] = h_new
                c_sc[l] = c_new
                x = h_new.astype(jnp.bfloat16)
            return carry

        lax.fori_loop(0, seq_len, step, 0, unroll=True)

        h_out[...] = h_sc[...]
        c_out[...] = c_sc[...]

    return kernel


def encoder_forward(params, src_emb):
    """src_emb: [S, Bp, Ep] bf16 -> (hidden, cell) each [L, Bp, Hp] f32."""
    S, Bp, Ep = src_emb.shape
    layers = params["layers"]
    L = len(layers)
    Hp = layers[0]["w_hh"].shape[0]

    in_specs = [pl.BlockSpec((S, Bp, Ep), lambda i: (0, 0, 0))]
    args = [src_emb]
    for lp in layers:
        in_specs += [pl.BlockSpec(lp["w_ih"].shape, lambda i: (0, 0)),
                     pl.BlockSpec(lp["w_hh"].shape, lambda i: (0, 0)),
                     pl.BlockSpec(lp["b"].shape, lambda i: (0, 0))]
        args += [lp["w_ih"], lp["w_hh"], lp["b"]]

    out_specs = (pl.BlockSpec((L, Bp, Hp), lambda i: (0, 0, 0)),
                 pl.BlockSpec((L, Bp, Hp), lambda i: (0, 0, 0)))

    hidden, cell = pl.pallas_call(
        _make_encoder_kernel(L, Hp, S),
        out_shape=(jax.ShapeDtypeStruct((L, Bp, Hp), jnp.float32),
                   jax.ShapeDtypeStruct((L, Bp, Hp), jnp.float32)),
        grid_spec=pltpu.PrefetchScalarGridSpec(
            num_scalar_prefetch=0,
            grid=(1,),
            in_specs=in_specs,
            out_specs=out_specs,
            scratch_shapes=[pltpu.VMEM((L, Bp, Hp), jnp.float32),
                            pltpu.VMEM((L, Bp, Hp), jnp.float32)]),
        compiler_params=pltpu.CompilerParams(
            dimension_semantics=("arbitrary",),
            vmem_limit_bytes=_VMEM_LIMIT),
    )(*args)
    return hidden, cell


# ---------------------------------------------------------------------------
# Fused decoder kernel: whole decode loop in one launch, SMEM token ids
# ---------------------------------------------------------------------------


def _make_decoder_kernel(n_layers, hid_pad, vocab_pad, batch_pad, steps):
    def kernel(tf_ref, trg_ref, emb_ref, *args):
        # tf_ref:  SMEM [steps] int32   (teacher-forcing flags)
        # trg_ref: SMEM [T, Bp] int32   (target token ids)
        # args: (w_ih, w_hh, b) * L, fc_w, fc_b, h0, c0,   (inputs)
        #       pred_ref,                                  (output)
        #       h_sc, c_sc, x_sc                           (scratch)
        w_ih = args[0:3 * n_layers:3]
        w_hh = args[1:3 * n_layers:3]
        b = args[2:3 * n_layers:3]
        base = 3 * n_layers
        fc_w_ref, fc_b_ref, h0_ref, c0_ref = args[base:base + 4]
        pred_ref = args[base + 4]
        h_sc, c_sc, x_sc = args[base + 5:base + 8]

        h_sc[...] = h0_ref[...]
        c_sc[...] = c0_ref[...]

        # Initial input: embedding rows for trg[0] (SMEM ids -> VMEM row gather).
        for bb in range(batch_pad):
            x_sc[pl.ds(bb, 1), :] = emb_ref[pl.ds(trg_ref[0, bb], 1), :]

        def step(s, carry):
            x = x_sc[...]                                           # [B, Ep] bf16
            for l in range(n_layers):
                h_new, c_new = _lstm_cell(x, h_sc[l], c_sc[l],
                                          w_ih[l], w_hh[l], b[l], hid_pad)
                h_sc[l] = h_new
                c_sc[l] = c_new
                x = h_new.astype(jnp.bfloat16)

            pred = (jnp.dot(x, fc_w_ref[...],
                            preferred_element_type=jnp.float32)
                    + fc_b_ref[...])                                # [B, Vp] f32
            pred_ref[s] = pred

            force = tf_ref[s] > 0

            @pl.when(force)
            def _teacher():
                # Next input = embedding of the ground-truth token (row gather).
                for bb in range(batch_pad):
                    x_sc[pl.ds(bb, 1), :] = \
                        emb_ref[pl.ds(trg_ref[s + 1, bb], 1), :]

            @pl.when(jnp.logical_not(force))
            def _greedy():
                # First-max argmax (matches torch.argmax); padded logit columns
                # carry a -1e9 bias so they are never selected.
                col = lax.broadcasted_iota(jnp.int32, (batch_pad, vocab_pad), 1)
                is_max = pred == jnp.max(pred, axis=-1, keepdims=True)
                top1 = jnp.min(jnp.where(is_max, col, vocab_pad),
                               axis=-1, keepdims=True)              # [B, 1]
                oh = (col == top1).astype(jnp.bfloat16)             # [B, Vp]
                # TODO(synk): replace this in-VMEM one-hot @ emb (MXU) with a
                #             per-row dynamic gather once the argmax index can
                #             be cheaply extracted to a scalar; at large vocab
                #             stream the embedding rows from HBM instead.
                x_sc[...] = jnp.dot(
                    oh, emb_ref[...],
                    preferred_element_type=jnp.float32).astype(jnp.bfloat16)

            return carry

        lax.fori_loop(0, steps, step, 0, unroll=True)

    return kernel


def decoder_run(params, h0, c0, trg_ids, tf_flags):
    """Runs all trg_len-1 decode steps in one pallas_call.

    trg_ids: [T, Bp] int32 token ids; returns logits [T-1, Bp, Vp] f32.
    """
    T, Bp = trg_ids.shape
    layers = params["layers"]
    L = len(layers)
    Hp = layers[0]["w_hh"].shape[0]
    Vp = params["fc_w_t"].shape[1]
    steps = T - 1

    in_specs = [pl.BlockSpec(params["emb"].shape, lambda i, tf, tr: (0, 0))]
    args = [params["emb"]]
    for lp in layers:
        in_specs += [pl.BlockSpec(lp["w_ih"].shape, lambda i, tf, tr: (0, 0)),
                     pl.BlockSpec(lp["w_hh"].shape, lambda i, tf, tr: (0, 0)),
                     pl.BlockSpec(lp["b"].shape, lambda i, tf, tr: (0, 0))]
        args += [lp["w_ih"], lp["w_hh"], lp["b"]]
    in_specs += [
        pl.BlockSpec(params["fc_w_t"].shape, lambda i, tf, tr: (0, 0)),
        pl.BlockSpec(params["fc_b"].shape, lambda i, tf, tr: (0, 0)),
        pl.BlockSpec((L, Bp, Hp), lambda i, tf, tr: (0, 0, 0)),
        pl.BlockSpec((L, Bp, Hp), lambda i, tf, tr: (0, 0, 0)),
    ]
    args += [params["fc_w_t"], params["fc_b"], h0, c0]

    Ep = params["emb"].shape[1]

    preds = pl.pallas_call(
        _make_decoder_kernel(L, Hp, Vp, Bp, steps),
        out_shape=jax.ShapeDtypeStruct((steps, Bp, Vp), jnp.float32),
        grid_spec=pltpu.PrefetchScalarGridSpec(
            num_scalar_prefetch=2,
            grid=(1,),
            in_specs=in_specs,
            out_specs=pl.BlockSpec((steps, Bp, Vp),
                                   lambda i, tf, tr: (0, 0, 0)),
            scratch_shapes=[pltpu.VMEM((L, Bp, Hp), jnp.float32),
                            pltpu.VMEM((L, Bp, Hp), jnp.float32),
                            pltpu.VMEM((Bp, Ep), jnp.bfloat16)]),
        compiler_params=pltpu.CompilerParams(
            dimension_semantics=("arbitrary",),
            vmem_limit_bytes=_VMEM_LIMIT),
    )(tf_flags, trg_ids, *args)
    return preds


# ---------------------------------------------------------------------------
# Parameter construction (deterministic, synthetic — no checkpoint loading)
# ---------------------------------------------------------------------------


def _uniform(key, shape, scale=0.08):
    return jax.random.uniform(key, shape, jnp.float32, -scale, scale)


def _pad_gate_cols(w, rows_pad, hid_dim, hid_pad):
    """[rows, 4*hid_dim] -> [rows_pad, 4*hid_pad]; each gate gets its own
    lane-aligned Hp block; padded rows/cols are zero (exact padding)."""
    rows = w.shape[0]
    out = jnp.zeros((rows_pad, 4 * hid_pad), jnp.float32)
    for g in range(4):
        out = out.at[:rows, g * hid_pad:g * hid_pad + hid_dim].set(
            w[:, g * hid_dim:(g + 1) * hid_dim])
    return out


def init_rnn_stack(key, emb_dim, hid_dim, n_layers, emb_pad, hid_pad):
    keys = jax.random.split(key, 4 * n_layers)
    layers = []
    for l in range(n_layers):
        in_dim = emb_dim if l == 0 else hid_dim
        in_pad = emb_pad if l == 0 else hid_pad
        k_ih, k_hh, k_bi, k_bh = keys[4 * l:4 * l + 4]
        w_ih = _uniform(k_ih, (in_dim, 4 * hid_dim))    # pre-transposed W_ih^T
        w_hh = _uniform(k_hh, (hid_dim, 4 * hid_dim))   # pre-transposed W_hh^T
        bias = (_uniform(k_bi, (1, 4 * hid_dim))        # b_ih + b_hh
                + _uniform(k_bh, (1, 4 * hid_dim)))
        layers.append({
            "w_ih": _pad_gate_cols(w_ih, in_pad, hid_dim,
                                   hid_pad).astype(jnp.bfloat16),
            "w_hh": _pad_gate_cols(w_hh, hid_pad, hid_dim,
                                   hid_pad).astype(jnp.bfloat16),
            "b": _pad_gate_cols(bias, 1, hid_dim, hid_pad),   # f32
        })
    return layers


def init_encoder(key, input_dim, emb_dim, hid_dim, n_layers):
    emb_pad = _round_up(emb_dim, 128)
    hid_pad = _round_up(hid_dim, 128)
    k_emb, k_rnn = jax.random.split(key)
    emb = jnp.zeros((input_dim, emb_pad), jnp.float32).at[:, :emb_dim].set(
        _uniform(k_emb, (input_dim, emb_dim)))
    return {"emb": emb,     # host-side gather only (stays f32 in HBM)
            "layers": init_rnn_stack(k_rnn, emb_dim, hid_dim, n_layers,
                                     emb_pad, hid_pad)}


def init_decoder(key, output_dim, emb_dim, hid_dim, n_layers):
    emb_pad = _round_up(emb_dim, 128)
    hid_pad = _round_up(hid_dim, 128)
    vocab_pad = _round_up(output_dim, 128)
    k_emb, k_rnn, k_fc_w, k_fc_b = jax.random.split(key, 4)
    emb = jnp.zeros((vocab_pad, emb_pad), jnp.float32).at[
        :output_dim, :emb_dim].set(_uniform(k_emb, (output_dim, emb_dim)))
    # Padded fc columns: weight 0, bias -1e9 so the in-kernel argmax never
    # picks them; padded fc rows (hidden pad) are zero.
    fc_w = jnp.zeros((hid_pad, vocab_pad), jnp.float32).at[
        :hid_dim, :output_dim].set(_uniform(k_fc_w, (hid_dim, output_dim)))
    fc_b = jnp.full((1, vocab_pad), -1e9, jnp.float32).at[
        :, :output_dim].set(_uniform(k_fc_b, (1, output_dim)))
    return {"emb": emb.astype(jnp.bfloat16),
            "layers": init_rnn_stack(k_rnn, emb_dim, hid_dim, n_layers,
                                     emb_pad, hid_pad),
            "fc_w_t": fc_w.astype(jnp.bfloat16),
            "fc_b": fc_b,
            "output_dim": output_dim}


# ---------------------------------------------------------------------------
# Seq2Seq forward (glue in plain JAX, compute in two fused Pallas kernels)
# ---------------------------------------------------------------------------


def seq2seq_forward(enc_params, dec_params, src, trg,
                    teacher_forcing_ratio=0.5, seed=0):
    """src: [src_len, B]; trg: [trg_len, B] -> outputs [trg_len, B, V]."""
    trg_len, batch = trg.shape
    V = dec_params["output_dim"]
    Vp = dec_params["fc_w_t"].shape[1]
    Bp = _round_up(batch, 16)      # bf16 sublane-dense batch padding

    # Host glue: one embedding gather for the whole source sequence + padding.
    src_emb = enc_params["emb"][src]                                # [S, B, Ep]
    src_emb = jnp.pad(src_emb, ((0, 0), (0, Bp - batch), (0, 0)))
    src_emb = src_emb.astype(jnp.bfloat16)

    # Target token ids go straight to SMEM (no one-hot materialization).
    trg_ids = jnp.pad(trg, ((0, 0), (0, Bp - batch))).astype(jnp.int32)

    hidden, cell = encoder_forward(enc_params, src_emb)

    # Host-side deterministic teacher-forcing coin flips (Python `random` in
    # the reference), one per decode step t = 1..trg_len-1, fed to SMEM.
    rng = random.Random(seed)
    tf_flags = jnp.asarray(
        [1 if rng.random() < teacher_forcing_ratio else 0
         for _ in range(trg_len - 1)], dtype=jnp.int32)

    preds = decoder_run(dec_params, hidden, cell, trg_ids, tf_flags)

    outputs = jnp.concatenate(
        [jnp.zeros((1, Bp, Vp), jnp.float32), preds], axis=0)       # row 0 stays 0
    return outputs[:, :batch, :V]


# ---------------------------------------------------------------------------
# Demo
# ---------------------------------------------------------------------------

if __name__ == "__main__":
    INPUT_DIM = 64    # src vocab
    OUTPUT_DIM = 64   # trg vocab
    EMB_DIM = 32
    HID_DIM = 32
    N_LAYERS = 2
    SRC_LEN = 8
    TRG_LEN = 8
    BATCH = 2

    key = jax.random.PRNGKey(0)
    k_enc, k_dec, k_src, k_trg = jax.random.split(key, 4)

    enc_params = init_encoder(k_enc, INPUT_DIM, EMB_DIM, HID_DIM, N_LAYERS)
    dec_params = init_decoder(k_dec, OUTPUT_DIM, EMB_DIM, HID_DIM, N_LAYERS)

    src = jax.random.randint(k_src, (SRC_LEN, BATCH), 0, INPUT_DIM, jnp.int32)
    trg = jax.random.randint(k_trg, (TRG_LEN, BATCH), 0, OUTPUT_DIM, jnp.int32)

    outputs = seq2seq_forward(enc_params, dec_params, src, trg,
                              teacher_forcing_ratio=0.5, seed=0)
    jax.block_until_ready(outputs)
    assert outputs.shape == (TRG_LEN, BATCH, OUTPUT_DIM)
    assert bool(jnp.all(jnp.isfinite(outputs)))
    print("KERNEL_OK")
</pallas_src>

<mosaic_0001>
module attributes {stable_mosaic.version = 11 : i64} {
  func.func @kernel(%arg0: i32, %arg1: memref<8x16x128xbf16, #tpu.memory_space<vmem>>, %arg2: memref<128x512xbf16, #tpu.memory_space<vmem>>, %arg3: memref<128x512xbf16, #tpu.memory_space<vmem>>, %arg4: memref<1x512xf32, #tpu.memory_space<vmem>>, %arg5: memref<128x512xbf16, #tpu.memory_space<vmem>>, %arg6: memref<128x512xbf16, #tpu.memory_space<vmem>>, %arg7: memref<1x512xf32, #tpu.memory_space<vmem>>, %arg8: memref<2x16x128xf32, #tpu.memory_space<vmem>>, %arg9: memref<2x16x128xf32, #tpu.memory_space<vmem>>, %arg10: memref<2x16x128xf32, #tpu.memory_space<vmem>>, %arg11: memref<2x16x128xf32, #tpu.memory_space<vmem>>) attributes {dimension_semantics = [#tpu.dimension_semantics<arbitrary>], iteration_bounds = array<i64: 1>, scalar_prefetch = 0 : i64, scratch_operands = 2 : i64, tpu.core_type = #tpu.core_type<tc>, window_params = [{pipeline_mode = #tpu.pipeline_mode<synchronous>, transform_indices = @transform_0, window_bounds = array<i64: 8, 16, 128>}, {pipeline_mode = #tpu.pipeline_mode<synchronous>, transform_indices = @transform_1, window_bounds = array<i64: 128, 512>}, {pipeline_mode = #tpu.pipeline_mode<synchronous>, transform_indices = @transform_2, window_bounds = array<i64: 128, 512>}, {pipeline_mode = #tpu.pipeline_mode<synchronous>, transform_indices = @transform_3, window_bounds = array<i64: 1, 512>}, {pipeline_mode = #tpu.pipeline_mode<synchronous>, transform_indices = @transform_4, window_bounds = array<i64: 128, 512>}, {pipeline_mode = #tpu.pipeline_mode<synchronous>, transform_indices = @transform_5, window_bounds = array<i64: 128, 512>}, {pipeline_mode = #tpu.pipeline_mode<synchronous>, transform_indices = @transform_6, window_bounds = array<i64: 1, 512>}, {pipeline_mode = #tpu.pipeline_mode<synchronous>, transform_indices = @transform_7, window_bounds = array<i64: 2, 16, 128>}, {pipeline_mode = #tpu.pipeline_mode<synchronous>, transform_indices = @transform_8, window_bounds = array<i64: 2, 16, 128>}]} {
    %cst = arith.constant 0.000000e+00 : f32
    %0 = vector.broadcast %cst : f32 to vector<2x16x128xf32>
    %c0 = arith.constant 0 : index
    %c0_0 = arith.constant 0 : index
    %c0_1 = arith.constant 0 : index
    %1 = vector.load %arg10[%c0, %c0_0, %c0_1] : memref<2x16x128xf32, #tpu.memory_space<vmem>>, vector<2x16x128xf32>
    tpu.vector_store %arg10[%c0, %c0_0, %c0_1], %0 {strides = array<i32>} : memref<2x16x128xf32, #tpu.memory_space<vmem>>, vector<2x16x128xf32>,
    %cst_2 = arith.constant 0.000000e+00 : f32
    %2 = vector.broadcast %cst_2 : f32 to vector<2x16x128xf32>
    %c0_3 = arith.constant 0 : index
    %c0_4 = arith.constant 0 : index
    %c0_5 = arith.constant 0 : index
    %3 = vector.load %arg11[%c0_3, %c0_4, %c0_5] : memref<2x16x128xf32, #tpu.memory_space<vmem>>, vector<2x16x128xf32>
    tpu.vector_store %arg11[%c0_3, %c0_4, %c0_5], %2 {strides = array<i32>} : memref<2x16x128xf32, #tpu.memory_space<vmem>>, vector<2x16x128xf32>,
    %c0_i32 = arith.constant 0 : i32
    %4 = arith.index_cast %c0_i32 : i32 to index
    %c0_6 = arith.constant 0 : index
    %c0_7 = arith.constant 0 : index
    %5 = vector.load %arg1[%4, %c0_6, %c0_7] : memref<8x16x128xbf16, #tpu.memory_space<vmem>>, vector<1x16x128xbf16>
    %6 = vector.shape_cast %5 : vector<1x16x128xbf16> to vector<16x128xbf16>
    %c0_8 = arith.constant 0 : index
    %c0_9 = arith.constant 0 : index
    %c0_10 = arith.constant 0 : index
    %7 = vector.load %arg10[%c0_8, %c0_9, %c0_10] : memref<2x16x128xf32, #tpu.memory_space<vmem>>, vector<1x16x128xf32>
    %8 = vector.shape_cast %7 : vector<1x16x128xf32> to vector<16x128xf32>
    %c0_11 = arith.constant 0 : index
    %c0_12 = arith.constant 0 : index
    %c0_13 = arith.constant 0 : index
    %9 = vector.load %arg11[%c0_11, %c0_12, %c0_13] : memref<2x16x128xf32, #tpu.memory_space<vmem>>, vector<1x16x128xf32>
    %10 = vector.shape_cast %9 : vector<1x16x128xf32> to vector<16x128xf32>
    %c0_14 = arith.constant 0 : index
    %c0_15 = arith.constant 0 : index
    %11 = vector.load %arg2[%c0_14, %c0_15] : memref<128x512xbf16, #tpu.memory_space<vmem>>, vector<128x512xbf16>
    %cst_16 = arith.constant dense<0.000000e+00> : vector<16x512xf32>
    %12 = tpu.matmul %6, %11, %cst_16 {dimension_numbers = #tpu.dot_dimension_numbers<[1], [0], [0], [1], [0, 0, 1, 1], [], []>} : vector<16x128xbf16>, vector<128x512xbf16>, vector<16x512xf32> -> vector<16x512xf32>
    %13 = arith.truncf %8 : vector<16x128xf32> to vector<16x128xbf16>
    %c0_17 = arith.constant 0 : index
    %c0_18 = arith.constant 0 : index
    %14 = vector.load %arg3[%c0_17, %c0_18] : memref<128x512xbf16, #tpu.memory_space<vmem>>, vector<128x512xbf16>
    %cst_19 = arith.constant dense<0.000000e+00> : vector<16x512xf32>
    %15 = tpu.matmul %13, %14, %cst_19 {dimension_numbers = #tpu.dot_dimension_numbers<[1], [0], [0], [1], [0, 0, 1, 1], [], []>} : vector<16x128xbf16>, vector<128x512xbf16>, vector<16x512xf32> -> vector<16x512xf32>
    %16 = arith.addf %12, %15 : vector<16x512xf32>
    %c0_20 = arith.constant 0 : index
    %c0_21 = arith.constant 0 : index
    %17 = vector.load %arg4[%c0_20, %c0_21] : memref<1x512xf32, #tpu.memory_space<vmem>>, vector<1x512xf32>
    %18 = vector.broadcast %17 : vector<1x512xf32> to vector<16x512xf32>
    %19 = arith.addf %16, %18 : vector<16x512xf32>
    %20 = vector.extract_strided_slice %19 {offsets = [0, 0], sizes = [16, 128], strides = [1, 1]} : vector<16x512xf32> to vector<16x128xf32>
    %21 = arith.negf %20 : vector<16x128xf32>
    %22 = math.exp %21 : vector<16x128xf32>
    %cst_22 = arith.constant 1.000000e+00 : f32
    %23 = vector.broadcast %cst_22 : f32 to vector<16x128xf32>
    %24 = arith.addf %23, %22 : vector<16x128xf32>
    %25 = arith.divf %23, %24 : vector<16x128xf32>
    %26 = vector.extract_strided_slice %19 {offsets = [0, 128], sizes = [16, 128], strides = [1, 1]} : vector<16x512xf32> to vector<16x128xf32>
    %27 = arith.negf %26 : vector<16x128xf32>
    %28 = math.exp %27 : vector<16x128xf32>
    %cst_23 = arith.constant 1.000000e+00 : f32
    %29 = vector.broadcast %cst_23 : f32 to vector<16x128xf32>
    %30 = arith.addf %29, %28 : vector<16x128xf32>
    %31 = arith.divf %29, %30 : vector<16x128xf32>
    %32 = vector.extract_strided_slice %19 {offsets = [0, 256], sizes = [16, 128], strides = [1, 1]} : vector<16x512xf32> to vector<16x128xf32>
    %33 = math.tanh %32 : vector<16x128xf32>
    %34 = vector.extract_strided_slice %19 {offsets = [0, 384], sizes = [16, 128], strides = [1, 1]} : vector<16x512xf32> to vector<16x128xf32>
    %35 = arith.negf %34 : vector<16x128xf32>
    %36 = math.exp %35 : vector<16x128xf32>
    %cst_24 = arith.constant 1.000000e+00 : f32
    %37 = vector.broadcast %cst_24 : f32 to vector<16x128xf32>
    %38 = arith.addf %37, %36 : vector<16x128xf32>
    %39 = arith.divf %37, %38 : vector<16x128xf32>
    %40 = arith.mulf %31, %10 : vector<16x128xf32>
    %41 = arith.mulf %25, %33 : vector<16x128xf32>
    %42 = arith.addf %40, %41 : vector<16x128xf32>
    %43 = math.tanh %42 : vector<16x128xf32>
    %44 = arith.mulf %39, %43 : vector<16x128xf32>
    %c0_25 = arith.constant 0 : index
    %c0_26 = arith.constant 0 : index
    %c0_27 = arith.constant 0 : index
    %45 = vector.load %arg10[%c0_25, %c0_26, %c0_27] : memref<2x16x128xf32, #tpu.memory_space<vmem>>, vector<1x16x128xf32>
    %46 = vector.shape_cast %45 : vector<1x16x128xf32> to vector<16x128xf32>
    %47 = vector.shape_cast %44 : vector<16x128xf32> to vector<1x16x128xf32>
    tpu.vector_store %arg10[%c0_25, %c0_26, %c0_27], %47 {strides = array<i32>} : memref<2x16x128xf32, #tpu.memory_space<vmem>>, vector<1x16x128xf32>,
    %c0_28 = arith.constant 0 : index
    %c0_29 = arith.constant 0 : index
    %c0_30 = arith.constant 0 : index
    %48 = vector.load %arg11[%c0_28, %c0_29, %c0_30] : memref<2x16x128xf32, #tpu.memory_space<vmem>>, vector<1x16x128xf32>
    %49 = vector.shape_cast %48 : vector<1x16x128xf32> to vector<16x128xf32>
    %50 = vector.shape_cast %42 : vector<16x128xf32> to vector<1x16x128xf32>
    tpu.vector_store %arg11[%c0_28, %c0_29, %c0_30], %50 {strides = array<i32>} : memref<2x16x128xf32, #tpu.memory_space<vmem>>, vector<1x16x128xf32>,
    %51 = arith.truncf %44 : vector<16x128xf32> to vector<16x128xbf16>
    %c1 = arith.constant 1 : index
    %c0_31 = arith.constant 0 : index
    %c0_32 = arith.constant 0 : index
    %52 = vector.load %arg10[%c1, %c0_31, %c0_32] : memref<2x16x128xf32, #tpu.memory_space<vmem>>, vector<1x16x128xf32>
    %53 = vector.shape_cast %52 : vector<1x16x128xf32> to vector<16x128xf32>
    %c1_33 = arith.constant 1 : index
    %c0_34 = arith.constant 0 : index
    %c0_35 = arith.constant 0 : index
    %54 = vector.load %arg11[%c1_33, %c0_34, %c0_35] : memref<2x16x128xf32, #tpu.memory_space<vmem>>, vector<1x16x128xf32>
    %55 = vector.shape_cast %54 : vector<1x16x128xf32> to vector<16x128xf32>
    %c0_36 = arith.constant 0 : index
    %c0_37 = arith.constant 0 : index
    %56 = vector.load %arg5[%c0_36, %c0_37] : memref<128x512xbf16, #tpu.memory_space<vmem>>, vector<128x512xbf16>
    %cst_38 = arith.constant dense<0.000000e+00> : vector<16x512xf32>
    %57 = tpu.matmul %51, %56, %cst_38 {dimension_numbers = #tpu.dot_dimension_numbers<[1], [0], [0], [1], [0, 0, 1, 1], [], []>} : vector<16x128xbf16>, vector<128x512xbf16>, vector<16x512xf32> -> vector<16x512xf32>
    %58 = arith.truncf %53 : vector<16x128xf32> to vector<16x128xbf16>
    %c0_39 = arith.constant 0 : index
    %c0_40 = arith.constant 0 : index
    %59 = vector.load %arg6[%c0_39, %c0_40] : memref<128x512xbf16, #tpu.memory_space<vmem>>, vector<128x512xbf16>
    %cst_41 = arith.constant dense<0.000000e+00> : vector<16x512xf32>
    %60 = tpu.matmul %58, %59, %cst_41 {dimension_numbers = #tpu.dot_dimension_numbers<[1], [0], [0], [1], [0, 0, 1, 1], [], []>} : vector<16x128xbf16>, vector<128x512xbf16>, vector<16x512xf32> -> vector<16x512xf32>
    %61 = arith.addf %57, %60 : vector<16x512xf32>
    %c0_42 = arith.constant 0 : index
    %c0_43 = arith.constant 0 : index
    %62 = vector.load %arg7[%c0_42, %c0_43] : memref<1x512xf32, #tpu.memory_space<vmem>>, vector<1x512xf32>
    %63 = vector.broadcast %62 : vector<1x512xf32> to vector<16x512xf32>
    %64 = arith.addf %61, %63 : vector<16x512xf32>
    %65 = vector.extract_strided_slice %64 {offsets = [0, 0], sizes = [16, 128], strides = [1, 1]} : vector<16x512xf32> to vector<16x128xf32>
    %66 = arith.negf %65 : vector<16x128xf32>
    %67 = math.exp %66 : vector<16x128xf32>
    %cst_44 = arith.constant 1.000000e+00 : f32
    %68 = vector.broadcast %cst_44 : f32 to vector<16x128xf32>
    %69 = arith.addf %68, %67 : vector<16x128xf32>
    %70 = arith.divf %68, %69 : vector<16x128xf32>
    %71 = vector.extract_strided_slice %64 {offsets = [0, 128], sizes = [16, 128], strides = [1, 1]} : vector<16x512xf32> to vector<16x128xf32>
    %72 = arith.negf %71 : vector<16x128xf32>
    %73 = math.exp %72 : vector<16x128xf32>
    %cst_45 = arith.constant 1.000000e+00 : f32
    %74 = vector.broadcast %cst_45 : f32 to vector<16x128xf32>
    %75 = arith.addf %74, %73 : vector<16x128xf32>
    %76 = arith.divf %74, %75 : vector<16x128xf32>
    %77 = vector.extract_strided_slice %64 {offsets = [0, 256], sizes = [16, 128], strides = [1, 1]} : vector<16x512xf32> to vector<16x128xf32>
    %78 = math.tanh %77 : vector<16x128xf32>
    %79 = vector.extract_strided_slice %64 {offsets = [0, 384], sizes = [16, 128], strides = [1, 1]} : vector<16x512xf32> to vector<16x128xf32>
    %80 = arith.negf %79 : vector<16x128xf32>
    %81 = math.exp %80 : vector<16x128xf32>
    %cst_46 = arith.constant 1.000000e+00 : f32
    %82 = vector.broadcast %cst_46 : f32 to vector<16x128xf32>
    %83 = arith.addf %82, %81 : vector<16x128xf32>
    %84 = arith.divf %82, %83 : vector<16x128xf32>
    %85 = arith.mulf %76, %55 : vector<16x128xf32>
    %86 = arith.mulf %70, %78 : vector<16x128xf32>
    %87 = arith.addf %85, %86 : vector<16x128xf32>
    %88 = math.tanh %87 : vector<16x128xf32>
    %89 = arith.mulf %84, %88 : vector<16x128xf32>
    %c1_47 = arith.constant 1 : index
    %c0_48 = arith.constant 0 : index
    %c0_49 = arith.constant 0 : index
    %90 = vector.load %arg10[%c1_47, %c0_48, %c0_49] : memref<2x16x128xf32, #tpu.memory_space<vmem>>, vector<1x16x128xf32>
    %91 = vector.shape_cast %90 : vector<1x16x128xf32> to vector<16x128xf32>
    %92 = vector.shape_cast %89 : vector<16x128xf32> to vector<1x16x128xf32>
    tpu.vector_store %arg10[%c1_47, %c0_48, %c0_49], %92 {strides = array<i32>} : memref<2x16x128xf32, #tpu.memory_space<vmem>>, vector<1x16x128xf32>,
    %c1_50 = arith.constant 1 : index
    %c0_51 = arith.constant 0 : index
    %c0_52 = arith.constant 0 : index
    %93 = vector.load %arg11[%c1_50, %c0_51, %c0_52] : memref<2x16x128xf32, #tpu.memory_space<vmem>>, vector<1x16x128xf32>
    %94 = vector.shape_cast %93 : vector<1x16x128xf32> to vector<16x128xf32>
    %95 = vector.shape_cast %87 : vector<16x128xf32> to vector<1x16x128xf32>
    tpu.vector_store %arg11[%c1_50, %c0_51, %c0_52], %95 {strides = array<i32>} : memref<2x16x128xf32, #tpu.memory_space<vmem>>, vector<1x16x128xf32>,
    %c1_i32 = arith.constant 1 : i32
    %96 = arith.index_cast %c1_i32 : i32 to index
    %c0_53 = arith.constant 0 : index
    %c0_54 = arith.constant 0 : index
    %97 = vector.load %arg1[%96, %c0_53, %c0_54] : memref<8x16x128xbf16, #tpu.memory_space<vmem>>, vector<1x16x128xbf16>
    %98 = vector.shape_cast %97 : vector<1x16x128xbf16> to vector<16x128xbf16>
    %c0_55 = arith.constant 0 : index
    %c0_56 = arith.constant 0 : index
    %c0_57 = arith.constant 0 : index
    %99 = vector.load %arg10[%c0_55, %c0_56, %c0_57] : memref<2x16x128xf32, #tpu.memory_space<vmem>>, vector<1x16x128xf32>
    %100 = vector.shape_cast %99 : vector<1x16x128xf32> to vector<16x128xf32>
    %c0_58 = arith.constant 0 : index
    %c0_59 = arith.constant 0 : index
    %c0_60 = arith.constant 0 : index
    %101 = vector.load %arg11[%c0_58, %c0_59, %c0_60] : memref<2x16x128xf32, #tpu.memory_space<vmem>>, vector<1x16x128xf32>
    %102 = vector.shape_cast %101 : vector<1x16x128xf32> to vector<16x128xf32>
    %c0_61 = arith.constant 0 : index
    %c0_62 = arith.constant 0 : index
    %103 = vector.load %arg2[%c0_61, %c0_62] : memref<128x512xbf16, #tpu.memory_space<vmem>>, vector<128x512xbf16>
    %cst_63 = arith.constant dense<0.000000e+00> : vector<16x512xf32>
    %104 = tpu.matmul %98, %103, %cst_63 {dimension_numbers = #tpu.dot_dimension_numbers<[1], [0], [0], [1], [0, 0, 1, 1], [], []>} : vector<16x128xbf16>, vector<128x512xbf16>, vector<16x512xf32> -> vector<16x512xf32>
    %105 = arith.truncf %100 : vector<16x128xf32> to vector<16x128xbf16>
    %c0_64 = arith.constant 0 : index
    %c0_65 = arith.constant 0 : index
    %106 = vector.load %arg3[%c0_64, %c0_65] : memref<128x512xbf16, #tpu.memory_space<vmem>>, vector<128x512xbf16>
    %cst_66 = arith.constant dense<0.000000e+00> : vector<16x512xf32>
    %107 = tpu.matmul %105, %106, %cst_66 {dimension_numbers = #tpu.dot_dimension_numbers<[1], [0], [0], [1], [0, 0, 1, 1], [], []>} : vector<16x128xbf16>, vector<128x512xbf16>, vector<16x512xf32> -> vector<16x512xf32>
    %108 = arith.addf %104, %107 : vector<16x512xf32>
    %c0_67 = arith.constant 0 : index
    %c0_68 = arith.constant 0 : index
    %109 = vector.load %arg4[%c0_67, %c0_68] : memref<1x512xf32, #tpu.memory_space<vmem>>, vector<1x512xf32>
    %110 = vector.broadcast %109 : vector<1x512xf32> to vector<16x512xf32>
    %111 = arith.addf %108, %110 : vector<16x512xf32>
    %112 = vector.extract_strided_slice %111 {offsets = [0, 0], sizes = [16, 128], strides = [1, 1]} : vector<16x512xf32> to vector<16x128xf32>
    %113 = arith.negf %112 : vector<16x128xf32>
    %114 = math.exp %113 : vector<16x128xf32>
    %cst_69 = arith.constant 1.000000e+00 : f32
    %115 = vector.broadcast %cst_69 : f32 to vector<16x128xf32>
    %116 = arith.addf %115, %114 : vector<16x128xf32>
    %117 = arith.divf %115, %116 : vector<16x128xf32>
    %118 = vector.extract_strided_slice %111 {offsets = [0, 128], sizes = [16, 128], strides = [1, 1]} : vector<16x512xf32> to vector<16x128xf32>
    %119 = arith.negf %118 : vector<16x128xf32>
    %120 = math.exp %119 : vector<16x128xf32>
    %cst_70 = arith.constant 1.000000e+00 : f32
    %121 = vector.broadcast %cst_70 : f32 to vector<16x128xf32>
    %122 = arith.addf %121, %120 : vector<16x128xf32>
    %123 = arith.divf %121, %122 : vector<16x128xf32>
    %124 = vector.extract_strided_slice %111 {offsets = [0, 256], sizes = [16, 128], strides = [1, 1]} : vector<16x512xf32> to vector<16x128xf32>
    %125 = math.tanh %124 : vector<16x128xf32>
    %126 = vector.extract_strided_slice %111 {offsets = [0, 384], sizes = [16, 128], strides = [1, 1]} : vector<16x512xf32> to vector<16x128xf32>
    %127 = arith.negf %126 : vector<16x128xf32>
    %128 = math.exp %127 : vector<16x128xf32>
    %cst_71 = arith.constant 1.000000e+00 : f32
    %129 = vector.broadcast %cst_71 : f32 to vector<16x128xf32>
    %130 = arith.addf %129, %128 : vector<16x128xf32>
    %131 = arith.divf %129, %130 : vector<16x128xf32>
    %132 = arith.mulf %123, %102 : vector<16x128xf32>
    %133 = arith.mulf %117, %125 : vector<16x128xf32>
    %134 = arith.addf %132, %133 : vector<16x128xf32>
    %135 = math.tanh %134 : vector<16x128xf32>
    %136 = arith.mulf %131, %135 : vector<16x128xf32>
    %c0_72 = arith.constant 0 : index
    %c0_73 = arith.constant 0 : index
    %c0_74 = arith.constant 0 : index
    %137 = vector.load %arg10[%c0_72, %c0_73, %c0_74] : memref<2x16x128xf32, #tpu.memory_space<vmem>>, vector<1x16x128xf32>
    %138 = vector.shape_cast %137 : vector<1x16x128xf32> to vector<16x128xf32>
    %139 = vector.shape_cast %136 : vector<16x128xf32> to vector<1x16x128xf32>
    tpu.vector_store %arg10[%c0_72, %c0_73, %c0_74], %139 {strides = array<i32>} : memref<2x16x128xf32, #tpu.memory_space<vmem>>, vector<1x16x128xf32>,
    %c0_75 = arith.constant 0 : index
    %c0_76 = arith.constant 0 : index
    %c0_77 = arith.constant 0 : index
    %140 = vector.load %arg11[%c0_75, %c0_76, %c0_77] : memref<2x16x128xf32, #tpu.memory_space<vmem>>, vector<1x16x128xf32>
    %141 = vector.shape_cast %140 : vector<1x16x128xf32> to vector<16x128xf32>
    %142 = vector.shape_cast %134 : vector<16x128xf32> to vector<1x16x128xf32>
    tpu.vector_store %arg11[%c0_75, %c0_76, %c0_77], %142 {strides = array<i32>} : memref<2x16x128xf32, #tpu.memory_space<vmem>>, vector<1x16x128xf32>,
    %143 = arith.truncf %136 : vector<16x128xf32> to vector<16x128xbf16>
    %c1_78 = arith.constant 1 : index
    %c0_79 = arith.constant 0 : index
    %c0_80 = arith.constant 0 : index
    %144 = vector.load %arg10[%c1_78, %c0_79, %c0_80] : memref<2x16x128xf32, #tpu.memory_space<vmem>>, vector<1x16x128xf32>
    %145 = vector.shape_cast %144 : vector<1x16x128xf32> to vector<16x128xf32>
    %c1_81 = arith.constant 1 : index
    %c0_82 = arith.constant 0 : index
    %c0_83 = arith.constant 0 : index
    %146 = vector.load %arg11[%c1_81, %c0_82, %c0_83] : memref<2x16x128xf32, #tpu.memory_space<vmem>>, vector<1x16x128xf32>
    %147 = vector.shape_cast %146 : vector<1x16x128xf32> to vector<16x128xf32>
    %c0_84 = arith.constant 0 : index
    %c0_85 = arith.constant 0 : index
    %148 = vector.load %arg5[%c0_84, %c0_85] : memref<128x512xbf16, #tpu.memory_space<vmem>>, vector<128x512xbf16>
    %cst_86 = arith.constant dense<0.000000e+00> : vector<16x512xf32>
    %149 = tpu.matmul %143, %148, %cst_86 {dimension_numbers = #tpu.dot_dimension_numbers<[1], [0], [0], [1], [0, 0, 1, 1], [], []>} : vector<16x128xbf16>, vector<128x512xbf16>, vector<16x512xf32> -> vector<16x512xf32>
    %150 = arith.truncf %145 : vector<16x128xf32> to vector<16x128xbf16>
    %c0_87 = arith.constant 0 : index
    %c0_88 = arith.constant 0 : index
    %151 = vector.load %arg6[%c0_87, %c0_88] : memref<128x512xbf16, #tpu.memory_space<vmem>>, vector<128x512xbf16>
    %cst_89 = arith.constant dense<0.000000e+00> : vector<16x512xf32>
    %152 = tpu.matmul %150, %151, %cst_89 {dimension_numbers = #tpu.dot_dimension_numbers<[1], [0], [0], [1], [0, 0, 1, 1], [], []>} : vector<16x128xbf16>, vector<128x512xbf16>, vector<16x512xf32> -> vector<16x512xf32>
    %153 = arith.addf %149, %152 : vector<16x512xf32>
    %c0_90 = arith.constant 0 : index
    %c0_91 = arith.constant 0 : index
    %154 = vector.load %arg7[%c0_90, %c0_91] : memref<1x512xf32, #tpu.memory_space<vmem>>, vector<1x512xf32>
    %155 = vector.broadcast %154 : vector<1x512xf32> to vector<16x512xf32>
    %156 = arith.addf %153, %155 : vector<16x512xf32>
    %157 = vector.extract_strided_slice %156 {offsets = [0, 0], sizes = [16, 128], strides = [1, 1]} : vector<16x512xf32> to vector<16x128xf32>
    %158 = arith.negf %157 : vector<16x128xf32>
    %159 = math.exp %158 : vector<16x128xf32>
    %cst_92 = arith.constant 1.000000e+00 : f32
    %160 = vector.broadcast %cst_92 : f32 to vector<16x128xf32>
    %161 = arith.addf %160, %159 : vector<16x128xf32>
    %162 = arith.divf %160, %161 : vector<16x128xf32>
    %163 = vector.extract_strided_slice %156 {offsets = [0, 128], sizes = [16, 128], strides = [1, 1]} : vector<16x512xf32> to vector<16x128xf32>
    %164 = arith.negf %163 : vector<16x128xf32>
    %165 = math.exp %164 : vector<16x128xf32>
    %cst_93 = arith.constant 1.000000e+00 : f32
    %166 = vector.broadcast %cst_93 : f32 to vector<16x128xf32>
    %167 = arith.addf %166, %165 : vector<16x128xf32>
    %168 = arith.divf %166, %167 : vector<16x128xf32>
    %169 = vector.extract_strided_slice %156 {offsets = [0, 256], sizes = [16, 128], strides = [1, 1]} : vector<16x512xf32> to vector<16x128xf32>
    %170 = math.tanh %169 : vector<16x128xf32>
    %171 = vector.extract_strided_slice %156 {offsets = [0, 384], sizes = [16, 128], strides = [1, 1]} : vector<16x512xf32> to vector<16x128xf32>
    %172 = arith.negf %171 : vector<16x128xf32>
    %173 = math.exp %172 : vector<16x128xf32>
    %cst_94 = arith.constant 1.000000e+00 : f32
    %174 = vector.broadcast %cst_94 : f32 to vector<16x128xf32>
    %175 = arith.addf %174, %173 : vector<16x128xf32>
    %176 = arith.divf %174, %175 : vector<16x128xf32>
    %177 = arith.mulf %168, %147 : vector<16x128xf32>
    %178 = arith.mulf %162, %170 : vector<16x128xf32>
    %179 = arith.addf %177, %178 : vector<16x128xf32>
    %180 = math.tanh %179 : vector<16x128xf32>
    %181 = arith.mulf %176, %180 : vector<16x128xf32>
    %c1_95 = arith.constant 1 : index
    %c0_96 = arith.constant 0 : index
    %c0_97 = arith.constant 0 : index
    %182 = vector.load %arg10[%c1_95, %c0_96, %c0_97] : memref<2x16x128xf32, #tpu.memory_space<vmem>>, vector<1x16x128xf32>
    %183 = vector.shape_cast %182 : vector<1x16x128xf32> to vector<16x128xf32>
    %184 = vector.shape_cast %181 : vector<16x128xf32> to vector<1x16x128xf32>
    tpu.vector_store %arg10[%c1_95, %c0_96, %c0_97], %184 {strides = array<i32>} : memref<2x16x128xf32, #tpu.memory_space<vmem>>, vector<1x16x128xf32>,
    %c1_98 = arith.constant 1 : index
    %c0_99 = arith.constant 0 : index
    %c0_100 = arith.constant 0 : index
    %185 = vector.load %arg11[%c1_98, %c0_99, %c0_100] : memref<2x16x128xf32, #tpu.memory_space<vmem>>, vector<1x16x128xf32>
    %186 = vector.shape_cast %185 : vector<1x16x128xf32> to vector<16x128xf32>
    %187 = vector.shape_cast %179 : vector<16x128xf32> to vector<1x16x128xf32>
    tpu.vector_store %arg11[%c1_98, %c0_99, %c0_100], %187 {strides = array<i32>} : memref<2x16x128xf32, #tpu.memory_space<vmem>>, vector<1x16x128xf32>,
    %c2_i32 = arith.constant 2 : i32
    %188 = arith.index_cast %c2_i32 : i32 to index
    %c0_101 = arith.constant 0 : index
    %c0_102 = arith.constant 0 : index
    %189 = vector.load %arg1[%188, %c0_101, %c0_102] : memref<8x16x128xbf16, #tpu.memory_space<vmem>>, vector<1x16x128xbf16>
    %190 = vector.shape_cast %189 : vector<1x16x128xbf16> to vector<16x128xbf16>
    %c0_103 = arith.constant 0 : index
    %c0_104 = arith.constant 0 : index
    %c0_105 = arith.constant 0 : index
    %191 = vector.load %arg10[%c0_103, %c0_104, %c0_105] : memref<2x16x128xf32, #tpu.memory_space<vmem>>, vector<1x16x128xf32>
    %192 = vector.shape_cast %191 : vector<1x16x128xf32> to vector<16x128xf32>
    %c0_106 = arith.constant 0 : index
    %c0_107 = arith.constant 0 : index
    %c0_108 = arith.constant 0 : index
    %193 = vector.load %arg11[%c0_106, %c0_107, %c0_108] : memref<2x16x128xf32, #tpu.memory_space<vmem>>, vector<1x16x128xf32>
    %194 = vector.shape_cast %193 : vector<1x16x128xf32> to vector<16x128xf32>
    %c0_109 = arith.constant 0 : index
    %c0_110 = arith.constant 0 : index
    %195 = vector.load %arg2[%c0_109, %c0_110] : memref<128x512xbf16, #tpu.memory_space<vmem>>, vector<128x512xbf16>
    %cst_111 = arith.constant dense<0.000000e+00> : vector<16x512xf32>
    %196 = tpu.matmul %190, %195, %cst_111 {dimension_numbers = #tpu.dot_dimension_numbers<[1], [0], [0], [1], [0, 0, 1, 1], [], []>} : vector<16x128xbf16>, vector<128x512xbf16>, vector<16x512xf32> -> vector<16x512xf32>
    %197 = arith.truncf %192 : vector<16x128xf32> to vector<16x128xbf16>
    %c0_112 = arith.constant 0 : index
    %c0_113 = arith.constant 0 : index
    %198 = vector.load %arg3[%c0_112, %c0_113] : memref<128x512xbf16, #tpu.memory_space<vmem>>, vector<128x512xbf16>
    %cst_114 = arith.constant dense<0.000000e+00> : vector<16x512xf32>
    %199 = tpu.matmul %197, %198, %cst_114 {dimension_numbers = #tpu.dot_dimension_numbers<[1], [0], [0], [1], [0, 0, 1, 1], [], []>} : vector<16x128xbf16>, vector<128x512xbf16>, vector<16x512xf32> -> vector<16x512xf32>
    %200 = arith.addf %196, %199 : vector<16x512xf32>
    %c0_115 = arith.constant 0 : index
    %c0_116 = arith.constant 0 : index
    %201 = vector.load %arg4[%c0_115, %c0_116] : memref<1x512xf32, #tpu.memory_space<vmem>>, vector<1x512xf32>
    %202 = vector.broadcast %201 : vector<1x512xf32> to vector<16x512xf32>
    %203 = arith.addf %200, %202 : vector<16x512xf32>
    %204 = vector.extract_strided_slice %203 {offsets = [0, 0], sizes = [16, 128], strides = [1, 1]} : vector<16x512xf32> to vector<16x128xf32>
    %205 = arith.negf %204 : vector<16x128xf32>
    %206 = math.exp %205 : vector<16x128xf32>
    %cst_117 = arith.constant 1.000000e+00 : f32
    %207 = vector.broadcast %cst_117 : f32 to vector<16x128xf32>
    %208 = arith.addf %207, %206 : vector<16x128xf32>
    %209 = arith.divf %207, %208 : vector<16x128xf32>
    %210 = vector.extract_strided_slice %203 {offsets = [0, 128], sizes = [16, 128], strides = [1, 1]} : vector<16x512xf32> to vector<16x128xf32>
    %211 = arith.negf %210 : vector<16x128xf32>
    %212 = math.exp %211 : vector<16x128xf32>
    %cst_118 = arith.constant 1.000000e+00 : f32
    %213 = vector.broadcast %cst_118 : f32 to vector<16x128xf32>
    %214 = arith.addf %213, %212 : vector<16x128xf32>
    %215 = arith.divf %213, %214 : vector<16x128xf32>
    %216 = vector.extract_strided_slice %203 {offsets = [0, 256], sizes = [16, 128], strides = [1, 1]} : vector<16x512xf32> to vector<16x128xf32>
    %217 = math.tanh %216 : vector<16x128xf32>
    %218 = vector.extract_strided_slice %203 {offsets = [0, 384], sizes = [16, 128], strides = [1, 1]} : vector<16x512xf32> to vector<16x128xf32>
    %219 = arith.negf %218 : vector<16x128xf32>
    %220 = math.exp %219 : vector<16x128xf32>
    %cst_119 = arith.constant 1.000000e+00 : f32
    %221 = vector.broadcast %cst_119 : f32 to vector<16x128xf32>
    %222 = arith.addf %221, %220 : vector<16x128xf32>
    %223 = arith.divf %221, %222 : vector<16x128xf32>
    %224 = arith.mulf %215, %194 : vector<16x128xf32>
    %225 = arith.mulf %209, %217 : vector<16x128xf32>
    %226 = arith.addf %224, %225 : vector<16x128xf32>
    %227 = math.tanh %226 : vector<16x128xf32>
    %228 = arith.mulf %223, %227 : vector<16x128xf32>
    %c0_120 = arith.constant 0 : index
    %c0_121 = arith.constant 0 : index
    %c0_122 = arith.constant 0 : index
    %229 = vector.load %arg10[%c0_120, %c0_121, %c0_122] : memref<2x16x128xf32, #tpu.memory_space<vmem>>, vector<1x16x128xf32>
    %230 = vector.shape_cast %229 : vector<1x16x128xf32> to vector<16x128xf32>
    %231 = vector.shape_cast %228 : vector<16x128xf32> to vector<1x16x128xf32>
    tpu.vector_store %arg10[%c0_120, %c0_121, %c0_122], %231 {strides = array<i32>} : memref<2x16x128xf32, #tpu.memory_space<vmem>>, vector<1x16x128xf32>,
    %c0_123 = arith.constant 0 : index
    %c0_124 = arith.constant 0 : index
    %c0_125 = arith.constant 0 : index
    %232 = vector.load %arg11[%c0_123, %c0_124, %c0_125] : memref<2x16x128xf32, #tpu.memory_space<vmem>>, vector<1x16x128xf32>
    %233 = vector.shape_cast %232 : vector<1x16x128xf32> to vector<16x128xf32>
    %234 = vector.shape_cast %226 : vector<16x128xf32> to vector<1x16x128xf32>
    tpu.vector_store %arg11[%c0_123, %c0_124, %c0_125], %234 {strides = array<i32>} : memref<2x16x128xf32, #tpu.memory_space<vmem>>, vector<1x16x128xf32>,
    %235 = arith.truncf %228 : vector<16x128xf32> to vector<16x128xbf16>
    %c1_126 = arith.constant 1 : index
    %c0_127 = arith.constant 0 : index
    %c0_128 = arith.constant 0 : index
    %236 = vector.load %arg10[%c1_126, %c0_127, %c0_128] : memref<2x16x128xf32, #tpu.memory_space<vmem>>, vector<1x16x128xf32>
    %237 = vector.shape_cast %236 : vector<1x16x128xf32> to vector<16x128xf32>
    %c1_129 = arith.constant 1 : index
    %c0_130 = arith.constant 0 : index
    %c0_131 = arith.constant 0 : index
    %238 = vector.load %arg11[%c1_129, %c0_130, %c0_131] : memref<2x16x128xf32, #tpu.memory_space<vmem>>, vector<1x16x128xf32>
    %239 = vector.shape_cast %238 : vector<1x16x128xf32> to vector<16x128xf32>
    %c0_132 = arith.constant 0 : index
    %c0_133 = arith.constant 0 : index
    %240 = vector.load %arg5[%c0_132, %c0_133] : memref<128x512xbf16, #tpu.memory_space<vmem>>, vector<128x512xbf16>
    %cst_134 = arith.constant dense<0.000000e+00> : vector<16x512xf32>
    %241 = tpu.matmul %235, %240, %cst_134 {dimension_numbers = #tpu.dot_dimension_numbers<[1], [0], [0], [1], [0, 0, 1, 1], [], []>} : vector<16x128xbf16>, vector<128x512xbf16>, vector<16x512xf32> -> vector<16x512xf32>
    %242 = arith.truncf %237 : vector<16x128xf32> to vector<16x128xbf16>
    %c0_135 = arith.constant 0 : index
    %c0_136 = arith.constant 0 : index
    %243 = vector.load %arg6[%c0_135, %c0_136] : memref<128x512xbf16, #tpu.memory_space<vmem>>, vector<128x512xbf16>
    %cst_137 = arith.constant dense<0.000000e+00> : vector<16x512xf32>
    %244 = tpu.matmul %242, %243, %cst_137 {dimension_numbers = #tpu.dot_dimension_numbers<[1], [0], [0], [1], [0, 0, 1, 1], [], []>} : vector<16x128xbf16>, vector<128x512xbf16>, vector<16x512xf32> -> vector<16x512xf32>
    %245 = arith.addf %241, %244 : vector<16x512xf32>
    %c0_138 = arith.constant 0 : index
    %c0_139 = arith.constant 0 : index
    %246 = vector.load %arg7[%c0_138, %c0_139] : memref<1x512xf32, #tpu.memory_space<vmem>>, vector<1x512xf32>
    %247 = vector.broadcast %246 : vector<1x512xf32> to vector<16x512xf32>
    %248 = arith.addf %245, %247 : vector<16x512xf32>
    %249 = vector.extract_strided_slice %248 {offsets = [0, 0], sizes = [16, 128], strides = [1, 1]} : vector<16x512xf32> to vector<16x128xf32>
    %250 = arith.negf %249 : vector<16x128xf32>
    %251 = math.exp %250 : vector<16x128xf32>
    %cst_140 = arith.constant 1.000000e+00 : f32
    %252 = vector.broadcast %cst_140 : f32 to vector<16x128xf32>
    %253 = arith.addf %252, %251 : vector<16x128xf32>
    %254 = arith.divf %252, %253 : vector<16x128xf32>
    %255 = vector.extract_strided_slice %248 {offsets = [0, 128], sizes = [16, 128], strides = [1, 1]} : vector<16x512xf32> to vector<16x128xf32>
    %256 = arith.negf %255 : vector<16x128xf32>
    %257 = math.exp %256 : vector<16x128xf32>
    %cst_141 = arith.constant 1.000000e+00 : f32
    %258 = vector.broadcast %cst_141 : f32 to vector<16x128xf32>
    %259 = arith.addf %258, %257 : vector<16x128xf32>
    %260 = arith.divf %258, %259 : vector<16x128xf32>
    %261 = vector.extract_strided_slice %248 {offsets = [0, 256], sizes = [16, 128], strides = [1, 1]} : vector<16x512xf32> to vector<16x128xf32>
    %262 = math.tanh %261 : vector<16x128xf32>
    %263 = vector.extract_strided_slice %248 {offsets = [0, 384], sizes = [16, 128], strides = [1, 1]} : vector<16x512xf32> to vector<16x128xf32>
    %264 = arith.negf %263 : vector<16x128xf32>
    %265 = math.exp %264 : vector<16x128xf32>
    %cst_142 = arith.constant 1.000000e+00 : f32
    %266 = vector.broadcast %cst_142 : f32 to vector<16x128xf32>
    %267 = arith.addf %266, %265 : vector<16x128xf32>
    %268 = arith.divf %266, %267 : vector<16x128xf32>
    %269 = arith.mulf %260, %239 : vector<16x128xf32>
    %270 = arith.mulf %254, %262 : vector<16x128xf32>
    %271 = arith.addf %269, %270 : vector<16x128xf32>
    %272 = math.tanh %271 : vector<16x128xf32>
    %273 = arith.mulf %268, %272 : vector<16x128xf32>
    %c1_143 = arith.constant 1 : index
    %c0_144 = arith.constant 0 : index
    %c0_145 = arith.constant 0 : index
    %274 = vector.load %arg10[%c1_143, %c0_144, %c0_145] : memref<2x16x128xf32, #tpu.memory_space<vmem>>, vector<1x16x128xf32>
    %275 = vector.shape_cast %274 : vector<1x16x128xf32> to vector<16x128xf32>
    %276 = vector.shape_cast %273 : vector<16x128xf32> to vector<1x16x128xf32>
    tpu.vector_store %arg10[%c1_143, %c0_144, %c0_145], %276 {strides = array<i32>} : memref<2x16x128xf32, #tpu.memory_space<vmem>>, vector<1x16x128xf32>,
    %c1_146 = arith.constant 1 : index
    %c0_147 = arith.constant 0 : index
    %c0_148 = arith.constant 0 : index
    %277 = vector.load %arg11[%c1_146, %c0_147, %c0_148] : memref<2x16x128xf32, #tpu.memory_space<vmem>>, vector<1x16x128xf32>
    %278 = vector.shape_cast %277 : vector<1x16x128xf32> to vector<16x128xf32>
    %279 = vector.shape_cast %271 : vector<16x128xf32> to vector<1x16x128xf32>
    tpu.vector_store %arg11[%c1_146, %c0_147, %c0_148], %279 {strides = array<i32>} : memref<2x16x128xf32, #tpu.memory_space<vmem>>, vector<1x16x128xf32>,
    %c3_i32 = arith.constant 3 : i32
    %280 = arith.index_cast %c3_i32 : i32 to index
    %c0_149 = arith.constant 0 : index
    %c0_150 = arith.constant 0 : index
    %281 = vector.load %arg1[%280, %c0_149, %c0_150] : memref<8x16x128xbf16, #tpu.memory_space<vmem>>, vector<1x16x128xbf16>
    %282 = vector.shape_cast %281 : vector<1x16x128xbf16> to vector<16x128xbf16>
    %c0_151 = arith.constant 0 : index
    %c0_152 = arith.constant 0 : index
    %c0_153 = arith.constant 0 : index
    %283 = vector.load %arg10[%c0_151, %c0_152, %c0_153] : memref<2x16x128xf32, #tpu.memory_space<vmem>>, vector<1x16x128xf32>
    %284 = vector.shape_cast %283 : vector<1x16x128xf32> to vector<16x128xf32>
    %c0_154 = arith.constant 0 : index
    %c0_155 = arith.constant 0 : index
    %c0_156 = arith.constant 0 : index
    %285 = vector.load %arg11[%c0_154, %c0_155, %c0_156] : memref<2x16x128xf32, #tpu.memory_space<vmem>>, vector<1x16x128xf32>
    %286 = vector.shape_cast %285 : vector<1x16x128xf32> to vector<16x128xf32>
    %c0_157 = arith.constant 0 : index
    %c0_158 = arith.constant 0 : index
    %287 = vector.load %arg2[%c0_157, %c0_158] : memref<128x512xbf16, #tpu.memory_space<vmem>>, vector<128x512xbf16>
    %cst_159 = arith.constant dense<0.000000e+00> : vector<16x512xf32>
    %288 = tpu.matmul %282, %287, %cst_159 {dimension_numbers = #tpu.dot_dimension_numbers<[1], [0], [0], [1], [0, 0, 1, 1], [], []>} : vector<16x128xbf16>, vector<128x512xbf16>, vector<16x512xf32> -> vector<16x512xf32>
    %289 = arith.truncf %284 : vector<16x128xf32> to vector<16x128xbf16>
    %c0_160 = arith.constant 0 : index
    %c0_161 = arith.constant 0 : index
    %290 = vector.load %arg3[%c0_160, %c0_161] : memref<128x512xbf16, #tpu.memory_space<vmem>>, vector<128x512xbf16>
    %cst_162 = arith.constant dense<0.000000e+00> : vector<16x512xf32>
    %291 = tpu.matmul %289, %290, %cst_162 {dimension_numbers = #tpu.dot_dimension_numbers<[1], [0], [0], [1], [0, 0, 1, 1], [], []>} : vector<16x128xbf16>, vector<128x512xbf16>, vector<16x512xf32> -> vector<16x512xf32>
    %292 = arith.addf %288, %291 : vector<16x512xf32>
    %c0_163 = arith.constant 0 : index
    %c0_164 = arith.constant 0 : index
    %293 = vector.load %arg4[%c0_163, %c0_164] : memref<1x512xf32, #tpu.memory_space<vmem>>, vector<1x512xf32>
    %294 = vector.broadcast %293 : vector<1x512xf32> to vector<16x512xf32>
    %295 = arith.addf %292, %294 : vector<16x512xf32>
    %296 = vector.extract_strided_slice %295 {offsets = [0, 0], sizes = [16, 128], strides = [1, 1]} : vector<16x512xf32> to vector<16x128xf32>
    %297 = arith.negf %296 : vector<16x128xf32>
    %298 = math.exp %297 : vector<16x128xf32>
    %cst_165 = arith.constant 1.000000e+00 : f32
    %299 = vector.broadcast %cst_165 : f32 to vector<16x128xf32>
    %300 = arith.addf %299, %298 : vector<16x128xf32>
    %301 = arith.divf %299, %300 : vector<16x128xf32>
    %302 = vector.extract_strided_slice %295 {offsets = [0, 128], sizes = [16, 128], strides = [1, 1]} : vector<16x512xf32> to vector<16x128xf32>
    %303 = arith.negf %302 : vector<16x128xf32>
    %304 = math.exp %303 : vector<16x128xf32>
    %cst_166 = arith.constant 1.000000e+00 : f32
    %305 = vector.broadcast %cst_166 : f32 to vector<16x128xf32>
    %306 = arith.addf %305, %304 : vector<16x128xf32>
    %307 = arith.divf %305, %306 : vector<16x128xf32>
    %308 = vector.extract_strided_slice %295 {offsets = [0, 256], sizes = [16, 128], strides = [1, 1]} : vector<16x512xf32> to vector<16x128xf32>
    %309 = math.tanh %308 : vector<16x128xf32>
    %310 = vector.extract_strided_slice %295 {offsets = [0, 384], sizes = [16, 128], strides = [1, 1]} : vector<16x512xf32> to vector<16x128xf32>
    %311 = arith.negf %310 : vector<16x128xf32>
    %312 = math.exp %311 : vector<16x128xf32>
    %cst_167 = arith.constant 1.000000e+00 : f32
    %313 = vector.broadcast %cst_167 : f32 to vector<16x128xf32>
    %314 = arith.addf %313, %312 : vector<16x128xf32>
    %315 = arith.divf %313, %314 : vector<16x128xf32>
    %316 = arith.mulf %307, %286 : vector<16x128xf32>
    %317 = arith.mulf %301, %309 : vector<16x128xf32>
    %318 = arith.addf %316, %317 : vector<16x128xf32>
    %319 = math.tanh %318 : vector<16x128xf32>
    %320 = arith.mulf %315, %319 : vector<16x128xf32>
    %c0_168 = arith.constant 0 : index
    %c0_169 = arith.constant 0 : index
    %c0_170 = arith.constant 0 : index
    %321 = vector.load %arg10[%c0_168, %c0_169, %c0_170] : memref<2x16x128xf32, #tpu.memory_space<vmem>>, vector<1x16x128xf32>
    %322 = vector.shape_cast %321 : vector<1x16x128xf32> to vector<16x128xf32>
    %323 = vector.shape_cast %320 : vector<16x128xf32> to vector<1x16x128xf32>
    tpu.vector_store %arg10[%c0_168, %c0_169, %c0_170], %323 {strides = array<i32>} : memref<2x16x128xf32, #tpu.memory_space<vmem>>, vector<1x16x128xf32>,
    %c0_171 = arith.constant 0 : index
    %c0_172 = arith.constant 0 : index
    %c0_173 = arith.constant 0 : index
    %324 = vector.load %arg11[%c0_171, %c0_172, %c0_173] : memref<2x16x128xf32, #tpu.memory_space<vmem>>, vector<1x16x128xf32>
    %325 = vector.shape_cast %324 : vector<1x16x128xf32> to vector<16x128xf32>
    %326 = vector.shape_cast %318 : vector<16x128xf32> to vector<1x16x128xf32>
    tpu.vector_store %arg11[%c0_171, %c0_172, %c0_173], %326 {strides = array<i32>} : memref<2x16x128xf32, #tpu.memory_space<vmem>>, vector<1x16x128xf32>,
    %327 = arith.truncf %320 : vector<16x128xf32> to vector<16x128xbf16>
    %c1_174 = arith.constant 1 : index
    %c0_175 = arith.constant 0 : index
    %c0_176 = arith.constant 0 : index
    %328 = vector.load %arg10[%c1_174, %c0_175, %c0_176] : memref<2x16x128xf32, #tpu.memory_space<vmem>>, vector<1x16x128xf32>
    %329 = vector.shape_cast %328 : vector<1x16x128xf32> to vector<16x128xf32>
    %c1_177 = arith.constant 1 : index
    %c0_178 = arith.constant 0 : index
    %c0_179 = arith.constant 0 : index
    %330 = vector.load %arg11[%c1_177, %c0_178, %c0_179] : memref<2x16x128xf32, #tpu.memory_space<vmem>>, vector<1x16x128xf32>
    %331 = vector.shape_cast %330 : vector<1x16x128xf32> to vector<16x128xf32>
    %c0_180 = arith.constant 0 : index
    %c0_181 = arith.constant 0 : index
    %332 = vector.load %arg5[%c0_180, %c0_181] : memref<128x512xbf16, #tpu.memory_space<vmem>>, vector<128x512xbf16>
    %cst_182 = arith.constant dense<0.000000e+00> : vector<16x512xf32>
    %333 = tpu.matmul %327, %332, %cst_182 {dimension_numbers = #tpu.dot_dimension_numbers<[1], [0], [0], [1], [0, 0, 1, 1], [], []>} : vector<16x128xbf16>, vector<128x512xbf16>, vector<16x512xf32> -> vector<16x512xf32>
    %334 = arith.truncf %329 : vector<16x128xf32> to vector<16x128xbf16>
    %c0_183 = arith.constant 0 : index
    %c0_184 = arith.constant 0 : index
    %335 = vector.load %arg6[%c0_183, %c0_184] : memref<128x512xbf16, #tpu.memory_space<vmem>>, vector<128x512xbf16>
    %cst_185 = arith.constant dense<0.000000e+00> : vector<16x512xf32>
    %336 = tpu.matmul %334, %335, %cst_185 {dimension_numbers = #tpu.dot_dimension_numbers<[1], [0], [0], [1], [0, 0, 1, 1], [], []>} : vector<16x128xbf16>, vector<128x512xbf16>, vector<16x512xf32> -> vector<16x512xf32>
    %337 = arith.addf %333, %336 : vector<16x512xf32>
    %c0_186 = arith.constant 0 : index
    %c0_187 = arith.constant 0 : index
    %338 = vector.load %arg7[%c0_186, %c0_187] : memref<1x512xf32, #tpu.memory_space<vmem>>, vector<1x512xf32>
    %339 = vector.broadcast %338 : vector<1x512xf32> to vector<16x512xf32>
    %340 = arith.addf %337, %339 : vector<16x512xf32>
    %341 = vector.extract_strided_slice %340 {offsets = [0, 0], sizes = [16, 128], strides = [1, 1]} : vector<16x512xf32> to vector<16x128xf32>
    %342 = arith.negf %341 : vector<16x128xf32>
    %343 = math.exp %342 : vector<16x128xf32>
    %cst_188 = arith.constant 1.000000e+00 : f32
    %344 = vector.broadcast %cst_188 : f32 to vector<16x128xf32>
    %345 = arith.addf %344, %343 : vector<16x128xf32>
    %346 = arith.divf %344, %345 : vector<16x128xf32>
    %347 = vector.extract_strided_slice %340 {offsets = [0, 128], sizes = [16, 128], strides = [1, 1]} : vector<16x512xf32> to vector<16x128xf32>
    %348 = arith.negf %347 : vector<16x128xf32>
    %349 = math.exp %348 : vector<16x128xf32>
    %cst_189 = arith.constant 1.000000e+00 : f32
    %350 = vector.broadcast %cst_189 : f32 to vector<16x128xf32>
    %351 = arith.addf %350, %349 : vector<16x128xf32>
    %352 = arith.divf %350, %351 : vector<16x128xf32>
    %353 = vector.extract_strided_slice %340 {offsets = [0, 256], sizes = [16, 128], strides = [1, 1]} : vector<16x512xf32> to vector<16x128xf32>
    %354 = math.tanh %353 : vector<16x128xf32>
    %355 = vector.extract_strided_slice %340 {offsets = [0, 384], sizes = [16, 128], strides = [1, 1]} : vector<16x512xf32> to vector<16x128xf32>
    %356 = arith.negf %355 : vector<16x128xf32>
    %357 = math.exp %356 : vector<16x128xf32>
    %cst_190 = arith.constant 1.000000e+00 : f32
    %358 = vector.broadcast %cst_190 : f32 to vector<16x128xf32>
    %359 = arith.addf %358, %357 : vector<16x128xf32>
    %360 = arith.divf %358, %359 : vector<16x128xf32>
    %361 = arith.mulf %352, %331 : vector<16x128xf32>
    %362 = arith.mulf %346, %354 : vector<16x128xf32>
    %363 = arith.addf %361, %362 : vector<16x128xf32>
    %364 = math.tanh %363 : vector<16x128xf32>
    %365 = arith.mulf %360, %364 : vector<16x128xf32>
    %c1_191 = arith.constant 1 : index
    %c0_192 = arith.constant 0 : index
    %c0_193 = arith.constant 0 : index
    %366 = vector.load %arg10[%c1_191, %c0_192, %c0_193] : memref<2x16x128xf32, #tpu.memory_space<vmem>>, vector<1x16x128xf32>
    %367 = vector.shape_cast %366 : vector<1x16x128xf32> to vector<16x128xf32>
    %368 = vector.shape_cast %365 : vector<16x128xf32> to vector<1x16x128xf32>
    tpu.vector_store %arg10[%c1_191, %c0_192, %c0_193], %368 {strides = array<i32>} : memref<2x16x128xf32, #tpu.memory_space<vmem>>, vector<1x16x128xf32>,
    %c1_194 = arith.constant 1 : index
    %c0_195 = arith.constant 0 : index
    %c0_196 = arith.constant 0 : index
    %369 = vector.load %arg11[%c1_194, %c0_195, %c0_196] : memref<2x16x128xf32, #tpu.memory_space<vmem>>, vector<1x16x128xf32>
    %370 = vector.shape_cast %369 : vector<1x16x128xf32> to vector<16x128xf32>
    %371 = vector.shape_cast %363 : vector<16x128xf32> to vector<1x16x128xf32>
    tpu.vector_store %arg11[%c1_194, %c0_195, %c0_196], %371 {strides = array<i32>} : memref<2x16x128xf32, #tpu.memory_space<vmem>>, vector<1x16x128xf32>,
    %c4_i32 = arith.constant 4 : i32
    %372 = arith.index_cast %c4_i32 : i32 to index
    %c0_197 = arith.constant 0 : index
    %c0_198 = arith.constant 0 : index
    %373 = vector.load %arg1[%372, %c0_197, %c0_198] : memref<8x16x128xbf16, #tpu.memory_space<vmem>>, vector<1x16x128xbf16>
    %374 = vector.shape_cast %373 : vector<1x16x128xbf16> to vector<16x128xbf16>
    %c0_199 = arith.constant 0 : index
    %c0_200 = arith.constant 0 : index
    %c0_201 = arith.constant 0 : index
    %375 = vector.load %arg10[%c0_199, %c0_200, %c0_201] : memref<2x16x128xf32, #tpu.memory_space<vmem>>, vector<1x16x128xf32>
    %376 = vector.shape_cast %375 : vector<1x16x128xf32> to vector<16x128xf32>
    %c0_202 = arith.constant 0 : index
    %c0_203 = arith.constant 0 : index
    %c0_204 = arith.constant 0 : index
    %377 = vector.load %arg11[%c0_202, %c0_203, %c0_204] : memref<2x16x128xf32, #tpu.memory_space<vmem>>, vector<1x16x128xf32>
    %378 = vector.shape_cast %377 : vector<1x16x128xf32> to vector<16x128xf32>
    %c0_205 = arith.constant 0 : index
    %c0_206 = arith.constant 0 : index
    %379 = vector.load %arg2[%c0_205, %c0_206] : memref<128x512xbf16, #tpu.memory_space<vmem>>, vector<128x512xbf16>
    %cst_207 = arith.constant dense<0.000000e+00> : vector<16x512xf32>
    %380 = tpu.matmul %374, %379, %cst_207 {dimension_numbers = #tpu.dot_dimension_numbers<[1], [0], [0], [1], [0, 0, 1, 1], [], []>} : vector<16x128xbf16>, vector<128x512xbf16>, vector<16x512xf32> -> vector<16x512xf32>
    %381 = arith.truncf %376 : vector<16x128xf32> to vector<16x128xbf16>
    %c0_208 = arith.constant 0 : index
    %c0_209 = arith.constant 0 : index
    %382 = vector.load %arg3[%c0_208, %c0_209] : memref<128x512xbf16, #tpu.memory_space<vmem>>, vector<128x512xbf16>
    %cst_210 = arith.constant dense<0.000000e+00> : vector<16x512xf32>
    %383 = tpu.matmul %381, %382, %cst_210 {dimension_numbers = #tpu.dot_dimension_numbers<[1], [0], [0], [1], [0, 0, 1, 1], [], []>} : vector<16x128xbf16>, vector<128x512xbf16>, vector<16x512xf32> -> vector<16x512xf32>
    %384 = arith.addf %380, %383 : vector<16x512xf32>
    %c0_211 = arith.constant 0 : index
    %c0_212 = arith.constant 0 : index
    %385 = vector.load %arg4[%c0_211, %c0_212] : memref<1x512xf32, #tpu.memory_space<vmem>>, vector<1x512xf32>
    %386 = vector.broadcast %385 : vector<1x512xf32> to vector<16x512xf32>
    %387 = arith.addf %384, %386 : vector<16x512xf32>
    %388 = vector.extract_strided_slice %387 {offsets = [0, 0], sizes = [16, 128], strides = [1, 1]} : vector<16x512xf32> to vector<16x128xf32>
    %389 = arith.negf %388 : vector<16x128xf32>
    %390 = math.exp %389 : vector<16x128xf32>
    %cst_213 = arith.constant 1.000000e+00 : f32
    %391 = vector.broadcast %cst_213 : f32 to vector<16x128xf32>
    %392 = arith.addf %391, %390 : vector<16x128xf32>
    %393 = arith.divf %391, %392 : vector<16x128xf32>
    %394 = vector.extract_strided_slice %387 {offsets = [0, 128], sizes = [16, 128], strides = [1, 1]} : vector<16x512xf32> to vector<16x128xf32>
    %395 = arith.negf %394 : vector<16x128xf32>
    %396 = math.exp %395 : vector<16x128xf32>
    %cst_214 = arith.constant 1.000000e+00 : f32
    %397 = vector.broadcast %cst_214 : f32 to vector<16x128xf32>
    %398 = arith.addf %397, %396 : vector<16x128xf32>
    %399 = arith.divf %397, %398 : vector<16x128xf32>
    %400 = vector.extract_strided_slice %387 {offsets = [0, 256], sizes = [16, 128], strides = [1, 1]} : vector<16x512xf32> to vector<16x128xf32>
    %401 = math.tanh %400 : vector<16x128xf32>
    %402 = vector.extract_strided_slice %387 {offsets = [0, 384], sizes = [16, 128], strides = [1, 1]} : vector<16x512xf32> to vector<16x128xf32>
    %403 = arith.negf %402 : vector<16x128xf32>
    %404 = math.exp %403 : vector<16x128xf32>
    %cst_215 = arith.constant 1.000000e+00 : f32
    %405 = vector.broadcast %cst_215 : f32 to vector<16x128xf32>
    %406 = arith.addf %405, %404 : vector<16x128xf32>
    %407 = arith.divf %405, %406 : vector<16x128xf32>
    %408 = arith.mulf %399, %378 : vector<16x128xf32>
    %409 = arith.mulf %393, %401 : vector<16x128xf32>
    %410 = arith.addf %408, %409 : vector<16x128xf32>
    %411 = math.tanh %410 : vector<16x128xf32>
    %412 = arith.mulf %407, %411 : vector<16x128xf32>
    %c0_216 = arith.constant 0 : index
    %c0_217 = arith.constant 0 : index
    %c0_218 = arith.constant 0 : index
    %413 = vector.load %arg10[%c0_216, %c0_217, %c0_218] : memref<2x16x128xf32, #tpu.memory_space<vmem>>, vector<1x16x128xf32>
    %414 = vector.shape_cast %413 : vector<1x16x128xf32> to vector<16x128xf32>
    %415 = vector.shape_cast %412 : vector<16x128xf32> to vector<1x16x128xf32>
    tpu.vector_store %arg10[%c0_216, %c0_217, %c0_218], %415 {strides = array<i32>} : memref<2x16x128xf32, #tpu.memory_space<vmem>>, vector<1x16x128xf32>,
    %c0_219 = arith.constant 0 : index
    %c0_220 = arith.constant 0 : index
    %c0_221 = arith.constant 0 : index
    %416 = vector.load %arg11[%c0_219, %c0_220, %c0_221] : memref<2x16x128xf32, #tpu.memory_space<vmem>>, vector<1x16x128xf32>
    %417 = vector.shape_cast %416 : vector<1x16x128xf32> to vector<16x128xf32>
    %418 = vector.shape_cast %410 : vector<16x128xf32> to vector<1x16x128xf32>
    tpu.vector_store %arg11[%c0_219, %c0_220, %c0_221], %418 {strides = array<i32>} : memref<2x16x128xf32, #tpu.memory_space<vmem>>, vector<1x16x128xf32>,
    %419 = arith.truncf %412 : vector<16x128xf32> to vector<16x128xbf16>
    %c1_222 = arith.constant 1 : index
    %c0_223 = arith.constant 0 : index
    %c0_224 = arith.constant 0 : index
    %420 = vector.load %arg10[%c1_222, %c0_223, %c0_224] : memref<2x16x128xf32, #tpu.memory_space<vmem>>, vector<1x16x128xf32>
    %421 = vector.shape_cast %420 : vector<1x16x128xf32> to vector<16x128xf32>
    %c1_225 = arith.constant 1 : index
    %c0_226 = arith.constant 0 : index
    %c0_227 = arith.constant 0 : index
    %422 = vector.load %arg11[%c1_225, %c0_226, %c0_227] : memref<2x16x128xf32, #tpu.memory_space<vmem>>, vector<1x16x128xf32>
    %423 = vector.shape_cast %422 : vector<1x16x128xf32> to vector<16x128xf32>
    %c0_228 = arith.constant 0 : index
    %c0_229 = arith.constant 0 : index
    %424 = vector.load %arg5[%c0_228, %c0_229] : memref<128x512xbf16, #tpu.memory_space<vmem>>, vector<128x512xbf16>
    %cst_230 = arith.constant dense<0.000000e+00> : vector<16x512xf32>
    %425 = tpu.matmul %419, %424, %cst_230 {dimension_numbers = #tpu.dot_dimension_numbers<[1], [0], [0], [1], [0, 0, 1, 1], [], []>} : vector<16x128xbf16>, vector<128x512xbf16>, vector<16x512xf32> -> vector<16x512xf32>
    %426 = arith.truncf %421 : vector<16x128xf32> to vector<16x128xbf16>
    %c0_231 = arith.constant 0 : index
    %c0_232 = arith.constant 0 : index
    %427 = vector.load %arg6[%c0_231, %c0_232] : memref<128x512xbf16, #tpu.memory_space<vmem>>, vector<128x512xbf16>
    %cst_233 = arith.constant dense<0.000000e+00> : vector<16x512xf32>
    %428 = tpu.matmul %426, %427, %cst_233 {dimension_numbers = #tpu.dot_dimension_numbers<[1], [0], [0], [1], [0, 0, 1, 1], [], []>} : vector<16x128xbf16>, vector<128x512xbf16>, vector<16x512xf32> -> vector<16x512xf32>
    %429 = arith.addf %425, %428 : vector<16x512xf32>
    %c0_234 = arith.constant 0 : index
    %c0_235 = arith.constant 0 : index
    %430 = vector.load %arg7[%c0_234, %c0_235] : memref<1x512xf32, #tpu.memory_space<vmem>>, vector<1x512xf32>
    %431 = vector.broadcast %430 : vector<1x512xf32> to vector<16x512xf32>
    %432 = arith.addf %429, %431 : vector<16x512xf32>
    %433 = vector.extract_strided_slice %432 {offsets = [0, 0], sizes = [16, 128], strides = [1, 1]} : vector<16x512xf32> to vector<16x128xf32>
    %434 = arith.negf %433 : vector<16x128xf32>
    %435 = math.exp %434 : vector<16x128xf32>
    %cst_236 = arith.constant 1.000000e+00 : f32
    %436 = vector.broadcast %cst_236 : f32 to vector<16x128xf32>
    %437 = arith.addf %436, %435 : vector<16x128xf32>
    %438 = arith.divf %436, %437 : vector<16x128xf32>
    %439 = vector.extract_strided_slice %432 {offsets = [0, 128], sizes = [16, 128], strides = [1, 1]} : vector<16x512xf32> to vector<16x128xf32>
    %440 = arith.negf %439 : vector<16x128xf32>
    %441 = math.exp %440 : vector<16x128xf32>
    %cst_237 = arith.constant 1.000000e+00 : f32
    %442 = vector.broadcast %cst_237 : f32 to vector<16x128xf32>
    %443 = arith.addf %442, %441 : vector<16x128xf32>
    %444 = arith.divf %442, %443 : vector<16x128xf32>
    %445 = vector.extract_strided_slice %432 {offsets = [0, 256], sizes = [16, 128], strides = [1, 1]} : vector<16x512xf32> to vector<16x128xf32>
    %446 = math.tanh %445 : vector<16x128xf32>
    %447 = vector.extract_strided_slice %432 {offsets = [0, 384], sizes = [16, 128], strides = [1, 1]} : vector<16x512xf32> to vector<16x128xf32>
    %448 = arith.negf %447 : vector<16x128xf32>
    %449 = math.exp %448 : vector<16x128xf32>
    %cst_238 = arith.constant 1.000000e+00 : f32
    %450 = vector.broadcast %cst_238 : f32 to vector<16x128xf32>
    %451 = arith.addf %450, %449 : vector<16x128xf32>
    %452 = arith.divf %450, %451 : vector<16x128xf32>
    %453 = arith.mulf %444, %423 : vector<16x128xf32>
    %454 = arith.mulf %438, %446 : vector<16x128xf32>
    %455 = arith.addf %453, %454 : vector<16x128xf32>
    %456 = math.tanh %455 : vector<16x128xf32>
    %457 = arith.mulf %452, %456 : vector<16x128xf32>
    %c1_239 = arith.constant 1 : index
    %c0_240 = arith.constant 0 : index
    %c0_241 = arith.constant 0 : index
    %458 = vector.load %arg10[%c1_239, %c0_240, %c0_241] : memref<2x16x128xf32, #tpu.memory_space<vmem>>, vector<1x16x128xf32>
    %459 = vector.shape_cast %458 : vector<1x16x128xf32> to vector<16x128xf32>
    %460 = vector.shape_cast %457 : vector<16x128xf32> to vector<1x16x128xf32>
    tpu.vector_store %arg10[%c1_239, %c0_240, %c0_241], %460 {strides = array<i32>} : memref<2x16x128xf32, #tpu.memory_space<vmem>>, vector<1x16x128xf32>,
    %c1_242 = arith.constant 1 : index
    %c0_243 = arith.constant 0 : index
    %c0_244 = arith.constant 0 : index
    %461 = vector.load %arg11[%c1_242, %c0_243, %c0_244] : memref<2x16x128xf32, #tpu.memory_space<vmem>>, vector<1x16x128xf32>
    %462 = vector.shape_cast %461 : vector<1x16x128xf32> to vector<16x128xf32>
    %463 = vector.shape_cast %455 : vector<16x128xf32> to vector<1x16x128xf32>
    tpu.vector_store %arg11[%c1_242, %c0_243, %c0_244], %463 {strides = array<i32>} : memref<2x16x128xf32, #tpu.memory_space<vmem>>, vector<1x16x128xf32>,
    %c5_i32 = arith.constant 5 : i32
    %464 = arith.index_cast %c5_i32 : i32 to index
    %c0_245 = arith.constant 0 : index
    %c0_246 = arith.constant 0 : index
    %465 = vector.load %arg1[%464, %c0_245, %c0_246] : memref<8x16x128xbf16, #tpu.memory_space<vmem>>, vector<1x16x128xbf16>
    %466 = vector.shape_cast %465 : vector<1x16x128xbf16> to vector<16x128xbf16>
    %c0_247 = arith.constant 0 : index
    %c0_248 = arith.constant 0 : index
    %c0_249 = arith.constant 0 : index
    %467 = vector.load %arg10[%c0_247, %c0_248, %c0_249] : memref<2x16x128xf32, #tpu.memory_space<vmem>>, vector<1x16x128xf32>
    %468 = vector.shape_cast %467 : vector<1x16x128xf32> to vector<16x128xf32>
    %c0_250 = arith.constant 0 : index
    %c0_251 = arith.constant 0 : index
    %c0_252 = arith.constant 0 : index
    %469 = vector.load %arg11[%c0_250, %c0_251, %c0_252] : memref<2x16x128xf32, #tpu.memory_space<vmem>>, vector<1x16x128xf32>
    %470 = vector.shape_cast %469 : vector<1x16x128xf32> to vector<16x128xf32>
    %c0_253 = arith.constant 0 : index
    %c0_254 = arith.constant 0 : index
    %471 = vector.load %arg2[%c0_253, %c0_254] : memref<128x512xbf16, #tpu.memory_space<vmem>>, vector<128x512xbf16>
    %cst_255 = arith.constant dense<0.000000e+00> : vector<16x512xf32>
    %472 = tpu.matmul %466, %471, %cst_255 {dimension_numbers = #tpu.dot_dimension_numbers<[1], [0], [0], [1], [0, 0, 1, 1], [], []>} : vector<16x128xbf16>, vector<128x512xbf16>, vector<16x512xf32> -> vector<16x512xf32>
    %473 = arith.truncf %468 : vector<16x128xf32> to vector<16x128xbf16>
    %c0_256 = arith.constant 0 : index
    %c0_257 = arith.constant 0 : index
    %474 = vector.load %arg3[%c0_256, %c0_257] : memref<128x512xbf16, #tpu.memory_space<vmem>>, vector<128x512xbf16>
    %cst_258 = arith.constant dense<0.000000e+00> : vector<16x512xf32>
    %475 = tpu.matmul %473, %474, %cst_258 {dimension_numbers = #tpu.dot_dimension_numbers<[1], [0], [0], [1], [0, 0, 1, 1], [], []>} : vector<16x128xbf16>, vector<128x512xbf16>, vector<16x512xf32> -> vector<16x512xf32>
    %476 = arith.addf %472, %475 : vector<16x512xf32>
    %c0_259 = arith.constant 0 : index
    %c0_260 = arith.constant 0 : index
    %477 = vector.load %arg4[%c0_259, %c0_260] : memref<1x512xf32, #tpu.memory_space<vmem>>, vector<1x512xf32>
    %478 = vector.broadcast %477 : vector<1x512xf32> to vector<16x512xf32>
    %479 = arith.addf %476, %478 : vector<16x512xf32>
    %480 = vector.extract_strided_slice %479 {offsets = [0, 0], sizes = [16, 128], strides = [1, 1]} : vector<16x512xf32> to vector<16x128xf32>
    %481 = arith.negf %480 : vector<16x128xf32>
    %482 = math.exp %481 : vector<16x128xf32>
    %cst_261 = arith.constant 1.000000e+00 : f32
    %483 = vector.broadcast %cst_261 : f32 to vector<16x128xf32>
    %484 = arith.addf %483, %482 : vector<16x128xf32>
    %485 = arith.divf %483, %484 : vector<16x128xf32>
    %486 = vector.extract_strided_slice %479 {offsets = [0, 128], sizes = [16, 128], strides = [1, 1]} : vector<16x512xf32> to vector<16x128xf32>
    %487 = arith.negf %486 : vector<16x128xf32>
    %488 = math.exp %487 : vector<16x128xf32>
    %cst_262 = arith.constant 1.000000e+00 : f32
    %489 = vector.broadcast %cst_262 : f32 to vector<16x128xf32>
    %490 = arith.addf %489, %488 : vector<16x128xf32>
    %491 = arith.divf %489, %490 : vector<16x128xf32>
    %492 = vector.extract_strided_slice %479 {offsets = [0, 256], sizes = [16, 128], strides = [1, 1]} : vector<16x512xf32> to vector<16x128xf32>
    %493 = math.tanh %492 : vector<16x128xf32>
    %494 = vector.extract_strided_slice %479 {offsets = [0, 384], sizes = [16, 128], strides = [1, 1]} : vector<16x512xf32> to vector<16x128xf32>
    %495 = arith.negf %494 : vector<16x128xf32>
    %496 = math.exp %495 : vector<16x128xf32>
    %cst_263 = arith.constant 1.000000e+00 : f32
    %497 = vector.broadcast %cst_263 : f32 to vector<16x128xf32>
    %498 = arith.addf %497, %496 : vector<16x128xf32>
    %499 = arith.divf %497, %498 : vector<16x128xf32>
    %500 = arith.mulf %491, %470 : vector<16x128xf32>
    %501 = arith.mulf %485, %493 : vector<16x128xf32>
    %502 = arith.addf %500, %501 : vector<16x128xf32>
    %503 = math.tanh %502 : vector<16x128xf32>
    %504 = arith.mulf %499, %503 : vector<16x128xf32>
    %c0_264 = arith.constant 0 : index
    %c0_265 = arith.constant 0 : index
    %c0_266 = arith.constant 0 : index
    %505 = vector.load %arg10[%c0_264, %c0_265, %c0_266] : memref<2x16x128xf32, #tpu.memory_space<vmem>>, vector<1x16x128xf32>
    %506 = vector.shape_cast %505 : vector<1x16x128xf32> to vector<16x128xf32>
    %507 = vector.shape_cast %504 : vector<16x128xf32> to vector<1x16x128xf32>
    tpu.vector_store %arg10[%c0_264, %c0_265, %c0_266], %507 {strides = array<i32>} : memref<2x16x128xf32, #tpu.memory_space<vmem>>, vector<1x16x128xf32>,
    %c0_267 = arith.constant 0 : index
    %c0_268 = arith.constant 0 : index
    %c0_269 = arith.constant 0 : index
    %508 = vector.load %arg11[%c0_267, %c0_268, %c0_269] : memref<2x16x128xf32, #tpu.memory_space<vmem>>, vector<1x16x128xf32>
    %509 = vector.shape_cast %508 : vector<1x16x128xf32> to vector<16x128xf32>
    %510 = vector.shape_cast %502 : vector<16x128xf32> to vector<1x16x128xf32>
    tpu.vector_store %arg11[%c0_267, %c0_268, %c0_269], %510 {strides = array<i32>} : memref<2x16x128xf32, #tpu.memory_space<vmem>>, vector<1x16x128xf32>,
    %511 = arith.truncf %504 : vector<16x128xf32> to vector<16x128xbf16>
    %c1_270 = arith.constant 1 : index
    %c0_271 = arith.constant 0 : index
    %c0_272 = arith.constant 0 : index
    %512 = vector.load %arg10[%c1_270, %c0_271, %c0_272] : memref<2x16x128xf32, #tpu.memory_space<vmem>>, vector<1x16x128xf32>
    %513 = vector.shape_cast %512 : vector<1x16x128xf32> to vector<16x128xf32>
    %c1_273 = arith.constant 1 : index
    %c0_274 = arith.constant 0 : index
    %c0_275 = arith.constant 0 : index
    %514 = vector.load %arg11[%c1_273, %c0_274, %c0_275] : memref<2x16x128xf32, #tpu.memory_space<vmem>>, vector<1x16x128xf32>
    %515 = vector.shape_cast %514 : vector<1x16x128xf32> to vector<16x128xf32>
    %c0_276 = arith.constant 0 : index
    %c0_277 = arith.constant 0 : index
    %516 = vector.load %arg5[%c0_276, %c0_277] : memref<128x512xbf16, #tpu.memory_space<vmem>>, vector<128x512xbf16>
    %cst_278 = arith.constant dense<0.000000e+00> : vector<16x512xf32>
    %517 = tpu.matmul %511, %516, %cst_278 {dimension_numbers = #tpu.dot_dimension_numbers<[1], [0], [0], [1], [0, 0, 1, 1], [], []>} : vector<16x128xbf16>, vector<128x512xbf16>, vector<16x512xf32> -> vector<16x512xf32>
    %518 = arith.truncf %513 : vector<16x128xf32> to vector<16x128xbf16>
    %c0_279 = arith.constant 0 : index
    %c0_280 = arith.constant 0 : index
    %519 = vector.load %arg6[%c0_279, %c0_280] : memref<128x512xbf16, #tpu.memory_space<vmem>>, vector<128x512xbf16>
    %cst_281 = arith.constant dense<0.000000e+00> : vector<16x512xf32>
    %520 = tpu.matmul %518, %519, %cst_281 {dimension_numbers = #tpu.dot_dimension_numbers<[1], [0], [0], [1], [0, 0, 1, 1], [], []>} : vector<16x128xbf16>, vector<128x512xbf16>, vector<16x512xf32> -> vector<16x512xf32>
    %521 = arith.addf %517, %520 : vector<16x512xf32>
    %c0_282 = arith.constant 0 : index
    %c0_283 = arith.constant 0 : index
    %522 = vector.load %arg7[%c0_282, %c0_283] : memref<1x512xf32, #tpu.memory_space<vmem>>, vector<1x512xf32>
    %523 = vector.broadcast %522 : vector<1x512xf32> to vector<16x512xf32>
    %524 = arith.addf %521, %523 : vector<16x512xf32>
    %525 = vector.extract_strided_slice %524 {offsets = [0, 0], sizes = [16, 128], strides = [1, 1]} : vector<16x512xf32> to vector<16x128xf32>
    %526 = arith.negf %525 : vector<16x128xf32>
    %527 = math.exp %526 : vector<16x128xf32>
    %cst_284 = arith.constant 1.000000e+00 : f32
    %528 = vector.broadcast %cst_284 : f32 to vector<16x128xf32>
    %529 = arith.addf %528, %527 : vector<16x128xf32>
    %530 = arith.divf %528, %529 : vector<16x128xf32>
    %531 = vector.extract_strided_slice %524 {offsets = [0, 128], sizes = [16, 128], strides = [1, 1]} : vector<16x512xf32> to vector<16x128xf32>
    %532 = arith.negf %531 : vector<16x128xf32>
    %533 = math.exp %532 : vector<16x128xf32>
    %cst_285 = arith.constant 1.000000e+00 : f32
    %534 = vector.broadcast %cst_285 : f32 to vector<16x128xf32>
    %535 = arith.addf %534, %533 : vector<16x128xf32>
    %536 = arith.divf %534, %535 : vector<16x128xf32>
    %537 = vector.extract_strided_slice %524 {offsets = [0, 256], sizes = [16, 128], strides = [1, 1]} : vector<16x512xf32> to vector<16x128xf32>
    %538 = math.tanh %537 : vector<16x128xf32>
    %539 = vector.extract_strided_slice %524 {offsets = [0, 384], sizes = [16, 128], strides = [1, 1]} : vector<16x512xf32> to vector<16x128xf32>
    %540 = arith.negf %539 : vector<16x128xf32>
    %541 = math.exp %540 : vector<16x128xf32>
    %cst_286 = arith.constant 1.000000e+00 : f32
    %542 = vector.broadcast %cst_286 : f32 to vector<16x128xf32>
    %543 = arith.addf %542, %541 : vector<16x128xf32>
    %544 = arith.divf %542, %543 : vector<16x128xf32>
    %545 = arith.mulf %536, %515 : vector<16x128xf32>
    %546 = arith.mulf %530, %538 : vector<16x128xf32>
    %547 = arith.addf %545, %546 : vector<16x128xf32>
    %548 = math.tanh %547 : vector<16x128xf32>
    %549 = arith.mulf %544, %548 : vector<16x128xf32>
    %c1_287 = arith.constant 1 : index
    %c0_288 = arith.constant 0 : index
    %c0_289 = arith.constant 0 : index
    %550 = vector.load %arg10[%c1_287, %c0_288, %c0_289] : memref<2x16x128xf32, #tpu.memory_space<vmem>>, vector<1x16x128xf32>
    %551 = vector.shape_cast %550 : vector<1x16x128xf32> to vector<16x128xf32>
    %552 = vector.shape_cast %549 : vector<16x128xf32> to vector<1x16x128xf32>
    tpu.vector_store %arg10[%c1_287, %c0_288, %c0_289], %552 {strides = array<i32>} : memref<2x16x128xf32, #tpu.memory_space<vmem>>, vector<1x16x128xf32>,
    %c1_290 = arith.constant 1 : index
    %c0_291 = arith.constant 0 : index
    %c0_292 = arith.constant 0 : index
    %553 = vector.load %arg11[%c1_290, %c0_291, %c0_292] : memref<2x16x128xf32, #tpu.memory_space<vmem>>, vector<1x16x128xf32>
    %554 = vector.shape_cast %553 : vector<1x16x128xf32> to vector<16x128xf32>
    %555 = vector.shape_cast %547 : vector<16x128xf32> to vector<1x16x128xf32>
    tpu.vector_store %arg11[%c1_290, %c0_291, %c0_292], %555 {strides = array<i32>} : memref<2x16x128xf32, #tpu.memory_space<vmem>>, vector<1x16x128xf32>,
    %c6_i32 = arith.constant 6 : i32
    %556 = arith.index_cast %c6_i32 : i32 to index
    %c0_293 = arith.constant 0 : index
    %c0_294 = arith.constant 0 : index
    %557 = vector.load %arg1[%556, %c0_293, %c0_294] : memref<8x16x128xbf16, #tpu.memory_space<vmem>>, vector<1x16x128xbf16>
    %558 = vector.shape_cast %557 : vector<1x16x128xbf16> to vector<16x128xbf16>
    %c0_295 = arith.constant 0 : index
    %c0_296 = arith.constant 0 : index
    %c0_297 = arith.constant 0 : index
    %559 = vector.load %arg10[%c0_295, %c0_296, %c0_297] : memref<2x16x128xf32, #tpu.memory_space<vmem>>, vector<1x16x128xf32>
    %560 = vector.shape_cast %559 : vector<1x16x128xf32> to vector<16x128xf32>
    %c0_298 = arith.constant 0 : index
    %c0_299 = arith.constant 0 : index
    %c0_300 = arith.constant 0 : index
    %561 = vector.load %arg11[%c0_298, %c0_299, %c0_300] : memref<2x16x128xf32, #tpu.memory_space<vmem>>, vector<1x16x128xf32>
    %562 = vector.shape_cast %561 : vector<1x16x128xf32> to vector<16x128xf32>
    %c0_301 = arith.constant 0 : index
    %c0_302 = arith.constant 0 : index
    %563 = vector.load %arg2[%c0_301, %c0_302] : memref<128x512xbf16, #tpu.memory_space<vmem>>, vector<128x512xbf16>
    %cst_303 = arith.constant dense<0.000000e+00> : vector<16x512xf32>
    %564 = tpu.matmul %558, %563, %cst_303 {dimension_numbers = #tpu.dot_dimension_numbers<[1], [0], [0], [1], [0, 0, 1, 1], [], []>} : vector<16x128xbf16>, vector<128x512xbf16>, vector<16x512xf32> -> vector<16x512xf32>
    %565 = arith.truncf %560 : vector<16x128xf32> to vector<16x128xbf16>
    %c0_304 = arith.constant 0 : index
    %c0_305 = arith.constant 0 : index
    %566 = vector.load %arg3[%c0_304, %c0_305] : memref<128x512xbf16, #tpu.memory_space<vmem>>, vector<128x512xbf16>
    %cst_306 = arith.constant dense<0.000000e+00> : vector<16x512xf32>
    %567 = tpu.matmul %565, %566, %cst_306 {dimension_numbers = #tpu.dot_dimension_numbers<[1], [0], [0], [1], [0, 0, 1, 1], [], []>} : vector<16x128xbf16>, vector<128x512xbf16>, vector<16x512xf32> -> vector<16x512xf32>
    %568 = arith.addf %564, %567 : vector<16x512xf32>
    %c0_307 = arith.constant 0 : index
    %c0_308 = arith.constant 0 : index
    %569 = vector.load %arg4[%c0_307, %c0_308] : memref<1x512xf32, #tpu.memory_space<vmem>>, vector<1x512xf32>
    %570 = vector.broadcast %569 : vector<1x512xf32> to vector<16x512xf32>
    %571 = arith.addf %568, %570 : vector<16x512xf32>
    %572 = vector.extract_strided_slice %571 {offsets = [0, 0], sizes = [16, 128], strides = [1, 1]} : vector<16x512xf32> to vector<16x128xf32>
    %573 = arith.negf %572 : vector<16x128xf32>
    %574 = math.exp %573 : vector<16x128xf32>
    %cst_309 = arith.constant 1.000000e+00 : f32
    %575 = vector.broadcast %cst_309 : f32 to vector<16x128xf32>
    %576 = arith.addf %575, %574 : vector<16x128xf32>
    %577 = arith.divf %575, %576 : vector<16x128xf32>
    %578 = vector.extract_strided_slice %571 {offsets = [0, 128], sizes = [16, 128], strides = [1, 1]} : vector<16x512xf32> to vector<16x128xf32>
    %579 = arith.negf %578 : vector<16x128xf32>
    %580 = math.exp %579 : vector<16x128xf32>
    %cst_310 = arith.constant 1.000000e+00 : f32
    %581 = vector.broadcast %cst_310 : f32 to vector<16x128xf32>
    %582 = arith.addf %581, %580 : vector<16x128xf32>
    %583 = arith.divf %581, %582 : vector<16x128xf32>
    %584 = vector.extract_strided_slice %571 {offsets = [0, 256], sizes = [16, 128], strides = [1, 1]} : vector<16x512xf32> to vector<16x128xf32>
    %585 = math.tanh %584 : vector<16x128xf32>
    %586 = vector.extract_strided_slice %571 {offsets = [0, 384], sizes = [16, 128], strides = [1, 1]} : vector<16x512xf32> to vector<16x128xf32>
    %587 = arith.negf %586 : vector<16x128xf32>
    %588 = math.exp %587 : vector<16x128xf32>
    %cst_311 = arith.constant 1.000000e+00 : f32
    %589 = vector.broadcast %cst_311 : f32 to vector<16x128xf32>
    %590 = arith.addf %589, %588 : vector<16x128xf32>
    %591 = arith.divf %589, %590 : vector<16x128xf32>
    %592 = arith.mulf %583, %562 : vector<16x128xf32>
    %593 = arith.mulf %577, %585 : vector<16x128xf32>
    %594 = arith.addf %592, %593 : vector<16x128xf32>
    %595 = math.tanh %594 : vector<16x128xf32>
    %596 = arith.mulf %591, %595 : vector<16x128xf32>
    %c0_312 = arith.constant 0 : index
    %c0_313 = arith.constant 0 : index
    %c0_314 = arith.constant 0 : index
    %597 = vector.load %arg10[%c0_312, %c0_313, %c0_314] : memref<2x16x128xf32, #tpu.memory_space<vmem>>, vector<1x16x128xf32>
    %598 = vector.shape_cast %597 : vector<1x16x128xf32> to vector<16x128xf32>
    %599 = vector.shape_cast %596 : vector<16x128xf32> to vector<1x16x128xf32>
    tpu.vector_store %arg10[%c0_312, %c0_313, %c0_314], %599 {strides = array<i32>} : memref<2x16x128xf32, #tpu.memory_space<vmem>>, vector<1x16x128xf32>,
    %c0_315 = arith.constant 0 : index
    %c0_316 = arith.constant 0 : index
    %c0_317 = arith.constant 0 : index
    %600 = vector.load %arg11[%c0_315, %c0_316, %c0_317] : memref<2x16x128xf32, #tpu.memory_space<vmem>>, vector<1x16x128xf32>
    %601 = vector.shape_cast %600 : vector<1x16x128xf32> to vector<16x128xf32>
    %602 = vector.shape_cast %594 : vector<16x128xf32> to vector<1x16x128xf32>
    tpu.vector_store %arg11[%c0_315, %c0_316, %c0_317], %602 {strides = array<i32>} : memref<2x16x128xf32, #tpu.memory_space<vmem>>, vector<1x16x128xf32>,
    %603 = arith.truncf %596 : vector<16x128xf32> to vector<16x128xbf16>
    %c1_318 = arith.constant 1 : index
    %c0_319 = arith.constant 0 : index
    %c0_320 = arith.constant 0 : index
    %604 = vector.load %arg10[%c1_318, %c0_319, %c0_320] : memref<2x16x128xf32, #tpu.memory_space<vmem>>, vector<1x16x128xf32>
    %605 = vector.shape_cast %604 : vector<1x16x128xf32> to vector<16x128xf32>
    %c1_321 = arith.constant 1 : index
    %c0_322 = arith.constant 0 : index
    %c0_323 = arith.constant 0 : index
    %606 = vector.load %arg11[%c1_321, %c0_322, %c0_323] : memref<2x16x128xf32, #tpu.memory_space<vmem>>, vector<1x16x128xf32>
    %607 = vector.shape_cast %606 : vector<1x16x128xf32> to vector<16x128xf32>
    %c0_324 = arith.constant 0 : index
    %c0_325 = arith.constant 0 : index
    %608 = vector.load %arg5[%c0_324, %c0_325] : memref<128x512xbf16, #tpu.memory_space<vmem>>, vector<128x512xbf16>
    %cst_326 = arith.constant dense<0.000000e+00> : vector<16x512xf32>
    %609 = tpu.matmul %603, %608, %cst_326 {dimension_numbers = #tpu.dot_dimension_numbers<[1], [0], [0], [1], [0, 0, 1, 1], [], []>} : vector<16x128xbf16>, vector<128x512xbf16>, vector<16x512xf32> -> vector<16x512xf32>
    %610 = arith.truncf %605 : vector<16x128xf32> to vector<16x128xbf16>
    %c0_327 = arith.constant 0 : index
    %c0_328 = arith.constant 0 : index
    %611 = vector.load %arg6[%c0_327, %c0_328] : memref<128x512xbf16, #tpu.memory_space<vmem>>, vector<128x512xbf16>
    %cst_329 = arith.constant dense<0.000000e+00> : vector<16x512xf32>
    %612 = tpu.matmul %610, %611, %cst_329 {dimension_numbers = #tpu.dot_dimension_numbers<[1], [0], [0], [1], [0, 0, 1, 1], [], []>} : vector<16x128xbf16>, vector<128x512xbf16>, vector<16x512xf32> -> vector<16x512xf32>
    %613 = arith.addf %609, %612 : vector<16x512xf32>
    %c0_330 = arith.constant 0 : index
    %c0_331 = arith.constant 0 : index
    %614 = vector.load %arg7[%c0_330, %c0_331] : memref<1x512xf32, #tpu.memory_space<vmem>>, vector<1x512xf32>
    %615 = vector.broadcast %614 : vector<1x512xf32> to vector<16x512xf32>
    %616 = arith.addf %613, %615 : vector<16x512xf32>
    %617 = vector.extract_strided_slice %616 {offsets = [0, 0], sizes = [16, 128], strides = [1, 1]} : vector<16x512xf32> to vector<16x128xf32>
    %618 = arith.negf %617 : vector<16x128xf32>
    %619 = math.exp %618 : vector<16x128xf32>
    %cst_332 = arith.constant 1.000000e+00 : f32
    %620 = vector.broadcast %cst_332 : f32 to vector<16x128xf32>
    %621 = arith.addf %620, %619 : vector<16x128xf32>
    %622 = arith.divf %620, %621 : vector<16x128xf32>
    %623 = vector.extract_strided_slice %616 {offsets = [0, 128], sizes = [16, 128], strides = [1, 1]} : vector<16x512xf32> to vector<16x128xf32>
    %624 = arith.negf %623 : vector<16x128xf32>
    %625 = math.exp %624 : vector<16x128xf32>
    %cst_333 = arith.constant 1.000000e+00 : f32
    %626 = vector.broadcast %cst_333 : f32 to vector<16x128xf32>
    %627 = arith.addf %626, %625 : vector<16x128xf32>
    %628 = arith.divf %626, %627 : vector<16x128xf32>
    %629 = vector.extract_strided_slice %616 {offsets = [0, 256], sizes = [16, 128], strides = [1, 1]} : vector<16x512xf32> to vector<16x128xf32>
    %630 = math.tanh %629 : vector<16x128xf32>
    %631 = vector.extract_strided_slice %616 {offsets = [0, 384], sizes = [16, 128], strides = [1, 1]} : vector<16x512xf32> to vector<16x128xf32>
    %632 = arith.negf %631 : vector<16x128xf32>
    %633 = math.exp %632 : vector<16x128xf32>
    %cst_334 = arith.constant 1.000000e+00 : f32
    %634 = vector.broadcast %cst_334 : f32 to vector<16x128xf32>
    %635 = arith.addf %634, %633 : vector<16x128xf32>
    %636 = arith.divf %634, %635 : vector<16x128xf32>
    %637 = arith.mulf %628, %607 : vector<16x128xf32>
    %638 = arith.mulf %622, %630 : vector<16x128xf32>
    %639 = arith.addf %637, %638 : vector<16x128xf32>
    %640 = math.tanh %639 : vector<16x128xf32>
    %641 = arith.mulf %636, %640 : vector<16x128xf32>
    %c1_335 = arith.constant 1 : index
    %c0_336 = arith.constant 0 : index
    %c0_337 = arith.constant 0 : index
    %642 = vector.load %arg10[%c1_335, %c0_336, %c0_337] : memref<2x16x128xf32, #tpu.memory_space<vmem>>, vector<1x16x128xf32>
    %643 = vector.shape_cast %642 : vector<1x16x128xf32> to vector<16x128xf32>
    %644 = vector.shape_cast %641 : vector<16x128xf32> to vector<1x16x128xf32>
    tpu.vector_store %arg10[%c1_335, %c0_336, %c0_337], %644 {strides = array<i32>} : memref<2x16x128xf32, #tpu.memory_space<vmem>>, vector<1x16x128xf32>,
    %c1_338 = arith.constant 1 : index
    %c0_339 = arith.constant 0 : index
    %c0_340 = arith.constant 0 : index
    %645 = vector.load %arg11[%c1_338, %c0_339, %c0_340] : memref<2x16x128xf32, #tpu.memory_space<vmem>>, vector<1x16x128xf32>
    %646 = vector.shape_cast %645 : vector<1x16x128xf32> to vector<16x128xf32>
    %647 = vector.shape_cast %639 : vector<16x128xf32> to vector<1x16x128xf32>
    tpu.vector_store %arg11[%c1_338, %c0_339, %c0_340], %647 {strides = array<i32>} : memref<2x16x128xf32, #tpu.memory_space<vmem>>, vector<1x16x128xf32>,
    %c7_i32 = arith.constant 7 : i32
    %648 = arith.index_cast %c7_i32 : i32 to index
    %c0_341 = arith.constant 0 : index
    %c0_342 = arith.constant 0 : index
    %649 = vector.load %arg1[%648, %c0_341, %c0_342] : memref<8x16x128xbf16, #tpu.memory_space<vmem>>, vector<1x16x128xbf16>
    %650 = vector.shape_cast %649 : vector<1x16x128xbf16> to vector<16x128xbf16>
    %c0_343 = arith.constant 0 : index
    %c0_344 = arith.constant 0 : index
    %c0_345 = arith.constant 0 : index
    %651 = vector.load %arg10[%c0_343, %c0_344, %c0_345] : memref<2x16x128xf32, #tpu.memory_space<vmem>>, vector<1x16x128xf32>
    %652 = vector.shape_cast %651 : vector<1x16x128xf32> to vector<16x128xf32>
    %c0_346 = arith.constant 0 : index
    %c0_347 = arith.constant 0 : index
    %c0_348 = arith.constant 0 : index
    %653 = vector.load %arg11[%c0_346, %c0_347, %c0_348] : memref<2x16x128xf32, #tpu.memory_space<vmem>>, vector<1x16x128xf32>
    %654 = vector.shape_cast %653 : vector<1x16x128xf32> to vector<16x128xf32>
    %c0_349 = arith.constant 0 : index
    %c0_350 = arith.constant 0 : index
    %655 = vector.load %arg2[%c0_349, %c0_350] : memref<128x512xbf16, #tpu.memory_space<vmem>>, vector<128x512xbf16>
    %cst_351 = arith.constant dense<0.000000e+00> : vector<16x512xf32>
    %656 = tpu.matmul %650, %655, %cst_351 {dimension_numbers = #tpu.dot_dimension_numbers<[1], [0], [0], [1], [0, 0, 1, 1], [], []>} : vector<16x128xbf16>, vector<128x512xbf16>, vector<16x512xf32> -> vector<16x512xf32>
    %657 = arith.truncf %652 : vector<16x128xf32> to vector<16x128xbf16>
    %c0_352 = arith.constant 0 : index
    %c0_353 = arith.constant 0 : index
    %658 = vector.load %arg3[%c0_352, %c0_353] : memref<128x512xbf16, #tpu.memory_space<vmem>>, vector<128x512xbf16>
    %cst_354 = arith.constant dense<0.000000e+00> : vector<16x512xf32>
    %659 = tpu.matmul %657, %658, %cst_354 {dimension_numbers = #tpu.dot_dimension_numbers<[1], [0], [0], [1], [0, 0, 1, 1], [], []>} : vector<16x128xbf16>, vector<128x512xbf16>, vector<16x512xf32> -> vector<16x512xf32>
    %660 = arith.addf %656, %659 : vector<16x512xf32>
    %c0_355 = arith.constant 0 : index
    %c0_356 = arith.constant 0 : index
    %661 = vector.load %arg4[%c0_355, %c0_356] : memref<1x512xf32, #tpu.memory_space<vmem>>, vector<1x512xf32>
    %662 = vector.broadcast %661 : vector<1x512xf32> to vector<16x512xf32>
    %663 = arith.addf %660, %662 : vector<16x512xf32>
    %664 = vector.extract_strided_slice %663 {offsets = [0, 0], sizes = [16, 128], strides = [1, 1]} : vector<16x512xf32> to vector<16x128xf32>
    %665 = arith.negf %664 : vector<16x128xf32>
    %666 = math.exp %665 : vector<16x128xf32>
    %cst_357 = arith.constant 1.000000e+00 : f32
    %667 = vector.broadcast %cst_357 : f32 to vector<16x128xf32>
    %668 = arith.addf %667, %666 : vector<16x128xf32>
    %669 = arith.divf %667, %668 : vector<16x128xf32>
    %670 = vector.extract_strided_slice %663 {offsets = [0, 128], sizes = [16, 128], strides = [1, 1]} : vector<16x512xf32> to vector<16x128xf32>
    %671 = arith.negf %670 : vector<16x128xf32>
    %672 = math.exp %671 : vector<16x128xf32>
    %cst_358 = arith.constant 1.000000e+00 : f32
    %673 = vector.broadcast %cst_358 : f32 to vector<16x128xf32>
    %674 = arith.addf %673, %672 : vector<16x128xf32>
    %675 = arith.divf %673, %674 : vector<16x128xf32>
    %676 = vector.extract_strided_slice %663 {offsets = [0, 256], sizes = [16, 128], strides = [1, 1]} : vector<16x512xf32> to vector<16x128xf32>
    %677 = math.tanh %676 : vector<16x128xf32>
    %678 = vector.extract_strided_slice %663 {offsets = [0, 384], sizes = [16, 128], strides = [1, 1]} : vector<16x512xf32> to vector<16x128xf32>
    %679 = arith.negf %678 : vector<16x128xf32>
    %680 = math.exp %679 : vector<16x128xf32>
    %cst_359 = arith.constant 1.000000e+00 : f32
    %681 = vector.broadcast %cst_359 : f32 to vector<16x128xf32>
    %682 = arith.addf %681, %680 : vector<16x128xf32>
    %683 = arith.divf %681, %682 : vector<16x128xf32>
    %684 = arith.mulf %675, %654 : vector<16x128xf32>
    %685 = arith.mulf %669, %677 : vector<16x128xf32>
    %686 = arith.addf %684, %685 : vector<16x128xf32>
    %687 = math.tanh %686 : vector<16x128xf32>
    %688 = arith.mulf %683, %687 : vector<16x128xf32>
    %c0_360 = arith.constant 0 : index
    %c0_361 = arith.constant 0 : index
    %c0_362 = arith.constant 0 : index
    %689 = vector.load %arg10[%c0_360, %c0_361, %c0_362] : memref<2x16x128xf32, #tpu.memory_space<vmem>>, vector<1x16x128xf32>
    %690 = vector.shape_cast %689 : vector<1x16x128xf32> to vector<16x128xf32>
    %691 = vector.shape_cast %688 : vector<16x128xf32> to vector<1x16x128xf32>
    tpu.vector_store %arg10[%c0_360, %c0_361, %c0_362], %691 {strides = array<i32>} : memref<2x16x128xf32, #tpu.memory_space<vmem>>, vector<1x16x128xf32>,
    %c0_363 = arith.constant 0 : index
    %c0_364 = arith.constant 0 : index
    %c0_365 = arith.constant 0 : index
    %692 = vector.load %arg11[%c0_363, %c0_364, %c0_365] : memref<2x16x128xf32, #tpu.memory_space<vmem>>, vector<1x16x128xf32>
    %693 = vector.shape_cast %692 : vector<1x16x128xf32> to vector<16x128xf32>
    %694 = vector.shape_cast %686 : vector<16x128xf32> to vector<1x16x128xf32>
    tpu.vector_store %arg11[%c0_363, %c0_364, %c0_365], %694 {strides = array<i32>} : memref<2x16x128xf32, #tpu.memory_space<vmem>>, vector<1x16x128xf32>,
    %695 = arith.truncf %688 : vector<16x128xf32> to vector<16x128xbf16>
    %c1_366 = arith.constant 1 : index
    %c0_367 = arith.constant 0 : index
    %c0_368 = arith.constant 0 : index
    %696 = vector.load %arg10[%c1_366, %c0_367, %c0_368] : memref<2x16x128xf32, #tpu.memory_space<vmem>>, vector<1x16x128xf32>
    %697 = vector.shape_cast %696 : vector<1x16x128xf32> to vector<16x128xf32>
    %c1_369 = arith.constant 1 : index
    %c0_370 = arith.constant 0 : index
    %c0_371 = arith.constant 0 : index
    %698 = vector.load %arg11[%c1_369, %c0_370, %c0_371] : memref<2x16x128xf32, #tpu.memory_space<vmem>>, vector<1x16x128xf32>
    %699 = vector.shape_cast %698 : vector<1x16x128xf32> to vector<16x128xf32>
    %c0_372 = arith.constant 0 : index
    %c0_373 = arith.constant 0 : index
    %700 = vector.load %arg5[%c0_372, %c0_373] : memref<128x512xbf16, #tpu.memory_space<vmem>>, vector<128x512xbf16>
    %cst_374 = arith.constant dense<0.000000e+00> : vector<16x512xf32>
    %701 = tpu.matmul %695, %700, %cst_374 {dimension_numbers = #tpu.dot_dimension_numbers<[1], [0], [0], [1], [0, 0, 1, 1], [], []>} : vector<16x128xbf16>, vector<128x512xbf16>, vector<16x512xf32> -> vector<16x512xf32>
    %702 = arith.truncf %697 : vector<16x128xf32> to vector<16x128xbf16>
    %c0_375 = arith.constant 0 : index
    %c0_376 = arith.constant 0 : index
    %703 = vector.load %arg6[%c0_375, %c0_376] : memref<128x512xbf16, #tpu.memory_space<vmem>>, vector<128x512xbf16>
    %cst_377 = arith.constant dense<0.000000e+00> : vector<16x512xf32>
    %704 = tpu.matmul %702, %703, %cst_377 {dimension_numbers = #tpu.dot_dimension_numbers<[1], [0], [0], [1], [0, 0, 1, 1], [], []>} : vector<16x128xbf16>, vector<128x512xbf16>, vector<16x512xf32> -> vector<16x512xf32>
    %705 = arith.addf %701, %704 : vector<16x512xf32>
    %c0_378 = arith.constant 0 : index
    %c0_379 = arith.constant 0 : index
    %706 = vector.load %arg7[%c0_378, %c0_379] : memref<1x512xf32, #tpu.memory_space<vmem>>, vector<1x512xf32>
    %707 = vector.broadcast %706 : vector<1x512xf32> to vector<16x512xf32>
    %708 = arith.addf %705, %707 : vector<16x512xf32>
    %709 = vector.extract_strided_slice %708 {offsets = [0, 0], sizes = [16, 128], strides = [1, 1]} : vector<16x512xf32> to vector<16x128xf32>
    %710 = arith.negf %709 : vector<16x128xf32>
    %711 = math.exp %710 : vector<16x128xf32>
    %cst_380 = arith.constant 1.000000e+00 : f32
    %712 = vector.broadcast %cst_380 : f32 to vector<16x128xf32>
    %713 = arith.addf %712, %711 : vector<16x128xf32>
    %714 = arith.divf %712, %713 : vector<16x128xf32>
    %715 = vector.extract_strided_slice %708 {offsets = [0, 128], sizes = [16, 128], strides = [1, 1]} : vector<16x512xf32> to vector<16x128xf32>
    %716 = arith.negf %715 : vector<16x128xf32>
    %717 = math.exp %716 : vector<16x128xf32>
    %cst_381 = arith.constant 1.000000e+00 : f32
    %718 = vector.broadcast %cst_381 : f32 to vector<16x128xf32>
    %719 = arith.addf %718, %717 : vector<16x128xf32>
    %720 = arith.divf %718, %719 : vector<16x128xf32>
    %721 = vector.extract_strided_slice %708 {offsets = [0, 256], sizes = [16, 128], strides = [1, 1]} : vector<16x512xf32> to vector<16x128xf32>
    %722 = math.tanh %721 : vector<16x128xf32>
    %723 = vector.extract_strided_slice %708 {offsets = [0, 384], sizes = [16, 128], strides = [1, 1]} : vector<16x512xf32> to vector<16x128xf32>
    %724 = arith.negf %723 : vector<16x128xf32>
    %725 = math.exp %724 : vector<16x128xf32>
    %cst_382 = arith.constant 1.000000e+00 : f32
    %726 = vector.broadcast %cst_382 : f32 to vector<16x128xf32>
    %727 = arith.addf %726, %725 : vector<16x128xf32>
    %728 = arith.divf %726, %727 : vector<16x128xf32>
    %729 = arith.mulf %720, %699 : vector<16x128xf32>
    %730 = arith.mulf %714, %722 : vector<16x128xf32>
    %731 = arith.addf %729, %730 : vector<16x128xf32>
    %732 = math.tanh %731 : vector<16x128xf32>
    %733 = arith.mulf %728, %732 : vector<16x128xf32>
    %c1_383 = arith.constant 1 : index
    %c0_384 = arith.constant 0 : index
    %c0_385 = arith.constant 0 : index
    %734 = vector.load %arg10[%c1_383, %c0_384, %c0_385] : memref<2x16x128xf32, #tpu.memory_space<vmem>>, vector<1x16x128xf32>
    %735 = vector.shape_cast %734 : vector<1x16x128xf32> to vector<16x128xf32>
    %736 = vector.shape_cast %733 : vector<16x128xf32> to vector<1x16x128xf32>
    tpu.vector_store %arg10[%c1_383, %c0_384, %c0_385], %736 {strides = array<i32>} : memref<2x16x128xf32, #tpu.memory_space<vmem>>, vector<1x16x128xf32>,
    %c1_386 = arith.constant 1 : index
    %c0_387 = arith.constant 0 : index
    %c0_388 = arith.constant 0 : index
    %737 = vector.load %arg11[%c1_386, %c0_387, %c0_388] : memref<2x16x128xf32, #tpu.memory_space<vmem>>, vector<1x16x128xf32>
    %738 = vector.shape_cast %737 : vector<1x16x128xf32> to vector<16x128xf32>
    %739 = vector.shape_cast %731 : vector<16x128xf32> to vector<1x16x128xf32>
    tpu.vector_store %arg11[%c1_386, %c0_387, %c0_388], %739 {strides = array<i32>} : memref<2x16x128xf32, #tpu.memory_space<vmem>>, vector<1x16x128xf32>,
    %c8_i32 = arith.constant 8 : i32
    %c0_389 = arith.constant 0 : index
    %c0_390 = arith.constant 0 : index
    %c0_391 = arith.constant 0 : index
    %740 = vector.load %arg10[%c0_389, %c0_390, %c0_391] : memref<2x16x128xf32, #tpu.memory_space<vmem>>, vector<2x16x128xf32>
    %c0_392 = arith.constant 0 : index
    %c0_393 = arith.constant 0 : index
    %c0_394 = arith.constant 0 : index
    %741 = vector.load %arg8[%c0_392, %c0_393, %c0_394] : memref<2x16x128xf32, #tpu.memory_space<vmem>>, vector<2x16x128xf32>
    tpu.vector_store %arg8[%c0_392, %c0_393, %c0_394], %740 {strides = array<i32>} : memref<2x16x128xf32, #tpu.memory_space<vmem>>, vector<2x16x128xf32>,
    %c0_395 = arith.constant 0 : index
    %c0_396 = arith.constant 0 : index
    %c0_397 = arith.constant 0 : index
    %742 = vector.load %arg11[%c0_395, %c0_396, %c0_397] : memref<2x16x128xf32, #tpu.memory_space<vmem>>, vector<2x16x128xf32>
    %c0_398 = arith.constant 0 : index
    %c0_399 = arith.constant 0 : index
    %c0_400 = arith.constant 0 : index
    %743 = vector.load %arg9[%c0_398, %c0_399, %c0_400] : memref<2x16x128xf32, #tpu.memory_space<vmem>>, vector<2x16x128xf32>
    tpu.vector_store %arg9[%c0_398, %c0_399, %c0_400], %742 {strides = array<i32>} : memref<2x16x128xf32, #tpu.memory_space<vmem>>, vector<2x16x128xf32>,
    return
  }
  func.func @transform_0(%arg0: i32) -> (i32, i32, i32) {
    %c0_i32 = arith.constant 0 : i32
    %c0_i32_0 = arith.constant 0 : i32
    %c0_i32_1 = arith.constant 0 : i32
    %c0_i32_2 = arith.constant 0 : i32
    return %c0_i32, %c0_i32_0, %c0_i32_1 : i32, i32, i32
  }
  func.func @transform_1(%arg0: i32) -> (i32, i32) {
    %c0_i32 = arith.constant 0 : i32
    %c0_i32_0 = arith.constant 0 : i32
    %c0_i32_1 = arith.constant 0 : i32
    return %c0_i32, %c0_i32_0 : i32, i32
  }
  func.func @transform_2(%arg0: i32) -> (i32, i32) {
    %c0_i32 = arith.constant 0 : i32
    %c0_i32_0 = arith.constant 0 : i32
    %c0_i32_1 = arith.constant 0 : i32
    return %c0_i32, %c0_i32_0 : i32, i32
  }
  func.func @transform_3(%arg0: i32) -> (i32, i32) {
    %c0_i32 = arith.constant 0 : i32
    %c0_i32_0 = arith.constant 0 : i32
    %c0_i32_1 = arith.constant 0 : i32
    return %c0_i32, %c0_i32_0 : i32, i32
  }
  func.func @transform_4(%arg0: i32) -> (i32, i32) {
    %c0_i32 = arith.constant 0 : i32
    %c0_i32_0 = arith.constant 0 : i32
    %c0_i32_1 = arith.constant 0 : i32
    return %c0_i32, %c0_i32_0 : i32, i32
  }
  func.func @transform_5(%arg0: i32) -> (i32, i32) {
    %c0_i32 = arith.constant 0 : i32
    %c0_i32_0 = arith.constant 0 : i32
    %c0_i32_1 = arith.constant 0 : i32
    return %c0_i32, %c0_i32_0 : i32, i32
  }
  func.func @transform_6(%arg0: i32) -> (i32, i32) {
    %c0_i32 = arith.constant 0 : i32
    %c0_i32_0 = arith.constant 0 : i32
    %c0_i32_1 = arith.constant 0 : i32
    return %c0_i32, %c0_i32_0 : i32, i32
  }
  func.func @transform_7(%arg0: i32) -> (i32, i32, i32) {
    %c0_i32 = arith.constant 0 : i32
    %c0_i32_0 = arith.constant 0 : i32
    %c0_i32_1 = arith.constant 0 : i32
    %c0_i32_2 = arith.constant 0 : i32
    return %c0_i32, %c0_i32_0, %c0_i32_1 : i32, i32, i32
  }
  func.func @transform_8(%arg0: i32) -> (i32, i32, i32) {
    %c0_i32 = arith.constant 0 : i32
    %c0_i32_0 = arith.constant 0 : i32
    %c0_i32_1 = arith.constant 0 : i32
    %c0_i32_2 = arith.constant 0 : i32
    return %c0_i32, %c0_i32_0, %c0_i32_1 : i32, i32, i32
  }
}

</mosaic_0001>

<llo_original>
// kernel: tpu_custom_call.1
$region0: #{tpu_custom_call.1}
  #allocation0 [shape = 'u32[]', space=smem, size = 0x4, offset = 0x4, fixed_abs, tag = 'smem constant byte address 0x4 - core index']
  #allocation1 [shape = 'u32[144,128]{1,0:T(1,128)}', space=vmem, size = 0x12000, scoped, tag = 'internal scratch']
  #allocation2 [shape = 'f32[2,16,128]{2,1,0:T(8,128)}', space=vmem, size = 0x4000, scoped, tag = 'scratch operand']
  #allocation3 [shape = 'f32[2,16,128]{2,1,0:T(8,128)}', space=vmem, size = 0x4000, scoped, tag = 'scratch operand']
  %s0 = inlined_call_operand.hbm [shape: bf16[8,16,128], index: 0, kind: input, shape index: {}]
  %s1 = inlined_call_operand.hbm [shape: bf16[128,512], index: 1, kind: input, shape index: {}]
  %s2 = inlined_call_operand.hbm [shape: bf16[128,512], index: 2, kind: input, shape index: {}]
  %s3 = inlined_call_operand.vmem [shape: f32[1,512], index: 3, kind: input, shape index: {}]
  %s4 = inlined_call_operand.hbm [shape: bf16[128,512], index: 4, kind: input, shape index: {}]
  %s5 = inlined_call_operand.hbm [shape: bf16[128,512], index: 5, kind: input, shape index: {}]
  %s6 = inlined_call_operand.vmem [shape: f32[1,512], index: 6, kind: input, shape index: {}]
  %s7 = inlined_call_operand.hbm [shape: f32[2,16,128], index: 7, kind: output, shape index: {0}]
  %s8 = inlined_call_operand.hbm [shape: f32[2,16,128], index: 8, kind: output, shape index: {1}]
  %9 = xla_tuple %s7, %s8
  %s10 = sld [smem:[#allocation0]]
  $region66: #{tpu_custom_call.1} parent=0
    _
  %s12 = ssub.s32 1, %s10
  %s13 = scalar_select 0, %s12, %s10
  $region1: #{tpu_custom_call.1} parent=0
    #allocation4 [shape = 'u8[32768]{0}', space=vmem, size = 0x8000, scoped, tag = 'input window, operand 0, single buffered']
    #allocation5 [shape = 's32[1]{0}', space=sflag, size = 0x4, scoped, tag = 'scoped memory for tpu_custom_call.1']
    #allocation6 [shape = 's32[1]{0}', space=sflag, size = 0x4, scoped, tag = 'scoped memory for tpu_custom_call.1']
    #allocation7 [shape = 'u8[131072]{0}', space=vmem, size = 0x20000, scoped, tag = 'input window, operand 1, single buffered']
    #allocation8 [shape = 's32[1]{0}', space=sflag, size = 0x4, scoped, tag = 'scoped memory for tpu_custom_call.1']
    #allocation9 [shape = 'u8[131072]{0}', space=vmem, size = 0x20000, scoped, tag = 'input window, operand 2, single buffered']
    #allocation10 [shape = 'u8[131072]{0}', space=vmem, size = 0x20000, scoped, tag = 'input window, operand 4, single buffered']
    #allocation11 [shape = 's32[1]{0}', space=sflag, size = 0x4, scoped, tag = 'scoped memory for tpu_custom_call.1']
    #allocation12 [shape = 'u8[131072]{0}', space=vmem, size = 0x20000, scoped, tag = 'input window, operand 5, single buffered']
    #allocation13 [shape = 'u8[16384]{0}', space=vmem, size = 0x4000, scoped, tag = 'output window, operand 0, single buffered']
    #allocation14 [shape = 'u8[16384]{0}', space=vmem, size = 0x4000, scoped, tag = 'output window, operand 1, single buffered']
    #allocation15 [shape = 's32[1]{0}', space=sflag, size = 0x4, scoped, tag = 'scoped memory for tpu_custom_call.1']
    %14 = vsyncpa [#allocation5], 0
    %15 = vsyncpa [#allocation8], 0
    %16 = vsyncpa [#allocation11], 0
    %17 = vsyncpa [#allocation6], 0
    %18 = vsyncpa [#allocation15], 0
    // Predicated region
    $region2: #{tpu_custom_call.1} parent=1 // pred_check
      _
    $region3: #{tpu_custom_call.1} parent=1 // pred_check_branch
      %20 = sbr.rel (0) target = $region5
    $region4: #{tpu_custom_call.1} parent=1 // pred_region
      %s22 = ssub.s32 1024, 1024
      %23 = vsyncadd [#allocation5], %s22
      %s24 = sshll.u32 [#allocation4], 4
      %s25 = int_to_ptr.vmem [resolvable:$true] %s24
      %30 = dma.hbm_to_vmem [thread:$0]  %s0, 1024, %s25, [#allocation5], 64, 64, 4
    $region5: #{tpu_custom_call.1} parent=1 // pred_fallthru
      _
    // Predicated region
    $region6: #{tpu_custom_call.1} parent=1 // pred_check
      _
    $region7: #{tpu_custom_call.1} parent=1 // pred_check_branch
      %32 = sbr.rel (0) target = $region9
    $region8: #{tpu_custom_call.1} parent=1 // pred_region
      %s34 = ssub.s32 4096, 4096
      %35 = vsyncadd [#allocation8], %s34
      %s36 = sshll.u32 [#allocation7], 4
      %s37 = int_to_ptr.vmem [resolvable:$true] %s36
      %42 = dma.hbm_to_vmem [thread:$0]  %s1, 4096, %s37, [#allocation8], 256, 256, 16
    $region9: #{tpu_custom_call.1} parent=1 // pred_fallthru
      _
    // Predicated region
    $region10: #{tpu_custom_call.1} parent=1 // pred_check
      _
    $region11: #{tpu_custom_call.1} parent=1 // pred_check_branch
      %44 = sbr.rel (0) target = $region13
    $region12: #{tpu_custom_call.1} parent=1 // pred_region
      %s46 = ssub.s32 4096, 4096
      %47 = vsyncadd [#allocation8], %s46
      %s48 = sshll.u32 [#allocation9], 4
      %s49 = int_to_ptr.vmem [resolvable:$true] %s48
      %54 = dma.hbm_to_vmem [thread:$0]  %s2, 4096, %s49, [#allocation8], 256, 256, 16
    $region13: #{tpu_custom_call.1} parent=1 // pred_fallthru
      _
    // Predicated region
    $region14: #{tpu_custom_call.1} parent=1 // pred_check
      _
    $region15: #{tpu_custom_call.1} parent=1 // pred_check_branch
      %56 = sbr.rel (0) target = $region17
    $region16: #{tpu_custom_call.1} parent=1 // pred_region
      _
    $region17: #{tpu_custom_call.1} parent=1 // pred_fallthru
      _
    // Predicated region
    $region18: #{tpu_custom_call.1} parent=1 // pred_check
      _
    $region19: #{tpu_custom_call.1} parent=1 // pred_check_branch
      %58 = sbr.rel (0) target = $region21
    $region20: #{tpu_custom_call.1} parent=1 // pred_region
      %s60 = ssub.s32 4096, 4096
      %61 = vsyncadd [#allocation11], %s60
      %s62 = sshll.u32 [#allocation10], 4
      %s63 = int_to_ptr.vmem [resolvable:$true] %s62
      %68 = dma.hbm_to_vmem [thread:$0]  %s4, 4096, %s63, [#allocation11], 256, 256, 16
    $region21: #{tpu_custom_call.1} parent=1 // pred_fallthru
      _
    // Predicated region
    $region22: #{tpu_custom_call.1} parent=1 // pred_check
      _
    $region23: #{tpu_custom_call.1} parent=1 // pred_check_branch
      %70 = sbr.rel (0) target = $region25
    $region24: #{tpu_custom_call.1} parent=1 // pred_region
      %s72 = ssub.s32 4096, 4096
      %73 = vsyncadd [#allocation11], %s72
      %s74 = sshll.u32 [#allocation12], 4
      %s75 = int_to_ptr.vmem [resolvable:$true] %s74
      %80 = dma.hbm_to_vmem [thread:$0]  %s5, 4096, %s75, [#allocation11], 256, 256, 16
    $region25: #{tpu_custom_call.1} parent=1 // pred_fallthru
      _
    // Predicated region
    $region26: #{tpu_custom_call.1} parent=1 // pred_check
      _
    $region27: #{tpu_custom_call.1} parent=1 // pred_check_branch
      %82 = sbr.rel (0) target = $region29
    $region28: #{tpu_custom_call.1} parent=1 // pred_region
      _
    $region29: #{tpu_custom_call.1} parent=1 // pred_fallthru
      _
    // Predicated region
    $region30: #{tpu_custom_call.1} parent=1 // pred_check
      _
    $region31: #{tpu_custom_call.1} parent=1 // pred_check_branch
      %84 = sbr.rel (0) target = $region33
    $region32: #{tpu_custom_call.1} parent=1 // pred_region
      %85 = dma.done [#allocation5], 1024
    $region33: #{tpu_custom_call.1} parent=1 // pred_fallthru
      _
    // Predicated region
    $region34: #{tpu_custom_call.1} parent=1 // pred_check
      _
    $region35: #{tpu_custom_call.1} parent=1 // pred_check_branch
      %87 = sbr.rel (0) target = $region37
    $region36: #{tpu_custom_call.1} parent=1 // pred_region
      %88 = dma.done [#allocation8], 4096
    $region37: #{tpu_custom_call.1} parent=1 // pred_fallthru
      _
    // Predicated region
    $region38: #{tpu_custom_call.1} parent=1 // pred_check
      _
    $region39: #{tpu_custom_call.1} parent=1 // pred_check_branch
      %90 = sbr.rel (0) target = $region41
    $region40: #{tpu_custom_call.1} parent=1 // pred_region
      %91 = dma.done [#allocation8], 4096
    $region41: #{tpu_custom_call.1} parent=1 // pred_fallthru
      _
    // Predicated region
    $region42: #{tpu_custom_call.1} parent=1 // pred_check
      _
    $region43: #{tpu_custom_call.1} parent=1 // pred_check_branch
      %93 = sbr.rel (0) target = $region45
    $region44: #{tpu_custom_call.1} parent=1 // pred_region
      %94 = dma.done [#allocation11], 4096
    $region45: #{tpu_custom_call.1} parent=1 // pred_fallthru
      _
    // Predicated region
    $region46: #{tpu_custom_call.1} parent=1 // pred_check
      _
    $region47: #{tpu_custom_call.1} parent=1 // pred_check_branch
      %96 = sbr.rel (0) target = $region49
    $region48: #{tpu_custom_call.1} parent=1 // pred_region
      %97 = dma.done [#allocation11], 4096
    $region49: #{tpu_custom_call.1} parent=1 // pred_fallthru
      _
    %99 = vst [vmem:[#allocation2] sm:$0xff] 0.0
    %100 = vst [vmem:[#allocation2 + $0x8] sm:$0xff] 0.0
    %101 = vst [vmem:[#allocation2 + $0x10] sm:$0xff] 0.0
    %102 = vst [vmem:[#allocation2 + $0x18] sm:$0xff] 0.0
    %103 = vst [vmem:[#allocation3] sm:$0xff] 0.0
    %104 = vst [vmem:[#allocation3 + $0x8] sm:$0xff] 0.0
    %105 = vst [vmem:[#allocation3 + $0x10] sm:$0xff] 0.0
    %106 = vst [vmem:[#allocation3 + $0x18] sm:$0xff] 0.0
    %v107 = vld [vmem:[#allocation4] sm:$0xf]
    %v108 = vld [vmem:[#allocation4 + $0x4] sm:$0xf]
    %v109 = vld [vmem:[#allocation2] sm:$0xff]
    %v110 = vld [vmem:[#allocation2 + $0x8] sm:$0xff]
    %v111 = vld [vmem:[#allocation3] sm:$0xff]
    %v112 = vld [vmem:[#allocation3 + $0x8] sm:$0xff]
    %v113 = vld [vmem:[#allocation7] sm:$0xff]
    %v114 = vld [vmem:[#allocation7 + $0x8] sm:$0xff]
    %v115 = vld [vmem:[#allocation7 + $0x10] sm:$0xff]
    %v116 = vld [vmem:[#allocation7 + $0x18] sm:$0xff]
    %v117 = vld [vmem:[#allocation7 + $0x20] sm:$0xff]
    %v118 = vld [vmem:[#allocation7 + $0x28] sm:$0xff]
    %v119 = vld [vmem:[#allocation7 + $0x30] sm:$0xff]
    %v120 = vld [vmem:[#allocation7 + $0x38] sm:$0xff]
    %v121 = vld [vmem:[#allocation7 + $0x40] sm:$0xff]
    %v122 = vld [vmem:[#allocation7 + $0x48] sm:$0xff]
    %v123 = vld [vmem:[#allocation7 + $0x50] sm:$0xff]
    %v124 = vld [vmem:[#allocation7 + $0x58] sm:$0xff]
    %v125 = vld [vmem:[#allocation7 + $0x60] sm:$0xff]
    %v126 = vld [vmem:[#allocation7 + $0x68] sm:$0xff]
    %v127 = vld [vmem:[#allocation7 + $0x70] sm:$0xff]
    %v128 = vld [vmem:[#allocation7 + $0x78] sm:$0xff]
    %v129 = vld [vmem:[#allocation7 + $0x80] sm:$0xff]
    %v130 = vld [vmem:[#allocation7 + $0x88] sm:$0xff]
    %v131 = vld [vmem:[#allocation7 + $0x90] sm:$0xff]
    %v132 = vld [vmem:[#allocation7 + $0x98] sm:$0xff]
    %v133 = vld [vmem:[#allocation7 + $0xa0] sm:$0xff]
    %v134 = vld [vmem:[#allocation7 + $0xa8] sm:$0xff]
    %v135 = vld [vmem:[#allocation7 + $0xb0] sm:$0xff]
    %v136 = vld [vmem:[#allocation7 + $0xb8] sm:$0xff]
    %v137 = vld [vmem:[#allocation7 + $0xc0] sm:$0xff]
    %v138 = vld [vmem:[#allocation7 + $0xc8] sm:$0xff]
    %v139 = vld [vmem:[#allocation7 + $0xd0] sm:$0xff]
    %v140 = vld [vmem:[#allocation7 + $0xd8] sm:$0xff]
    %v141 = vld [vmem:[#allocation7 + $0xe0] sm:$0xff]
    %v142 = vld [vmem:[#allocation7 + $0xe8] sm:$0xff]
    %v143 = vld [vmem:[#allocation7 + $0xf0] sm:$0xff]
    %v144 = vld [vmem:[#allocation7 + $0xf8] sm:$0xff]
    %v145 = vpack.c.bf16 %v110, %v109
    %v146 = vld [vmem:[#allocation9] sm:$0xff]
    %v147 = vld [vmem:[#allocation9 + $0x8] sm:$0xff]
    %v148 = vld [vmem:[#allocation9 + $0x10] sm:$0xff]
    %v149 = vld [vmem:[#allocation9 + $0x18] sm:$0xff]
    %v150 = vld [vmem:[#allocation9 + $0x20] sm:$0xff]
    %v151 = vld [vmem:[#allocation9 + $0x28] sm:$0xff]
    %v152 = vld [vmem:[#allocation9 + $0x30] sm:$0xff]
    %v153 = vld [vmem:[#allocation9 + $0x38] sm:$0xff]
    %v154 = vld [vmem:[#allocation9 + $0x40] sm:$0xff]
    %v155 = vld [vmem:[#allocation9 + $0x48] sm:$0xff]
    %v156 = vld [vmem:[#allocation9 + $0x50] sm:$0xff]
    %v157 = vld [vmem:[#allocation9 + $0x58] sm:$0xff]
    %v158 = vld [vmem:[#allocation9 + $0x60] sm:$0xff]
    %v159 = vld [vmem:[#allocation9 + $0x68] sm:$0xff]
    %v160 = vld [vmem:[#allocation9 + $0x70] sm:$0xff]
    %v161 = vld [vmem:[#allocation9 + $0x78] sm:$0xff]
    %v162 = vld [vmem:[#allocation9 + $0x80] sm:$0xff]
    %v163 = vld [vmem:[#allocation9 + $0x88] sm:$0xff]
    %v164 = vld [vmem:[#allocation9 + $0x90] sm:$0xff]
    %v165 = vld [vmem:[#allocation9 + $0x98] sm:$0xff]
    %v166 = vld [vmem:[#allocation9 + $0xa0] sm:$0xff]
    %v167 = vld [vmem:[#allocation9 + $0xa8] sm:$0xff]
    %v168 = vld [vmem:[#allocation9 + $0xb0] sm:$0xff]
    %v169 = vld [vmem:[#allocation9 + $0xb8] sm:$0xff]
    %v170 = vld [vmem:[#allocation9 + $0xc0] sm:$0xff]
    %v171 = vld [vmem:[#allocation9 + $0xc8] sm:$0xff]
    %v172 = vld [vmem:[#allocation9 + $0xd0] sm:$0xff]
    %v173 = vld [vmem:[#allocation9 + $0xd8] sm:$0xff]
    %v174 = vld [vmem:[#allocation9 + $0xe0] sm:$0xff]
    %v175 = vld [vmem:[#allocation9 + $0xe8] sm:$0xff]
    %v176 = vld [vmem:[#allocation9 + $0xf0] sm:$0xff]
    %v177 = vld [vmem:[#allocation9 + $0xf8] sm:$0xff]
    %v210 = vunpack.c.l.b16 %v146
    %v211 = vunpack.c.h.b16 %v146
    %v212 = vunpack.c.l.b16 %v147
    %v213 = vunpack.c.h.b16 %v147
    %v214 = vunpack.c.l.b16 %v148
    %v215 = vunpack.c.h.b16 %v148
    %v216 = vunpack.c.l.b16 %v149
    %v217 = vunpack.c.h.b16 %v149
    %v218 = vunpack.c.l.b16 %v150
    %v219 = vunpack.c.h.b16 %v150
    %v220 = vunpack.c.l.b16 %v151
    %v221 = vunpack.c.h.b16 %v151
    %v222 = vunpack.c.l.b16 %v152
    %v223 = vunpack.c.h.b16 %v152
    %v224 = vunpack.c.l.b16 %v153
    %v225 = vunpack.c.h.b16 %v153
    %v226 = vunpack.c.l.b16 %v154
    %v227 = vunpack.c.h.b16 %v154
    %v228 = vunpack.c.l.b16 %v155
    %v229 = vunpack.c.h.b16 %v155
    %v230 = vunpack.c.l.b16 %v156
    %v231 = vunpack.c.h.b16 %v156
    %v232 = vunpack.c.l.b16 %v157
    %v233 = vunpack.c.h.b16 %v157
    %v234 = vunpack.c.l.b16 %v158
    %v235 = vunpack.c.h.b16 %v158
    %v236 = vunpack.c.l.b16 %v159
    %v237 = vunpack.c.h.b16 %v159
    %v238 = vunpack.c.l.b16 %v160
    %v239 = vunpack.c.h.b16 %v160
    %v240 = vunpack.c.l.b16 %v161
    %v241 = vunpack.c.h.b16 %v161
    %v242 = vunpack.c.l.b16 %v162
    %v243 = vunpack.c.h.b16 %v162
    %v244 = vunpack.c.l.b16 %v163
    %v245 = vunpack.c.h.b16 %v163
    %v246 = vunpack.c.l.b16 %v164
    %v247 = vunpack.c.h.b16 %v164
    %v248 = vunpack.c.l.b16 %v165
    %v249 = vunpack.c.h.b16 %v165
    %v250 = vunpack.c.l.b16 %v166
    %v251 = vunpack.c.h.b16 %v166
    %v252 = vunpack.c.l.b16 %v167
    %v253 = vunpack.c.h.b16 %v167
    %v254 = vunpack.c.l.b16 %v168
    %v255 = vunpack.c.h.b16 %v168
    %v256 = vunpack.c.l.b16 %v169
    %v257 = vunpack.c.h.b16 %v169
    %v258 = vunpack.c.l.b16 %v170
    %v259 = vunpack.c.h.b16 %v170
    %v260 = vunpack.c.l.b16 %v171
    %v261 = vunpack.c.h.b16 %v171
    %v262 = vunpack.c.l.b16 %v172
    %v263 = vunpack.c.h.b16 %v172
    %v264 = vunpack.c.l.b16 %v173
    %v265 = vunpack.c.h.b16 %v173
    %v266 = vunpack.c.l.b16 %v174
    %v267 = vunpack.c.h.b16 %v174
    %v268 = vunpack.c.l.b16 %v175
    %v269 = vunpack.c.h.b16 %v175
    %v270 = vunpack.c.l.b16 %v176
    %v271 = vunpack.c.h.b16 %v176
    %v272 = vunpack.c.l.b16 %v177
    %v273 = vunpack.c.h.b16 %v177
    %v274 = vpack.c.b16 %v214, %v210
    %v275 = vpack.c.b16 %v215, %v211
    %v276 = vpack.c.b16 %v216, %v212
    %v277 = vpack.c.b16 %v217, %v213
    %v278 = vpack.c.b16 %v222, %v218
    %v279 = vpack.c.b16 %v223, %v219
    %v280 = vpack.c.b16 %v224, %v220
    %v281 = vpack.c.b16 %v225, %v221
    %v282 = vpack.c.b16 %v230, %v226
    %v283 = vpack.c.b16 %v231, %v227
    %v284 = vpack.c.b16 %v232, %v228
    %v285 = vpack.c.b16 %v233, %v229
    %v286 = vpack.c.b16 %v238, %v234
    %v287 = vpack.c.b16 %v239, %v235
    %v288 = vpack.c.b16 %v240, %v236
    %v289 = vpack.c.b16 %v241, %v237
    %v290 = vpack.c.b16 %v246, %v242
    %v291 = vpack.c.b16 %v247, %v243
    %v292 = vpack.c.b16 %v248, %v244
    %v293 = vpack.c.b16 %v249, %v245
    %v294 = vpack.c.b16 %v254, %v250
    %v295 = vpack.c.b16 %v255, %v251
    %v296 = vpack.c.b16 %v256, %v252
    %v297 = vpack.c.b16 %v257, %v253
    %v298 = vpack.c.b16 %v262, %v258
    %v299 = vpack.c.b16 %v263, %v259
    %v300 = vpack.c.b16 %v264, %v260
    %v301 = vpack.c.b16 %v265, %v261
    %v302 = vpack.c.b16 %v270, %v266
    %v303 = vpack.c.b16 %v271, %v267
    %v304 = vpack.c.b16 %v272, %v268
    %v305 = vpack.c.b16 %v273, %v269
    %338 = vmatprep.subr.bf16.mxu0 %v275
    %339 = vmatpush1.bf16.msra.mxu0 %v274
    %340 = vmatprep.subr.bf16.mxu0 %v279
    %341 = vmatpush1.bf16.msra.mxu0 %v278
    %342 = vmatprep.subr.bf16.mxu0 %v283
    %343 = vmatpush1.bf16.msra.mxu0 %v282
    %344 = vmatprep.subr.bf16.mxu0 %v287
    %345 = vmatpush1.bf16.msra.mxu0 %v286
    %346 = vmatprep.subr.bf16.mxu0 %v291
    %347 = vmatpush1.bf16.msra.mxu0 %v290
    %348 = vmatprep.subr.bf16.mxu0 %v295
    %349 = vmatpush1.bf16.msra.mxu0 %v294
    %350 = vmatprep.subr.bf16.mxu0 %v299
    %351 = vmatpush1.bf16.msra.mxu0 %v298
    %352 = vmatprep.subr.bf16.mxu0 %v303
    %353 = vmatpush1.bf16.msra.mxu0 %v302
    %354 = vmatprep.subr.bf16.mxu0 0
    %355 = vmatpush1.bf16.msra.mxu0 0
    %356 = vmatprep.subr.bf16.mxu0 0
    %357 = vmatpush1.bf16.msra.mxu0 0
    %358 = vmatprep.subr.bf16.mxu0 0
    %359 = vmatpush1.bf16.msra.mxu0 0
    %360 = vmatprep.subr.bf16.mxu0 0
    %361 = vmatpush1.bf16.msra.mxu0 0
    %362 = vmatprep.subr.bf16.mxu0 0
    %363 = vmatpush1.bf16.msra.mxu0 0
    %364 = vmatprep.subr.bf16.mxu0 0
    %365 = vmatpush1.bf16.msra.mxu0 0
    %366 = vmatprep.subr.bf16.mxu0 0
    %367 = vmatpush1.bf16.msra.mxu0 0
    %368 = vmatprep.subr.bf16.mxu0 0
    %369 = vmatpush1.bf16.msra.mxu0 0
    %370 = vmatprep.mubr.bf16.mxu0 0
    %371 = vmatmul.mubr.bf16.gmra.mrb[0].mxu0 %v145
    %v372 = vpop.f32.mrb[0].mxu0
    %v373 = vadd.f32 0.0, %v372
    %v374 = vpop.f32.mrb[0].mxu0
    %v375 = vadd.f32 0.0, %v374
    %v376 = vpop.f32.mrb[0].mxu0
    %v377 = vadd.f32 0.0, %v376
    %v378 = vpop.f32.mrb[0].mxu0
    %v379 = vadd.f32 0.0, %v378
    %380 = vdwg.mxu0
    %381 = vmatprep.subr.bf16.mxu0 %v277
    %382 = vmatpush1.bf16.msra.mxu0 %v276
    %383 = vmatprep.subr.bf16.mxu0 %v281
    %384 = vmatpush1.bf16.msra.mxu0 %v280
    %385 = vmatprep.subr.bf16.mxu0 %v285
    %386 = vmatpush1.bf16.msra.mxu0 %v284
    %387 = vmatprep.subr.bf16.mxu0 %v289
    %388 = vmatpush1.bf16.msra.mxu0 %v288
    %389 = vmatprep.subr.bf16.mxu0 %v293
    %390 = vmatpush1.bf16.msra.mxu0 %v292
    %391 = vmatprep.subr.bf16.mxu0 %v297
    %392 = vmatpush1.bf16.msra.mxu0 %v296
    %393 = vmatprep.subr.bf16.mxu0 %v301
    %394 = vmatpush1.bf16.msra.mxu0 %v300
    %395 = vmatprep.subr.bf16.mxu0 %v305
    %396 = vmatpush1.bf16.msra.mxu0 %v304
    %397 = vmatprep.subr.bf16.mxu0 0
    %398 = vmatpush1.bf16.msra.mxu0 0
    %399 = vmatprep.subr.bf16.mxu0 0
    %400 = vmatpush1.bf16.msra.mxu0 0
    %401 = vmatprep.subr.bf16.mxu0 0
    %402 = vmatpush1.bf16.msra.mxu0 0
    %403 = vmatprep.subr.bf16.mxu0 0
    %404 = vmatpush1.bf16.msra.mxu0 0
    %405 = vmatprep.subr.bf16.mxu0 0
    %406 = vmatpush1.bf16.msra.mxu0 0
    %407 = vmatprep.subr.bf16.mxu0 0
    %408 = vmatpush1.bf16.msra.mxu0 0
    %409 = vmatprep.subr.bf16.mxu0 0
    %410 = vmatpush1.bf16.msra.mxu0 0
    %411 = vmatprep.subr.bf16.mxu0 0
    %412 = vmatpush1.bf16.msra.mxu0 0
    %413 = vmatprep.mubr.bf16.mxu0 0
    %414 = vmatmul.mubr.bf16.gmra.mrb[0].mxu0 %v145
    %v415 = vpop.f32.mrb[0].mxu0
    %v416 = vadd.f32 0.0, %v415
    %v417 = vpop.f32.mrb[0].mxu0
    %v418 = vadd.f32 0.0, %v417
    %v419 = vpop.f32.mrb[0].mxu0
    %v420 = vadd.f32 0.0, %v419
    %v421 = vpop.f32.mrb[0].mxu0
    %v422 = vadd.f32 0.0, %v421
    %423 = vdwg.mxu0
    %v426 = vunpack.c.l.b16 %v107
    %v427 = vunpack.c.l.b16 %v108
    %v428 = vpack.c.b16 %v427, %v426
    %v462 = vunpack.c.l.b16 %v113
    %v463 = vunpack.c.h.b16 %v113
    %v464 = vunpack.c.l.b16 %v114
    %v465 = vunpack.c.h.b16 %v114
    %v466 = vunpack.c.l.b16 %v115
    %v467 = vunpack.c.h.b16 %v115
    %v468 = vunpack.c.l.b16 %v116
    %v469 = vunpack.c.h.b16 %v116
    %v470 = vunpack.c.l.b16 %v117
    %v471 = vunpack.c.h.b16 %v117
    %v472 = vunpack.c.l.b16 %v118
    %v473 = vunpack.c.h.b16 %v118
    %v474 = vunpack.c.l.b16 %v119
    %v475 = vunpack.c.h.b16 %v119
    %v476 = vunpack.c.l.b16 %v120
    %v477 = vunpack.c.h.b16 %v120
    %v478 = vunpack.c.l.b16 %v121
    %v479 = vunpack.c.h.b16 %v121
    %v480 = vunpack.c.l.b16 %v122
    %v481 = vunpack.c.h.b16 %v122
    %v482 = vunpack.c.l.b16 %v123
    %v483 = vunpack.c.h.b16 %v123
    %v484 = vunpack.c.l.b16 %v124
    %v485 = vunpack.c.h.b16 %v124
    %v486 = vunpack.c.l.b16 %v125
    %v487 = vunpack.c.h.b16 %v125
    %v488 = vunpack.c.l.b16 %v126
    %v489 = vunpack.c.h.b16 %v126
    %v490 = vunpack.c.l.b16 %v127
    %v491 = vunpack.c.h.b16 %v127
    %v492 = vunpack.c.l.b16 %v128
    %v493 = vunpack.c.h.b16 %v128
    %v494 = vunpack.c.l.b16 %v129
    %v495 = vunpack.c.h.b16 %v129
    %v496 = vunpack.c.l.b16 %v130
    %v497 = vunpack.c.h.b16 %v130
    %v498 = vunpack.c.l.b16 %v131
    %v499 = vunpack.c.h.b16 %v131
    %v500 = vunpack.c.l.b16 %v132
    %v501 = vunpack.c.h.b16 %v132
    %v502 = vunpack.c.l.b16 %v133
    %v503 = vunpack.c.h.b16 %v133
    %v504 = vunpack.c.l.b16 %v134
    %v505 = vunpack.c.h.b16 %v134
    %v506 = vunpack.c.l.b16 %v135
    %v507 = vunpack.c.h.b16 %v135
    %v508 = vunpack.c.l.b16 %v136
    %v509 = vunpack.c.h.b16 %v136
    %v510 = vunpack.c.l.b16 %v137
    %v511 = vunpack.c.h.b16 %v137
    %v512 = vunpack.c.l.b16 %v138
    %v513 = vunpack.c.h.b16 %v138
    %v514 = vunpack.c.l.b16 %v139
    %v515 = vunpack.c.h.b16 %v139
    %v516 = vunpack.c.l.b16 %v140
    %v517 = vunpack.c.h.b16 %v140
    %v518 = vunpack.c.l.b16 %v141
    %v519 = vunpack.c.h.b16 %v141
    %v520 = vunpack.c.l.b16 %v142
    %v521 = vunpack.c.h.b16 %v142
    %v522 = vunpack.c.l.b16 %v143
    %v523 = vunpack.c.h.b16 %v143
    %v524 = vunpack.c.l.b16 %v144
    %v525 = vunpack.c.h.b16 %v144
    %v526 = vpack.c.b16 %v466, %v462
    %v527 = vpack.c.b16 %v467, %v463
    %v528 = vpack.c.b16 %v468, %v464
    %v529 = vpack.c.b16 %v469, %v465
    %v530 = vpack.c.b16 %v474, %v470
    %v531 = vpack.c.b16 %v475, %v471
    %v532 = vpack.c.b16 %v476, %v472
    %v533 = vpack.c.b16 %v477, %v473
    %v534 = vpack.c.b16 %v482, %v478
    %v535 = vpack.c.b16 %v483, %v479
    %v536 = vpack.c.b16 %v484, %v480
    %v537 = vpack.c.b16 %v485, %v481
    %v538 = vpack.c.b16 %v490, %v486
    %v539 = vpack.c.b16 %v491, %v487
    %v540 = vpack.c.b16 %v492, %v488
    %v541 = vpack.c.b16 %v493, %v489
    %v542 = vpack.c.b16 %v498, %v494
    %v543 = vpack.c.b16 %v499, %v495
    %v544 = vpack.c.b16 %v500, %v496
    %v545 = vpack.c.b16 %v501, %v497
    %v546 = vpack.c.b16 %v506, %v502
    %v547 = vpack.c.b16 %v507, %v503
    %v548 = vpack.c.b16 %v508, %v504
    %v549 = vpack.c.b16 %v509, %v505
    %v550 = vpack.c.b16 %v514, %v510
    %v551 = vpack.c.b16 %v515, %v511
    %v552 = vpack.c.b16 %v516, %v512
    %v553 = vpack.c.b16 %v517, %v513
    %v554 = vpack.c.b16 %v522, %v518
    %v555 = vpack.c.b16 %v523, %v519
    %v556 = vpack.c.b16 %v524, %v520
    %v557 = vpack.c.b16 %v525, %v521
    %590 = vmatprep.subr.bf16.mxu0 %v527
    %591 = vmatpush1.bf16.msra.mxu0 %v526
    %592 = vmatprep.subr.bf16.mxu0 %v531
    %593 = vmatpush1.bf16.msra.mxu0 %v530
    %594 = vmatprep.subr.bf16.mxu0 %v535
    %595 = vmatpush1.bf16.msra.mxu0 %v534
    %596 = vmatprep.subr.bf16.mxu0 %v539
    %597 = vmatpush1.bf16.msra.mxu0 %v538
    %598 = vmatprep.subr.bf16.mxu0 %v543
    %599 = vmatpush1.bf16.msra.mxu0 %v542
    %600 = vmatprep.subr.bf16.mxu0 %v547
    %601 = vmatpush1.bf16.msra.mxu0 %v546
    %602 = vmatprep.subr.bf16.mxu0 %v551
    %603 = vmatpush1.bf16.msra.mxu0 %v550
    %604 = vmatprep.subr.bf16.mxu0 %v555
    %605 = vmatpush1.bf16.msra.mxu0 %v554
    %606 = vmatprep.subr.bf16.mxu0 0
    %607 = vmatpush1.bf16.msra.mxu0 0
    %608 = vmatprep.subr.bf16.mxu0 0
    %609 = vmatpush1.bf16.msra.mxu0 0
    %610 = vmatprep.subr.bf16.mxu0 0
    %611 = vmatpush1.bf16.msra.mxu0 0
    %612 = vmatprep.subr.bf16.mxu0 0
    %613 = vmatpush1.bf16.msra.mxu0 0
    %614 = vmatprep.subr.bf16.mxu0 0
    %615 = vmatpush1.bf16.msra.mxu0 0
    %616 = vmatprep.subr.bf16.mxu0 0
    %617 = vmatpush1.bf16.msra.mxu0 0
    %618 = vmatprep.subr.bf16.mxu0 0
    %619 = vmatpush1.bf16.msra.mxu0 0
    %620 = vmatprep.subr.bf16.mxu0 0
    %621 = vmatpush1.bf16.msra.mxu0 0
    %622 = vmatprep.mubr.bf16.mxu0 0
    %623 = vmatmul.mubr.bf16.gmra.mrb[0].mxu0 %v428
    %v624 = vpop.f32.mrb[0].mxu0
    %v625 = vadd.f32 %v373, %v624
    %v626 = vpop.f32.mrb[0].mxu0
    %v627 = vadd.f32 %v375, %v626
    %v628 = vpop.f32.mrb[0].mxu0
    %v629 = vadd.f32 %v377, %v628
    %v630 = vpop.f32.mrb[0].mxu0
    %v631 = vadd.f32 %v379, %v630
    %632 = vdwg.mxu0
    %633 = vmatprep.subr.bf16.mxu0 %v529
    %634 = vmatpush1.bf16.msra.mxu0 %v528
    %635 = vmatprep.subr.bf16.mxu0 %v533
    %636 = vmatpush1.bf16.msra.mxu0 %v532
    %637 = vmatprep.subr.bf16.mxu0 %v537
    %638 = vmatpush1.bf16.msra.mxu0 %v536
    %639 = vmatprep.subr.bf16.mxu0 %v541
    %640 = vmatpush1.bf16.msra.mxu0 %v540
    %641 = vmatprep.subr.bf16.mxu0 %v545
    %642 = vmatpush1.bf16.msra.mxu0 %v544
    %643 = vmatprep.subr.bf16.mxu0 %v549
    %644 = vmatpush1.bf16.msra.mxu0 %v548
    %645 = vmatprep.subr.bf16.mxu0 %v553
    %646 = vmatpush1.bf16.msra.mxu0 %v552
    %647 = vmatprep.subr.bf16.mxu0 %v557
    %648 = vmatpush1.bf16.msra.mxu0 %v556
    %649 = vmatprep.subr.bf16.mxu0 0
    %650 = vmatpush1.bf16.msra.mxu0 0
    %651 = vmatprep.subr.bf16.mxu0 0
    %652 = vmatpush1.bf16.msra.mxu0 0
    %653 = vmatprep.subr.bf16.mxu0 0
    %654 = vmatpush1.bf16.msra.mxu0 0
    %655 = vmatprep.subr.bf16.mxu0 0
    %656 = vmatpush1.bf16.msra.mxu0 0
    %657 = vmatprep.subr.bf16.mxu0 0
    %658 = vmatpush1.bf16.msra.mxu0 0
    %659 = vmatprep.subr.bf16.mxu0 0
    %660 = vmatpush1.bf16.msra.mxu0 0
    %661 = vmatprep.subr.bf16.mxu0 0
    %662 = vmatpush1.bf16.msra.mxu0 0
    %663 = vmatprep.subr.bf16.mxu0 0
    %664 = vmatpush1.bf16.msra.mxu0 0
    %665 = vmatprep.mubr.bf16.mxu0 0
    %666 = vmatmul.mubr.bf16.gmra.mrb[0].mxu0 %v428
    %v667 = vpop.f32.mrb[0].mxu0
    %v668 = vadd.f32 %v416, %v667
    %v669 = vpop.f32.mrb[0].mxu0
    %v670 = vadd.f32 %v418, %v669
    %v671 = vpop.f32.mrb[0].mxu0
    %v672 = vadd.f32 %v420, %v671
    %v673 = vpop.f32.mrb[0].mxu0
    %v674 = vadd.f32 %v422, %v673
    %675 = vdwg.mxu0
    %v676 = vld [vmem:[%s3] sm:$0xf]
    %v678 = vlaneseq
    %v679 = vshrl.u32 %v678, 7
    %v680 = vsub.s32 0, %v679
    %v681 = vrot.slane %v676, %v680
    %v682 = vlaneseq
    %v683 = vshrl.u32 %v682, 7
    %v684 = vsub.s32 1, %v683
    %v685 = vrot.slane %v676, %v684
    %v686 = vlaneseq
    %v687 = vshrl.u32 %v686, 7
    %v688 = vsub.s32 2, %v687
    %v689 = vrot.slane %v676, %v688
    %v690 = vlaneseq
    %v691 = vshrl.u32 %v690, 7
    %v692 = vsub.s32 3, %v691
    %v693 = vrot.slane %v676, %v692
    %v698 = vadd.f32 %v625, %v681
    %v699 = vadd.f32 %v627, %v685
    %v700 = vadd.f32 %v668, %v689
    %v701 = vadd.f32 %v670, %v693
    %v702 = vadd.f32 %v629, %v681
    %v703 = vadd.f32 %v631, %v685
    %v704 = vadd.f32 %v672, %v689
    %v705 = vadd.f32 %v674, %v693
    %v706 = vxor.u32 %v698, 2147483648
    %v707 = vxor.u32 %v702, 2147483648
    %v708 = vmul.f32 %v706, 1.442695
    %v709 = vpow.pop %v708
    %v710 = vmul.f32 %v707, 1.442695
    %v711 = vpow.pop %v710
    %v712 = vadd.f32 %v709, 1.0
    %v713 = vadd.f32 %v711, 1.0
    %v714 = vrcp.pop %v712
    %v715 = vmul.f32 1.0, %v714
    %v716 = vrcp.pop %v713
    %v717 = vmul.f32 1.0, %v716
    %v718 = vxor.u32 %v699, 2147483648
    %v719 = vxor.u32 %v703, 2147483648
    %v720 = vmul.f32 %v718, 1.442695
    %v721 = vpow.pop %v720
    %v722 = vmul.f32 %v719, 1.442695
    %v723 = vpow.pop %v722
    %v724 = vadd.f32 %v721, 1.0
    %v725 = vadd.f32 %v723, 1.0
    %v726 = vrcp.pop %v724
    %v727 = vmul.f32 1.0, %v726
    %v728 = vrcp.pop %v725
    %v729 = vmul.f32 1.0, %v728
    %v730 = vtanh.pop %v700
    %v731 = vtanh.pop %v704
    %v732 = vxor.u32 %v701, 2147483648
    %v733 = vxor.u32 %v705, 2147483648
    %v734 = vmul.f32 %v732, 1.442695
    %v735 = vpow.pop %v734
    %v736 = vmul.f32 %v733, 1.442695
    %v737 = vpow.pop %v736
    %v738 = vadd.f32 %v735, 1.0
    %v739 = vadd.f32 %v737, 1.0
    %v740 = vrcp.pop %v738
    %v741 = vmul.f32 1.0, %v740
    %v742 = vrcp.pop %v739
    %v743 = vmul.f32 1.0, %v742
    %v744 = vmul.f32 %v727, %v111
    %v745 = vmul.f32 %v729, %v112
    %v746 = vmul.f32 %v715, %v730
    %v747 = vmul.f32 %v717, %v731
    %v748 = vadd.f32 %v744, %v746
    %v749 = vadd.f32 %v745, %v747
    %v750 = vtanh.pop %v748
    %v751 = vtanh.pop %v749
    %v752 = vmul.f32 %v741, %v750
    %v753 = vmul.f32 %v743, %v751
    %754 = vst [vmem:[#allocation2] sm:$0xff] %v752
    %755 = vst [vmem:[#allocation2 + $0x8] sm:$0xff] %v753
    %756 = vst [vmem:[#allocation3] sm:$0xff] %v748
    %757 = vst [vmem:[#allocation3 + $0x8] sm:$0xff] %v749
    %v758 = vpack.c.bf16 %v753, %v752
    %s759 = scalar_lea.vmem [#allocation2], 16
    %v760 = vld [vmem:[%s759] sm:$0xff]
    %v761 = vld [vmem:[%s759 + $0x8] sm:$0xff]
    %s762 = scalar_lea.vmem [#allocation3], 16
    %v763 = vld [vmem:[%s762] sm:$0xff]
    %v764 = vld [vmem:[%s762 + $0x8] sm:$0xff]
    %v765 = vld [vmem:[#allocation10] sm:$0xff]
    %v766 = vld [vmem:[#allocation10 + $0x8] sm:$0xff]
    %v767 = vld [vmem:[#allocation10 + $0x10] sm:$0xff]
    %v768 = vld [vmem:[#allocation10 + $0x18] sm:$0xff]
    %v769 = vld [vmem:[#allocation10 + $0x20] sm:$0xff]
    %v770 = vld [vmem:[#allocation10 + $0x28] sm:$0xff]
    %v771 = vld [vmem:[#allocation10 + $0x30] sm:$0xff]
    %v772 = vld [vmem:[#allocation10 + $0x38] sm:$0xff]
    %v773 = vld [vmem:[#allocation10 + $0x40] sm:$0xff]
    %v774 = vld [vmem:[#allocation10 + $0x48] sm:$0xff]
    %v775 = vld [vmem:[#allocation10 + $0x50] sm:$0xff]
    %v776 = vld [vmem:[#allocation10 + $0x58] sm:$0xff]
    %v777 = vld [vmem:[#allocation10 + $0x60] sm:$0xff]
    %v778 = vld [vmem:[#allocation10 + $0x68] sm:$0xff]
    %v779 = vld [vmem:[#allocation10 + $0x70] sm:$0xff]
    %v780 = vld [vmem:[#allocation10 + $0x78] sm:$0xff]
    %v781 = vld [vmem:[#allocation10 + $0x80] sm:$0xff]
    %v782 = vld [vmem:[#allocation10 + $0x88] sm:$0xff]
    %v783 = vld [vmem:[#allocation10 + $0x90] sm:$0xff]
    %v784 = vld [vmem:[#allocation10 + $0x98] sm:$0xff]
    %v785 = vld [vmem:[#allocation10 + $0xa0] sm:$0xff]
    %v786 = vld [vmem:[#allocation10 + $0xa8] sm:$0xff]
    %v787 = vld [vmem:[#allocation10 + $0xb0] sm:$0xff]
    %v788 = vld [vmem:[#allocation10 + $0xb8] sm:$0xff]
    %v789 = vld [vmem:[#allocation10 + $0xc0] sm:$0xff]
    %v790 = vld [vmem:[#allocation10 + $0xc8] sm:$0xff]
    %v791 = vld [vmem:[#allocation10 + $0xd0] sm:$0xff]
    %v792 = vld [vmem:[#allocation10 + $0xd8] sm:$0xff]
    %v793 = vld [vmem:[#allocation10 + $0xe0] sm:$0xff]
    %v794 = vld [vmem:[#allocation10 + $0xe8] sm:$0xff]
    %v795 = vld [vmem:[#allocation10 + $0xf0] sm:$0xff]
    %v796 = vld [vmem:[#allocation10 + $0xf8] sm:$0xff]
    %v797 = vpack.c.bf16 %v761, %v760
    %v798 = vld [vmem:[#allocation12] sm:$0xff]
    %v799 = vld [vmem:[#allocation12 + $0x8] sm:$0xff]
    %v800 = vld [vmem:[#allocation12 + $0x10] sm:$0xff]
    %v801 = vld [vmem:[#allocation12 + $0x18] sm:$0xff]
    %v802 = vld [vmem:[#allocation12 + $0x20] sm:$0xff]
    %v803 = vld [vmem:[#allocation12 + $0x28] sm:$0xff]
    %v804 = vld [vmem:[#allocation12 + $0x30] sm:$0xff]
    %v805 = vld [vmem:[#allocation12 + $0x38] sm:$0xff]
    %v806 = vld [vmem:[#allocation12 + $0x40] sm:$0xff]
    %v807 = vld [vmem:[#allocation12 + $0x48] sm:$0xff]
    %v808 = vld [vmem:[#allocation12 + $0x50] sm:$0xff]
    %v809 = vld [vmem:[#allocation12 + $0x58] sm:$0xff]
    %v810 = vld [vmem:[#allocation12 + $0x60] sm:$0xff]
    %v811 = vld [vmem:[#allocation12 + $0x68] sm:$0xff]
    %v812 = vld [vmem:[#allocation12 + $0x70] sm:$0xff]
    %v813 = vld [vmem:[#allocation12 + $0x78] sm:$0xff]
    %v814 = vld [vmem:[#allocation12 + $0x80] sm:$0xff]
    %v815 = vld [vmem:[#allocation12 + $0x88] sm:$0xff]
    %v816 = vld [vmem:[#allocation12 + $0x90] sm:$0xff]
    %v817 = vld [vmem:[#allocation12 + $0x98] sm:$0xff]
    %v818 = vld [vmem:[#allocation12 + $0xa0] sm:$0xff]
    %v819 = vld [vmem:[#allocation12 + $0xa8] sm:$0xff]
    %v820 = vld [vmem:[#allocation12 + $0xb0] sm:$0xff]
    %v821 = vld [vmem:[#allocation12 + $0xb8] sm:$0xff]
    %v822 = vld [vmem:[#allocation12 + $0xc0] sm:$0xff]
    %v823 = vld [vmem:[#allocation12 + $0xc8] sm:$0xff]
    %v824 = vld [vmem:[#allocation12 + $0xd0] sm:$0xff]
    %v825 = vld [vmem:[#allocation12 + $0xd8] sm:$0xff]
    %v826 = vld [vmem:[#allocation12 + $0xe0] sm:$0xff]
    %v827 = vld [vmem:[#allocation12 + $0xe8] sm:$0xff]
    %v828 = vld [vmem:[#allocation12 + $0xf0] sm:$0xff]
    %v829 = vld [vmem:[#allocation12 + $0xf8] sm:$0xff]
    %v862 = vunpack.c.l.b16 %v798
    %v863 = vunpack.c.h.b16 %v798
    %v864 = vunpack.c.l.b16 %v799
    %v865 = vunpack.c.h.b16 %v799
    %v866 = vunpack.c.l.b16 %v800
    %v867 = vunpack.c.h.b16 %v800
    %v868 = vunpack.c.l.b16 %v801
    %v869 = vunpack.c.h.b16 %v801
    %v870 = vunpack.c.l.b16 %v802
    %v871 = vunpack.c.h.b16 %v802
    %v872 = vunpack.c.l.b16 %v803
    %v873 = vunpack.c.h.b16 %v803
    %v874 = vunpack.c.l.b16 %v804
    %v875 = vunpack.c.h.b16 %v804
    %v876 = vunpack.c.l.b16 %v805
    %v877 = vunpack.c.h.b16 %v805
    %v878 = vunpack.c.l.b16 %v806
    %v879 = vunpack.c.h.b16 %v806
    %v880 = vunpack.c.l.b16 %v807
    %v881 = vunpack.c.h.b16 %v807
    %v882 = vunpack.c.l.b16 %v808
    %v883 = vunpack.c.h.b16 %v808
    %v884 = vunpack.c.l.b16 %v809
    %v885 = vunpack.c.h.b16 %v809
    %v886 = vunpack.c.l.b16 %v810
    %v887 = vunpack.c.h.b16 %v810
    %v888 = vunpack.c.l.b16 %v811
    %v889 = vunpack.c.h.b16 %v811
    %v890 = vunpack.c.l.b16 %v812
    %v891 = vunpack.c.h.b16 %v812
    %v892 = vunpack.c.l.b16 %v813
    %v893 = vunpack.c.h.b16 %v813
    %v894 = vunpack.c.l.b16 %v814
    %v895 = vunpack.c.h.b16 %v814
    %v896 = vunpack.c.l.b16 %v815
    %v897 = vunpack.c.h.b16 %v815
    %v898 = vunpack.c.l.b16 %v816
    %v899 = vunpack.c.h.b16 %v816
    %v900 = vunpack.c.l.b16 %v817
    %v901 = vunpack.c.h.b16 %v817
    %v902 = vunpack.c.l.b16 %v818
    %v903 = vunpack.c.h.b16 %v818
    %v904 = vunpack.c.l.b16 %v819
    %v905 = vunpack.c.h.b16 %v819
    %v906 = vunpack.c.l.b16 %v820
    %v907 = vunpack.c.h.b16 %v820
    %v908 = vunpack.c.l.b16 %v821
    %v909 = vunpack.c.h.b16 %v821
    %v910 = vunpack.c.l.b16 %v822
    %v911 = vunpack.c.h.b16 %v822
    %v912 = vunpack.c.l.b16 %v823
    %v913 = vunpack.c.h.b16 %v823
    %v914 = vunpack.c.l.b16 %v824
    %v915 = vunpack.c.h.b16 %v824
    %v916 = vunpack.c.l.b16 %v825
    %v917 = vunpack.c.h.b16 %v825
    %v918 = vunpack.c.l.b16 %v826
    %v919 = vunpack.c.h.b16 %v826
    %v920 = vunpack.c.l.b16 %v827
    %v921 = vunpack.c.h.b16 %v827
    %v922 = vunpack.c.l.b16 %v828
    %v923 = vunpack.c.h.b16 %v828
    %v924 = vunpack.c.l.b16 %v829
    %v925 = vunpack.c.h.b16 %v829
    %v926 = vpack.c.b16 %v866, %v862
    %v927 = vpack.c.b16 %v867, %v863
    %v928 = vpack.c.b16 %v868, %v864
    %v929 = vpack.c.b16 %v869, %v865
    %v930 = vpack.c.b16 %v874, %v870
    %v931 = vpack.c.b16 %v875, %v871
    %v932 = vpack.c.b16 %v876, %v872
    %v933 = vpack.c.b16 %v877, %v873
    %v934 = vpack.c.b16 %v882, %v878
    %v935 = vpack.c.b16 %v883, %v879
    %v936 = vpack.c.b16 %v884, %v880
    %v937 = vpack.c.b16 %v885, %v881
    %v938 = vpack.c.b16 %v890, %v886
    %v939 = vpack.c.b16 %v891, %v887
    %v940 = vpack.c.b16 %v892, %v888
    %v941 = vpack.c.b16 %v893, %v889
    %v942 = vpack.c.b16 %v898, %v894
    %v943 = vpack.c.b16 %v899, %v895
    %v944 = vpack.c.b16 %v900, %v896
    %v945 = vpack.c.b16 %v901, %v897
    %v946 = vpack.c.b16 %v906, %v902
    %v947 = vpack.c.b16 %v907, %v903
    %v948 = vpack.c.b16 %v908, %v904
    %v949 = vpack.c.b16 %v909, %v905
    %v950 = vpack.c.b16 %v914, %v910
    %v951 = vpack.c.b16 %v915, %v911
    %v952 = vpack.c.b16 %v916, %v912
    %v953 = vpack.c.b16 %v917, %v913
    %v954 = vpack.c.b16 %v922, %v918
    %v955 = vpack.c.b16 %v923, %v919
    %v956 = vpack.c.b16 %v924, %v920
    %v957 = vpack.c.b16 %v925, %v921
    %990 = vmatprep.subr.bf16.mxu0 %v927
    %991 = vmatpush1.bf16.msra.mxu0 %v926
    %992 = vmatprep.subr.bf16.mxu0 %v931
    %993 = vmatpush1.bf16.msra.mxu0 %v930
    %994 = vmatprep.subr.bf16.mxu0 %v935
    %995 = vmatpush1.bf16.msra.mxu0 %v934
    %996 = vmatprep.subr.bf16.mxu0 %v939
    %997 = vmatpush1.bf16.msra.mxu0 %v938
    %998 = vmatprep.subr.bf16.mxu0 %v943
    %999 = vmatpush1.bf16.msra.mxu0 %v942
    %1000 = vmatprep.subr.bf16.mxu0 %v947
    %1001 = vmatpush1.bf16.msra.mxu0 %v946
    %1002 = vmatprep.subr.bf16.mxu0 %v951
    %1003 = vmatpush1.bf16.msra.mxu0 %v950
    %1004 = vmatprep.subr.bf16.mxu0 %v955
    %1005 = vmatpush1.bf16.msra.mxu0 %v954
    %1006 = vmatprep.subr.bf16.mxu0 0
    %1007 = vmatpush1.bf16.msra.mxu0 0
    %1008 = vmatprep.subr.bf16.mxu0 0
    %1009 = vmatpush1.bf16.msra.mxu0 0
    %1010 = vmatprep.subr.bf16.mxu0 0
    %1011 = vmatpush1.bf16.msra.mxu0 0
    %1012 = vmatprep.subr.bf16.mxu0 0
    %1013 = vmatpush1.bf16.msra.mxu0 0
    %1014 = vmatprep.subr.bf16.mxu0 0
    %1015 = vmatpush1.bf16.msra.mxu0 0
    %1016 = vmatprep.subr.bf16.mxu0 0
    %1017 = vmatpush1.bf16.msra.mxu0 0
    %1018 = vmatprep.subr.bf16.mxu0 0
    %1019 = vmatpush1.bf16.msra.mxu0 0
    %1020 = vmatprep.subr.bf16.mxu0 0
    %1021 = vmatpush1.bf16.msra.mxu0 0
    %1022 = vmatprep.mubr.bf16.mxu0 0
    %1023 = vmatmul.mubr.bf16.gmra.mrb[0].mxu0 %v797
    %v1024 = vpop.f32.mrb[0].mxu0
    %v1025 = vadd.f32 0.0, %v1024
    %v1026 = vpop.f32.mrb[0].mxu0
    %v1027 = vadd.f32 0.0, %v1026
    %v1028 = vpop.f32.mrb[0].mxu0
    %v1029 = vadd.f32 0.0, %v1028
    %v1030 = vpop.f32.mrb[0].mxu0
    %v1031 = vadd.f32 0.0, %v1030
    %1032 = vdwg.mxu0
    %1033 = vmatprep.subr.bf16.mxu0 %v929
    %1034 = vmatpush1.bf16.msra.mxu0 %v928
    %1035 = vmatprep.subr.bf16.mxu0 %v933
    %1036 = vmatpush1.bf16.msra.mxu0 %v932
    %1037 = vmatprep.subr.bf16.mxu0 %v937
    %1038 = vmatpush1.bf16.msra.mxu0 %v936
    %1039 = vmatprep.subr.bf16.mxu0 %v941
    %1040 = vmatpush1.bf16.msra.mxu0 %v940
    %1041 = vmatprep.subr.bf16.mxu0 %v945
    %1042 = vmatpush1.bf16.msra.mxu0 %v944
    %1043 = vmatprep.subr.bf16.mxu0 %v949
    %1044 = vmatpush1.bf16.msra.mxu0 %v948
    %1045 = vmatprep.subr.bf16.mxu0 %v953
    %1046 = vmatpush1.bf16.msra.mxu0 %v952
    %1047 = vmatprep.subr.bf16.mxu0 %v957
    %1048 = vmatpush1.bf16.msra.mxu0 %v956
    %1049 = vmatprep.subr.bf16.mxu0 0
    %1050 = vmatpush1.bf16.msra.mxu0 0
    %1051 = vmatprep.subr.bf16.mxu0 0
    %1052 = vmatpush1.bf16.msra.mxu0 0
    %1053 = vmatprep.subr.bf16.mxu0 0
    %1054 = vmatpush1.bf16.msra.mxu0 0
    %1055 = vmatprep.subr.bf16.mxu0 0
    %1056 = vmatpush1.bf16.msra.mxu0 0
    %1057 = vmatprep.subr.bf16.mxu0 0
    %1058 = vmatpush1.bf16.msra.mxu0 0
    %1059 = vmatprep.subr.bf16.mxu0 0
    %1060 = vmatpush1.bf16.msra.mxu0 0
    %1061 = vmatprep.subr.bf16.mxu0 0
    %1062 = vmatpush1.bf16.msra.mxu0 0
    %1063 = vmatprep.subr.bf16.mxu0 0
    %1064 = vmatpush1.bf16.msra.mxu0 0
    %1065 = vmatprep.mubr.bf16.mxu0 0
    %1066 = vmatmul.mubr.bf16.gmra.mrb[0].mxu0 %v797
    %v1067 = vpop.f32.mrb[0].mxu0
    %v1068 = vadd.f32 0.0, %v1067
    %v1069 = vpop.f32.mrb[0].mxu0
    %v1070 = vadd.f32 0.0, %v1069
    %v1071 = vpop.f32.mrb[0].mxu0
    %v1072 = vadd.f32 0.0, %v1071
    %v1073 = vpop.f32.mrb[0].mxu0
    %v1074 = vadd.f32 0.0, %v1073
    %1075 = vdwg.mxu0
    %v1108 = vunpack.c.l.b16 %v765
    %v1109 = vunpack.c.h.b16 %v765
    %v1110 = vunpack.c.l.b16 %v766
    %v1111 = vunpack.c.h.b16 %v766
    %v1112 = vunpack.c.l.b16 %v767
    %v1113 = vunpack.c.h.b16 %v767
    %v1114 = vunpack.c.l.b16 %v768
    %v1115 = vunpack.c.h.b16 %v768
    %v1116 = vunpack.c.l.b16 %v769
    %v1117 = vunpack.c.h.b16 %v769
    %v1118 = vunpack.c.l.b16 %v770
    %v1119 = vunpack.c.h.b16 %v770
    %v1120 = vunpack.c.l.b16 %v771
    %v1121 = vunpack.c.h.b16 %v771
    %v1122 = vunpack.c.l.b16 %v772
    %v1123 = vunpack.c.h.b16 %v772
    %v1124 = vunpack.c.l.b16 %v773
    %v1125 = vunpack.c.h.b16 %v773
    %v1126 = vunpack.c.l.b16 %v774
    %v1127 = vunpack.c.h.b16 %v774
    %v1128 = vunpack.c.l.b16 %v775
    %v1129 = vunpack.c.h.b16 %v775
    %v1130 = vunpack.c.l.b16 %v776
    %v1131 = vunpack.c.h.b16 %v776
    %v1132 = vunpack.c.l.b16 %v777
    %v1133 = vunpack.c.h.b16 %v777
    %v1134 = vunpack.c.l.b16 %v778
    %v1135 = vunpack.c.h.b16 %v778
    %v1136 = vunpack.c.l.b16 %v779
    %v1137 = vunpack.c.h.b16 %v779
    %v1138 = vunpack.c.l.b16 %v780
    %v1139 = vunpack.c.h.b16 %v780
    %v1140 = vunpack.c.l.b16 %v781
    %v1141 = vunpack.c.h.b16 %v781
    %v1142 = vunpack.c.l.b16 %v782
    %v1143 = vunpack.c.h.b16 %v782
    %v1144 = vunpack.c.l.b16 %v783
    %v1145 = vunpack.c.h.b16 %v783
    %v1146 = vunpack.c.l.b16 %v784
    %v1147 = vunpack.c.h.b16 %v784
    %v1148 = vunpack.c.l.b16 %v785
    %v1149 = vunpack.c.h.b16 %v785
    %v1150 = vunpack.c.l.b16 %v786
    %v1151 = vunpack.c.h.b16 %v786
    %v1152 = vunpack.c.l.b16 %v787
    %v1153 = vunpack.c.h.b16 %v787
    %v1154 = vunpack.c.l.b16 %v788
    %v1155 = vunpack.c.h.b16 %v788
    %v1156 = vunpack.c.l.b16 %v789
    %v1157 = vunpack.c.h.b16 %v789
    %v1158 = vunpack.c.l.b16 %v790
    %v1159 = vunpack.c.h.b16 %v790
    %v1160 = vunpack.c.l.b16 %v791
    %v1161 = vunpack.c.h.b16 %v791
    %v1162 = vunpack.c.l.b16 %v792
    %v1163 = vunpack.c.h.b16 %v792
    %v1164 = vunpack.c.l.b16 %v793
    %v1165 = vunpack.c.h.b16 %v793
    %v1166 = vunpack.c.l.b16 %v794
    %v1167 = vunpack.c.h.b16 %v794
    %v1168 = vunpack.c.l.b16 %v795
    %v1169 = vunpack.c.h.b16 %v795
    %v1170 = vunpack.c.l.b16 %v796
    %v1171 = vunpack.c.h.b16 %v796
    %v1172 = vpack.c.b16 %v1112, %v1108
    %v1173 = vpack.c.b16 %v1113, %v1109
    %v1174 = vpack.c.b16 %v1114, %v1110
    %v1175 = vpack.c.b16 %v1115, %v1111
    %v1176 = vpack.c.b16 %v1120, %v1116
    %v1177 = vpack.c.b16 %v1121, %v1117
    %v1178 = vpack.c.b16 %v1122, %v1118
    %v1179 = vpack.c.b16 %v1123, %v1119
    %v1180 = vpack.c.b16 %v1128, %v1124
    %v1181 = vpack.c.b16 %v1129, %v1125
    %v1182 = vpack.c.b16 %v1130, %v1126
    %v1183 = vpack.c.b16 %v1131, %v1127
    %v1184 = vpack.c.b16 %v1136, %v1132
    %v1185 = vpack.c.b16 %v1137, %v1133
    %v1186 = vpack.c.b16 %v1138, %v1134
    %v1187 = vpack.c.b16 %v1139, %v1135
    %v1188 = vpack.c.b16 %v1144, %v1140
    %v1189 = vpack.c.b16 %v1145, %v1141
    %v1190 = vpack.c.b16 %v1146, %v1142
    %v1191 = vpack.c.b16 %v1147, %v1143
    %v1192 = vpack.c.b16 %v1152, %v1148
    %v1193 = vpack.c.b16 %v1153, %v1149
    %v1194 = vpack.c.b16 %v1154, %v1150
    %v1195 = vpack.c.b16 %v1155, %v1151
    %v1196 = vpack.c.b16 %v1160, %v1156
    %v1197 = vpack.c.b16 %v1161, %v1157
    %v1198 = vpack.c.b16 %v1162, %v1158
    %v1199 = vpack.c.b16 %v1163, %v1159
    %v1200 = vpack.c.b16 %v1168, %v1164
    %v1201 = vpack.c.b16 %v1169, %v1165
    %v1202 = vpack.c.b16 %v1170, %v1166
    %v1203 = vpack.c.b16 %v1171, %v1167
    %1236 = vmatprep.subr.bf16.mxu0 %v1173
    %1237 = vmatpush1.bf16.msra.mxu0 %v1172
    %1238 = vmatprep.subr.bf16.mxu0 %v1177
    %1239 = vmatpush1.bf16.msra.mxu0 %v1176
    %1240 = vmatprep.subr.bf16.mxu0 %v1181
    %1241 = vmatpush1.bf16.msra.mxu0 %v1180
    %1242 = vmatprep.subr.bf16.mxu0 %v1185
    %1243 = vmatpush1.bf16.msra.mxu0 %v1184
    %1244 = vmatprep.subr.bf16.mxu0 %v1189
    %1245 = vmatpush1.bf16.msra.mxu0 %v1188
    %1246 = vmatprep.subr.bf16.mxu0 %v1193
    %1247 = vmatpush1.bf16.msra.mxu0 %v1192
    %1248 = vmatprep.subr.bf16.mxu0 %v1197
    %1249 = vmatpush1.bf16.msra.mxu0 %v1196
    %1250 = vmatprep.subr.bf16.mxu0 %v1201
    %1251 = vmatpush1.bf16.msra.mxu0 %v1200
    %1252 = vmatprep.subr.bf16.mxu0 0
    %1253 = vmatpush1.bf16.msra.mxu0 0
    %1254 = vmatprep.subr.bf16.mxu0 0
    %1255 = vmatpush1.bf16.msra.mxu0 0
    %1256 = vmatprep.subr.bf16.mxu0 0
    %1257 = vmatpush1.bf16.msra.mxu0 0
    %1258 = vmatprep.subr.bf16.mxu0 0
    %1259 = vmatpush1.bf16.msra.mxu0 0
    %1260 = vmatprep.subr.bf16.mxu0 0
    %1261 = vmatpush1.bf16.msra.mxu0 0
    %1262 = vmatprep.subr.bf16.mxu0 0
    %1263 = vmatpush1.bf16.msra.mxu0 0
    %1264 = vmatprep.subr.bf16.mxu0 0
    %1265 = vmatpush1.bf16.msra.mxu0 0
    %1266 = vmatprep.subr.bf16.mxu0 0
    %1267 = vmatpush1.bf16.msra.mxu0 0
    %1268 = vmatprep.mubr.bf16.mxu0 0
    %1269 = vmatmul.mubr.bf16.gmra.mrb[0].mxu0 %v758
    %v1270 = vpop.f32.mrb[0].mxu0
    %v1271 = vadd.f32 %v1025, %v1270
    %v1272 = vpop.f32.mrb[0].mxu0
    %v1273 = vadd.f32 %v1027, %v1272
    %v1274 = vpop.f32.mrb[0].mxu0
    %v1275 = vadd.f32 %v1029, %v1274
    %v1276 = vpop.f32.mrb[0].mxu0
    %v1277 = vadd.f32 %v1031, %v1276
    %1278 = vdwg.mxu0
    %1279 = vmatprep.subr.bf16.mxu0 %v1175
    %1280 = vmatpush1.bf16.msra.mxu0 %v1174
    %1281 = vmatprep.subr.bf16.mxu0 %v1179
    %1282 = vmatpush1.bf16.msra.mxu0 %v1178
    %1283 = vmatprep.subr.bf16.mxu0 %v1183
    %1284 = vmatpush1.bf16.msra.mxu0 %v1182
    %1285 = vmatprep.subr.bf16.mxu0 %v1187
    %1286 = vmatpush1.bf16.msra.mxu0 %v1186
    %1287 = vmatprep.subr.bf16.mxu0 %v1191
    %1288 = vmatpush1.bf16.msra.mxu0 %v1190
    %1289 = vmatprep.subr.bf16.mxu0 %v1195
    %1290 = vmatpush1.bf16.msra.mxu0 %v1194
    %1291 = vmatprep.subr.bf16.mxu0 %v1199
    %1292 = vmatpush1.bf16.msra.mxu0 %v1198
    %1293 = vmatprep.subr.bf16.mxu0 %v1203
    %1294 = vmatpush1.bf16.msra.mxu0 %v1202
    %1295 = vmatprep.subr.bf16.mxu0 0
    %1296 = vmatpush1.bf16.msra.mxu0 0
    %1297 = vmatprep.subr.bf16.mxu0 0
    %1298 = vmatpush1.bf16.msra.mxu0 0
    %1299 = vmatprep.subr.bf16.mxu0 0
    %1300 = vmatpush1.bf16.msra.mxu0 0
    %1301 = vmatprep.subr.bf16.mxu0 0
    %1302 = vmatpush1.bf16.msra.mxu0 0
    %1303 = vmatprep.subr.bf16.mxu0 0
    %1304 = vmatpush1.bf16.msra.mxu0 0
    %1305 = vmatprep.subr.bf16.mxu0 0
    %1306 = vmatpush1.bf16.msra.mxu0 0
    %1307 = vmatprep.subr.bf16.mxu0 0
    %1308 = vmatpush1.bf16.msra.mxu0 0
    %1309 = vmatprep.subr.bf16.mxu0 0
    %1310 = vmatpush1.bf16.msra.mxu0 0
    %1311 = vmatprep.mubr.bf16.mxu0 0
    %1312 = vmatmul.mubr.bf16.gmra.mrb[0].mxu0 %v758
    %v1313 = vpop.f32.mrb[0].mxu0
    %v1314 = vadd.f32 %v1068, %v1313
    %v1315 = vpop.f32.mrb[0].mxu0
    %v1316 = vadd.f32 %v1070, %v1315
    %v1317 = vpop.f32.mrb[0].mxu0
    %v1318 = vadd.f32 %v1072, %v1317
    %v1319 = vpop.f32.mrb[0].mxu0
    %v1320 = vadd.f32 %v1074, %v1319
    %1321 = vdwg.mxu0
    %v1322 = vld [vmem:[%s6] sm:$0xf]
    %v1324 = vlaneseq
    %v1325 = vshrl.u32 %v1324, 7
    %v1326 = vsub.s32 0, %v1325
    %v1327 = vrot.slane %v1322, %v1326
    %v1328 = vlaneseq
    %v1329 = vshrl.u32 %v1328, 7
    %v1330 = vsub.s32 1, %v1329
    %v1331 = vrot.slane %v1322, %v1330
    %v1332 = vlaneseq
    %v1333 = vshrl.u32 %v1332, 7
    %v1334 = vsub.s32 2, %v1333
    %v1335 = vrot.slane %v1322, %v1334
    %v1336 = vlaneseq
    %v1337 = vshrl.u32 %v1336, 7
    %v1338 = vsub.s32 3, %v1337
    %v1339 = vrot.slane %v1322, %v1338
    %v1344 = vadd.f32 %v1271, %v1327
    %v1345 = vadd.f32 %v1273, %v1331
    %v1346 = vadd.f32 %v1314, %v1335
    %v1347 = vadd.f32 %v1316, %v1339
    %v1348 = vadd.f32 %v1275, %v1327
    %v1349 = vadd.f32 %v1277, %v1331
    %v1350 = vadd.f32 %v1318, %v1335
    %v1351 = vadd.f32 %v1320, %v1339
    %v1352 = vxor.u32 %v1344, 2147483648
    %v1353 = vxor.u32 %v1348, 2147483648
    %v1354 = vmul.f32 %v1352, 1.442695
    %v1355 = vpow.pop %v1354
    %v1356 = vmul.f32 %v1353, 1.442695
    %v1357 = vpow.pop %v1356
    %v1358 = vadd.f32 %v1355, 1.0
    %v1359 = vadd.f32 %v1357, 1.0
    %v1360 = vrcp.pop %v1358
    %v1361 = vmul.f32 1.0, %v1360
    %v1362 = vrcp.pop %v1359
    %v1363 = vmul.f32 1.0, %v1362
    %v1364 = vxor.u32 %v1345, 2147483648
    %v1365 = vxor.u32 %v1349, 2147483648
    %v1366 = vmul.f32 %v1364, 1.442695
    %v1367 = vpow.pop %v1366
    %v1368 = vmul.f32 %v1365, 1.442695
    %v1369 = vpow.pop %v1368
    %v1370 = vadd.f32 %v1367, 1.0
    %v1371 = vadd.f32 %v1369, 1.0
    %v1372 = vrcp.pop %v1370
    %v1373 = vmul.f32 1.0, %v1372
    %v1374 = vrcp.pop %v1371
    %v1375 = vmul.f32 1.0, %v1374
    %v1376 = vtanh.pop %v1346
    %v1377 = vtanh.pop %v1350
    %v1378 = vxor.u32 %v1347, 2147483648
    %v1379 = vxor.u32 %v1351, 2147483648
    %v1380 = vmul.f32 %v1378, 1.442695
    %v1381 = vpow.pop %v1380
    %v1382 = vmul.f32 %v1379, 1.442695
    %v1383 = vpow.pop %v1382
    %v1384 = vadd.f32 %v1381, 1.0
    %v1385 = vadd.f32 %v1383, 1.0
    %v1386 = vrcp.pop %v1384
    %v1387 = vmul.f32 1.0, %v1386
    %v1388 = vrcp.pop %v1385
    %v1389 = vmul.f32 1.0, %v1388
    %v1390 = vmul.f32 %v1373, %v763
    %v1391 = vmul.f32 %v1375, %v764
    %v1392 = vmul.f32 %v1361, %v1376
    %v1393 = vmul.f32 %v1363, %v1377
    %v1394 = vadd.f32 %v1390, %v1392
    %v1395 = vadd.f32 %v1391, %v1393
    %v1396 = vtanh.pop %v1394
    %v1397 = vtanh.pop %v1395
    %v1398 = vmul.f32 %v1387, %v1396
    %v1399 = vmul.f32 %v1389, %v1397
    %1400 = vst [vmem:[%s759] sm:$0xff] %v1398
    %1401 = vst [vmem:[%s759 + $0x8] sm:$0xff] %v1399
    %1402 = vst [vmem:[%s762] sm:$0xff] %v1394
    %1403 = vst [vmem:[%s762 + $0x8] sm:$0xff] %v1395
    %s1404 = scalar_lea.vmem [#allocation4], 8
    %v1405 = vld [vmem:[%s1404] sm:$0xf]
    %v1406 = vld [vmem:[%s1404 + $0x4] sm:$0xf]
    %v1407 = vld [vmem:[#allocation2] sm:$0xff]
    %v1408 = vld [vmem:[#allocation2 + $0x8] sm:$0xff]
    %v1409 = vld [vmem:[#allocation3] sm:$0xff]
    %v1410 = vld [vmem:[#allocation3 + $0x8] sm:$0xff]
    %v1411 = vld [vmem:[#allocation7] sm:$0xff]
    %v1412 = vld [vmem:[#allocation7 + $0x8] sm:$0xff]
    %v1413 = vld [vmem:[#allocation7 + $0x10] sm:$0xff]
    %v1414 = vld [vmem:[#allocation7 + $0x18] sm:$0xff]
    %v1415 = vld [vmem:[#allocation7 + $0x20] sm:$0xff]
    %v1416 = vld [vmem:[#allocation7 + $0x28] sm:$0xff]
    %v1417 = vld [vmem:[#allocation7 + $0x30] sm:$0xff]
    %v1418 = vld [vmem:[#allocation7 + $0x38] sm:$0xff]
    %v1419 = vld [vmem:[#allocation7 + $0x40] sm:$0xff]
    %v1420 = vld [vmem:[#allocation7 + $0x48] sm:$0xff]
    %v1421 = vld [vmem:[#allocation7 + $0x50] sm:$0xff]
    %v1422 = vld [vmem:[#allocation7 + $0x58] sm:$0xff]
    %v1423 = vld [vmem:[#allocation7 + $0x60] sm:$0xff]
    %v1424 = vld [vmem:[#allocation7 + $0x68] sm:$0xff]
    %v1425 = vld [vmem:[#allocation7 + $0x70] sm:$0xff]
    %v1426 = vld [vmem:[#allocation7 + $0x78] sm:$0xff]
    %v1427 = vld [vmem:[#allocation7 + $0x80] sm:$0xff]
    %v1428 = vld [vmem:[#allocation7 + $0x88] sm:$0xff]
    %v1429 = vld [vmem:[#allocation7 + $0x90] sm:$0xff]
    %v1430 = vld [vmem:[#allocation7 + $0x98] sm:$0xff]
    %v1431 = vld [vmem:[#allocation7 + $0xa0] sm:$0xff]
    %v1432 = vld [vmem:[#allocation7 + $0xa8] sm:$0xff]
    %v1433 = vld [vmem:[#allocation7 + $0xb0] sm:$0xff]
    %v1434 = vld [vmem:[#allocation7 + $0xb8] sm:$0xff]
    %v1435 = vld [vmem:[#allocation7 + $0xc0] sm:$0xff]
    %v1436 = vld [vmem:[#allocation7 + $0xc8] sm:$0xff]
    %v1437 = vld [vmem:[#allocation7 + $0xd0] sm:$0xff]
    %v1438 = vld [vmem:[#allocation7 + $0xd8] sm:$0xff]
    %v1439 = vld [vmem:[#allocation7 + $0xe0] sm:$0xff]
    %v1440 = vld [vmem:[#allocation7 + $0xe8] sm:$0xff]
    %v1441 = vld [vmem:[#allocation7 + $0xf0] sm:$0xff]
    %v1442 = vld [vmem:[#allocation7 + $0xf8] sm:$0xff]
    %v1443 = vpack.c.bf16 %v1408, %v1407
    %v1444 = vld [vmem:[#allocation9] sm:$0xff]
    %v1445 = vld [vmem:[#allocation9 + $0x8] sm:$0xff]
    %v1446 = vld [vmem:[#allocation9 + $0x10] sm:$0xff]
    %v1447 = vld [vmem:[#allocation9 + $0x18] sm:$0xff]
    %v1448 = vld [vmem:[#allocation9 + $0x20] sm:$0xff]
    %v1449 = vld [vmem:[#allocation9 + $0x28] sm:$0xff]
    %v1450 = vld [vmem:[#allocation9 + $0x30] sm:$0xff]
    %v1451 = vld [vmem:[#allocation9 + $0x38] sm:$0xff]
    %v1452 = vld [vmem:[#allocation9 + $0x40] sm:$0xff]
    %v1453 = vld [vmem:[#allocation9 + $0x48] sm:$0xff]
    %v1454 = vld [vmem:[#allocation9 + $0x50] sm:$0xff]
    %v1455 = vld [vmem:[#allocation9 + $0x58] sm:$0xff]
    %v1456 = vld [vmem:[#allocation9 + $0x60] sm:$0xff]
    %v1457 = vld [vmem:[#allocation9 + $0x68] sm:$0xff]
    %v1458 = vld [vmem:[#allocation9 + $0x70] sm:$0xff]
    %v1459 = vld [vmem:[#allocation9 + $0x78] sm:$0xff]
    %v1460 = vld [vmem:[#allocation9 + $0x80] sm:$0xff]
    %v1461 = vld [vmem:[#allocation9 + $0x88] sm:$0xff]
    %v1462 = vld [vmem:[#allocation9 + $0x90] sm:$0xff]
    %v1463 = vld [vmem:[#allocation9 + $0x98] sm:$0xff]
    %v1464 = vld [vmem:[#allocation9 + $0xa0] sm:$0xff]
    %v1465 = vld [vmem:[#allocation9 + $0xa8] sm:$0xff]
    %v1466 = vld [vmem:[#allocation9 + $0xb0] sm:$0xff]
    %v1467 = vld [vmem:[#allocation9 + $0xb8] sm:$0xff]
    %v1468 = vld [vmem:[#allocation9 + $0xc0] sm:$0xff]
    %v1469 = vld [vmem:[#allocation9 + $0xc8] sm:$0xff]
    %v1470 = vld [vmem:[#allocation9 + $0xd0] sm:$0xff]
    %v1471 = vld [vmem:[#allocation9 + $0xd8] sm:$0xff]
    %v1472 = vld [vmem:[#allocation9 + $0xe0] sm:$0xff]
    %v1473 = vld [vmem:[#allocation9 + $0xe8] sm:$0xff]
    %v1474 = vld [vmem:[#allocation9 + $0xf0] sm:$0xff]
    %v1475 = vld [vmem:[#allocation9 + $0xf8] sm:$0xff]
    %v1508 = vunpack.c.l.b16 %v1444
    %v1509 = vunpack.c.h.b16 %v1444
    %v1510 = vunpack.c.l.b16 %v1445
    %v1511 = vunpack.c.h.b16 %v1445
    %v1512 = vunpack.c.l.b16 %v1446
    %v1513 = vunpack.c.h.b16 %v1446
    %v1514 = vunpack.c.l.b16 %v1447
    %v1515 = vunpack.c.h.b16 %v1447
    %v1516 = vunpack.c.l.b16 %v1448
    %v1517 = vunpack.c.h.b16 %v1448
    %v1518 = vunpack.c.l.b16 %v1449
    %v1519 = vunpack.c.h.b16 %v1449
    %v1520 = vunpack.c.l.b16 %v1450
    %v1521 = vunpack.c.h.b16 %v1450
    %v1522 = vunpack.c.l.b16 %v1451
    %v1523 = vunpack.c.h.b16 %v1451
    %v1524 = vunpack.c.l.b16 %v1452
    %v1525 = vunpack.c.h.b16 %v1452
    %v1526 = vunpack.c.l.b16 %v1453
    %v1527 = vunpack.c.h.b16 %v1453
    %v1528 = vunpack.c.l.b16 %v1454
    %v1529 = vunpack.c.h.b16 %v1454
    %v1530 = vunpack.c.l.b16 %v1455
    %v1531 = vunpack.c.h.b16 %v1455
    %v1532 = vunpack.c.l.b16 %v1456
    %v1533 = vunpack.c.h.b16 %v1456
    %v1534 = vunpack.c.l.b16 %v1457
    %v1535 = vunpack.c.h.b16 %v1457
    %v1536 = vunpack.c.l.b16 %v1458
    %v1537 = vunpack.c.h.b16 %v1458
    %v1538 = vunpack.c.l.b16 %v1459
    %v1539 = vunpack.c.h.b16 %v1459
    %v1540 = vunpack.c.l.b16 %v1460
    %v1541 = vunpack.c.h.b16 %v1460
    %v1542 = vunpack.c.l.b16 %v1461
    %v1543 = vunpack.c.h.b16 %v1461
    %v1544 = vunpack.c.l.b16 %v1462
    %v1545 = vunpack.c.h.b16 %v1462
    %v1546 = vunpack.c.l.b16 %v1463
    %v1547 = vunpack.c.h.b16 %v1463
    %v1548 = vunpack.c.l.b16 %v1464
    %v1549 = vunpack.c.h.b16 %v1464
    %v1550 = vunpack.c.l.b16 %v1465
    %v1551 = vunpack.c.h.b16 %v1465
    %v1552 = vunpack.c.l.b16 %v1466
    %v1553 = vunpack.c.h.b16 %v1466
    %v1554 = vunpack.c.l.b16 %v1467
    %v1555 = vunpack.c.h.b16 %v1467
    %v1556 = vunpack.c.l.b16 %v1468
    %v1557 = vunpack.c.h.b16 %v1468
    %v1558 = vunpack.c.l.b16 %v1469
    %v1559 = vunpack.c.h.b16 %v1469
    %v1560 = vunpack.c.l.b16 %v1470
    %v1561 = vunpack.c.h.b16 %v1470
    %v1562 = vunpack.c.l.b16 %v1471
    %v1563 = vunpack.c.h.b16 %v1471
    %v1564 = vunpack.c.l.b16 %v1472
    %v1565 = vunpack.c.h.b16 %v1472
    %v1566 = vunpack.c.l.b16 %v1473
    %v1567 = vunpack.c.h.b16 %v1473
    %v1568 = vunpack.c.l.b16 %v1474
    %v1569 = vunpack.c.h.b16 %v1474
    %v1570 = vunpack.c.l.b16 %v1475
    %v1571 = vunpack.c.h.b16 %v1475
    %v1572 = vpack.c.b16 %v1512, %v1508
    %v1573 = vpack.c.b16 %v1513, %v1509
    %v1574 = vpack.c.b16 %v1514, %v1510
    %v1575 = vpack.c.b16 %v1515, %v1511
    %v1576 = vpack.c.b16 %v1520, %v1516
    %v1577 = vpack.c.b16 %v1521, %v1517
    %v1578 = vpack.c.b16 %v1522, %v1518
    %v1579 = vpack.c.b16 %v1523, %v1519
    %v1580 = vpack.c.b16 %v1528, %v1524
    %v1581 = vpack.c.b16 %v1529, %v1525
    %v1582 = vpack.c.b16 %v1530, %v1526
    %v1583 = vpack.c.b16 %v1531, %v1527
    %v1584 = vpack.c.b16 %v1536, %v1532
    %v1585 = vpack.c.b16 %v1537, %v1533
    %v1586 = vpack.c.b16 %v1538, %v1534
    %v1587 = vpack.c.b16 %v1539, %v1535
    %v1588 = vpack.c.b16 %v1544, %v1540
    %v1589 = vpack.c.b16 %v1545, %v1541
    %v1590 = vpack.c.b16 %v1546, %v1542
    %v1591 = vpack.c.b16 %v1547, %v1543
    %v1592 = vpack.c.b16 %v1552, %v1548
    %v1593 = vpack.c.b16 %v1553, %v1549
    %v1594 = vpack.c.b16 %v1554, %v1550
    %v1595 = vpack.c.b16 %v1555, %v1551
    %v1596 = vpack.c.b16 %v1560, %v1556
    %v1597 = vpack.c.b16 %v1561, %v1557
    %v1598 = vpack.c.b16 %v1562, %v1558
    %v1599 = vpack.c.b16 %v1563, %v1559
    %v1600 = vpack.c.b16 %v1568, %v1564
    %v1601 = vpack.c.b16 %v1569, %v1565
    %v1602 = vpack.c.b16 %v1570, %v1566
    %v1603 = vpack.c.b16 %v1571, %v1567
    %1636 = vmatprep.subr.bf16.mxu0 %v1573
    %1637 = vmatpush1.bf16.msra.mxu0 %v1572
    %1638 = vmatprep.subr.bf16.mxu0 %v1577
    %1639 = vmatpush1.bf16.msra.mxu0 %v1576
    %1640 = vmatprep.subr.bf16.mxu0 %v1581
    %1641 = vmatpush1.bf16.msra.mxu0 %v1580
    %1642 = vmatprep.subr.bf16.mxu0 %v1585
    %1643 = vmatpush1.bf16.msra.mxu0 %v1584
    %1644 = vmatprep.subr.bf16.mxu0 %v1589
    %1645 = vmatpush1.bf16.msra.mxu0 %v1588
    %1646 = vmatprep.subr.bf16.mxu0 %v1593
    %1647 = vmatpush1.bf16.msra.mxu0 %v1592
    %1648 = vmatprep.subr.bf16.mxu0 %v1597
    %1649 = vmatpush1.bf16.msra.mxu0 %v1596
    %1650 = vmatprep.subr.bf16.mxu0 %v1601
    %1651 = vmatpush1.bf16.msra.mxu0 %v1600
    %1652 = vmatprep.subr.bf16.mxu0 0
    %1653 = vmatpush1.bf16.msra.mxu0 0
    %1654 = vmatprep.subr.bf16.mxu0 0
    %1655 = vmatpush1.bf16.msra.mxu0 0
    %1656 = vmatprep.subr.bf16.mxu0 0
    %1657 = vmatpush1.bf16.msra.mxu0 0
    %1658 = vmatprep.subr.bf16.mxu0 0
    %1659 = vmatpush1.bf16.msra.mxu0 0
    %1660 = vmatprep.subr.bf16.mxu0 0
    %1661 = vmatpush1.bf16.msra.mxu0 0
    %1662 = vmatprep.subr.bf16.mxu0 0
    %1663 = vmatpush1.bf16.msra.mxu0 0
    %1664 = vmatprep.subr.bf16.mxu0 0
    %1665 = vmatpush1.bf16.msra.mxu0 0
    %1666 = vmatprep.subr.bf16.mxu0 0
    %1667 = vmatpush1.bf16.msra.mxu0 0
    %1668 = vmatprep.mubr.bf16.mxu0 0
    %1669 = vmatmul.mubr.bf16.gmra.mrb[0].mxu0 %v1443
    %v1670 = vpop.f32.mrb[0].mxu0
    %v1671 = vadd.f32 0.0, %v1670
    %v1672 = vpop.f32.mrb[0].mxu0
    %v1673 = vadd.f32 0.0, %v1672
    %v1674 = vpop.f32.mrb[0].mxu0
    %v1675 = vadd.f32 0.0, %v1674
    %v1676 = vpop.f32.mrb[0].mxu0
    %v1677 = vadd.f32 0.0, %v1676
    %1678 = vdwg.mxu0
    %1679 = vmatprep.subr.bf16.mxu0 %v1575
    %1680 = vmatpush1.bf16.msra.mxu0 %v1574
    %1681 = vmatprep.subr.bf16.mxu0 %v1579
    %1682 = vmatpush1.bf16.msra.mxu0 %v1578
    %1683 = vmatprep.subr.bf16.mxu0 %v1583
    %1684 = vmatpush1.bf16.msra.mxu0 %v1582
    %1685 = vmatprep.subr.bf16.mxu0 %v1587
    %1686 = vmatpush1.bf16.msra.mxu0 %v1586
    %1687 = vmatprep.subr.bf16.mxu0 %v1591
    %1688 = vmatpush1.bf16.msra.mxu0 %v1590
    %1689 = vmatprep.subr.bf16.mxu0 %v1595
    %1690 = vmatpush1.bf16.msra.mxu0 %v1594
    %1691 = vmatprep.subr.bf16.mxu0 %v1599
    %1692 = vmatpush1.bf16.msra.mxu0 %v1598
    %1693 = vmatprep.subr.bf16.mxu0 %v1603
    %1694 = vmatpush1.bf16.msra.mxu0 %v1602
    %1695 = vmatprep.subr.bf16.mxu0 0
    %1696 = vmatpush1.bf16.msra.mxu0 0
    %1697 = vmatprep.subr.bf16.mxu0 0
    %1698 = vmatpush1.bf16.msra.mxu0 0
    %1699 = vmatprep.subr.bf16.mxu0 0
    %1700 = vmatpush1.bf16.msra.mxu0 0
    %1701 = vmatprep.subr.bf16.mxu0 0
    %1702 = vmatpush1.bf16.msra.mxu0 0
    %1703 = vmatprep.subr.bf16.mxu0 0
    %1704 = vmatpush1.bf16.msra.mxu0 0
    %1705 = vmatprep.subr.bf16.mxu0 0
    %1706 = vmatpush1.bf16.msra.mxu0 0
    %1707 = vmatprep.subr.bf16.mxu0 0
    %1708 = vmatpush1.bf16.msra.mxu0 0
    %1709 = vmatprep.subr.bf16.mxu0 0
    %1710 = vmatpush1.bf16.msra.mxu0 0
    %1711 = vmatprep.mubr.bf16.mxu0 0
    %1712 = vmatmul.mubr.bf16.gmra.mrb[0].mxu0 %v1443
    %v1713 = vpop.f32.mrb[0].mxu0
    %v1714 = vadd.f32 0.0, %v1713
    %v1715 = vpop.f32.mrb[0].mxu0
    %v1716 = vadd.f32 0.0, %v1715
    %v1717 = vpop.f32.mrb[0].mxu0
    %v1718 = vadd.f32 0.0, %v1717
    %v1719 = vpop.f32.mrb[0].mxu0
    %v1720 = vadd.f32 0.0, %v1719
    %1721 = vdwg.mxu0
    %v1724 = vunpack.c.l.b16 %v1405
    %v1725 = vunpack.c.l.b16 %v1406
    %v1726 = vpack.c.b16 %v1725, %v1724
    %v1760 = vunpack.c.l.b16 %v1411
    %v1761 = vunpack.c.h.b16 %v1411
    %v1762 = vunpack.c.l.b16 %v1412
    %v1763 = vunpack.c.h.b16 %v1412
    %v1764 = vunpack.c.l.b16 %v1413
    %v1765 = vunpack.c.h.b16 %v1413
    %v1766 = vunpack.c.l.b16 %v1414
    %v1767 = vunpack.c.h.b16 %v1414
    %v1768 = vunpack.c.l.b16 %v1415
    %v1769 = vunpack.c.h.b16 %v1415
    %v1770 = vunpack.c.l.b16 %v1416
    %v1771 = vunpack.c.h.b16 %v1416
    %v1772 = vunpack.c.l.b16 %v1417
    %v1773 = vunpack.c.h.b16 %v1417
    %v1774 = vunpack.c.l.b16 %v1418
    %v1775 = vunpack.c.h.b16 %v1418
    %v1776 = vunpack.c.l.b16 %v1419
    %v1777 = vunpack.c.h.b16 %v1419
    %v1778 = vunpack.c.l.b16 %v1420
    %v1779 = vunpack.c.h.b16 %v1420
    %v1780 = vunpack.c.l.b16 %v1421
    %v1781 = vunpack.c.h.b16 %v1421
    %v1782 = vunpack.c.l.b16 %v1422
    %v1783 = vunpack.c.h.b16 %v1422
    %v1784 = vunpack.c.l.b16 %v1423
    %v1785 = vunpack.c.h.b16 %v1423
    %v1786 = vunpack.c.l.b16 %v1424
    %v1787 = vunpack.c.h.b16 %v1424
    %v1788 = vunpack.c.l.b16 %v1425
    %v1789 = vunpack.c.h.b16 %v1425
    %v1790 = vunpack.c.l.b16 %v1426
    %v1791 = vunpack.c.h.b16 %v1426
    %v1792 = vunpack.c.l.b16 %v1427
    %v1793 = vunpack.c.h.b16 %v1427
    %v1794 = vunpack.c.l.b16 %v1428
    %v1795 = vunpack.c.h.b16 %v1428
    %v1796 = vunpack.c.l.b16 %v1429
    %v1797 = vunpack.c.h.b16 %v1429
    %v1798 = vunpack.c.l.b16 %v1430
    %v1799 = vunpack.c.h.b16 %v1430
    %v1800 = vunpack.c.l.b16 %v1431
    %v1801 = vunpack.c.h.b16 %v1431
    %v1802 = vunpack.c.l.b16 %v1432
    %v1803 = vunpack.c.h.b16 %v1432
    %v1804 = vunpack.c.l.b16 %v1433
    %v1805 = vunpack.c.h.b16 %v1433
    %v1806 = vunpack.c.l.b16 %v1434
    %v1807 = vunpack.c.h.b16 %v1434
    %v1808 = vunpack.c.l.b16 %v1435
    %v1809 = vunpack.c.h.b16 %v1435
    %v1810 = vunpack.c.l.b16 %v1436
    %v1811 = vunpack.c.h.b16 %v1436
    %v1812 = vunpack.c.l.b16 %v1437
    %v1813 = vunpack.c.h.b16 %v1437
    %v1814 = vunpack.c.l.b16 %v1438
    %v1815 = vunpack.c.h.b16 %v1438
    %v1816 = vunpack.c.l.b16 %v1439
    %v1817 = vunpack.c.h.b16 %v1439
    %v1818 = vunpack.c.l.b16 %v1440
    %v1819 = vunpack.c.h.b16 %v1440
    %v1820 = vunpack.c.l.b16 %v1441
    %v1821 = vunpack.c.h.b16 %v1441
    %v1822 = vunpack.c.l.b16 %v1442
    %v1823 = vunpack.c.h.b16 %v1442
    %v1824 = vpack.c.b16 %v1764, %v1760
    %v1825 = vpack.c.b16 %v1765, %v1761
    %v1826 = vpack.c.b16 %v1766, %v1762
    %v1827 = vpack.c.b16 %v1767, %v1763
    %v1828 = vpack.c.b16 %v1772, %v1768
    %v1829 = vpack.c.b16 %v1773, %v1769
    %v1830 = vpack.c.b16 %v1774, %v1770
    %v1831 = vpack.c.b16 %v1775, %v1771
    %v1832 = vpack.c.b16 %v1780, %v1776
    %v1833 = vpack.c.b16 %v1781, %v1777
    %v1834 = vpack.c.b16 %v1782, %v1778
    %v1835 = vpack.c.b16 %v1783, %v1779
    %v1836 = vpack.c.b16 %v1788, %v1784
    %v1837 = vpack.c.b16 %v1789, %v1785
    %v1838 = vpack.c.b16 %v1790, %v1786
    %v1839 = vpack.c.b16 %v1791, %v1787
    %v1840 = vpack.c.b16 %v1796, %v1792
    %v1841 = vpack.c.b16 %v1797, %v1793
    %v1842 = vpack.c.b16 %v1798, %v1794
    %v1843 = vpack.c.b16 %v1799, %v1795
    %v1844 = vpack.c.b16 %v1804, %v1800
    %v1845 = vpack.c.b16 %v1805, %v1801
    %v1846 = vpack.c.b16 %v1806, %v1802
    %v1847 = vpack.c.b16 %v1807, %v1803
    %v1848 = vpack.c.b16 %v1812, %v1808
    %v1849 = vpack.c.b16 %v1813, %v1809
    %v1850 = vpack.c.b16 %v1814, %v1810
    %v1851 = vpack.c.b16 %v1815, %v1811
    %v1852 = vpack.c.b16 %v1820, %v1816
    %v1853 = vpack.c.b16 %v1821, %v1817
    %v1854 = vpack.c.b16 %v1822, %v1818
    %v1855 = vpack.c.b16 %v1823, %v1819
    %1888 = vmatprep.subr.bf16.mxu0 %v1825
    %1889 = vmatpush1.bf16.msra.mxu0 %v1824
    %1890 = vmatprep.subr.bf16.mxu0 %v1829
    %1891 = vmatpush1.bf16.msra.mxu0 %v1828
    %1892 = vmatprep.subr.bf16.mxu0 %v1833
    %1893 = vmatpush1.bf16.msra.mxu0 %v1832
    %1894 = vmatprep.subr.bf16.mxu0 %v1837
    %1895 = vmatpush1.bf16.msra.mxu0 %v1836
    %1896 = vmatprep.subr.bf16.mxu0 %v1841
    %1897 = vmatpush1.bf16.msra.mxu0 %v1840
    %1898 = vmatprep.subr.bf16.mxu0 %v1845
    %1899 = vmatpush1.bf16.msra.mxu0 %v1844
    %1900 = vmatprep.subr.bf16.mxu0 %v1849
    %1901 = vmatpush1.bf16.msra.mxu0 %v1848
    %1902 = vmatprep.subr.bf16.mxu0 %v1853
    %1903 = vmatpush1.bf16.msra.mxu0 %v1852
    %1904 = vmatprep.subr.bf16.mxu0 0
    %1905 = vmatpush1.bf16.msra.mxu0 0
    %1906 = vmatprep.subr.bf16.mxu0 0
    %1907 = vmatpush1.bf16.msra.mxu0 0
    %1908 = vmatprep.subr.bf16.mxu0 0
    %1909 = vmatpush1.bf16.msra.mxu0 0
    %1910 = vmatprep.subr.bf16.mxu0 0
    %1911 = vmatpush1.bf16.msra.mxu0 0
    %1912 = vmatprep.subr.bf16.mxu0 0
    %1913 = vmatpush1.bf16.msra.mxu0 0
    %1914 = vmatprep.subr.bf16.mxu0 0
    %1915 = vmatpush1.bf16.msra.mxu0 0
    %1916 = vmatprep.subr.bf16.mxu0 0
    %1917 = vmatpush1.bf16.msra.mxu0 0
    %1918 = vmatprep.subr.bf16.mxu0 0
    %1919 = vmatpush1.bf16.msra.mxu0 0
    %1920 = vmatprep.mubr.bf16.mxu0 0
    %1921 = vmatmul.mubr.bf16.gmra.mrb[0].mxu0 %v1726
    %v1922 = vpop.f32.mrb[0].mxu0
    %v1923 = vadd.f32 %v1671, %v1922
    %v1924 = vpop.f32.mrb[0].mxu0
    %v1925 = vadd.f32 %v1673, %v1924
    %v1926 = vpop.f32.mrb[0].mxu0
    %v1927 = vadd.f32 %v1675, %v1926
    %v1928 = vpop.f32.mrb[0].mxu0
    %v1929 = vadd.f32 %v1677, %v1928
    %1930 = vdwg.mxu0
    %1931 = vmatprep.subr.bf16.mxu0 %v1827
    %1932 = vmatpush1.bf16.msra.mxu0 %v1826
    %1933 = vmatprep.subr.bf16.mxu0 %v1831
    %1934 = vmatpush1.bf16.msra.mxu0 %v1830
    %1935 = vmatprep.subr.bf16.mxu0 %v1835
    %1936 = vmatpush1.bf16.msra.mxu0 %v1834
    %1937 = vmatprep.subr.bf16.mxu0 %v1839
    %1938 = vmatpush1.bf16.msra.mxu0 %v1838
    %1939 = vmatprep.subr.bf16.mxu0 %v1843
    %1940 = vmatpush1.bf16.msra.mxu0 %v1842
    %1941 = vmatprep.subr.bf16.mxu0 %v1847
    %1942 = vmatpush1.bf16.msra.mxu0 %v1846
    %1943 = vmatprep.subr.bf16.mxu0 %v1851
    %1944 = vmatpush1.bf16.msra.mxu0 %v1850
    %1945 = vmatprep.subr.bf16.mxu0 %v1855
    %1946 = vmatpush1.bf16.msra.mxu0 %v1854
    %1947 = vmatprep.subr.bf16.mxu0 0
    %1948 = vmatpush1.bf16.msra.mxu0 0
    %1949 = vmatprep.subr.bf16.mxu0 0
    %1950 = vmatpush1.bf16.msra.mxu0 0
    %1951 = vmatprep.subr.bf16.mxu0 0
    %1952 = vmatpush1.bf16.msra.mxu0 0
    %1953 = vmatprep.subr.bf16.mxu0 0
    %1954 = vmatpush1.bf16.msra.mxu0 0
    %1955 = vmatprep.subr.bf16.mxu0 0
    %1956 = vmatpush1.bf16.msra.mxu0 0
    %1957 = vmatprep.subr.bf16.mxu0 0
    %1958 = vmatpush1.bf16.msra.mxu0 0
    %1959 = vmatprep.subr.bf16.mxu0 0
    %1960 = vmatpush1.bf16.msra.mxu0 0
    %1961 = vmatprep.subr.bf16.mxu0 0
    %1962 = vmatpush1.bf16.msra.mxu0 0
    %1963 = vmatprep.mubr.bf16.mxu0 0
    %1964 = vmatmul.mubr.bf16.gmra.mrb[0].mxu0 %v1726
    %v1965 = vpop.f32.mrb[0].mxu0
    %v1966 = vadd.f32 %v1714, %v1965
    %v1967 = vpop.f32.mrb[0].mxu0
    %v1968 = vadd.f32 %v1716, %v1967
    %v1969 = vpop.f32.mrb[0].mxu0
    %v1970 = vadd.f32 %v1718, %v1969
    %v1971 = vpop.f32.mrb[0].mxu0
    %v1972 = vadd.f32 %v1720, %v1971
    %1973 = vdwg.mxu0
    %v1974 = vld [vmem:[%s3] sm:$0xf]
    %v1976 = vlaneseq
    %v1977 = vshrl.u32 %v1976, 7
    %v1978 = vsub.s32 0, %v1977
    %v1979 = vrot.slane %v1974, %v1978
    %v1980 = vlaneseq
    %v1981 = vshrl.u32 %v1980, 7
    %v1982 = vsub.s32 1, %v1981
    %v1983 = vrot.slane %v1974, %v1982
    %v1984 = vlaneseq
    %v1985 = vshrl.u32 %v1984, 7
    %v1986 = vsub.s32 2, %v1985
    %v1987 = vrot.slane %v1974, %v1986
    %v1988 = vlaneseq
    %v1989 = vshrl.u32 %v1988, 7
    %v1990 = vsub.s32 3, %v1989
    %v1991 = vrot.slane %v1974, %v1990
    %v1996 = vadd.f32 %v1923, %v1979
    %v1997 = vadd.f32 %v1925, %v1983
    %v1998 = vadd.f32 %v1966, %v1987
    %v1999 = vadd.f32 %v1968, %v1991
    %v2000 = vadd.f32 %v1927, %v1979
    %v2001 = vadd.f32 %v1929, %v1983
    %v2002 = vadd.f32 %v1970, %v1987
    %v2003 = vadd.f32 %v1972, %v1991
    %v2004 = vxor.u32 %v1996, 2147483648
    %v2005 = vxor.u32 %v2000, 2147483648
    %v2006 = vmul.f32 %v2004, 1.442695
    %v2007 = vpow.pop %v2006
    %v2008 = vmul.f32 %v2005, 1.442695
    %v2009 = vpow.pop %v2008
    %v2010 = vadd.f32 %v2007, 1.0
    %v2011 = vadd.f32 %v2009, 1.0
    %v2012 = vrcp.pop %v2010
    %v2013 = vmul.f32 1.0, %v2012
    %v2014 = vrcp.pop %v2011
    %v2015 = vmul.f32 1.0, %v2014
    %v2016 = vxor.u32 %v1997, 2147483648
    %v2017 = vxor.u32 %v2001, 2147483648
    %v2018 = vmul.f32 %v2016, 1.442695
    %v2019 = vpow.pop %v2018
    %v2020 = vmul.f32 %v2017, 1.442695
    %v2021 = vpow.pop %v2020
    %v2022 = vadd.f32 %v2019, 1.0
    %v2023 = vadd.f32 %v2021, 1.0
    %v2024 = vrcp.pop %v2022
    %v2025 = vmul.f32 1.0, %v2024
    %v2026 = vrcp.pop %v2023
    %v2027 = vmul.f32 1.0, %v2026
    %v2028 = vtanh.pop %v1998
    %v2029 = vtanh.pop %v2002
    %v2030 = vxor.u32 %v1999, 2147483648
    %v2031 = vxor.u32 %v2003, 2147483648
    %v2032 = vmul.f32 %v2030, 1.442695
    %v2033 = vpow.pop %v2032
    %v2034 = vmul.f32 %v2031, 1.442695
    %v2035 = vpow.pop %v2034
    %v2036 = vadd.f32 %v2033, 1.0
    %v2037 = vadd.f32 %v2035, 1.0
    %v2038 = vrcp.pop %v2036
    %v2039 = vmul.f32 1.0, %v2038
    %v2040 = vrcp.pop %v2037
    %v2041 = vmul.f32 1.0, %v2040
    %v2042 = vmul.f32 %v2025, %v1409
    %v2043 = vmul.f32 %v2027, %v1410
    %v2044 = vmul.f32 %v2013, %v2028
    %v2045 = vmul.f32 %v2015, %v2029
    %v2046 = vadd.f32 %v2042, %v2044
    %v2047 = vadd.f32 %v2043, %v2045
    %v2048 = vtanh.pop %v2046
    %v2049 = vtanh.pop %v2047
    %v2050 = vmul.f32 %v2039, %v2048
    %v2051 = vmul.f32 %v2041, %v2049
    %2052 = vst [vmem:[#allocation2] sm:$0xff] %v2050
    %2053 = vst [vmem:[#allocation2 + $0x8] sm:$0xff] %v2051
    %2054 = vst [vmem:[#allocation3] sm:$0xff] %v2046
    %2055 = vst [vmem:[#allocation3 + $0x8] sm:$0xff] %v2047
    %v2056 = vpack.c.bf16 %v2051, %v2050
    %v2057 = vld [vmem:[%s759] sm:$0xff]
    %v2058 = vld [vmem:[%s759 + $0x8] sm:$0xff]
    %v2059 = vld [vmem:[%s762] sm:$0xff]
    %v2060 = vld [vmem:[%s762 + $0x8] sm:$0xff]
    %v2061 = vld [vmem:[#allocation10] sm:$0xff]
    %v2062 = vld [vmem:[#allocation10 + $0x8] sm:$0xff]
    %v2063 = vld [vmem:[#allocation10 + $0x10] sm:$0xff]
    %v2064 = vld [vmem:[#allocation10 + $0x18] sm:$0xff]
    %v2065 = vld [vmem:[#allocation10 + $0x20] sm:$0xff]
    %v2066 = vld [vmem:[#allocation10 + $0x28] sm:$0xff]
    %v2067 = vld [vmem:[#allocation10 + $0x30] sm:$0xff]
    %v2068 = vld [vmem:[#allocation10 + $0x38] sm:$0xff]
    %v2069 = vld [vmem:[#allocation10 + $0x40] sm:$0xff]
    %v2070 = vld [vmem:[#allocation10 + $0x48] sm:$0xff]
    %v2071 = vld [vmem:[#allocation10 + $0x50] sm:$0xff]
    %v2072 = vld [vmem:[#allocation10 + $0x58] sm:$0xff]
    %v2073 = vld [vmem:[#allocation10 + $0x60] sm:$0xff]
    %v2074 = vld [vmem:[#allocation10 + $0x68] sm:$0xff]
    %v2075 = vld [vmem:[#allocation10 + $0x70] sm:$0xff]
    %v2076 = vld [vmem:[#allocation10 + $0x78] sm:$0xff]
    %v2077 = vld [vmem:[#allocation10 + $0x80] sm:$0xff]
    %v2078 = vld [vmem:[#allocation10 + $0x88] sm:$0xff]
    %v2079 = vld [vmem:[#allocation10 + $0x90] sm:$0xff]
    %v2080 = vld [vmem:[#allocation10 + $0x98] sm:$0xff]
    %v2081 = vld [vmem:[#allocation10 + $0xa0] sm:$0xff]
    %v2082 = vld [vmem:[#allocation10 + $0xa8] sm:$0xff]
    %v2083 = vld [vmem:[#allocation10 + $0xb0] sm:$0xff]
    %v2084 = vld [vmem:[#allocation10 + $0xb8] sm:$0xff]
    %v2085 = vld [vmem:[#allocation10 + $0xc0] sm:$0xff]
    %v2086 = vld [vmem:[#allocation10 + $0xc8] sm:$0xff]
    %v2087 = vld [vmem:[#allocation10 + $0xd0] sm:$0xff]
    %v2088 = vld [vmem:[#allocation10 + $0xd8] sm:$0xff]
    %v2089 = vld [vmem:[#allocation10 + $0xe0] sm:$0xff]
    %v2090 = vld [vmem:[#allocation10 + $0xe8] sm:$0xff]
    %v2091 = vld [vmem:[#allocation10 + $0xf0] sm:$0xff]
    %v2092 = vld [vmem:[#allocation10 + $0xf8] sm:$0xff]
    %v2093 = vpack.c.bf16 %v2058, %v2057
    %v2094 = vld [vmem:[#allocation12] sm:$0xff]
    %v2095 = vld [vmem:[#allocation12 + $0x8] sm:$0xff]
    %v2096 = vld [vmem:[#allocation12 + $0x10] sm:$0xff]
    %v2097 = vld [vmem:[#allocation12 + $0x18] sm:$0xff]
    %v2098 = vld [vmem:[#allocation12 + $0x20] sm:$0xff]
    %v2099 = vld [vmem:[#allocation12 + $0x28] sm:$0xff]
    %v2100 = vld [vmem:[#allocation12 + $0x30] sm:$0xff]
    %v2101 = vld [vmem:[#allocation12 + $0x38] sm:$0xff]
    %v2102 = vld [vmem:[#allocation12 + $0x40] sm:$0xff]
    %v2103 = vld [vmem:[#allocation12 + $0x48] sm:$0xff]
    %v2104 = vld [vmem:[#allocation12 + $0x50] sm:$0xff]
    %v2105 = vld [vmem:[#allocation12 + $0x58] sm:$0xff]
    %v2106 = vld [vmem:[#allocation12 + $0x60] sm:$0xff]
    %v2107 = vld [vmem:[#allocation12 + $0x68] sm:$0xff]
    %v2108 = vld [vmem:[#allocation12 + $0x70] sm:$0xff]
    %v2109 = vld [vmem:[#allocation12 + $0x78] sm:$0xff]
    %v2110 = vld [vmem:[#allocation12 + $0x80] sm:$0xff]
    %v2111 = vld [vmem:[#allocation12 + $0x88] sm:$0xff]
    %v2112 = vld [vmem:[#allocation12 + $0x90] sm:$0xff]
    %v2113 = vld [vmem:[#allocation12 + $0x98] sm:$0xff]
    %v2114 = vld [vmem:[#allocation12 + $0xa0] sm:$0xff]
    %v2115 = vld [vmem:[#allocation12 + $0xa8] sm:$0xff]
    %v2116 = vld [vmem:[#allocation12 + $0xb0] sm:$0xff]
    %v2117 = vld [vmem:[#allocation12 + $0xb8] sm:$0xff]
    %v2118 = vld [vmem:[#allocation12 + $0xc0] sm:$0xff]
    %v2119 = vld [vmem:[#allocation12 + $0xc8] sm:$0xff]
    %v2120 = vld [vmem:[#allocation12 + $0xd0] sm:$0xff]
    %v2121 = vld [vmem:[#allocation12 + $0xd8] sm:$0xff]
    %v2122 = vld [vmem:[#allocation12 + $0xe0] sm:$0xff]
    %v2123 = vld [vmem:[#allocation12 + $0xe8] sm:$0xff]
    %v2124 = vld [vmem:[#allocation12 + $0xf0] sm:$0xff]
    %v2125 = vld [vmem:[#allocation12 + $0xf8] sm:$0xff]
    %v2158 = vunpack.c.l.b16 %v2094
    %v2159 = vunpack.c.h.b16 %v2094
    %v2160 = vunpack.c.l.b16 %v2095
    %v2161 = vunpack.c.h.b16 %v2095
    %v2162 = vunpack.c.l.b16 %v2096
    %v2163 = vunpack.c.h.b16 %v2096
    %v2164 = vunpack.c.l.b16 %v2097
    %v2165 = vunpack.c.h.b16 %v2097
    %v2166 = vunpack.c.l.b16 %v2098
    %v2167 = vunpack.c.h.b16 %v2098
    %v2168 = vunpack.c.l.b16 %v2099
    %v2169 = vunpack.c.h.b16 %v2099
    %v2170 = vunpack.c.l.b16 %v2100
    %v2171 = vunpack.c.h.b16 %v2100
    %v2172 = vunpack.c.l.b16 %v2101
    %v2173 = vunpack.c.h.b16 %v2101
    %v2174 = vunpack.c.l.b16 %v2102
    %v2175 = vunpack.c.h.b16 %v2102
    %v2176 = vunpack.c.l.b16 %v2103
    %v2177 = vunpack.c.h.b16 %v2103
    %v2178 = vunpack.c.l.b16 %v2104
    %v2179 = vunpack.c.h.b16 %v2104
    %v2180 = vunpack.c.l.b16 %v2105
    %v2181 = vunpack.c.h.b16 %v2105
    %v2182 = vunpack.c.l.b16 %v2106
    %v2183 = vunpack.c.h.b16 %v2106
    %v2184 = vunpack.c.l.b16 %v2107
    %v2185 = vunpack.c.h.b16 %v2107
    %v2186 = vunpack.c.l.b16 %v2108
    %v2187 = vunpack.c.h.b16 %v2108
    %v2188 = vunpack.c.l.b16 %v2109
    %v2189 = vunpack.c.h.b16 %v2109
    %v2190 = vunpack.c.l.b16 %v2110
    %v2191 = vunpack.c.h.b16 %v2110
    %v2192 = vunpack.c.l.b16 %v2111
    %v2193 = vunpack.c.h.b16 %v2111
    %v2194 = vunpack.c.l.b16 %v2112
    %v2195 = vunpack.c.h.b16 %v2112
    %v2196 = vunpack.c.l.b16 %v2113
    %v2197 = vunpack.c.h.b16 %v2113
    %v2198 = vunpack.c.l.b16 %v2114
    %v2199 = vunpack.c.h.b16 %v2114
    %v2200 = vunpack.c.l.b16 %v2115
    %v2201 = vunpack.c.h.b16 %v2115
    %v2202 = vunpack.c.l.b16 %v2116
    %v2203 = vunpack.c.h.b16 %v2116
    %v2204 = vunpack.c.l.b16 %v2117
    %v2205 = vunpack.c.h.b16 %v2117
    %v2206 = vunpack.c.l.b16 %v2118
    %v2207 = vunpack.c.h.b16 %v2118
    %v2208 = vunpack.c.l.b16 %v2119
    %v2209 = vunpack.c.h.b16 %v2119
    %v2210 = vunpack.c.l.b16 %v2120
    %v2211 = vunpack.c.h.b16 %v2120
    %v2212 = vunpack.c.l.b16 %v2121
    %v2213 = vunpack.c.h.b16 %v2121
    %v2214 = vunpack.c.l.b16 %v2122
    %v2215 = vunpack.c.h.b16 %v2122
    %v2216 = vunpack.c.l.b16 %v2123
    %v2217 = vunpack.c.h.b16 %v2123
    %v2218 = vunpack.c.l.b16 %v2124
    %v2219 = vunpack.c.h.b16 %v2124
    %v2220 = vunpack.c.l.b16 %v2125
    %v2221 = vunpack.c.h.b16 %v2125
    %v2222 = vpack.c.b16 %v2162, %v2158
    %v2223 = vpack.c.b16 %v2163, %v2159
    %v2224 = vpack.c.b16 %v2164, %v2160
    %v2225 = vpack.c.b16 %v2165, %v2161
    %v2226 = vpack.c.b16 %v2170, %v2166
    %v2227 = vpack.c.b16 %v2171, %v2167
    %v2228 = vpack.c.b16 %v2172, %v2168
    %v2229 = vpack.c.b16 %v2173, %v2169
    %v2230 = vpack.c.b16 %v2178, %v2174
    %v2231 = vpack.c.b16 %v2179, %v2175
    %v2232 = vpack.c.b16 %v2180, %v2176
    %v2233 = vpack.c.b16 %v2181, %v2177
    %v2234 = vpack.c.b16 %v2186, %v2182
    %v2235 = vpack.c.b16 %v2187, %v2183
    %v2236 = vpack.c.b16 %v2188, %v2184
    %v2237 = vpack.c.b16 %v2189, %v2185
    %v2238 = vpack.c.b16 %v2194, %v2190
    %v2239 = vpack.c.b16 %v2195, %v2191
    %v2240 = vpack.c.b16 %v2196, %v2192
    %v2241 = vpack.c.b16 %v2197, %v2193
    %v2242 = vpack.c.b16 %v2202, %v2198
    %v2243 = vpack.c.b16 %v2203, %v2199
    %v2244 = vpack.c.b16 %v2204, %v2200
    %v2245 = vpack.c.b16 %v2205, %v2201
    %v2246 = vpack.c.b16 %v2210, %v2206
    %v2247 = vpack.c.b16 %v2211, %v2207
    %v2248 = vpack.c.b16 %v2212, %v2208
    %v2249 = vpack.c.b16 %v2213, %v2209
    %v2250 = vpack.c.b16 %v2218, %v2214
    %v2251 = vpack.c.b16 %v2219, %v2215
    %v2252 = vpack.c.b16 %v2220, %v2216
    %v2253 = vpack.c.b16 %v2221, %v2217
    %2286 = vmatprep.subr.bf16.mxu0 %v2223
    %2287 = vmatpush1.bf16.msra.mxu0 %v2222
    %2288 = vmatprep.subr.bf16.mxu0 %v2227
    %2289 = vmatpush1.bf16.msra.mxu0 %v2226
    %2290 = vmatprep.subr.bf16.mxu0 %v2231
    %2291 = vmatpush1.bf16.msra.mxu0 %v2230
    %2292 = vmatprep.subr.bf16.mxu0 %v2235
    %2293 = vmatpush1.bf16.msra.mxu0 %v2234
    %2294 = vmatprep.subr.bf16.mxu0 %v2239
    %2295 = vmatpush1.bf16.msra.mxu0 %v2238
    %2296 = vmatprep.subr.bf16.mxu0 %v2243
    %2297 = vmatpush1.bf16.msra.mxu0 %v2242
    %2298 = vmatprep.subr.bf16.mxu0 %v2247
    %2299 = vmatpush1.bf16.msra.mxu0 %v2246
    %2300 = vmatprep.subr.bf16.mxu0 %v2251
    %2301 = vmatpush1.bf16.msra.mxu0 %v2250
    %2302 = vmatprep.subr.bf16.mxu0 0
    %2303 = vmatpush1.bf16.msra.mxu0 0
    %2304 = vmatprep.subr.bf16.mxu0 0
    %2305 = vmatpush1.bf16.msra.mxu0 0
    %2306 = vmatprep.subr.bf16.mxu0 0
    %2307 = vmatpush1.bf16.msra.mxu0 0
    %2308 = vmatprep.subr.bf16.mxu0 0
    %2309 = vmatpush1.bf16.msra.mxu0 0
    %2310 = vmatprep.subr.bf16.mxu0 0
    %2311 = vmatpush1.bf16.msra.mxu0 0
    %2312 = vmatprep.subr.bf16.mxu0 0
    %2313 = vmatpush1.bf16.msra.mxu0 0
    %2314 = vmatprep.subr.bf16.mxu0 0
    %2315 = vmatpush1.bf16.msra.mxu0 0
    %2316 = vmatprep.subr.bf16.mxu0 0
    %2317 = vmatpush1.bf16.msra.mxu0 0
    %2318 = vmatprep.mubr.bf16.mxu0 0
    %2319 = vmatmul.mubr.bf16.gmra.mrb[0].mxu0 %v2093
    %v2320 = vpop.f32.mrb[0].mxu0
    %v2321 = vadd.f32 0.0, %v2320
    %v2322 = vpop.f32.mrb[0].mxu0
    %v2323 = vadd.f32 0.0, %v2322
    %v2324 = vpop.f32.mrb[0].mxu0
    %v2325 = vadd.f32 0.0, %v2324
    %v2326 = vpop.f32.mrb[0].mxu0
    %v2327 = vadd.f32 0.0, %v2326
    %2328 = vdwg.mxu0
    %2329 = vmatprep.subr.bf16.mxu0 %v2225
    %2330 = vmatpush1.bf16.msra.mxu0 %v2224
    %2331 = vmatprep.subr.bf16.mxu0 %v2229
    %2332 = vmatpush1.bf16.msra.mxu0 %v2228
    %2333 = vmatprep.subr.bf16.mxu0 %v2233
    %2334 = vmatpush1.bf16.msra.mxu0 %v2232
    %2335 = vmatprep.subr.bf16.mxu0 %v2237
    %2336 = vmatpush1.bf16.msra.mxu0 %v2236
    %2337 = vmatprep.subr.bf16.mxu0 %v2241
    %2338 = vmatpush1.bf16.msra.mxu0 %v2240
    %2339 = vmatprep.subr.bf16.mxu0 %v2245
    %2340 = vmatpush1.bf16.msra.mxu0 %v2244
    %2341 = vmatprep.subr.bf16.mxu0 %v2249
    %2342 = vmatpush1.bf16.msra.mxu0 %v2248
    %2343 = vmatprep.subr.bf16.mxu0 %v2253
    %2344 = vmatpush1.bf16.msra.mxu0 %v2252
    %2345 = vmatprep.subr.bf16.mxu0 0
    %2346 = vmatpush1.bf16.msra.mxu0 0
    %2347 = vmatprep.subr.bf16.mxu0 0
    %2348 = vmatpush1.bf16.msra.mxu0 0
    %2349 = vmatprep.subr.bf16.mxu0 0
    %2350 = vmatpush1.bf16.msra.mxu0 0
    %2351 = vmatprep.subr.bf16.mxu0 0
    %2352 = vmatpush1.bf16.msra.mxu0 0
    %2353 = vmatprep.subr.bf16.mxu0 0
    %2354 = vmatpush1.bf16.msra.mxu0 0
    %2355 = vmatprep.subr.bf16.mxu0 0
    %2356 = vmatpush1.bf16.msra.mxu0 0
    %2357 = vmatprep.subr.bf16.mxu0 0
    %2358 = vmatpush1.bf16.msra.mxu0 0
    %2359 = vmatprep.subr.bf16.mxu0 0
    %2360 = vmatpush1.bf16.msra.mxu0 0
    %2361 = vmatprep.mubr.bf16.mxu0 0
    %2362 = vmatmul.mubr.bf16.gmra.mrb[0].mxu0 %v2093
    %v2363 = vpop.f32.mrb[0].mxu0
    %v2364 = vadd.f32 0.0, %v2363
    %v2365 = vpop.f32.mrb[0].mxu0
    %v2366 = vadd.f32 0.0, %v2365
    %v2367 = vpop.f32.mrb[0].mxu0
    %v2368 = vadd.f32 0.0, %v2367
    %v2369 = vpop.f32.mrb[0].mxu0
    %v2370 = vadd.f32 0.0, %v2369
    %2371 = vdwg.mxu0
    %v2404 = vunpack.c.l.b16 %v2061
    %v2405 = vunpack.c.h.b16 %v2061
    %v2406 = vunpack.c.l.b16 %v2062
    %v2407 = vunpack.c.h.b16 %v2062
    %v2408 = vunpack.c.l.b16 %v2063
    %v2409 = vunpack.c.h.b16 %v2063
    %v2410 = vunpack.c.l.b16 %v2064
    %v2411 = vunpack.c.h.b16 %v2064
    %v2412 = vunpack.c.l.b16 %v2065
    %v2413 = vunpack.c.h.b16 %v2065
    %v2414 = vunpack.c.l.b16 %v2066
    %v2415 = vunpack.c.h.b16 %v2066
    %v2416 = vunpack.c.l.b16 %v2067
    %v2417 = vunpack.c.h.b16 %v2067
    %v2418 = vunpack.c.l.b16 %v2068
    %v2419 = vunpack.c.h.b16 %v2068
    %v2420 = vunpack.c.l.b16 %v2069
    %v2421 = vunpack.c.h.b16 %v2069
    %v2422 = vunpack.c.l.b16 %v2070
    %v2423 = vunpack.c.h.b16 %v2070
    %v2424 = vunpack.c.l.b16 %v2071
    %v2425 = vunpack.c.h.b16 %v2071
    %v2426 = vunpack.c.l.b16 %v2072
    %v2427 = vunpack.c.h.b16 %v2072
    %v2428 = vunpack.c.l.b16 %v2073
    %v2429 = vunpack.c.h.b16 %v2073
    %v2430 = vunpack.c.l.b16 %v2074
    %v2431 = vunpack.c.h.b16 %v2074
    %v2432 = vunpack.c.l.b16 %v2075
    %v2433 = vunpack.c.h.b16 %v2075
    %v2434 = vunpack.c.l.b16 %v2076
    %v2435 = vunpack.c.h.b16 %v2076
    %v2436 = vunpack.c.l.b16 %v2077
    %v2437 = vunpack.c.h.b16 %v2077
    %v2438 = vunpack.c.l.b16 %v2078
    %v2439 = vunpack.c.h.b16 %v2078
    %v2440 = vunpack.c.l.b16 %v2079
    %v2441 = vunpack.c.h.b16 %v2079
    %v2442 = vunpack.c.l.b16 %v2080
    %v2443 = vunpack.c.h.b16 %v2080
    %v2444 = vunpack.c.l.b16 %v2081
    %v2445 = vunpack.c.h.b16 %v2081
    %v2446 = vunpack.c.l.b16 %v2082
    %v2447 = vunpack.c.h.b16 %v2082
    %v2448 = vunpack.c.l.b16 %v2083
    %v2449 = vunpack.c.h.b16 %v2083
    %v2450 = vunpack.c.l.b16 %v2084
    %v2451 = vunpack.c.h.b16 %v2084
    %v2452 = vunpack.c.l.b16 %v2085
    %v2453 = vunpack.c.h.b16 %v2085
    %v2454 = vunpack.c.l.b16 %v2086
    %v2455 = vunpack.c.h.b16 %v2086
    %v2456 = vunpack.c.l.b16 %v2087
    %v2457 = vunpack.c.h.b16 %v2087
    %v2458 = vunpack.c.l.b16 %v2088
    %v2459 = vunpack.c.h.b16 %v2088
    %v2460 = vunpack.c.l.b16 %v2089
    %v2461 = vunpack.c.h.b16 %v2089
    %v2462 = vunpack.c.l.b16 %v2090
    %v2463 = vunpack.c.h.b16 %v2090
    %v2464 = vunpack.c.l.b16 %v2091
    %v2465 = vunpack.c.h.b16 %v2091
    %v2466 = vunpack.c.l.b16 %v2092
    %v2467 = vunpack.c.h.b16 %v2092
    %v2468 = vpack.c.b16 %v2408, %v2404
    %v2469 = vpack.c.b16 %v2409, %v2405
    %v2470 = vpack.c.b16 %v2410, %v2406
    %v2471 = vpack.c.b16 %v2411, %v2407
    %v2472 = vpack.c.b16 %v2416, %v2412
    %v2473 = vpack.c.b16 %v2417, %v2413
    %v2474 = vpack.c.b16 %v2418, %v2414
    %v2475 = vpack.c.b16 %v2419, %v2415
    %v2476 = vpack.c.b16 %v2424, %v2420
    %v2477 = vpack.c.b16 %v2425, %v2421
    %v2478 = vpack.c.b16 %v2426, %v2422
    %v2479 = vpack.c.b16 %v2427, %v2423
    %v2480 = vpack.c.b16 %v2432, %v2428
    %v2481 = vpack.c.b16 %v2433, %v2429
    %v2482 = vpack.c.b16 %v2434, %v2430
    %v2483 = vpack.c.b16 %v2435, %v2431
    %v2484 = vpack.c.b16 %v2440, %v2436
    %v2485 = vpack.c.b16 %v2441, %v2437
    %v2486 = vpack.c.b16 %v2442, %v2438
    %v2487 = vpack.c.b16 %v2443, %v2439
    %v2488 = vpack.c.b16 %v2448, %v2444
    %v2489 = vpack.c.b16 %v2449, %v2445
    %v2490 = vpack.c.b16 %v2450, %v2446
    %v2491 = vpack.c.b16 %v2451, %v2447
    %v2492 = vpack.c.b16 %v2456, %v2452
    %v2493 = vpack.c.b16 %v2457, %v2453
    %v2494 = vpack.c.b16 %v2458, %v2454
    %v2495 = vpack.c.b16 %v2459, %v2455
    %v2496 = vpack.c.b16 %v2464, %v2460
    %v2497 = vpack.c.b16 %v2465, %v2461
    %v2498 = vpack.c.b16 %v2466, %v2462
    %v2499 = vpack.c.b16 %v2467, %v2463
    %2532 = vmatprep.subr.bf16.mxu0 %v2469
    %2533 = vmatpush1.bf16.msra.mxu0 %v2468
    %2534 = vmatprep.subr.bf16.mxu0 %v2473
    %2535 = vmatpush1.bf16.msra.mxu0 %v2472
    %2536 = vmatprep.subr.bf16.mxu0 %v2477
    %2537 = vmatpush1.bf16.msra.mxu0 %v2476
    %2538 = vmatprep.subr.bf16.mxu0 %v2481
    %2539 = vmatpush1.bf16.msra.mxu0 %v2480
    %2540 = vmatprep.subr.bf16.mxu0 %v2485
    %2541 = vmatpush1.bf16.msra.mxu0 %v2484
    %2542 = vmatprep.subr.bf16.mxu0 %v2489
    %2543 = vmatpush1.bf16.msra.mxu0 %v2488
    %2544 = vmatprep.subr.bf16.mxu0 %v2493
    %2545 = vmatpush1.bf16.msra.mxu0 %v2492
    %2546 = vmatprep.subr.bf16.mxu0 %v2497
    %2547 = vmatpush1.bf16.msra.mxu0 %v2496
    %2548 = vmatprep.subr.bf16.mxu0 0
    %2549 = vmatpush1.bf16.msra.mxu0 0
    %2550 = vmatprep.subr.bf16.mxu0 0
    %2551 = vmatpush1.bf16.msra.mxu0 0
    %2552 = vmatprep.subr.bf16.mxu0 0
    %2553 = vmatpush1.bf16.msra.mxu0 0
    %2554 = vmatprep.subr.bf16.mxu0 0
    %2555 = vmatpush1.bf16.msra.mxu0 0
    %2556 = vmatprep.subr.bf16.mxu0 0
    %2557 = vmatpush1.bf16.msra.mxu0 0
    %2558 = vmatprep.subr.bf16.mxu0 0
    %2559 = vmatpush1.bf16.msra.mxu0 0
    %2560 = vmatprep.subr.bf16.mxu0 0
    %2561 = vmatpush1.bf16.msra.mxu0 0
    %2562 = vmatprep.subr.bf16.mxu0 0
    %2563 = vmatpush1.bf16.msra.mxu0 0
    %2564 = vmatprep.mubr.bf16.mxu0 0
    %2565 = vmatmul.mubr.bf16.gmra.mrb[0].mxu0 %v2056
    %v2566 = vpop.f32.mrb[0].mxu0
    %v2567 = vadd.f32 %v2321, %v2566
    %v2568 = vpop.f32.mrb[0].mxu0
    %v2569 = vadd.f32 %v2323, %v2568
    %v2570 = vpop.f32.mrb[0].mxu0
    %v2571 = vadd.f32 %v2325, %v2570
    %v2572 = vpop.f32.mrb[0].mxu0
    %v2573 = vadd.f32 %v2327, %v2572
    %2574 = vdwg.mxu0
    %2575 = vmatprep.subr.bf16.mxu0 %v2471
    %2576 = vmatpush1.bf16.msra.mxu0 %v2470
    %2577 = vmatprep.subr.bf16.mxu0 %v2475
    %2578 = vmatpush1.bf16.msra.mxu0 %v2474
    %2579 = vmatprep.subr.bf16.mxu0 %v2479
    %2580 = vmatpush1.bf16.msra.mxu0 %v2478
    %2581 = vmatprep.subr.bf16.mxu0 %v2483
    %2582 = vmatpush1.bf16.msra.mxu0 %v2482
    %2583 = vmatprep.subr.bf16.mxu0 %v2487
    %2584 = vmatpush1.bf16.msra.mxu0 %v2486
    %2585 = vmatprep.subr.bf16.mxu0 %v2491
    %2586 = vmatpush1.bf16.msra.mxu0 %v2490
    %2587 = vmatprep.subr.bf16.mxu0 %v2495
    %2588 = vmatpush1.bf16.msra.mxu0 %v2494
    %2589 = vmatprep.subr.bf16.mxu0 %v2499
    %2590 = vmatpush1.bf16.msra.mxu0 %v2498
    %2591 = vmatprep.subr.bf16.mxu0 0
    %2592 = vmatpush1.bf16.msra.mxu0 0
    %2593 = vmatprep.subr.bf16.mxu0 0
    %2594 = vmatpush1.bf16.msra.mxu0 0
    %2595 = vmatprep.subr.bf16.mxu0 0
    %2596 = vmatpush1.bf16.msra.mxu0 0
    %2597 = vmatprep.subr.bf16.mxu0 0
    %2598 = vmatpush1.bf16.msra.mxu0 0
    %2599 = vmatprep.subr.bf16.mxu0 0
    %2600 = vmatpush1.bf16.msra.mxu0 0
    %2601 = vmatprep.subr.bf16.mxu0 0
    %2602 = vmatpush1.bf16.msra.mxu0 0
    %2603 = vmatprep.subr.bf16.mxu0 0
    %2604 = vmatpush1.bf16.msra.mxu0 0
    %2605 = vmatprep.subr.bf16.mxu0 0
    %2606 = vmatpush1.bf16.msra.mxu0 0
    %2607 = vmatprep.mubr.bf16.mxu0 0
    %2608 = vmatmul.mubr.bf16.gmra.mrb[0].mxu0 %v2056
    %v2609 = vpop.f32.mrb[0].mxu0
    %v2610 = vadd.f32 %v2364, %v2609
    %v2611 = vpop.f32.mrb[0].mxu0
    %v2612 = vadd.f32 %v2366, %v2611
    %v2613 = vpop.f32.mrb[0].mxu0
    %v2614 = vadd.f32 %v2368, %v2613
    %v2615 = vpop.f32.mrb[0].mxu0
    %v2616 = vadd.f32 %v2370, %v2615
    %2617 = vdwg.mxu0
    %v2618 = vld [vmem:[%s6] sm:$0xf]
    %v2620 = vlaneseq
    %v2621 = vshrl.u32 %v2620, 7
    %v2622 = vsub.s32 0, %v2621
    %v2623 = vrot.slane %v2618, %v2622
    %v2624 = vlaneseq
    %v2625 = vshrl.u32 %v2624, 7
    %v2626 = vsub.s32 1, %v2625
    %v2627 = vrot.slane %v2618, %v2626
    %v2628 = vlaneseq
    %v2629 = vshrl.u32 %v2628, 7
    %v2630 = vsub.s32 2, %v2629
    %v2631 = vrot.slane %v2618, %v2630
    %v2632 = vlaneseq
    %v2633 = vshrl.u32 %v2632, 7
    %v2634 = vsub.s32 3, %v2633
    %v2635 = vrot.slane %v2618, %v2634
    %v2640 = vadd.f32 %v2567, %v2623
    %v2641 = vadd.f32 %v2569, %v2627
    %v2642 = vadd.f32 %v2610, %v2631
    %v2643 = vadd.f32 %v2612, %v2635
    %v2644 = vadd.f32 %v2571, %v2623
    %v2645 = vadd.f32 %v2573, %v2627
    %v2646 = vadd.f32 %v2614, %v2631
    %v2647 = vadd.f32 %v2616, %v2635
    %v2648 = vxor.u32 %v2640, 2147483648
    %v2649 = vxor.u32 %v2644, 2147483648
    %v2650 = vmul.f32 %v2648, 1.442695
    %v2651 = vpow.pop %v2650
    %v2652 = vmul.f32 %v2649, 1.442695
    %v2653 = vpow.pop %v2652
    %v2654 = vadd.f32 %v2651, 1.0
    %v2655 = vadd.f32 %v2653, 1.0
    %v2656 = vrcp.pop %v2654
    %v2657 = vmul.f32 1.0, %v2656
    %v2658 = vrcp.pop %v2655
    %v2659 = vmul.f32 1.0, %v2658
    %v2660 = vxor.u32 %v2641, 2147483648
    %v2661 = vxor.u32 %v2645, 2147483648
    %v2662 = vmul.f32 %v2660, 1.442695
    %v2663 = vpow.pop %v2662
    %v2664 = vmul.f32 %v2661, 1.442695
    %v2665 = vpow.pop %v2664
    %v2666 = vadd.f32 %v2663, 1.0
    %v2667 = vadd.f32 %v2665, 1.0
    %v2668 = vrcp.pop %v2666
    %v2669 = vmul.f32 1.0, %v2668
    %v2670 = vrcp.pop %v2667
    %v2671 = vmul.f32 1.0, %v2670
    %v2672 = vtanh.pop %v2642
    %v2673 = vtanh.pop %v2646
    %v2674 = vxor.u32 %v2643, 2147483648
    %v2675 = vxor.u32 %v2647, 2147483648
    %v2676 = vmul.f32 %v2674, 1.442695
    %v2677 = vpow.pop %v2676
    %v2678 = vmul.f32 %v2675, 1.442695
    %v2679 = vpow.pop %v2678
    %v2680 = vadd.f32 %v2677, 1.0
    %v2681 = vadd.f32 %v2679, 1.0
    %v2682 = vrcp.pop %v2680
    %v2683 = vmul.f32 1.0, %v2682
    %v2684 = vrcp.pop %v2681
    %v2685 = vmul.f32 1.0, %v2684
    %v2686 = vmul.f32 %v2669, %v2059
    %v2687 = vmul.f32 %v2671, %v2060
    %v2688 = vmul.f32 %v2657, %v2672
    %v2689 = vmul.f32 %v2659, %v2673
    %v2690 = vadd.f32 %v2686, %v2688
    %v2691 = vadd.f32 %v2687, %v2689
    %v2692 = vtanh.pop %v2690
    %v2693 = vtanh.pop %v2691
    %v2694 = vmul.f32 %v2683, %v2692
    %v2695 = vmul.f32 %v2685, %v2693
    %2696 = vst [vmem:[%s759] sm:$0xff] %v2694
    %2697 = vst [vmem:[%s759 + $0x8] sm:$0xff] %v2695
    %2698 = vst [vmem:[%s762] sm:$0xff] %v2690
    %2699 = vst [vmem:[%s762 + $0x8] sm:$0xff] %v2691
    %s2700 = scalar_lea.vmem [#allocation4], 16
    %v2701 = vld [vmem:[%s2700] sm:$0xf]
    %v2702 = vld [vmem:[%s2700 + $0x4] sm:$0xf]
    %v2703 = vld [vmem:[#allocation2] sm:$0xff]
    %v2704 = vld [vmem:[#allocation2 + $0x8] sm:$0xff]
    %v2705 = vld [vmem:[#allocation3] sm:$0xff]
    %v2706 = vld [vmem:[#allocation3 + $0x8] sm:$0xff]
    %v2707 = vld [vmem:[#allocation7] sm:$0xff]
    %v2708 = vld [vmem:[#allocation7 + $0x8] sm:$0xff]
    %v2709 = vld [vmem:[#allocation7 + $0x10] sm:$0xff]
    %v2710 = vld [vmem:[#allocation7 + $0x18] sm:$0xff]
    %v2711 = vld [vmem:[#allocation7 + $0x20] sm:$0xff]
    %v2712 = vld [vmem:[#allocation7 + $0x28] sm:$0xff]
    %v2713 = vld [vmem:[#allocation7 + $0x30] sm:$0xff]
    %v2714 = vld [vmem:[#allocation7 + $0x38] sm:$0xff]
    %v2715 = vld [vmem:[#allocation7 + $0x40] sm:$0xff]
    %v2716 = vld [vmem:[#allocation7 + $0x48] sm:$0xff]
    %v2717 = vld [vmem:[#allocation7 + $0x50] sm:$0xff]
    %v2718 = vld [vmem:[#allocation7 + $0x58] sm:$0xff]
    %v2719 = vld [vmem:[#allocation7 + $0x60] sm:$0xff]
    %v2720 = vld [vmem:[#allocation7 + $0x68] sm:$0xff]
    %v2721 = vld [vmem:[#allocation7 + $0x70] sm:$0xff]
    %v2722 = vld [vmem:[#allocation7 + $0x78] sm:$0xff]
    %v2723 = vld [vmem:[#allocation7 + $0x80] sm:$0xff]
    %v2724 = vld [vmem:[#allocation7 + $0x88] sm:$0xff]
    %v2725 = vld [vmem:[#allocation7 + $0x90] sm:$0xff]
    %v2726 = vld [vmem:[#allocation7 + $0x98] sm:$0xff]
    %v2727 = vld [vmem:[#allocation7 + $0xa0] sm:$0xff]
    %v2728 = vld [vmem:[#allocation7 + $0xa8] sm:$0xff]
    %v2729 = vld [vmem:[#allocation7 + $0xb0] sm:$0xff]
    %v2730 = vld [vmem:[#allocation7 + $0xb8] sm:$0xff]
    %v2731 = vld [vmem:[#allocation7 + $0xc0] sm:$0xff]
    %v2732 = vld [vmem:[#allocation7 + $0xc8] sm:$0xff]
    %v2733 = vld [vmem:[#allocation7 + $0xd0] sm:$0xff]
    %v2734 = vld [vmem:[#allocation7 + $0xd8] sm:$0xff]
    %v2735 = vld [vmem:[#allocation7 + $0xe0] sm:$0xff]
    %v2736 = vld [vmem:[#allocation7 + $0xe8] sm:$0xff]
    %v2737 = vld [vmem:[#allocation7 + $0xf0] sm:$0xff]
    %v2738 = vld [vmem:[#allocation7 + $0xf8] sm:$0xff]
    %v2739 = vpack.c.bf16 %v2704, %v2703
    %v2740 = vld [vmem:[#allocation9] sm:$0xff]
    %v2741 = vld [vmem:[#allocation9 + $0x8] sm:$0xff]
    %v2742 = vld [vmem:[#allocation9 + $0x10] sm:$0xff]
    %v2743 = vld [vmem:[#allocation9 + $0x18] sm:$0xff]
    %v2744 = vld [vmem:[#allocation9 + $0x20] sm:$0xff]
    %v2745 = vld [vmem:[#allocation9 + $0x28] sm:$0xff]
    %v2746 = vld [vmem:[#allocation9 + $0x30] sm:$0xff]
    %v2747 = vld [vmem:[#allocation9 + $0x38] sm:$0xff]
    %v2748 = vld [vmem:[#allocation9 + $0x40] sm:$0xff]
    %v2749 = vld [vmem:[#allocation9 + $0x48] sm:$0xff]
    %v2750 = vld [vmem:[#allocation9 + $0x50] sm:$0xff]
    %v2751 = vld [vmem:[#allocation9 + $0x58] sm:$0xff]
    %v2752 = vld [vmem:[#allocation9 + $0x60] sm:$0xff]
    %v2753 = vld [vmem:[#allocation9 + $0x68] sm:$0xff]
    %v2754 = vld [vmem:[#allocation9 + $0x70] sm:$0xff]
    %v2755 = vld [vmem:[#allocation9 + $0x78] sm:$0xff]
    %v2756 = vld [vmem:[#allocation9 + $0x80] sm:$0xff]
    %v2757 = vld [vmem:[#allocation9 + $0x88] sm:$0xff]
    %v2758 = vld [vmem:[#allocation9 + $0x90] sm:$0xff]
    %v2759 = vld [vmem:[#allocation9 + $0x98] sm:$0xff]
    %v2760 = vld [vmem:[#allocation9 + $0xa0] sm:$0xff]
    %v2761 = vld [vmem:[#allocation9 + $0xa8] sm:$0xff]
    %v2762 = vld [vmem:[#allocation9 + $0xb0] sm:$0xff]
    %v2763 = vld [vmem:[#allocation9 + $0xb8] sm:$0xff]
    %v2764 = vld [vmem:[#allocation9 + $0xc0] sm:$0xff]
    %v2765 = vld [vmem:[#allocation9 + $0xc8] sm:$0xff]
    %v2766 = vld [vmem:[#allocation9 + $0xd0] sm:$0xff]
    %v2767 = vld [vmem:[#allocation9 + $0xd8] sm:$0xff]
    %v2768 = vld [vmem:[#allocation9 + $0xe0] sm:$0xff]
    %v2769 = vld [vmem:[#allocation9 + $0xe8] sm:$0xff]
    %v2770 = vld [vmem:[#allocation9 + $0xf0] sm:$0xff]
    %v2771 = vld [vmem:[#allocation9 + $0xf8] sm:$0xff]
    %v2804 = vunpack.c.l.b16 %v2740
    %v2805 = vunpack.c.h.b16 %v2740
    %v2806 = vunpack.c.l.b16 %v2741
    %v2807 = vunpack.c.h.b16 %v2741
    %v2808 = vunpack.c.l.b16 %v2742
    %v2809 = vunpack.c.h.b16 %v2742
    %v2810 = vunpack.c.l.b16 %v2743
    %v2811 = vunpack.c.h.b16 %v2743
    %v2812 = vunpack.c.l.b16 %v2744
    %v2813 = vunpack.c.h.b16 %v2744
    %v2814 = vunpack.c.l.b16 %v2745
    %v2815 = vunpack.c.h.b16 %v2745
    %v2816 = vunpack.c.l.b16 %v2746
    %v2817 = vunpack.c.h.b16 %v2746
    %v2818 = vunpack.c.l.b16 %v2747
    %v2819 = vunpack.c.h.b16 %v2747
    %v2820 = vunpack.c.l.b16 %v2748
    %v2821 = vunpack.c.h.b16 %v2748
    %v2822 = vunpack.c.l.b16 %v2749
    %v2823 = vunpack.c.h.b16 %v2749
    %v2824 = vunpack.c.l.b16 %v2750
    %v2825 = vunpack.c.h.b16 %v2750
    %v2826 = vunpack.c.l.b16 %v2751
    %v2827 = vunpack.c.h.b16 %v2751
    %v2828 = vunpack.c.l.b16 %v2752
    %v2829 = vunpack.c.h.b16 %v2752
    %v2830 = vunpack.c.l.b16 %v2753
    %v2831 = vunpack.c.h.b16 %v2753
    %v2832 = vunpack.c.l.b16 %v2754
    %v2833 = vunpack.c.h.b16 %v2754
    %v2834 = vunpack.c.l.b16 %v2755
    %v2835 = vunpack.c.h.b16 %v2755
    %v2836 = vunpack.c.l.b16 %v2756
    %v2837 = vunpack.c.h.b16 %v2756
    %v2838 = vunpack.c.l.b16 %v2757
    %v2839 = vunpack.c.h.b16 %v2757
    %v2840 = vunpack.c.l.b16 %v2758
    %v2841 = vunpack.c.h.b16 %v2758
    %v2842 = vunpack.c.l.b16 %v2759
    %v2843 = vunpack.c.h.b16 %v2759
    %v2844 = vunpack.c.l.b16 %v2760
    %v2845 = vunpack.c.h.b16 %v2760
    %v2846 = vunpack.c.l.b16 %v2761
    %v2847 = vunpack.c.h.b16 %v2761
    %v2848 = vunpack.c.l.b16 %v2762
    %v2849 = vunpack.c.h.b16 %v2762
    %v2850 = vunpack.c.l.b16 %v2763
    %v2851 = vunpack.c.h.b16 %v2763
    %v2852 = vunpack.c.l.b16 %v2764
    %v2853 = vunpack.c.h.b16 %v2764
    %v2854 = vunpack.c.l.b16 %v2765
    %v2855 = vunpack.c.h.b16 %v2765
    %v2856 = vunpack.c.l.b16 %v2766
    %v2857 = vunpack.c.h.b16 %v2766
    %v2858 = vunpack.c.l.b16 %v2767
    %v2859 = vunpack.c.h.b16 %v2767
    %v2860 = vunpack.c.l.b16 %v2768
    %v2861 = vunpack.c.h.b16 %v2768
    %v2862 = vunpack.c.l.b16 %v2769
    %v2863 = vunpack.c.h.b16 %v2769
    %v2864 = vunpack.c.l.b16 %v2770
    %v2865 = vunpack.c.h.b16 %v2770
    %v2866 = vunpack.c.l.b16 %v2771
    %v2867 = vunpack.c.h.b16 %v2771
    %v2868 = vpack.c.b16 %v2808, %v2804
    %v2869 = vpack.c.b16 %v2809, %v2805
    %v2870 = vpack.c.b16 %v2810, %v2806
    %v2871 = vpack.c.b16 %v2811, %v2807
    %v2872 = vpack.c.b16 %v2816, %v2812
    %v2873 = vpack.c.b16 %v2817, %v2813
    %v2874 = vpack.c.b16 %v2818, %v2814
    %v2875 = vpack.c.b16 %v2819, %v2815
    %v2876 = vpack.c.b16 %v2824, %v2820
    %v2877 = vpack.c.b16 %v2825, %v2821
    %v2878 = vpack.c.b16 %v2826, %v2822
    %v2879 = vpack.c.b16 %v2827, %v2823
    %v2880 = vpack.c.b16 %v2832, %v2828
    %v2881 = vpack.c.b16 %v2833, %v2829
    %v2882 = vpack.c.b16 %v2834, %v2830
    %v2883 = vpack.c.b16 %v2835, %v2831
    %v2884 = vpack.c.b16 %v2840, %v2836
    %v2885 = vpack.c.b16 %v2841, %v2837
    %v2886 = vpack.c.b16 %v2842, %v2838
    %v2887 = vpack.c.b16 %v2843, %v2839
    %v2888 = vpack.c.b16 %v2848, %v2844
    %v2889 = vpack.c.b16 %v2849, %v2845
    %v2890 = vpack.c.b16 %v2850, %v2846
    %v2891 = vpack.c.b16 %v2851, %v2847
    %v2892 = vpack.c.b16 %v2856, %v2852
    %v2893 = vpack.c.b16 %v2857, %v2853
    %v2894 = vpack.c.b16 %v2858, %v2854
    %v2895 = vpack.c.b16 %v2859, %v2855
    %v2896 = vpack.c.b16 %v2864, %v2860
    %v2897 = vpack.c.b16 %v2865, %v2861
    %v2898 = vpack.c.b16 %v2866, %v2862
    %v2899 = vpack.c.b16 %v2867, %v2863
    %2932 = vmatprep.subr.bf16.mxu0 %v2869
    %2933 = vmatpush1.bf16.msra.mxu0 %v2868
    %2934 = vmatprep.subr.bf16.mxu0 %v2873
    %2935 = vmatpush1.bf16.msra.mxu0 %v2872
    %2936 = vmatprep.subr.bf16.mxu0 %v2877
    %2937 = vmatpush1.bf16.msra.mxu0 %v2876
    %2938 = vmatprep.subr.bf16.mxu0 %v2881
    %2939 = vmatpush1.bf16.msra.mxu0 %v2880
    %2940 = vmatprep.subr.bf16.mxu0 %v2885
    %2941 = vmatpush1.bf16.msra.mxu0 %v2884
    %2942 = vmatprep.subr.bf16.mxu0 %v2889
    %2943 = vmatpush1.bf16.msra.mxu0 %v2888
    %2944 = vmatprep.subr.bf16.mxu0 %v2893
    %2945 = vmatpush1.bf16.msra.mxu0 %v2892
    %2946 = vmatprep.subr.bf16.mxu0 %v2897
    %2947 = vmatpush1.bf16.msra.mxu0 %v2896
    %2948 = vmatprep.subr.bf16.mxu0 0
    %2949 = vmatpush1.bf16.msra.mxu0 0
    %2950 = vmatprep.subr.bf16.mxu0 0
    %2951 = vmatpush1.bf16.msra.mxu0 0
    %2952 = vmatprep.subr.bf16.mxu0 0
    %2953 = vmatpush1.bf16.msra.mxu0 0
    %2954 = vmatprep.subr.bf16.mxu0 0
    %2955 = vmatpush1.bf16.msra.mxu0 0
    %2956 = vmatprep.subr.bf16.mxu0 0
    %2957 = vmatpush1.bf16.msra.mxu0 0
    %2958 = vmatprep.subr.bf16.mxu0 0
    %2959 = vmatpush1.bf16.msra.mxu0 0
    %2960 = vmatprep.subr.bf16.mxu0 0
    %2961 = vmatpush1.bf16.msra.mxu0 0
    %2962 = vmatprep.subr.bf16.mxu0 0
    %2963 = vmatpush1.bf16.msra.mxu0 0
    %2964 = vmatprep.mubr.bf16.mxu0 0
    %2965 = vmatmul.mubr.bf16.gmra.mrb[0].mxu0 %v2739
    %v2966 = vpop.f32.mrb[0].mxu0
    %v2967 = vadd.f32 0.0, %v2966
    %v2968 = vpop.f32.mrb[0].mxu0
    %v2969 = vadd.f32 0.0, %v2968
    %v2970 = vpop.f32.mrb[0].mxu0
    %v2971 = vadd.f32 0.0, %v2970
    %v2972 = vpop.f32.mrb[0].mxu0
    %v2973 = vadd.f32 0.0, %v2972
    %2974 = vdwg.mxu0
    %2975 = vmatprep.subr.bf16.mxu0 %v2871
    %2976 = vmatpush1.bf16.msra.mxu0 %v2870
    %2977 = vmatprep.subr.bf16.mxu0 %v2875
    %2978 = vmatpush1.bf16.msra.mxu0 %v2874
    %2979 = vmatprep.subr.bf16.mxu0 %v2879
    %2980 = vmatpush1.bf16.msra.mxu0 %v2878
    %2981 = vmatprep.subr.bf16.mxu0 %v2883
    %2982 = vmatpush1.bf16.msra.mxu0 %v2882
    %2983 = vmatprep.subr.bf16.mxu0 %v2887
    %2984 = vmatpush1.bf16.msra.mxu0 %v2886
    %2985 = vmatprep.subr.bf16.mxu0 %v2891
    %2986 = vmatpush1.bf16.msra.mxu0 %v2890
    %2987 = vmatprep.subr.bf16.mxu0 %v2895
    %2988 = vmatpush1.bf16.msra.mxu0 %v2894
    %2989 = vmatprep.subr.bf16.mxu0 %v2899
    %2990 = vmatpush1.bf16.msra.mxu0 %v2898
    %2991 = vmatprep.subr.bf16.mxu0 0
    %2992 = vmatpush1.bf16.msra.mxu0 0
    %2993 = vmatprep.subr.bf16.mxu0 0
    %2994 = vmatpush1.bf16.msra.mxu0 0
    %2995 = vmatprep.subr.bf16.mxu0 0
    %2996 = vmatpush1.bf16.msra.mxu0 0
    %2997 = vmatprep.subr.bf16.mxu0 0
    %2998 = vmatpush1.bf16.msra.mxu0 0
    %2999 = vmatprep.subr.bf16.mxu0 0
    %3000 = vmatpush1.bf16.msra.mxu0 0
    %3001 = vmatprep.subr.bf16.mxu0 0
    %3002 = vmatpush1.bf16.msra.mxu0 0
    %3003 = vmatprep.subr.bf16.mxu0 0
    %3004 = vmatpush1.bf16.msra.mxu0 0
    %3005 = vmatprep.subr.bf16.mxu0 0
    %3006 = vmatpush1.bf16.msra.mxu0 0
    %3007 = vmatprep.mubr.bf16.mxu0 0
    %3008 = vmatmul.mubr.bf16.gmra.mrb[0].mxu0 %v2739
    %v3009 = vpop.f32.mrb[0].mxu0
    %v3010 = vadd.f32 0.0, %v3009
    %v3011 = vpop.f32.mrb[0].mxu0
    %v3012 = vadd.f32 0.0, %v3011
    %v3013 = vpop.f32.mrb[0].mxu0
    %v3014 = vadd.f32 0.0, %v3013
    %v3015 = vpop.f32.mrb[0].mxu0
    %v3016 = vadd.f32 0.0, %v3015
    %3017 = vdwg.mxu0
    %v3020 = vunpack.c.l.b16 %v2701
    %v3021 = vunpack.c.l.b16 %v2702
    %v3022 = vpack.c.b16 %v3021, %v3020
    %v3056 = vunpack.c.l.b16 %v2707
    %v3057 = vunpack.c.h.b16 %v2707
    %v3058 = vunpack.c.l.b16 %v2708
    %v3059 = vunpack.c.h.b16 %v2708
    %v3060 = vunpack.c.l.b16 %v2709
    %v3061 = vunpack.c.h.b16 %v2709
    %v3062 = vunpack.c.l.b16 %v2710
    %v3063 = vunpack.c.h.b16 %v2710
    %v3064 = vunpack.c.l.b16 %v2711
    %v3065 = vunpack.c.h.b16 %v2711
    %v3066 = vunpack.c.l.b16 %v2712
    %v3067 = vunpack.c.h.b16 %v2712
    %v3068 = vunpack.c.l.b16 %v2713
    %v3069 = vunpack.c.h.b16 %v2713
    %v3070 = vunpack.c.l.b16 %v2714
    %v3071 = vunpack.c.h.b16 %v2714
    %v3072 = vunpack.c.l.b16 %v2715
    %v3073 = vunpack.c.h.b16 %v2715
    %v3074 = vunpack.c.l.b16 %v2716
    %v3075 = vunpack.c.h.b16 %v2716
    %v3076 = vunpack.c.l.b16 %v2717
    %v3077 = vunpack.c.h.b16 %v2717
    %v3078 = vunpack.c.l.b16 %v2718
    %v3079 = vunpack.c.h.b16 %v2718
    %v3080 = vunpack.c.l.b16 %v2719
    %v3081 = vunpack.c.h.b16 %v2719
    %v3082 = vunpack.c.l.b16 %v2720
    %v3083 = vunpack.c.h.b16 %v2720
    %v3084 = vunpack.c.l.b16 %v2721
    %v3085 = vunpack.c.h.b16 %v2721
    %v3086 = vunpack.c.l.b16 %v2722
    %v3087 = vunpack.c.h.b16 %v2722
    %v3088 = vunpack.c.l.b16 %v2723
    %v3089 = vunpack.c.h.b16 %v2723
    %v3090 = vunpack.c.l.b16 %v2724
    %v3091 = vunpack.c.h.b16 %v2724
    %v3092 = vunpack.c.l.b16 %v2725
    %v3093 = vunpack.c.h.b16 %v2725
    %v3094 = vunpack.c.l.b16 %v2726
    %v3095 = vunpack.c.h.b16 %v2726
    %v3096 = vunpack.c.l.b16 %v2727
    %v3097 = vunpack.c.h.b16 %v2727
    %v3098 = vunpack.c.l.b16 %v2728
    %v3099 = vunpack.c.h.b16 %v2728
    %v3100 = vunpack.c.l.b16 %v2729
    %v3101 = vunpack.c.h.b16 %v2729
    %v3102 = vunpack.c.l.b16 %v2730
    %v3103 = vunpack.c.h.b16 %v2730
    %v3104 = vunpack.c.l.b16 %v2731
    %v3105 = vunpack.c.h.b16 %v2731
    %v3106 = vunpack.c.l.b16 %v2732
    %v3107 = vunpack.c.h.b16 %v2732
    %v3108 = vunpack.c.l.b16 %v2733
    %v3109 = vunpack.c.h.b16 %v2733
    %v3110 = vunpack.c.l.b16 %v2734
    %v3111 = vunpack.c.h.b16 %v2734
    %v3112 = vunpack.c.l.b16 %v2735
    %v3113 = vunpack.c.h.b16 %v2735
    %v3114 = vunpack.c.l.b16 %v2736
    %v3115 = vunpack.c.h.b16 %v2736
    %v3116 = vunpack.c.l.b16 %v2737
    %v3117 = vunpack.c.h.b16 %v2737
    %v3118 = vunpack.c.l.b16 %v2738
    %v3119 = vunpack.c.h.b16 %v2738
    %v3120 = vpack.c.b16 %v3060, %v3056
    %v3121 = vpack.c.b16 %v3061, %v3057
    %v3122 = vpack.c.b16 %v3062, %v3058
    %v3123 = vpack.c.b16 %v3063, %v3059
    %v3124 = vpack.c.b16 %v3068, %v3064
    %v3125 = vpack.c.b16 %v3069, %v3065
    %v3126 = vpack.c.b16 %v3070, %v3066
    %v3127 = vpack.c.b16 %v3071, %v3067
    %v3128 = vpack.c.b16 %v3076, %v3072
    %v3129 = vpack.c.b16 %v3077, %v3073
    %v3130 = vpack.c.b16 %v3078, %v3074
    %v3131 = vpack.c.b16 %v3079, %v3075
    %v3132 = vpack.c.b16 %v3084, %v3080
    %v3133 = vpack.c.b16 %v3085, %v3081
    %v3134 = vpack.c.b16 %v3086, %v3082
    %v3135 = vpack.c.b16 %v3087, %v3083
    %v3136 = vpack.c.b16 %v3092, %v3088
    %v3137 = vpack.c.b16 %v3093, %v3089
    %v3138 = vpack.c.b16 %v3094, %v3090
    %v3139 = vpack.c.b16 %v3095, %v3091
    %v3140 = vpack.c.b16 %v3100, %v3096
    %v3141 = vpack.c.b16 %v3101, %v3097
    %v3142 = vpack.c.b16 %v3102, %v3098
    %v3143 = vpack.c.b16 %v3103, %v3099
    %v3144 = vpack.c.b16 %v3108, %v3104
    %v3145 = vpack.c.b16 %v3109, %v3105
    %v3146 = vpack.c.b16 %v3110, %v3106
    %v3147 = vpack.c.b16 %v3111, %v3107
    %v3148 = vpack.c.b16 %v3116, %v3112
    %v3149 = vpack.c.b16 %v3117, %v3113
    %v3150 = vpack.c.b16 %v3118, %v3114
    %v3151 = vpack.c.b16 %v3119, %v3115
    %3184 = vmatprep.subr.bf16.mxu0 %v3121
    %3185 = vmatpush1.bf16.msra.mxu0 %v3120
    %3186 = vmatprep.subr.bf16.mxu0 %v3125
    %3187 = vmatpush1.bf16.msra.mxu0 %v3124
    %3188 = vmatprep.subr.bf16.mxu0 %v3129
    %3189 = vmatpush1.bf16.msra.mxu0 %v3128
    %3190 = vmatprep.subr.bf16.mxu0 %v3133
    %3191 = vmatpush1.bf16.msra.mxu0 %v3132
    %3192 = vmatprep.subr.bf16.mxu0 %v3137
    %3193 = vmatpush1.bf16.msra.mxu0 %v3136
    %3194 = vmatprep.subr.bf16.mxu0 %v3141
    %3195 = vmatpush1.bf16.msra.mxu0 %v3140
    %3196 = vmatprep.subr.bf16.mxu0 %v3145
    %3197 = vmatpush1.bf16.msra.mxu0 %v3144
    %3198 = vmatprep.subr.bf16.mxu0 %v3149
    %3199 = vmatpush1.bf16.msra.mxu0 %v3148
    %3200 = vmatprep.subr.bf16.mxu0 0
    %3201 = vmatpush1.bf16.msra.mxu0 0
    %3202 = vmatprep.subr.bf16.mxu0 0
    %3203 = vmatpush1.bf16.msra.mxu0 0
    %3204 = vmatprep.subr.bf16.mxu0 0
    %3205 = vmatpush1.bf16.msra.mxu0 0
    %3206 = vmatprep.subr.bf16.mxu0 0
    %3207 = vmatpush1.bf16.msra.mxu0 0
    %3208 = vmatprep.subr.bf16.mxu0 0
    %3209 = vmatpush1.bf16.msra.mxu0 0
    %3210 = vmatprep.subr.bf16.mxu0 0
    %3211 = vmatpush1.bf16.msra.mxu0 0
    %3212 = vmatprep.subr.bf16.mxu0 0
    %3213 = vmatpush1.bf16.msra.mxu0 0
    %3214 = vmatprep.subr.bf16.mxu0 0
    %3215 = vmatpush1.bf16.msra.mxu0 0
    %3216 = vmatprep.mubr.bf16.mxu0 0
    %3217 = vmatmul.mubr.bf16.gmra.mrb[0].mxu0 %v3022
    %v3218 = vpop.f32.mrb[0].mxu0
    %v3219 = vadd.f32 %v2967, %v3218
    %v3220 = vpop.f32.mrb[0].mxu0
    %v3221 = vadd.f32 %v2969, %v3220
    %v3222 = vpop.f32.mrb[0].mxu0
    %v3223 = vadd.f32 %v2971, %v3222
    %v3224 = vpop.f32.mrb[0].mxu0
    %v3225 = vadd.f32 %v2973, %v3224
    %3226 = vdwg.mxu0
    %3227 = vmatprep.subr.bf16.mxu0 %v3123
    %3228 = vmatpush1.bf16.msra.mxu0 %v3122
    %3229 = vmatprep.subr.bf16.mxu0 %v3127
    %3230 = vmatpush1.bf16.msra.mxu0 %v3126
    %3231 = vmatprep.subr.bf16.mxu0 %v3131
    %3232 = vmatpush1.bf16.msra.mxu0 %v3130
    %3233 = vmatprep.subr.bf16.mxu0 %v3135
    %3234 = vmatpush1.bf16.msra.mxu0 %v3134
    %3235 = vmatprep.subr.bf16.mxu0 %v3139
    %3236 = vmatpush1.bf16.msra.mxu0 %v3138
    %3237 = vmatprep.subr.bf16.mxu0 %v3143
    %3238 = vmatpush1.bf16.msra.mxu0 %v3142
    %3239 = vmatprep.subr.bf16.mxu0 %v3147
    %3240 = vmatpush1.bf16.msra.mxu0 %v3146
    %3241 = vmatprep.subr.bf16.mxu0 %v3151
    %3242 = vmatpush1.bf16.msra.mxu0 %v3150
    %3243 = vmatprep.subr.bf16.mxu0 0
    %3244 = vmatpush1.bf16.msra.mxu0 0
    %3245 = vmatprep.subr.bf16.mxu0 0
    %3246 = vmatpush1.bf16.msra.mxu0 0
    %3247 = vmatprep.subr.bf16.mxu0 0
    %3248 = vmatpush1.bf16.msra.mxu0 0
    %3249 = vmatprep.subr.bf16.mxu0 0
    %3250 = vmatpush1.bf16.msra.mxu0 0
    %3251 = vmatprep.subr.bf16.mxu0 0
    %3252 = vmatpush1.bf16.msra.mxu0 0
    %3253 = vmatprep.subr.bf16.mxu0 0
    %3254 = vmatpush1.bf16.msra.mxu0 0
    %3255 = vmatprep.subr.bf16.mxu0 0
    %3256 = vmatpush1.bf16.msra.mxu0 0
    %3257 = vmatprep.subr.bf16.mxu0 0
    %3258 = vmatpush1.bf16.msra.mxu0 0
    %3259 = vmatprep.mubr.bf16.mxu0 0
    %3260 = vmatmul.mubr.bf16.gmra.mrb[0].mxu0 %v3022
    %v3261 = vpop.f32.mrb[0].mxu0
    %v3262 = vadd.f32 %v3010, %v3261
    %v3263 = vpop.f32.mrb[0].mxu0
    %v3264 = vadd.f32 %v3012, %v3263
    %v3265 = vpop.f32.mrb[0].mxu0
    %v3266 = vadd.f32 %v3014, %v3265
    %v3267 = vpop.f32.mrb[0].mxu0
    %v3268 = vadd.f32 %v3016, %v3267
    %3269 = vdwg.mxu0
    %v3270 = vld [vmem:[%s3] sm:$0xf]
    %v3272 = vlaneseq
    %v3273 = vshrl.u32 %v3272, 7
    %v3274 = vsub.s32 0, %v3273
    %v3275 = vrot.slane %v3270, %v3274
    %v3276 = vlaneseq
    %v3277 = vshrl.u32 %v3276, 7
    %v3278 = vsub.s32 1, %v3277
    %v3279 = vrot.slane %v3270, %v3278
    %v3280 = vlaneseq
    %v3281 = vshrl.u32 %v3280, 7
    %v3282 = vsub.s32 2, %v3281
    %v3283 = vrot.slane %v3270, %v3282
    %v3284 = vlaneseq
    %v3285 = vshrl.u32 %v3284, 7
    %v3286 = vsub.s32 3, %v3285
    %v3287 = vrot.slane %v3270, %v3286
    %v3292 = vadd.f32 %v3219, %v3275
    %v3293 = vadd.f32 %v3221, %v3279
    %v3294 = vadd.f32 %v3262, %v3283
    %v3295 = vadd.f32 %v3264, %v3287
    %v3296 = vadd.f32 %v3223, %v3275
    %v3297 = vadd.f32 %v3225, %v3279
    %v3298 = vadd.f32 %v3266, %v3283
    %v3299 = vadd.f32 %v3268, %v3287
    %v3300 = vxor.u32 %v3292, 2147483648
    %v3301 = vxor.u32 %v3296, 2147483648
    %v3302 = vmul.f32 %v3300, 1.442695
    %v3303 = vpow.pop %v3302
    %v3304 = vmul.f32 %v3301, 1.442695
    %v3305 = vpow.pop %v3304
    %v3306 = vadd.f32 %v3303, 1.0
    %v3307 = vadd.f32 %v3305, 1.0
    %v3308 = vrcp.pop %v3306
    %v3309 = vmul.f32 1.0, %v3308
    %v3310 = vrcp.pop %v3307
    %v3311 = vmul.f32 1.0, %v3310
    %v3312 = vxor.u32 %v3293, 2147483648
    %v3313 = vxor.u32 %v3297, 2147483648
    %v3314 = vmul.f32 %v3312, 1.442695
    %v3315 = vpow.pop %v3314
    %v3316 = vmul.f32 %v3313, 1.442695
    %v3317 = vpow.pop %v3316
    %v3318 = vadd.f32 %v3315, 1.0
    %v3319 = vadd.f32 %v3317, 1.0
    %v3320 = vrcp.pop %v3318
    %v3321 = vmul.f32 1.0, %v3320
    %v3322 = vrcp.pop %v3319
    %v3323 = vmul.f32 1.0, %v3322
    %v3324 = vtanh.pop %v3294
    %v3325 = vtanh.pop %v3298
    %v3326 = vxor.u32 %v3295, 2147483648
    %v3327 = vxor.u32 %v3299, 2147483648
    %v3328 = vmul.f32 %v3326, 1.442695
    %v3329 = vpow.pop %v3328
    %v3330 = vmul.f32 %v3327, 1.442695
    %v3331 = vpow.pop %v3330
    %v3332 = vadd.f32 %v3329, 1.0
    %v3333 = vadd.f32 %v3331, 1.0
    %v3334 = vrcp.pop %v3332
    %v3335 = vmul.f32 1.0, %v3334
    %v3336 = vrcp.pop %v3333
    %v3337 = vmul.f32 1.0, %v3336
    %v3338 = vmul.f32 %v3321, %v2705
    %v3339 = vmul.f32 %v3323, %v2706
    %v3340 = vmul.f32 %v3309, %v3324
    %v3341 = vmul.f32 %v3311, %v3325
    %v3342 = vadd.f32 %v3338, %v3340
    %v3343 = vadd.f32 %v3339, %v3341
    %v3344 = vtanh.pop %v3342
    %v3345 = vtanh.pop %v3343
    %v3346 = vmul.f32 %v3335, %v3344
    %v3347 = vmul.f32 %v3337, %v3345
    %3348 = vst [vmem:[#allocation2] sm:$0xff] %v3346
    %3349 = vst [vmem:[#allocation2 + $0x8] sm:$0xff] %v3347
    %3350 = vst [vmem:[#allocation3] sm:$0xff] %v3342
    %3351 = vst [vmem:[#allocation3 + $0x8] sm:$0xff] %v3343
    %v3352 = vpack.c.bf16 %v3347, %v3346
    %v3353 = vld [vmem:[%s759] sm:$0xff]
    %v3354 = vld [vmem:[%s759 + $0x8] sm:$0xff]
    %v3355 = vld [vmem:[%s762] sm:$0xff]
    %v3356 = vld [vmem:[%s762 + $0x8] sm:$0xff]
    %v3357 = vld [vmem:[#allocation10] sm:$0xff]
    %v3358 = vld [vmem:[#allocation10 + $0x8] sm:$0xff]
    %v3359 = vld [vmem:[#allocation10 + $0x10] sm:$0xff]
    %v3360 = vld [vmem:[#allocation10 + $0x18] sm:$0xff]
    %v3361 = vld [vmem:[#allocation10 + $0x20] sm:$0xff]
    %v3362 = vld [vmem:[#allocation10 + $0x28] sm:$0xff]
    %v3363 = vld [vmem:[#allocation10 + $0x30] sm:$0xff]
    %v3364 = vld [vmem:[#allocation10 + $0x38] sm:$0xff]
    %v3365 = vld [vmem:[#allocation10 + $0x40] sm:$0xff]
    %v3366 = vld [vmem:[#allocation10 + $0x48] sm:$0xff]
    %v3367 = vld [vmem:[#allocation10 + $0x50] sm:$0xff]
    %v3368 = vld [vmem:[#allocation10 + $0x58] sm:$0xff]
    %v3369 = vld [vmem:[#allocation10 + $0x60] sm:$0xff]
    %v3370 = vld [vmem:[#allocation10 + $0x68] sm:$0xff]
    %v3371 = vld [vmem:[#allocation10 + $0x70] sm:$0xff]
    %v3372 = vld [vmem:[#allocation10 + $0x78] sm:$0xff]
    %v3373 = vld [vmem:[#allocation10 + $0x80] sm:$0xff]
    %v3374 = vld [vmem:[#allocation10 + $0x88] sm:$0xff]
    %v3375 = vld [vmem:[#allocation10 + $0x90] sm:$0xff]
    %v3376 = vld [vmem:[#allocation10 + $0x98] sm:$0xff]
    %v3377 = vld [vmem:[#allocation10 + $0xa0] sm:$0xff]
    %v3378 = vld [vmem:[#allocation10 + $0xa8] sm:$0xff]
    %v3379 = vld [vmem:[#allocation10 + $0xb0] sm:$0xff]
    %v3380 = vld [vmem:[#allocation10 + $0xb8] sm:$0xff]
    %v3381 = vld [vmem:[#allocation10 + $0xc0] sm:$0xff]
    %v3382 = vld [vmem:[#allocation10 + $0xc8] sm:$0xff]
    %v3383 = vld [vmem:[#allocation10 + $0xd0] sm:$0xff]
    %v3384 = vld [vmem:[#allocation10 + $0xd8] sm:$0xff]
    %v3385 = vld [vmem:[#allocation10 + $0xe0] sm:$0xff]
    %v3386 = vld [vmem:[#allocation10 + $0xe8] sm:$0xff]
    %v3387 = vld [vmem:[#allocation10 + $0xf0] sm:$0xff]
    %v3388 = vld [vmem:[#allocation10 + $0xf8] sm:$0xff]
    %v3389 = vpack.c.bf16 %v3354, %v3353
    %v3390 = vld [vmem:[#allocation12] sm:$0xff]
    %v3391 = vld [vmem:[#allocation12 + $0x8] sm:$0xff]
    %v3392 = vld [vmem:[#allocation12 + $0x10] sm:$0xff]
    %v3393 = vld [vmem:[#allocation12 + $0x18] sm:$0xff]
    %v3394 = vld [vmem:[#allocation12 + $0x20] sm:$0xff]
    %v3395 = vld [vmem:[#allocation12 + $0x28] sm:$0xff]
    %v3396 = vld [vmem:[#allocation12 + $0x30] sm:$0xff]
    %v3397 = vld [vmem:[#allocation12 + $0x38] sm:$0xff]
    %v3398 = vld [vmem:[#allocation12 + $0x40] sm:$0xff]
    %v3399 = vld [vmem:[#allocation12 + $0x48] sm:$0xff]
    %v3400 = vld [vmem:[#allocation12 + $0x50] sm:$0xff]
    %v3401 = vld [vmem:[#allocation12 + $0x58] sm:$0xff]
    %v3402 = vld [vmem:[#allocation12 + $0x60] sm:$0xff]
    %v3403 = vld [vmem:[#allocation12 + $0x68] sm:$0xff]
    %v3404 = vld [vmem:[#allocation12 + $0x70] sm:$0xff]
    %v3405 = vld [vmem:[#allocation12 + $0x78] sm:$0xff]
    %v3406 = vld [vmem:[#allocation12 + $0x80] sm:$0xff]
    %v3407 = vld [vmem:[#allocation12 + $0x88] sm:$0xff]
    %v3408 = vld [vmem:[#allocation12 + $0x90] sm:$0xff]
    %v3409 = vld [vmem:[#allocation12 + $0x98] sm:$0xff]
    %v3410 = vld [vmem:[#allocation12 + $0xa0] sm:$0xff]
    %v3411 = vld [vmem:[#allocation12 + $0xa8] sm:$0xff]
    %v3412 = vld [vmem:[#allocation12 + $0xb0] sm:$0xff]
    %v3413 = vld [vmem:[#allocation12 + $0xb8] sm:$0xff]
    %v3414 = vld [vmem:[#allocation12 + $0xc0] sm:$0xff]
    %v3415 = vld [vmem:[#allocation12 + $0xc8] sm:$0xff]
    %v3416 = vld [vmem:[#allocation12 + $0xd0] sm:$0xff]
    %v3417 = vld [vmem:[#allocation12 + $0xd8] sm:$0xff]
    %v3418 = vld [vmem:[#allocation12 + $0xe0] sm:$0xff]
    %v3419 = vld [vmem:[#allocation12 + $0xe8] sm:$0xff]
    %v3420 = vld [vmem:[#allocation12 + $0xf0] sm:$0xff]
    %v3421 = vld [vmem:[#allocation12 + $0xf8] sm:$0xff]
    %v3454 = vunpack.c.l.b16 %v3390
    %v3455 = vunpack.c.h.b16 %v3390
    %v3456 = vunpack.c.l.b16 %v3391
    %v3457 = vunpack.c.h.b16 %v3391
    %v3458 = vunpack.c.l.b16 %v3392
    %v3459 = vunpack.c.h.b16 %v3392
    %v3460 = vunpack.c.l.b16 %v3393
    %v3461 = vunpack.c.h.b16 %v3393
    %v3462 = vunpack.c.l.b16 %v3394
    %v3463 = vunpack.c.h.b16 %v3394
    %v3464 = vunpack.c.l.b16 %v3395
    %v3465 = vunpack.c.h.b16 %v3395
    %v3466 = vunpack.c.l.b16 %v3396
    %v3467 = vunpack.c.h.b16 %v3396
    %v3468 = vunpack.c.l.b16 %v3397
    %v3469 = vunpack.c.h.b16 %v3397
    %v3470 = vunpack.c.l.b16 %v3398
    %v3471 = vunpack.c.h.b16 %v3398
    %v3472 = vunpack.c.l.b16 %v3399
    %v3473 = vunpack.c.h.b16 %v3399
    %v3474 = vunpack.c.l.b16 %v3400
    %v3475 = vunpack.c.h.b16 %v3400
    %v3476 = vunpack.c.l.b16 %v3401
    %v3477 = vunpack.c.h.b16 %v3401
    %v3478 = vunpack.c.l.b16 %v3402
    %v3479 = vunpack.c.h.b16 %v3402
    %v3480 = vunpack.c.l.b16 %v3403
    %v3481 = vunpack.c.h.b16 %v3403
    %v3482 = vunpack.c.l.b16 %v3404
    %v3483 = vunpack.c.h.b16 %v3404
    %v3484 = vunpack.c.l.b16 %v3405
    %v3485 = vunpack.c.h.b16 %v3405
    %v3486 = vunpack.c.l.b16 %v3406
    %v3487 = vunpack.c.h.b16 %v3406
    %v3488 = vunpack.c.l.b16 %v3407
    %v3489 = vunpack.c.h.b16 %v3407
    %v3490 = vunpack.c.l.b16 %v3408
    %v3491 = vunpack.c.h.b16 %v3408
    %v3492 = vunpack.c.l.b16 %v3409
    %v3493 = vunpack.c.h.b16 %v3409
    %v3494 = vunpack.c.l.b16 %v3410
    %v3495 = vunpack.c.h.b16 %v3410
    %v3496 = vunpack.c.l.b16 %v3411
    %v3497 = vunpack.c.h.b16 %v3411
    %v3498 = vunpack.c.l.b16 %v3412
    %v3499 = vunpack.c.h.b16 %v3412
    %v3500 = vunpack.c.l.b16 %v3413
    %v3501 = vunpack.c.h.b16 %v3413
    %v3502 = vunpack.c.l.b16 %v3414
    %v3503 = vunpack.c.h.b16 %v3414
    %v3504 = vunpack.c.l.b16 %v3415
    %v3505 = vunpack.c.h.b16 %v3415
    %v3506 = vunpack.c.l.b16 %v3416
    %v3507 = vunpack.c.h.b16 %v3416
    %v3508 = vunpack.c.l.b16 %v3417
    %v3509 = vunpack.c.h.b16 %v3417
    %v3510 = vunpack.c.l.b16 %v3418
    %v3511 = vunpack.c.h.b16 %v3418
    %v3512 = vunpack.c.l.b16 %v3419
    %v3513 = vunpack.c.h.b16 %v3419
    %v3514 = vunpack.c.l.b16 %v3420
    %v3515 = vunpack.c.h.b16 %v3420
    %v3516 = vunpack.c.l.b16 %v3421
    %v3517 = vunpack.c.h.b16 %v3421
    %v3518 = vpack.c.b16 %v3458, %v3454
    %v3519 = vpack.c.b16 %v3459, %v3455
    %v3520 = vpack.c.b16 %v3460, %v3456
    %v3521 = vpack.c.b16 %v3461, %v3457
    %v3522 = vpack.c.b16 %v3466, %v3462
    %v3523 = vpack.c.b16 %v3467, %v3463
    %v3524 = vpack.c.b16 %v3468, %v3464
    %v3525 = vpack.c.b16 %v3469, %v3465
    %v3526 = vpack.c.b16 %v3474, %v3470
    %v3527 = vpack.c.b16 %v3475, %v3471
    %v3528 = vpack.c.b16 %v3476, %v3472
    %v3529 = vpack.c.b16 %v3477, %v3473
    %v3530 = vpack.c.b16 %v3482, %v3478
    %v3531 = vpack.c.b16 %v3483, %v3479
    %v3532 = vpack.c.b16 %v3484, %v3480
    %v3533 = vpack.c.b16 %v3485, %v3481
    %v3534 = vpack.c.b16 %v3490, %v3486
    %v3535 = vpack.c.b16 %v3491, %v3487
    %v3536 = vpack.c.b16 %v3492, %v3488
    %v3537 = vpack.c.b16 %v3493, %v3489
    %v3538 = vpack.c.b16 %v3498, %v3494
    %v3539 = vpack.c.b16 %v3499, %v3495
    %v3540 = vpack.c.b16 %v3500, %v3496
    %v3541 = vpack.c.b16 %v3501, %v3497
    %v3542 = vpack.c.b16 %v3506, %v3502
    %v3543 = vpack.c.b16 %v3507, %v3503
    %v3544 = vpack.c.b16 %v3508, %v3504
    %v3545 = vpack.c.b16 %v3509, %v3505
    %v3546 = vpack.c.b16 %v3514, %v3510
    %v3547 = vpack.c.b16 %v3515, %v3511
    %v3548 = vpack.c.b16 %v3516, %v3512
    %v3549 = vpack.c.b16 %v3517, %v3513
    %3582 = vmatprep.subr.bf16.mxu0 %v3519
    %3583 = vmatpush1.bf16.msra.mxu0 %v3518
    %3584 = vmatprep.subr.bf16.mxu0 %v3523
    %3585 = vmatpush1.bf16.msra.mxu0 %v3522
    %3586 = vmatprep.subr.bf16.mxu0 %v3527
    %3587 = vmatpush1.bf16.msra.mxu0 %v3526
    %3588 = vmatprep.subr.bf16.mxu0 %v3531
    %3589 = vmatpush1.bf16.msra.mxu0 %v3530
    %3590 = vmatprep.subr.bf16.mxu0 %v3535
    %3591 = vmatpush1.bf16.msra.mxu0 %v3534
    %3592 = vmatprep.subr.bf16.mxu0 %v3539
    %3593 = vmatpush1.bf16.msra.mxu0 %v3538
    %3594 = vmatprep.subr.bf16.mxu0 %v3543
    %3595 = vmatpush1.bf16.msra.mxu0 %v3542
    %3596 = vmatprep.subr.bf16.mxu0 %v3547
    %3597 = vmatpush1.bf16.msra.mxu0 %v3546
    %3598 = vmatprep.subr.bf16.mxu0 0
    %3599 = vmatpush1.bf16.msra.mxu0 0
    %3600 = vmatprep.subr.bf16.mxu0 0
    %3601 = vmatpush1.bf16.msra.mxu0 0
    %3602 = vmatprep.subr.bf16.mxu0 0
    %3603 = vmatpush1.bf16.msra.mxu0 0
    %3604 = vmatprep.subr.bf16.mxu0 0
    %3605 = vmatpush1.bf16.msra.mxu0 0
    %3606 = vmatprep.subr.bf16.mxu0 0
    %3607 = vmatpush1.bf16.msra.mxu0 0
    %3608 = vmatprep.subr.bf16.mxu0 0
    %3609 = vmatpush1.bf16.msra.mxu0 0
    %3610 = vmatprep.subr.bf16.mxu0 0
    %3611 = vmatpush1.bf16.msra.mxu0 0
    %3612 = vmatprep.subr.bf16.mxu0 0
    %3613 = vmatpush1.bf16.msra.mxu0 0
    %3614 = vmatprep.mubr.bf16.mxu0 0
    %3615 = vmatmul.mubr.bf16.gmra.mrb[0].mxu0 %v3389
    %v3616 = vpop.f32.mrb[0].mxu0
    %v3617 = vadd.f32 0.0, %v3616
    %v3618 = vpop.f32.mrb[0].mxu0
    %v3619 = vadd.f32 0.0, %v3618
    %v3620 = vpop.f32.mrb[0].mxu0
    %v3621 = vadd.f32 0.0, %v3620
    %v3622 = vpop.f32.mrb[0].mxu0
    %v3623 = vadd.f32 0.0, %v3622
    %3624 = vdwg.mxu0
    %3625 = vmatprep.subr.bf16.mxu0 %v3521
    %3626 = vmatpush1.bf16.msra.mxu0 %v3520
    %3627 = vmatprep.subr.bf16.mxu0 %v3525
    %3628 = vmatpush1.bf16.msra.mxu0 %v3524
    %3629 = vmatprep.subr.bf16.mxu0 %v3529
    %3630 = vmatpush1.bf16.msra.mxu0 %v3528
    %3631 = vmatprep.subr.bf16.mxu0 %v3533
    %3632 = vmatpush1.bf16.msra.mxu0 %v3532
    %3633 = vmatprep.subr.bf16.mxu0 %v3537
    %3634 = vmatpush1.bf16.msra.mxu0 %v3536
    %3635 = vmatprep.subr.bf16.mxu0 %v3541
    %3636 = vmatpush1.bf16.msra.mxu0 %v3540
    %3637 = vmatprep.subr.bf16.mxu0 %v3545
    %3638 = vmatpush1.bf16.msra.mxu0 %v3544
    %3639 = vmatprep.subr.bf16.mxu0 %v3549
    %3640 = vmatpush1.bf16.msra.mxu0 %v3548
    %3641 = vmatprep.subr.bf16.mxu0 0
    %3642 = vmatpush1.bf16.msra.mxu0 0
    %3643 = vmatprep.subr.bf16.mxu0 0
    %3644 = vmatpush1.bf16.msra.mxu0 0
    %3645 = vmatprep.subr.bf16.mxu0 0
    %3646 = vmatpush1.bf16.msra.mxu0 0
    %3647 = vmatprep.subr.bf16.mxu0 0
    %3648 = vmatpush1.bf16.msra.mxu0 0
    %3649 = vmatprep.subr.bf16.mxu0 0
    %3650 = vmatpush1.bf16.msra.mxu0 0
    %3651 = vmatprep.subr.bf16.mxu0 0
    %3652 = vmatpush1.bf16.msra.mxu0 0
    %3653 = vmatprep.subr.bf16.mxu0 0
    %3654 = vmatpush1.bf16.msra.mxu0 0
    %3655 = vmatprep.subr.bf16.mxu0 0
    %3656 = vmatpush1.bf16.msra.mxu0 0
    %3657 = vmatprep.mubr.bf16.mxu0 0
    %3658 = vmatmul.mubr.bf16.gmra.mrb[0].mxu0 %v3389
    %v3659 = vpop.f32.mrb[0].mxu0
    %v3660 = vadd.f32 0.0, %v3659
    %v3661 = vpop.f32.mrb[0].mxu0
    %v3662 = vadd.f32 0.0, %v3661
    %v3663 = vpop.f32.mrb[0].mxu0
    %v3664 = vadd.f32 0.0, %v3663
    %v3665 = vpop.f32.mrb[0].mxu0
    %v3666 = vadd.f32 0.0, %v3665
    %3667 = vdwg.mxu0
    %v3700 = vunpack.c.l.b16 %v3357
    %v3701 = vunpack.c.h.b16 %v3357
    %v3702 = vunpack.c.l.b16 %v3358
    %v3703 = vunpack.c.h.b16 %v3358
    %v3704 = vunpack.c.l.b16 %v3359
    %v3705 = vunpack.c.h.b16 %v3359
    %v3706 = vunpack.c.l.b16 %v3360
    %v3707 = vunpack.c.h.b16 %v3360
    %v3708 = vunpack.c.l.b16 %v3361
    %v3709 = vunpack.c.h.b16 %v3361
    %v3710 = vunpack.c.l.b16 %v3362
    %v3711 = vunpack.c.h.b16 %v3362
    %v3712 = vunpack.c.l.b16 %v3363
    %v3713 = vunpack.c.h.b16 %v3363
    %v3714 = vunpack.c.l.b16 %v3364
    %v3715 = vunpack.c.h.b16 %v3364
    %v3716 = vunpack.c.l.b16 %v3365
    %v3717 = vunpack.c.h.b16 %v3365
    %v3718 = vunpack.c.l.b16 %v3366
    %v3719 = vunpack.c.h.b16 %v3366
    %v3720 = vunpack.c.l.b16 %v3367
    %v3721 = vunpack.c.h.b16 %v3367
    %v3722 = vunpack.c.l.b16 %v3368
    %v3723 = vunpack.c.h.b16 %v3368
    %v3724 = vunpack.c.l.b16 %v3369
    %v3725 = vunpack.c.h.b16 %v3369
    %v3726 = vunpack.c.l.b16 %v3370
    %v3727 = vunpack.c.h.b16 %v3370
    %v3728 = vunpack.c.l.b16 %v3371
    %v3729 = vunpack.c.h.b16 %v3371
    %v3730 = vunpack.c.l.b16 %v3372
    %v3731 = vunpack.c.h.b16 %v3372
    %v3732 = vunpack.c.l.b16 %v3373
    %v3733 = vunpack.c.h.b16 %v3373
    %v3734 = vunpack.c.l.b16 %v3374
    %v3735 = vunpack.c.h.b16 %v3374
    %v3736 = vunpack.c.l.b16 %v3375
    %v3737 = vunpack.c.h.b16 %v3375
    %v3738 = vunpack.c.l.b16 %v3376
    %v3739 = vunpack.c.h.b16 %v3376
    %v3740 = vunpack.c.l.b16 %v3377
    %v3741 = vunpack.c.h.b16 %v3377
    %v3742 = vunpack.c.l.b16 %v3378
    %v3743 = vunpack.c.h.b16 %v3378
    %v3744 = vunpack.c.l.b16 %v3379
    %v3745 = vunpack.c.h.b16 %v3379
    %v3746 = vunpack.c.l.b16 %v3380
    %v3747 = vunpack.c.h.b16 %v3380
    %v3748 = vunpack.c.l.b16 %v3381
    %v3749 = vunpack.c.h.b16 %v3381
    %v3750 = vunpack.c.l.b16 %v3382
    %v3751 = vunpack.c.h.b16 %v3382
    %v3752 = vunpack.c.l.b16 %v3383
    %v3753 = vunpack.c.h.b16 %v3383
    %v3754 = vunpack.c.l.b16 %v3384
    %v3755 = vunpack.c.h.b16 %v3384
    %v3756 = vunpack.c.l.b16 %v3385
    %v3757 = vunpack.c.h.b16 %v3385
    %v3758 = vunpack.c.l.b16 %v3386
    %v3759 = vunpack.c.h.b16 %v3386
    %v3760 = vunpack.c.l.b16 %v3387
    %v3761 = vunpack.c.h.b16 %v3387
    %v3762 = vunpack.c.l.b16 %v3388
    %v3763 = vunpack.c.h.b16 %v3388
    %v3764 = vpack.c.b16 %v3704, %v3700
    %v3765 = vpack.c.b16 %v3705, %v3701
    %v3766 = vpack.c.b16 %v3706, %v3702
    %v3767 = vpack.c.b16 %v3707, %v3703
    %v3768 = vpack.c.b16 %v3712, %v3708
    %v3769 = vpack.c.b16 %v3713, %v3709
    %v3770 = vpack.c.b16 %v3714, %v3710
    %v3771 = vpack.c.b16 %v3715, %v3711
    %v3772 = vpack.c.b16 %v3720, %v3716
    %v3773 = vpack.c.b16 %v3721, %v3717
    %v3774 = vpack.c.b16 %v3722, %v3718
    %v3775 = vpack.c.b16 %v3723, %v3719
    %v3776 = vpack.c.b16 %v3728, %v3724
    %v3777 = vpack.c.b16 %v3729, %v3725
    %v3778 = vpack.c.b16 %v3730, %v3726
    %v3779 = vpack.c.b16 %v3731, %v3727
    %v3780 = vpack.c.b16 %v3736, %v3732
    %v3781 = vpack.c.b16 %v3737, %v3733
    %v3782 = vpack.c.b16 %v3738, %v3734
    %v3783 = vpack.c.b16 %v3739, %v3735
    %v3784 = vpack.c.b16 %v3744, %v3740
    %v3785 = vpack.c.b16 %v3745, %v3741
    %v3786 = vpack.c.b16 %v3746, %v3742
    %v3787 = vpack.c.b16 %v3747, %v3743
    %v3788 = vpack.c.b16 %v3752, %v3748
    %v3789 = vpack.c.b16 %v3753, %v3749
    %v3790 = vpack.c.b16 %v3754, %v3750
    %v3791 = vpack.c.b16 %v3755, %v3751
    %v3792 = vpack.c.b16 %v3760, %v3756
    %v3793 = vpack.c.b16 %v3761, %v3757
    %v3794 = vpack.c.b16 %v3762, %v3758
    %v3795 = vpack.c.b16 %v3763, %v3759
    %3828 = vmatprep.subr.bf16.mxu0 %v3765
    %3829 = vmatpush1.bf16.msra.mxu0 %v3764
    %3830 = vmatprep.subr.bf16.mxu0 %v3769
    %3831 = vmatpush1.bf16.msra.mxu0 %v3768
    %3832 = vmatprep.subr.bf16.mxu0 %v3773
    %3833 = vmatpush1.bf16.msra.mxu0 %v3772
    %3834 = vmatprep.subr.bf16.mxu0 %v3777
    %3835 = vmatpush1.bf16.msra.mxu0 %v3776
    %3836 = vmatprep.subr.bf16.mxu0 %v3781
    %3837 = vmatpush1.bf16.msra.mxu0 %v3780
    %3838 = vmatprep.subr.bf16.mxu0 %v3785
    %3839 = vmatpush1.bf16.msra.mxu0 %v3784
    %3840 = vmatprep.subr.bf16.mxu0 %v3789
    %3841 = vmatpush1.bf16.msra.mxu0 %v3788
    %3842 = vmatprep.subr.bf16.mxu0 %v3793
    %3843 = vmatpush1.bf16.msra.mxu0 %v3792
    %3844 = vmatprep.subr.bf16.mxu0 0
    %3845 = vmatpush1.bf16.msra.mxu0 0
    %3846 = vmatprep.subr.bf16.mxu0 0
    %3847 = vmatpush1.bf16.msra.mxu0 0
    %3848 = vmatprep.subr.bf16.mxu0 0
    %3849 = vmatpush1.bf16.msra.mxu0 0
    %3850 = vmatprep.subr.bf16.mxu0 0
    %3851 = vmatpush1.bf16.msra.mxu0 0
    %3852 = vmatprep.subr.bf16.mxu0 0
    %3853 = vmatpush1.bf16.msra.mxu0 0
    %3854 = vmatprep.subr.bf16.mxu0 0
    %3855 = vmatpush1.bf16.msra.mxu0 0
    %3856 = vmatprep.subr.bf16.mxu0 0
    %3857 = vmatpush1.bf16.msra.mxu0 0
    %3858 = vmatprep.subr.bf16.mxu0 0
    %3859 = vmatpush1.bf16.msra.mxu0 0
    %3860 = vmatprep.mubr.bf16.mxu0 0
    %3861 = vmatmul.mubr.bf16.gmra.mrb[0].mxu0 %v3352
    %v3862 = vpop.f32.mrb[0].mxu0
    %v3863 = vadd.f32 %v3617, %v3862
    %v3864 = vpop.f32.mrb[0].mxu0
    %v3865 = vadd.f32 %v3619, %v3864
    %v3866 = vpop.f32.mrb[0].mxu0
    %v3867 = vadd.f32 %v3621, %v3866
    %v3868 = vpop.f32.mrb[0].mxu0
    %v3869 = vadd.f32 %v3623, %v3868
    %3870 = vdwg.mxu0
    %3871 = vmatprep.subr.bf16.mxu0 %v3767
    %3872 = vmatpush1.bf16.msra.mxu0 %v3766
    %3873 = vmatprep.subr.bf16.mxu0 %v3771
    %3874 = vmatpush1.bf16.msra.mxu0 %v3770
    %3875 = vmatprep.subr.bf16.mxu0 %v3775
    %3876 = vmatpush1.bf16.msra.mxu0 %v3774
    %3877 = vmatprep.subr.bf16.mxu0 %v3779
    %3878 = vmatpush1.bf16.msra.mxu0 %v3778
    %3879 = vmatprep.subr.bf16.mxu0 %v3783
    %3880 = vmatpush1.bf16.msra.mxu0 %v3782
    %3881 = vmatprep.subr.bf16.mxu0 %v3787
    %3882 = vmatpush1.bf16.msra.mxu0 %v3786
    %3883 = vmatprep.subr.bf16.mxu0 %v3791
    %3884 = vmatpush1.bf16.msra.mxu0 %v3790
    %3885 = vmatprep.subr.bf16.mxu0 %v3795
    %3886 = vmatpush1.bf16.msra.mxu0 %v3794
    %3887 = vmatprep.subr.bf16.mxu0 0
    %3888 = vmatpush1.bf16.msra.mxu0 0
    %3889 = vmatprep.subr.bf16.mxu0 0
    %3890 = vmatpush1.bf16.msra.mxu0 0
    %3891 = vmatprep.subr.bf16.mxu0 0
    %3892 = vmatpush1.bf16.msra.mxu0 0
    %3893 = vmatprep.subr.bf16.mxu0 0
    %3894 = vmatpush1.bf16.msra.mxu0 0
    %3895 = vmatprep.subr.bf16.mxu0 0
    %3896 = vmatpush1.bf16.msra.mxu0 0
    %3897 = vmatprep.subr.bf16.mxu0 0
    %3898 = vmatpush1.bf16.msra.mxu0 0
    %3899 = vmatprep.subr.bf16.mxu0 0
    %3900 = vmatpush1.bf16.msra.mxu0 0
    %3901 = vmatprep.subr.bf16.mxu0 0
    %3902 = vmatpush1.bf16.msra.mxu0 0
    %3903 = vmatprep.mubr.bf16.mxu0 0
    %3904 = vmatmul.mubr.bf16.gmra.mrb[0].mxu0 %v3352
    %v3905 = vpop.f32.mrb[0].mxu0
    %v3906 = vadd.f32 %v3660, %v3905
    %v3907 = vpop.f32.mrb[0].mxu0
    %v3908 = vadd.f32 %v3662, %v3907
    %v3909 = vpop.f32.mrb[0].mxu0
    %v3910 = vadd.f32 %v3664, %v3909
    %v3911 = vpop.f32.mrb[0].mxu0
    %v3912 = vadd.f32 %v3666, %v3911
    %3913 = vdwg.mxu0
    %v3914 = vld [vmem:[%s6] sm:$0xf]
    %v3916 = vlaneseq
    %v3917 = vshrl.u32 %v3916, 7
    %v3918 = vsub.s32 0, %v3917
    %v3919 = vrot.slane %v3914, %v3918
    %v3920 = vlaneseq
    %v3921 = vshrl.u32 %v3920, 7
    %v3922 = vsub.s32 1, %v3921
    %v3923 = vrot.slane %v3914, %v3922
    %v3924 = vlaneseq
    %v3925 = vshrl.u32 %v3924, 7
    %v3926 = vsub.s32 2, %v3925
    %v3927 = vrot.slane %v3914, %v3926
    %v3928 = vlaneseq
    %v3929 = vshrl.u32 %v3928, 7
    %v3930 = vsub.s32 3, %v3929
    %v3931 = vrot.slane %v3914, %v3930
    %v3936 = vadd.f32 %v3863, %v3919
    %v3937 = vadd.f32 %v3865, %v3923
    %v3938 = vadd.f32 %v3906, %v3927
    %v3939 = vadd.f32 %v3908, %v3931
    %v3940 = vadd.f32 %v3867, %v3919
    %v3941 = vadd.f32 %v3869, %v3923
    %v3942 = vadd.f32 %v3910, %v3927
    %v3943 = vadd.f32 %v3912, %v3931
    %v3944 = vxor.u32 %v3936, 2147483648
    %v3945 = vxor.u32 %v3940, 2147483648
    %v3946 = vmul.f32 %v3944, 1.442695
    %v3947 = vpow.pop %v3946
    %v3948 = vmul.f32 %v3945, 1.442695
    %v3949 = vpow.pop %v3948
    %v3950 = vadd.f32 %v3947, 1.0
    %v3951 = vadd.f32 %v3949, 1.0
    %v3952 = vrcp.pop %v3950
    %v3953 = vmul.f32 1.0, %v3952
    %v3954 = vrcp.pop %v3951
    %v3955 = vmul.f32 1.0, %v3954
    %v3956 = vxor.u32 %v3937, 2147483648
    %v3957 = vxor.u32 %v3941, 2147483648
    %v3958 = vmul.f32 %v3956, 1.442695
    %v3959 = vpow.pop %v3958
    %v3960 = vmul.f32 %v3957, 1.442695
    %v3961 = vpow.pop %v3960
    %v3962 = vadd.f32 %v3959, 1.0
    %v3963 = vadd.f32 %v3961, 1.0
    %v3964 = vrcp.pop %v3962
    %v3965 = vmul.f32 1.0, %v3964
    %v3966 = vrcp.pop %v3963
    %v3967 = vmul.f32 1.0, %v3966
    %v3968 = vtanh.pop %v3938
    %v3969 = vtanh.pop %v3942
    %v3970 = vxor.u32 %v3939, 2147483648
    %v3971 = vxor.u32 %v3943, 2147483648
    %v3972 = vmul.f32 %v3970, 1.442695
    %v3973 = vpow.pop %v3972
    %v3974 = vmul.f32 %v3971, 1.442695
    %v3975 = vpow.pop %v3974
    %v3976 = vadd.f32 %v3973, 1.0
    %v3977 = vadd.f32 %v3975, 1.0
    %v3978 = vrcp.pop %v3976
    %v3979 = vmul.f32 1.0, %v3978
    %v3980 = vrcp.pop %v3977
    %v3981 = vmul.f32 1.0, %v3980
    %v3982 = vmul.f32 %v3965, %v3355
    %v3983 = vmul.f32 %v3967, %v3356
    %v3984 = vmul.f32 %v3953, %v3968
    %v3985 = vmul.f32 %v3955, %v3969
    %v3986 = vadd.f32 %v3982, %v3984
    %v3987 = vadd.f32 %v3983, %v3985
    %v3988 = vtanh.pop %v3986
    %v3989 = vtanh.pop %v3987
    %v3990 = vmul.f32 %v3979, %v3988
    %v3991 = vmul.f32 %v3981, %v3989
    %3992 = vst [vmem:[%s759] sm:$0xff] %v3990
    %3993 = vst [vmem:[%s759 + $0x8] sm:$0xff] %v3991
    %3994 = vst [vmem:[%s762] sm:$0xff] %v3986
    %3995 = vst [vmem:[%s762 + $0x8] sm:$0xff] %v3987
    %s3996 = scalar_lea.vmem [#allocation4], 24
    %v3997 = vld [vmem:[%s3996] sm:$0xf]
    %v3998 = vld [vmem:[%s3996 + $0x4] sm:$0xf]
    %v3999 = vld [vmem:[#allocation2] sm:$0xff]
    %v4000 = vld [vmem:[#allocation2 + $0x8] sm:$0xff]
    %v4001 = vld [vmem:[#allocation3] sm:$0xff]
    %v4002 = vld [vmem:[#allocation3 + $0x8] sm:$0xff]
    %v4003 = vld [vmem:[#allocation7] sm:$0xff]
    %v4004 = vld [vmem:[#allocation7 + $0x8] sm:$0xff]
    %v4005 = vld [vmem:[#allocation7 + $0x10] sm:$0xff]
    %v4006 = vld [vmem:[#allocation7 + $0x18] sm:$0xff]
    %v4007 = vld [vmem:[#allocation7 + $0x20] sm:$0xff]
    %v4008 = vld [vmem:[#allocation7 + $0x28] sm:$0xff]
    %v4009 = vld [vmem:[#allocation7 + $0x30] sm:$0xff]
    %v4010 = vld [vmem:[#allocation7 + $0x38] sm:$0xff]
    %v4011 = vld [vmem:[#allocation7 + $0x40] sm:$0xff]
    %v4012 = vld [vmem:[#allocation7 + $0x48] sm:$0xff]
    %v4013 = vld [vmem:[#allocation7 + $0x50] sm:$0xff]
    %v4014 = vld [vmem:[#allocation7 + $0x58] sm:$0xff]
    %v4015 = vld [vmem:[#allocation7 + $0x60] sm:$0xff]
    %v4016 = vld [vmem:[#allocation7 + $0x68] sm:$0xff]
    %v4017 = vld [vmem:[#allocation7 + $0x70] sm:$0xff]
    %v4018 = vld [vmem:[#allocation7 + $0x78] sm:$0xff]
    %v4019 = vld [vmem:[#allocation7 + $0x80] sm:$0xff]
    %v4020 = vld [vmem:[#allocation7 + $0x88] sm:$0xff]
    %v4021 = vld [vmem:[#allocation7 + $0x90] sm:$0xff]
    %v4022 = vld [vmem:[#allocation7 + $0x98] sm:$0xff]
    %v4023 = vld [vmem:[#allocation7 + $0xa0] sm:$0xff]
    %v4024 = vld [vmem:[#allocation7 + $0xa8] sm:$0xff]
    %v4025 = vld [vmem:[#allocation7 + $0xb0] sm:$0xff]
    %v4026 = vld [vmem:[#allocation7 + $0xb8] sm:$0xff]
    %v4027 = vld [vmem:[#allocation7 + $0xc0] sm:$0xff]
    %v4028 = vld [vmem:[#allocation7 + $0xc8] sm:$0xff]
    %v4029 = vld [vmem:[#allocation7 + $0xd0] sm:$0xff]
    %v4030 = vld [vmem:[#allocation7 + $0xd8] sm:$0xff]
    %v4031 = vld [vmem:[#allocation7 + $0xe0] sm:$0xff]
    %v4032 = vld [vmem:[#allocation7 + $0xe8] sm:$0xff]
    %v4033 = vld [vmem:[#allocation7 + $0xf0] sm:$0xff]
    %v4034 = vld [vmem:[#allocation7 + $0xf8] sm:$0xff]
    %v4035 = vpack.c.bf16 %v4000, %v3999
    %v4036 = vld [vmem:[#allocation9] sm:$0xff]
    %v4037 = vld [vmem:[#allocation9 + $0x8] sm:$0xff]
    %v4038 = vld [vmem:[#allocation9 + $0x10] sm:$0xff]
    %v4039 = vld [vmem:[#allocation9 + $0x18] sm:$0xff]
    %v4040 = vld [vmem:[#allocation9 + $0x20] sm:$0xff]
    %v4041 = vld [vmem:[#allocation9 + $0x28] sm:$0xff]
    %v4042 = vld [vmem:[#allocation9 + $0x30] sm:$0xff]
    %v4043 = vld [vmem:[#allocation9 + $0x38] sm:$0xff]
    %v4044 = vld [vmem:[#allocation9 + $0x40] sm:$0xff]
    %v4045 = vld [vmem:[#allocation9 + $0x48] sm:$0xff]
    %v4046 = vld [vmem:[#allocation9 + $0x50] sm:$0xff]
    %v4047 = vld [vmem:[#allocation9 + $0x58] sm:$0xff]
    %v4048 = vld [vmem:[#allocation9 + $0x60] sm:$0xff]
    %v4049 = vld [vmem:[#allocation9 + $0x68] sm:$0xff]
    %v4050 = vld [vmem:[#allocation9 + $0x70] sm:$0xff]
    %v4051 = vld [vmem:[#allocation9 + $0x78] sm:$0xff]
    %v4052 = vld [vmem:[#allocation9 + $0x80] sm:$0xff]
    %v4053 = vld [vmem:[#allocation9 + $0x88] sm:$0xff]
    %v4054 = vld [vmem:[#allocation9 + $0x90] sm:$0xff]
    %v4055 = vld [vmem:[#allocation9 + $0x98] sm:$0xff]
    %v4056 = vld [vmem:[#allocation9 + $0xa0] sm:$0xff]
    %v4057 = vld [vmem:[#allocation9 + $0xa8] sm:$0xff]
    %v4058 = vld [vmem:[#allocation9 + $0xb0] sm:$0xff]
    %v4059 = vld [vmem:[#allocation9 + $0xb8] sm:$0xff]
    %v4060 = vld [vmem:[#allocation9 + $0xc0] sm:$0xff]
    %v4061 = vld [vmem:[#allocation9 + $0xc8] sm:$0xff]
    %v4062 = vld [vmem:[#allocation9 + $0xd0] sm:$0xff]
    %v4063 = vld [vmem:[#allocation9 + $0xd8] sm:$0xff]
    %v4064 = vld [vmem:[#allocation9 + $0xe0] sm:$0xff]
    %v4065 = vld [vmem:[#allocation9 + $0xe8] sm:$0xff]
    %v4066 = vld [vmem:[#allocation9 + $0xf0] sm:$0xff]
    %v4067 = vld [vmem:[#allocation9 + $0xf8] sm:$0xff]
    %v4100 = vunpack.c.l.b16 %v4036
    %v4101 = vunpack.c.h.b16 %v4036
    %v4102 = vunpack.c.l.b16 %v4037
    %v4103 = vunpack.c.h.b16 %v4037
    %v4104 = vunpack.c.l.b16 %v4038
    %v4105 = vunpack.c.h.b16 %v4038
    %v4106 = vunpack.c.l.b16 %v4039
    %v4107 = vunpack.c.h.b16 %v4039
    %v4108 = vunpack.c.l.b16 %v4040
    %v4109 = vunpack.c.h.b16 %v4040
    %v4110 = vunpack.c.l.b16 %v4041
    %v4111 = vunpack.c.h.b16 %v4041
    %v4112 = vunpack.c.l.b16 %v4042
    %v4113 = vunpack.c.h.b16 %v4042
    %v4114 = vunpack.c.l.b16 %v4043
    %v4115 = vunpack.c.h.b16 %v4043
    %v4116 = vunpack.c.l.b16 %v4044
    %v4117 = vunpack.c.h.b16 %v4044
    %v4118 = vunpack.c.l.b16 %v4045
    %v4119 = vunpack.c.h.b16 %v4045
    %v4120 = vunpack.c.l.b16 %v4046
    %v4121 = vunpack.c.h.b16 %v4046
    %v4122 = vunpack.c.l.b16 %v4047
    %v4123 = vunpack.c.h.b16 %v4047
    %v4124 = vunpack.c.l.b16 %v4048
    %v4125 = vunpack.c.h.b16 %v4048
    %v4126 = vunpack.c.l.b16 %v4049
    %v4127 = vunpack.c.h.b16 %v4049
    %v4128 = vunpack.c.l.b16 %v4050
    %v4129 = vunpack.c.h.b16 %v4050
    %v4130 = vunpack.c.l.b16 %v4051
    %v4131 = vunpack.c.h.b16 %v4051
    %v4132 = vunpack.c.l.b16 %v4052
    %v4133 = vunpack.c.h.b16 %v4052
    %v4134 = vunpack.c.l.b16 %v4053
    %v4135 = vunpack.c.h.b16 %v4053
    %v4136 = vunpack.c.l.b16 %v4054
    %v4137 = vunpack.c.h.b16 %v4054
    %v4138 = vunpack.c.l.b16 %v4055
    %v4139 = vunpack.c.h.b16 %v4055
    %v4140 = vunpack.c.l.b16 %v4056
    %v4141 = vunpack.c.h.b16 %v4056
    %v4142 = vunpack.c.l.b16 %v4057
    %v4143 = vunpack.c.h.b16 %v4057
    %v4144 = vunpack.c.l.b16 %v4058
    %v4145 = vunpack.c.h.b16 %v4058
    %v4146 = vunpack.c.l.b16 %v4059
    %v4147 = vunpack.c.h.b16 %v4059
    %v4148 = vunpack.c.l.b16 %v4060
    %v4149 = vunpack.c.h.b16 %v4060
    %v4150 = vunpack.c.l.b16 %v4061
    %v4151 = vunpack.c.h.b16 %v4061
    %v4152 = vunpack.c.l.b16 %v4062
    %v4153 = vunpack.c.h.b16 %v4062
    %v4154 = vunpack.c.l.b16 %v4063
    %v4155 = vunpack.c.h.b16 %v4063
    %v4156 = vunpack.c.l.b16 %v4064
    %v4157 = vunpack.c.h.b16 %v4064
    %v4158 = vunpack.c.l.b16 %v4065
    %v4159 = vunpack.c.h.b16 %v4065
    %v4160 = vunpack.c.l.b16 %v4066
    %v4161 = vunpack.c.h.b16 %v4066
    %v4162 = vunpack.c.l.b16 %v4067
    %v4163 = vunpack.c.h.b16 %v4067
    %v4164 = vpack.c.b16 %v4104, %v4100
    %v4165 = vpack.c.b16 %v4105, %v4101
    %v4166 = vpack.c.b16 %v4106, %v4102
    %v4167 = vpack.c.b16 %v4107, %v4103
    %v4168 = vpack.c.b16 %v4112, %v4108
    %v4169 = vpack.c.b16 %v4113, %v4109
    %v4170 = vpack.c.b16 %v4114, %v4110
    %v4171 = vpack.c.b16 %v4115, %v4111
    %v4172 = vpack.c.b16 %v4120, %v4116
    %v4173 = vpack.c.b16 %v4121, %v4117
    %v4174 = vpack.c.b16 %v4122, %v4118
    %v4175 = vpack.c.b16 %v4123, %v4119
    %v4176 = vpack.c.b16 %v4128, %v4124
    %v4177 = vpack.c.b16 %v4129, %v4125
    %v4178 = vpack.c.b16 %v4130, %v4126
    %v4179 = vpack.c.b16 %v4131, %v4127
    %v4180 = vpack.c.b16 %v4136, %v4132
    %v4181 = vpack.c.b16 %v4137, %v4133
    %v4182 = vpack.c.b16 %v4138, %v4134
    %v4183 = vpack.c.b16 %v4139, %v4135
    %v4184 = vpack.c.b16 %v4144, %v4140
    %v4185 = vpack.c.b16 %v4145, %v4141
    %v4186 = vpack.c.b16 %v4146, %v4142
    %v4187 = vpack.c.b16 %v4147, %v4143
    %v4188 = vpack.c.b16 %v4152, %v4148
    %v4189 = vpack.c.b16 %v4153, %v4149
    %v4190 = vpack.c.b16 %v4154, %v4150
    %v4191 = vpack.c.b16 %v4155, %v4151
    %v4192 = vpack.c.b16 %v4160, %v4156
    %v4193 = vpack.c.b16 %v4161, %v4157
    %v4194 = vpack.c.b16 %v4162, %v4158
    %v4195 = vpack.c.b16 %v4163, %v4159
    %4228 = vmatprep.subr.bf16.mxu0 %v4165
    %4229 = vmatpush1.bf16.msra.mxu0 %v4164
    %4230 = vmatprep.subr.bf16.mxu0 %v4169
    %4231 = vmatpush1.bf16.msra.mxu0 %v4168
    %4232 = vmatprep.subr.bf16.mxu0 %v4173
    %4233 = vmatpush1.bf16.msra.mxu0 %v4172
    %4234 = vmatprep.subr.bf16.mxu0 %v4177
    %4235 = vmatpush1.bf16.msra.mxu0 %v4176
    %4236 = vmatprep.subr.bf16.mxu0 %v4181
    %4237 = vmatpush1.bf16.msra.mxu0 %v4180
    %4238 = vmatprep.subr.bf16.mxu0 %v4185
    %4239 = vmatpush1.bf16.msra.mxu0 %v4184
    %4240 = vmatprep.subr.bf16.mxu0 %v4189
    %4241 = vmatpush1.bf16.msra.mxu0 %v4188
    %4242 = vmatprep.subr.bf16.mxu0 %v4193
    %4243 = vmatpush1.bf16.msra.mxu0 %v4192
    %4244 = vmatprep.subr.bf16.mxu0 0
    %4245 = vmatpush1.bf16.msra.mxu0 0
    %4246 = vmatprep.subr.bf16.mxu0 0
    %4247 = vmatpush1.bf16.msra.mxu0 0
    %4248 = vmatprep.subr.bf16.mxu0 0
    %4249 = vmatpush1.bf16.msra.mxu0 0
    %4250 = vmatprep.subr.bf16.mxu0 0
    %4251 = vmatpush1.bf16.msra.mxu0 0
    %4252 = vmatprep.subr.bf16.mxu0 0
    %4253 = vmatpush1.bf16.msra.mxu0 0
    %4254 = vmatprep.subr.bf16.mxu0 0
    %4255 = vmatpush1.bf16.msra.mxu0 0
    %4256 = vmatprep.subr.bf16.mxu0 0
    %4257 = vmatpush1.bf16.msra.mxu0 0
    %4258 = vmatprep.subr.bf16.mxu0 0
    %4259 = vmatpush1.bf16.msra.mxu0 0
    %4260 = vmatprep.mubr.bf16.mxu0 0
    %4261 = vmatmul.mubr.bf16.gmra.mrb[0].mxu0 %v4035
    %v4262 = vpop.f32.mrb[0].mxu0
    %v4263 = vadd.f32 0.0, %v4262
    %v4264 = vpop.f32.mrb[0].mxu0
    %v4265 = vadd.f32 0.0, %v4264
    %v4266 = vpop.f32.mrb[0].mxu0
    %v4267 = vadd.f32 0.0, %v4266
    %v4268 = vpop.f32.mrb[0].mxu0
    %v4269 = vadd.f32 0.0, %v4268
    %4270 = vdwg.mxu0
    %4271 = vmatprep.subr.bf16.mxu0 %v4167
    %4272 = vmatpush1.bf16.msra.mxu0 %v4166
    %4273 = vmatprep.subr.bf16.mxu0 %v4171
    %4274 = vmatpush1.bf16.msra.mxu0 %v4170
    %4275 = vmatprep.subr.bf16.mxu0 %v4175
    %4276 = vmatpush1.bf16.msra.mxu0 %v4174
    %4277 = vmatprep.subr.bf16.mxu0 %v4179
    %4278 = vmatpush1.bf16.msra.mxu0 %v4178
    %4279 = vmatprep.subr.bf16.mxu0 %v4183
    %4280 = vmatpush1.bf16.msra.mxu0 %v4182
    %4281 = vmatprep.subr.bf16.mxu0 %v4187
    %4282 = vmatpush1.bf16.msra.mxu0 %v4186
    %4283 = vmatprep.subr.bf16.mxu0 %v4191
    %4284 = vmatpush1.bf16.msra.mxu0 %v4190
    %4285 = vmatprep.subr.bf16.mxu0 %v4195
    %4286 = vmatpush1.bf16.msra.mxu0 %v4194
    %4287 = vmatprep.subr.bf16.mxu0 0
    %4288 = vmatpush1.bf16.msra.mxu0 0
    %4289 = vmatprep.subr.bf16.mxu0 0
    %4290 = vmatpush1.bf16.msra.mxu0 0
    %4291 = vmatprep.subr.bf16.mxu0 0
    %4292 = vmatpush1.bf16.msra.mxu0 0
    %4293 = vmatprep.subr.bf16.mxu0 0
    %4294 = vmatpush1.bf16.msra.mxu0 0
    %4295 = vmatprep.subr.bf16.mxu0 0
    %4296 = vmatpush1.bf16.msra.mxu0 0
    %4297 = vmatprep.subr.bf16.mxu0 0
    %4298 = vmatpush1.bf16.msra.mxu0 0
    %4299 = vmatprep.subr.bf16.mxu0 0
    %4300 = vmatpush1.bf16.msra.mxu0 0
    %4301 = vmatprep.subr.bf16.mxu0 0
    %4302 = vmatpush1.bf16.msra.mxu0 0
    %4303 = vmatprep.mubr.bf16.mxu0 0
    %4304 = vmatmul.mubr.bf16.gmra.mrb[0].mxu0 %v4035
    %v4305 = vpop.f32.mrb[0].mxu0
    %v4306 = vadd.f32 0.0, %v4305
    %v4307 = vpop.f32.mrb[0].mxu0
    %v4308 = vadd.f32 0.0, %v4307
    %v4309 = vpop.f32.mrb[0].mxu0
    %v4310 = vadd.f32 0.0, %v4309
    %v4311 = vpop.f32.mrb[0].mxu0
    %v4312 = vadd.f32 0.0, %v4311
    %4313 = vdwg.mxu0
    %v4316 = vunpack.c.l.b16 %v3997
    %v4317 = vunpack.c.l.b16 %v3998
    %v4318 = vpack.c.b16 %v4317, %v4316
    %v4352 = vunpack.c.l.b16 %v4003
    %v4353 = vunpack.c.h.b16 %v4003
    %v4354 = vunpack.c.l.b16 %v4004
    %v4355 = vunpack.c.h.b16 %v4004
    %v4356 = vunpack.c.l.b16 %v4005
    %v4357 = vunpack.c.h.b16 %v4005
    %v4358 = vunpack.c.l.b16 %v4006
    %v4359 = vunpack.c.h.b16 %v4006
    %v4360 = vunpack.c.l.b16 %v4007
    %v4361 = vunpack.c.h.b16 %v4007
    %v4362 = vunpack.c.l.b16 %v4008
    %v4363 = vunpack.c.h.b16 %v4008
    %v4364 = vunpack.c.l.b16 %v4009
    %v4365 = vunpack.c.h.b16 %v4009
    %v4366 = vunpack.c.l.b16 %v4010
    %v4367 = vunpack.c.h.b16 %v4010
    %v4368 = vunpack.c.l.b16 %v4011
    %v4369 = vunpack.c.h.b16 %v4011
    %v4370 = vunpack.c.l.b16 %v4012
    %v4371 = vunpack.c.h.b16 %v4012
    %v4372 = vunpack.c.l.b16 %v4013
    %v4373 = vunpack.c.h.b16 %v4013
    %v4374 = vunpack.c.l.b16 %v4014
    %v4375 = vunpack.c.h.b16 %v4014
    %v4376 = vunpack.c.l.b16 %v4015
    %v4377 = vunpack.c.h.b16 %v4015
    %v4378 = vunpack.c.l.b16 %v4016
    %v4379 = vunpack.c.h.b16 %v4016
    %v4380 = vunpack.c.l.b16 %v4017
    %v4381 = vunpack.c.h.b16 %v4017
    %v4382 = vunpack.c.l.b16 %v4018
    %v4383 = vunpack.c.h.b16 %v4018
    %v4384 = vunpack.c.l.b16 %v4019
    %v4385 = vunpack.c.h.b16 %v4019
    %v4386 = vunpack.c.l.b16 %v4020
    %v4387 = vunpack.c.h.b16 %v4020
    %v4388 = vunpack.c.l.b16 %v4021
    %v4389 = vunpack.c.h.b16 %v4021
    %v4390 = vunpack.c.l.b16 %v4022
    %v4391 = vunpack.c.h.b16 %v4022
    %v4392 = vunpack.c.l.b16 %v4023
    %v4393 = vunpack.c.h.b16 %v4023
    %v4394 = vunpack.c.l.b16 %v4024
    %v4395 = vunpack.c.h.b16 %v4024
    %v4396 = vunpack.c.l.b16 %v4025
    %v4397 = vunpack.c.h.b16 %v4025
    %v4398 = vunpack.c.l.b16 %v4026
    %v4399 = vunpack.c.h.b16 %v4026
    %v4400 = vunpack.c.l.b16 %v4027
    %v4401 = vunpack.c.h.b16 %v4027
    %v4402 = vunpack.c.l.b16 %v4028
    %v4403 = vunpack.c.h.b16 %v4028
    %v4404 = vunpack.c.l.b16 %v4029
    %v4405 = vunpack.c.h.b16 %v4029
    %v4406 = vunpack.c.l.b16 %v4030
    %v4407 = vunpack.c.h.b16 %v4030
    %v4408 = vunpack.c.l.b16 %v4031
    %v4409 = vunpack.c.h.b16 %v4031
    %v4410 = vunpack.c.l.b16 %v4032
    %v4411 = vunpack.c.h.b16 %v4032
    %v4412 = vunpack.c.l.b16 %v4033
    %v4413 = vunpack.c.h.b16 %v4033
    %v4414 = vunpack.c.l.b16 %v4034
    %v4415 = vunpack.c.h.b16 %v4034
    %v4416 = vpack.c.b16 %v4356, %v4352
    %v4417 = vpack.c.b16 %v4357, %v4353
    %v4418 = vpack.c.b16 %v4358, %v4354
    %v4419 = vpack.c.b16 %v4359, %v4355
    %v4420 = vpack.c.b16 %v4364, %v4360
    %v4421 = vpack.c.b16 %v4365, %v4361
    %v4422 = vpack.c.b16 %v4366, %v4362
    %v4423 = vpack.c.b16 %v4367, %v4363
    %v4424 = vpack.c.b16 %v4372, %v4368
    %v4425 = vpack.c.b16 %v4373, %v4369
    %v4426 = vpack.c.b16 %v4374, %v4370
    %v4427 = vpack.c.b16 %v4375, %v4371
    %v4428 = vpack.c.b16 %v4380, %v4376
    %v4429 = vpack.c.b16 %v4381, %v4377
    %v4430 = vpack.c.b16 %v4382, %v4378
    %v4431 = vpack.c.b16 %v4383, %v4379
    %v4432 = vpack.c.b16 %v4388, %v4384
    %v4433 = vpack.c.b16 %v4389, %v4385
    %v4434 = vpack.c.b16 %v4390, %v4386
    %v4435 = vpack.c.b16 %v4391, %v4387
    %v4436 = vpack.c.b16 %v4396, %v4392
    %v4437 = vpack.c.b16 %v4397, %v4393
    %v4438 = vpack.c.b16 %v4398, %v4394
    %v4439 = vpack.c.b16 %v4399, %v4395
    %v4440 = vpack.c.b16 %v4404, %v4400
    %v4441 = vpack.c.b16 %v4405, %v4401
    %v4442 = vpack.c.b16 %v4406, %v4402
    %v4443 = vpack.c.b16 %v4407, %v4403
    %v4444 = vpack.c.b16 %v4412, %v4408
    %v4445 = vpack.c.b16 %v4413, %v4409
    %v4446 = vpack.c.b16 %v4414, %v4410
    %v4447 = vpack.c.b16 %v4415, %v4411
    %4480 = vmatprep.subr.bf16.mxu0 %v4417
    %4481 = vmatpush1.bf16.msra.mxu0 %v4416
    %4482 = vmatprep.subr.bf16.mxu0 %v4421
    %4483 = vmatpush1.bf16.msra.mxu0 %v4420
    %4484 = vmatprep.subr.bf16.mxu0 %v4425
    %4485 = vmatpush1.bf16.msra.mxu0 %v4424
    %4486 = vmatprep.subr.bf16.mxu0 %v4429
    %4487 = vmatpush1.bf16.msra.mxu0 %v4428
    %4488 = vmatprep.subr.bf16.mxu0 %v4433
    %4489 = vmatpush1.bf16.msra.mxu0 %v4432
    %4490 = vmatprep.subr.bf16.mxu0 %v4437
    %4491 = vmatpush1.bf16.msra.mxu0 %v4436
    %4492 = vmatprep.subr.bf16.mxu0 %v4441
    %4493 = vmatpush1.bf16.msra.mxu0 %v4440
    %4494 = vmatprep.subr.bf16.mxu0 %v4445
    %4495 = vmatpush1.bf16.msra.mxu0 %v4444
    %4496 = vmatprep.subr.bf16.mxu0 0
    %4497 = vmatpush1.bf16.msra.mxu0 0
    %4498 = vmatprep.subr.bf16.mxu0 0
    %4499 = vmatpush1.bf16.msra.mxu0 0
    %4500 = vmatprep.subr.bf16.mxu0 0
    %4501 = vmatpush1.bf16.msra.mxu0 0
    %4502 = vmatprep.subr.bf16.mxu0 0
    %4503 = vmatpush1.bf16.msra.mxu0 0
    %4504 = vmatprep.subr.bf16.mxu0 0
    %4505 = vmatpush1.bf16.msra.mxu0 0
    %4506 = vmatprep.subr.bf16.mxu0 0
    %4507 = vmatpush1.bf16.msra.mxu0 0
    %4508 = vmatprep.subr.bf16.mxu0 0
    %4509 = vmatpush1.bf16.msra.mxu0 0
    %4510 = vmatprep.subr.bf16.mxu0 0
    %4511 = vmatpush1.bf16.msra.mxu0 0
    %4512 = vmatprep.mubr.bf16.mxu0 0
    %4513 = vmatmul.mubr.bf16.gmra.mrb[0].mxu0 %v4318
    %v4514 = vpop.f32.mrb[0].mxu0
    %v4515 = vadd.f32 %v4263, %v4514
    %v4516 = vpop.f32.mrb[0].mxu0
    %v4517 = vadd.f32 %v4265, %v4516
    %v4518 = vpop.f32.mrb[0].mxu0
    %v4519 = vadd.f32 %v4267, %v4518
    %v4520 = vpop.f32.mrb[0].mxu0
    %v4521 = vadd.f32 %v4269, %v4520
    %4522 = vdwg.mxu0
    %4523 = vmatprep.subr.bf16.mxu0 %v4419
    %4524 = vmatpush1.bf16.msra.mxu0 %v4418
    %4525 = vmatprep.subr.bf16.mxu0 %v4423
    %4526 = vmatpush1.bf16.msra.mxu0 %v4422
    %4527 = vmatprep.subr.bf16.mxu0 %v4427
    %4528 = vmatpush1.bf16.msra.mxu0 %v4426
    %4529 = vmatprep.subr.bf16.mxu0 %v4431
    %4530 = vmatpush1.bf16.msra.mxu0 %v4430
    %4531 = vmatprep.subr.bf16.mxu0 %v4435
    %4532 = vmatpush1.bf16.msra.mxu0 %v4434
    %4533 = vmatprep.subr.bf16.mxu0 %v4439
    %4534 = vmatpush1.bf16.msra.mxu0 %v4438
    %4535 = vmatprep.subr.bf16.mxu0 %v4443
    %4536 = vmatpush1.bf16.msra.mxu0 %v4442
    %4537 = vmatprep.subr.bf16.mxu0 %v4447
    %4538 = vmatpush1.bf16.msra.mxu0 %v4446
    %4539 = vmatprep.subr.bf16.mxu0 0
    %4540 = vmatpush1.bf16.msra.mxu0 0
    %4541 = vmatprep.subr.bf16.mxu0 0
    %4542 = vmatpush1.bf16.msra.mxu0 0
    %4543 = vmatprep.subr.bf16.mxu0 0
    %4544 = vmatpush1.bf16.msra.mxu0 0
    %4545 = vmatprep.subr.bf16.mxu0 0
    %4546 = vmatpush1.bf16.msra.mxu0 0
    %4547 = vmatprep.subr.bf16.mxu0 0
    %4548 = vmatpush1.bf16.msra.mxu0 0
    %4549 = vmatprep.subr.bf16.mxu0 0
    %4550 = vmatpush1.bf16.msra.mxu0 0
    %4551 = vmatprep.subr.bf16.mxu0 0
    %4552 = vmatpush1.bf16.msra.mxu0 0
    %4553 = vmatprep.subr.bf16.mxu0 0
    %4554 = vmatpush1.bf16.msra.mxu0 0
    %4555 = vmatprep.mubr.bf16.mxu0 0
    %4556 = vmatmul.mubr.bf16.gmra.mrb[0].mxu0 %v4318
    %v4557 = vpop.f32.mrb[0].mxu0
    %v4558 = vadd.f32 %v4306, %v4557
    %v4559 = vpop.f32.mrb[0].mxu0
    %v4560 = vadd.f32 %v4308, %v4559
    %v4561 = vpop.f32.mrb[0].mxu0
    %v4562 = vadd.f32 %v4310, %v4561
    %v4563 = vpop.f32.mrb[0].mxu0
    %v4564 = vadd.f32 %v4312, %v4563
    %4565 = vdwg.mxu0
    %v4566 = vld [vmem:[%s3] sm:$0xf]
    %v4568 = vlaneseq
    %v4569 = vshrl.u32 %v4568, 7
    %v4570 = vsub.s32 0, %v4569
    %v4571 = vrot.slane %v4566, %v4570
    %v4572 = vlaneseq
    %v4573 = vshrl.u32 %v4572, 7
    %v4574 = vsub.s32 1, %v4573
    %v4575 = vrot.slane %v4566, %v4574
    %v4576 = vlaneseq
    %v4577 = vshrl.u32 %v4576, 7
    %v4578 = vsub.s32 2, %v4577
    %v4579 = vrot.slane %v4566, %v4578
    %v4580 = vlaneseq
    %v4581 = vshrl.u32 %v4580, 7
    %v4582 = vsub.s32 3, %v4581
    %v4583 = vrot.slane %v4566, %v4582
    %v4588 = vadd.f32 %v4515, %v4571
    %v4589 = vadd.f32 %v4517, %v4575
    %v4590 = vadd.f32 %v4558, %v4579
    %v4591 = vadd.f32 %v4560, %v4583
    %v4592 = vadd.f32 %v4519, %v4571
    %v4593 = vadd.f32 %v4521, %v4575
    %v4594 = vadd.f32 %v4562, %v4579
    %v4595 = vadd.f32 %v4564, %v4583
    %v4596 = vxor.u32 %v4588, 2147483648
    %v4597 = vxor.u32 %v4592, 2147483648
    %v4598 = vmul.f32 %v4596, 1.442695
    %v4599 = vpow.pop %v4598
    %v4600 = vmul.f32 %v4597, 1.442695
    %v4601 = vpow.pop %v4600
    %v4602 = vadd.f32 %v4599, 1.0
    %v4603 = vadd.f32 %v4601, 1.0
    %v4604 = vrcp.pop %v4602
    %v4605 = vmul.f32 1.0, %v4604
    %v4606 = vrcp.pop %v4603
    %v4607 = vmul.f32 1.0, %v4606
    %v4608 = vxor.u32 %v4589, 2147483648
    %v4609 = vxor.u32 %v4593, 2147483648
    %v4610 = vmul.f32 %v4608, 1.442695
    %v4611 = vpow.pop %v4610
    %v4612 = vmul.f32 %v4609, 1.442695
    %v4613 = vpow.pop %v4612
    %v4614 = vadd.f32 %v4611, 1.0
    %v4615 = vadd.f32 %v4613, 1.0
    %v4616 = vrcp.pop %v4614
    %v4617 = vmul.f32 1.0, %v4616
    %v4618 = vrcp.pop %v4615
    %v4619 = vmul.f32 1.0, %v4618
    %v4620 = vtanh.pop %v4590
    %v4621 = vtanh.pop %v4594
    %v4622 = vxor.u32 %v4591, 2147483648
    %v4623 = vxor.u32 %v4595, 2147483648
    %v4624 = vmul.f32 %v4622, 1.442695
    %v4625 = vpow.pop %v4624
    %v4626 = vmul.f32 %v4623, 1.442695
    %v4627 = vpow.pop %v4626
    %v4628 = vadd.f32 %v4625, 1.0
    %v4629 = vadd.f32 %v4627, 1.0
    %v4630 = vrcp.pop %v4628
    %v4631 = vmul.f32 1.0, %v4630
    %v4632 = vrcp.pop %v4629
    %v4633 = vmul.f32 1.0, %v4632
    %v4634 = vmul.f32 %v4617, %v4001
    %v4635 = vmul.f32 %v4619, %v4002
    %v4636 = vmul.f32 %v4605, %v4620
    %v4637 = vmul.f32 %v4607, %v4621
    %v4638 = vadd.f32 %v4634, %v4636
    %v4639 = vadd.f32 %v4635, %v4637
    %v4640 = vtanh.pop %v4638
    %v4641 = vtanh.pop %v4639
    %v4642 = vmul.f32 %v4631, %v4640
    %v4643 = vmul.f32 %v4633, %v4641
    %4644 = vst [vmem:[#allocation2] sm:$0xff] %v4642
    %4645 = vst [vmem:[#allocation2 + $0x8] sm:$0xff] %v4643
    %4646 = vst [vmem:[#allocation3] sm:$0xff] %v4638
    %4647 = vst [vmem:[#allocation3 + $0x8] sm:$0xff] %v4639
    %v4648 = vpack.c.bf16 %v4643, %v4642
    %v4649 = vld [vmem:[%s759] sm:$0xff]
    %v4650 = vld [vmem:[%s759 + $0x8] sm:$0xff]
    %v4651 = vld [vmem:[%s762] sm:$0xff]
    %v4652 = vld [vmem:[%s762 + $0x8] sm:$0xff]
    %v4653 = vld [vmem:[#allocation10] sm:$0xff]
    %v4654 = vld [vmem:[#allocation10 + $0x8] sm:$0xff]
    %v4655 = vld [vmem:[#allocation10 + $0x10] sm:$0xff]
    %v4656 = vld [vmem:[#allocation10 + $0x18] sm:$0xff]
    %v4657 = vld [vmem:[#allocation10 + $0x20] sm:$0xff]
    %v4658 = vld [vmem:[#allocation10 + $0x28] sm:$0xff]
    %v4659 = vld [vmem:[#allocation10 + $0x30] sm:$0xff]
    %v4660 = vld [vmem:[#allocation10 + $0x38] sm:$0xff]
    %v4661 = vld [vmem:[#allocation10 + $0x40] sm:$0xff]
    %v4662 = vld [vmem:[#allocation10 + $0x48] sm:$0xff]
    %v4663 = vld [vmem:[#allocation10 + $0x50] sm:$0xff]
    %v4664 = vld [vmem:[#allocation10 + $0x58] sm:$0xff]
    %v4665 = vld [vmem:[#allocation10 + $0x60] sm:$0xff]
    %v4666 = vld [vmem:[#allocation10 + $0x68] sm:$0xff]
    %v4667 = vld [vmem:[#allocation10 + $0x70] sm:$0xff]
    %v4668 = vld [vmem:[#allocation10 + $0x78] sm:$0xff]
    %v4669 = vld [vmem:[#allocation10 + $0x80] sm:$0xff]
    %v4670 = vld [vmem:[#allocation10 + $0x88] sm:$0xff]
    %v4671 = vld [vmem:[#allocation10 + $0x90] sm:$0xff]
    %v4672 = vld [vmem:[#allocation10 + $0x98] sm:$0xff]
    %v4673 = vld [vmem:[#allocation10 + $0xa0] sm:$0xff]
    %v4674 = vld [vmem:[#allocation10 + $0xa8] sm:$0xff]
    %v4675 = vld [vmem:[#allocation10 + $0xb0] sm:$0xff]
    %v4676 = vld [vmem:[#allocation10 + $0xb8] sm:$0xff]
    %v4677 = vld [vmem:[#allocation10 + $0xc0] sm:$0xff]
    %v4678 = vld [vmem:[#allocation10 + $0xc8] sm:$0xff]
    %v4679 = vld [vmem:[#allocation10 + $0xd0] sm:$0xff]
    %v4680 = vld [vmem:[#allocation10 + $0xd8] sm:$0xff]
    %v4681 = vld [vmem:[#allocation10 + $0xe0] sm:$0xff]
    %v4682 = vld [vmem:[#allocation10 + $0xe8] sm:$0xff]
    %v4683 = vld [vmem:[#allocation10 + $0xf0] sm:$0xff]
    %v4684 = vld [vmem:[#allocation10 + $0xf8] sm:$0xff]
    %v4685 = vpack.c.bf16 %v4650, %v4649
    %v4686 = vld [vmem:[#allocation12] sm:$0xff]
    %v4687 = vld [vmem:[#allocation12 + $0x8] sm:$0xff]
    %v4688 = vld [vmem:[#allocation12 + $0x10] sm:$0xff]
    %v4689 = vld [vmem:[#allocation12 + $0x18] sm:$0xff]
    %v4690 = vld [vmem:[#allocation12 + $0x20] sm:$0xff]
    %v4691 = vld [vmem:[#allocation12 + $0x28] sm:$0xff]
    %v4692 = vld [vmem:[#allocation12 + $0x30] sm:$0xff]
    %v4693 = vld [vmem:[#allocation12 + $0x38] sm:$0xff]
    %v4694 = vld [vmem:[#allocation12 + $0x40] sm:$0xff]
    %v4695 = vld [vmem:[#allocation12 + $0x48] sm:$0xff]
    %v4696 = vld [vmem:[#allocation12 + $0x50] sm:$0xff]
    %v4697 = vld [vmem:[#allocation12 + $0x58] sm:$0xff]
    %v4698 = vld [vmem:[#allocation12 + $0x60] sm:$0xff]
    %v4699 = vld [vmem:[#allocation12 + $0x68] sm:$0xff]
    %v4700 = vld [vmem:[#allocation12 + $0x70] sm:$0xff]
    %v4701 = vld [vmem:[#allocation12 + $0x78] sm:$0xff]
    %v4702 = vld [vmem:[#allocation12 + $0x80] sm:$0xff]
    %v4703 = vld [vmem:[#allocation12 + $0x88] sm:$0xff]
    %v4704 = vld [vmem:[#allocation12 + $0x90] sm:$0xff]
    %v4705 = vld [vmem:[#allocation12 + $0x98] sm:$0xff]
    %v4706 = vld [vmem:[#allocation12 + $0xa0] sm:$0xff]
    %v4707 = vld [vmem:[#allocation12 + $0xa8] sm:$0xff]
    %v4708 = vld [vmem:[#allocation12 + $0xb0] sm:$0xff]
    %v4709 = vld [vmem:[#allocation12 + $0xb8] sm:$0xff]
    %v4710 = vld [vmem:[#allocation12 + $0xc0] sm:$0xff]
    %v4711 = vld [vmem:[#allocation12 + $0xc8] sm:$0xff]
    %v4712 = vld [vmem:[#allocation12 + $0xd0] sm:$0xff]
    %v4713 = vld [vmem:[#allocation12 + $0xd8] sm:$0xff]
    %v4714 = vld [vmem:[#allocation12 + $0xe0] sm:$0xff]
    %v4715 = vld [vmem:[#allocation12 + $0xe8] sm:$0xff]
    %v4716 = vld [vmem:[#allocation12 + $0xf0] sm:$0xff]
    %v4717 = vld [vmem:[#allocation12 + $0xf8] sm:$0xff]
    %v4750 = vunpack.c.l.b16 %v4686
    %v4751 = vunpack.c.h.b16 %v4686
    %v4752 = vunpack.c.l.b16 %v4687
    %v4753 = vunpack.c.h.b16 %v4687
    %v4754 = vunpack.c.l.b16 %v4688
    %v4755 = vunpack.c.h.b16 %v4688
    %v4756 = vunpack.c.l.b16 %v4689
    %v4757 = vunpack.c.h.b16 %v4689
    %v4758 = vunpack.c.l.b16 %v4690
    %v4759 = vunpack.c.h.b16 %v4690
    %v4760 = vunpack.c.l.b16 %v4691
    %v4761 = vunpack.c.h.b16 %v4691
    %v4762 = vunpack.c.l.b16 %v4692
    %v4763 = vunpack.c.h.b16 %v4692
    %v4764 = vunpack.c.l.b16 %v4693
    %v4765 = vunpack.c.h.b16 %v4693
    %v4766 = vunpack.c.l.b16 %v4694
    %v4767 = vunpack.c.h.b16 %v4694
    %v4768 = vunpack.c.l.b16 %v4695
    %v4769 = vunpack.c.h.b16 %v4695
    %v4770 = vunpack.c.l.b16 %v4696
    %v4771 = vunpack.c.h.b16 %v4696
    %v4772 = vunpack.c.l.b16 %v4697
    %v4773 = vunpack.c.h.b16 %v4697
    %v4774 = vunpack.c.l.b16 %v4698
    %v4775 = vunpack.c.h.b16 %v4698
    %v4776 = vunpack.c.l.b16 %v4699
    %v4777 = vunpack.c.h.b16 %v4699
    %v4778 = vunpack.c.l.b16 %v4700
    %v4779 = vunpack.c.h.b16 %v4700
    %v4780 = vunpack.c.l.b16 %v4701
    %v4781 = vunpack.c.h.b16 %v4701
    %v4782 = vunpack.c.l.b16 %v4702
    %v4783 = vunpack.c.h.b16 %v4702
    %v4784 = vunpack.c.l.b16 %v4703
    %v4785 = vunpack.c.h.b16 %v4703
    %v4786 = vunpack.c.l.b16 %v4704
    %v4787 = vunpack.c.h.b16 %v4704
    %v4788 = vunpack.c.l.b16 %v4705
    %v4789 = vunpack.c.h.b16 %v4705
    %v4790 = vunpack.c.l.b16 %v4706
    %v4791 = vunpack.c.h.b16 %v4706
    %v4792 = vunpack.c.l.b16 %v4707
    %v4793 = vunpack.c.h.b16 %v4707
    %v4794 = vunpack.c.l.b16 %v4708
    %v4795 = vunpack.c.h.b16 %v4708
    %v4796 = vunpack.c.l.b16 %v4709
    %v4797 = vunpack.c.h.b16 %v4709
    %v4798 = vunpack.c.l.b16 %v4710
    %v4799 = vunpack.c.h.b16 %v4710
    %v4800 = vunpack.c.l.b16 %v4711
    %v4801 = vunpack.c.h.b16 %v4711
    %v4802 = vunpack.c.l.b16 %v4712
    %v4803 = vunpack.c.h.b16 %v4712
    %v4804 = vunpack.c.l.b16 %v4713
    %v4805 = vunpack.c.h.b16 %v4713
    %v4806 = vunpack.c.l.b16 %v4714
    %v4807 = vunpack.c.h.b16 %v4714
    %v4808 = vunpack.c.l.b16 %v4715
    %v4809 = vunpack.c.h.b16 %v4715
    %v4810 = vunpack.c.l.b16 %v4716
    %v4811 = vunpack.c.h.b16 %v4716
    %v4812 = vunpack.c.l.b16 %v4717
    %v4813 = vunpack.c.h.b16 %v4717
    %v4814 = vpack.c.b16 %v4754, %v4750
    %v4815 = vpack.c.b16 %v4755, %v4751
    %v4816 = vpack.c.b16 %v4756, %v4752
    %v4817 = vpack.c.b16 %v4757, %v4753
    %v4818 = vpack.c.b16 %v4762, %v4758
    %v4819 = vpack.c.b16 %v4763, %v4759
    %v4820 = vpack.c.b16 %v4764, %v4760
    %v4821 = vpack.c.b16 %v4765, %v4761
    %v4822 = vpack.c.b16 %v4770, %v4766
    %v4823 = vpack.c.b16 %v4771, %v4767
    %v4824 = vpack.c.b16 %v4772, %v4768
    %v4825 = vpack.c.b16 %v4773, %v4769
    %v4826 = vpack.c.b16 %v4778, %v4774
    %v4827 = vpack.c.b16 %v4779, %v4775
    %v4828 = vpack.c.b16 %v4780, %v4776
    %v4829 = vpack.c.b16 %v4781, %v4777
    %v4830 = vpack.c.b16 %v4786, %v4782
    %v4831 = vpack.c.b16 %v4787, %v4783
    %v4832 = vpack.c.b16 %v4788, %v4784
    %v4833 = vpack.c.b16 %v4789, %v4785
    %v4834 = vpack.c.b16 %v4794, %v4790
    %v4835 = vpack.c.b16 %v4795, %v4791
    %v4836 = vpack.c.b16 %v4796, %v4792
    %v4837 = vpack.c.b16 %v4797, %v4793
    %v4838 = vpack.c.b16 %v4802, %v4798
    %v4839 = vpack.c.b16 %v4803, %v4799
    %v4840 = vpack.c.b16 %v4804, %v4800
    %v4841 = vpack.c.b16 %v4805, %v4801
    %v4842 = vpack.c.b16 %v4810, %v4806
    %v4843 = vpack.c.b16 %v4811, %v4807
    %v4844 = vpack.c.b16 %v4812, %v4808
    %v4845 = vpack.c.b16 %v4813, %v4809
    %4878 = vmatprep.subr.bf16.mxu0 %v4815
    %4879 = vmatpush1.bf16.msra.mxu0 %v4814
    %4880 = vmatprep.subr.bf16.mxu0 %v4819
    %4881 = vmatpush1.bf16.msra.mxu0 %v4818
    %4882 = vmatprep.subr.bf16.mxu0 %v4823
    %4883 = vmatpush1.bf16.msra.mxu0 %v4822
    %4884 = vmatprep.subr.bf16.mxu0 %v4827
    %4885 = vmatpush1.bf16.msra.mxu0 %v4826
    %4886 = vmatprep.subr.bf16.mxu0 %v4831
    %4887 = vmatpush1.bf16.msra.mxu0 %v4830
    %4888 = vmatprep.subr.bf16.mxu0 %v4835
    %4889 = vmatpush1.bf16.msra.mxu0 %v4834
    %4890 = vmatprep.subr.bf16.mxu0 %v4839
    %4891 = vmatpush1.bf16.msra.mxu0 %v4838
    %4892 = vmatprep.subr.bf16.mxu0 %v4843
    %4893 = vmatpush1.bf16.msra.mxu0 %v4842
    %4894 = vmatprep.subr.bf16.mxu0 0
    %4895 = vmatpush1.bf16.msra.mxu0 0
    %4896 = vmatprep.subr.bf16.mxu0 0
    %4897 = vmatpush1.bf16.msra.mxu0 0
    %4898 = vmatprep.subr.bf16.mxu0 0
    %4899 = vmatpush1.bf16.msra.mxu0 0
    %4900 = vmatprep.subr.bf16.mxu0 0
    %4901 = vmatpush1.bf16.msra.mxu0 0
    %4902 = vmatprep.subr.bf16.mxu0 0
    %4903 = vmatpush1.bf16.msra.mxu0 0
    %4904 = vmatprep.subr.bf16.mxu0 0
    %4905 = vmatpush1.bf16.msra.mxu0 0
    %4906 = vmatprep.subr.bf16.mxu0 0
    %4907 = vmatpush1.bf16.msra.mxu0 0
    %4908 = vmatprep.subr.bf16.mxu0 0
    %4909 = vmatpush1.bf16.msra.mxu0 0
    %4910 = vmatprep.mubr.bf16.mxu0 0
    %4911 = vmatmul.mubr.bf16.gmra.mrb[0].mxu0 %v4685
    %v4912 = vpop.f32.mrb[0].mxu0
    %v4913 = vadd.f32 0.0, %v4912
    %v4914 = vpop.f32.mrb[0].mxu0
    %v4915 = vadd.f32 0.0, %v4914
    %v4916 = vpop.f32.mrb[0].mxu0
    %v4917 = vadd.f32 0.0, %v4916
    %v4918 = vpop.f32.mrb[0].mxu0
    %v4919 = vadd.f32 0.0, %v4918
    %4920 = vdwg.mxu0
    %4921 = vmatprep.subr.bf16.mxu0 %v4817
    %4922 = vmatpush1.bf16.msra.mxu0 %v4816
    %4923 = vmatprep.subr.bf16.mxu0 %v4821
    %4924 = vmatpush1.bf16.msra.mxu0 %v4820
    %4925 = vmatprep.subr.bf16.mxu0 %v4825
    %4926 = vmatpush1.bf16.msra.mxu0 %v4824
    %4927 = vmatprep.subr.bf16.mxu0 %v4829
    %4928 = vmatpush1.bf16.msra.mxu0 %v4828
    %4929 = vmatprep.subr.bf16.mxu0 %v4833
    %4930 = vmatpush1.bf16.msra.mxu0 %v4832
    %4931 = vmatprep.subr.bf16.mxu0 %v4837
    %4932 = vmatpush1.bf16.msra.mxu0 %v4836
    %4933 = vmatprep.subr.bf16.mxu0 %v4841
    %4934 = vmatpush1.bf16.msra.mxu0 %v4840
    %4935 = vmatprep.subr.bf16.mxu0 %v4845
    %4936 = vmatpush1.bf16.msra.mxu0 %v4844
    %4937 = vmatprep.subr.bf16.mxu0 0
    %4938 = vmatpush1.bf16.msra.mxu0 0
    %4939 = vmatprep.subr.bf16.mxu0 0
    %4940 = vmatpush1.bf16.msra.mxu0 0
    %4941 = vmatprep.subr.bf16.mxu0 0
    %4942 = vmatpush1.bf16.msra.mxu0 0
    %4943 = vmatprep.subr.bf16.mxu0 0
    %4944 = vmatpush1.bf16.msra.mxu0 0
    %4945 = vmatprep.subr.bf16.mxu0 0
    %4946 = vmatpush1.bf16.msra.mxu0 0
    %4947 = vmatprep.subr.bf16.mxu0 0
    %4948 = vmatpush1.bf16.msra.mxu0 0
    %4949 = vmatprep.subr.bf16.mxu0 0
    %4950 = vmatpush1.bf16.msra.mxu0 0
    %4951 = vmatprep.subr.bf16.mxu0 0
    %4952 = vmatpush1.bf16.msra.mxu0 0
    %4953 = vmatprep.mubr.bf16.mxu0 0
    %4954 = vmatmul.mubr.bf16.gmra.mrb[0].mxu0 %v4685
    %v4955 = vpop.f32.mrb[0].mxu0
    %v4956 = vadd.f32 0.0, %v4955
    %v4957 = vpop.f32.mrb[0].mxu0
    %v4958 = vadd.f32 0.0, %v4957
    %v4959 = vpop.f32.mrb[0].mxu0
    %v4960 = vadd.f32 0.0, %v4959
    %v4961 = vpop.f32.mrb[0].mxu0
    %v4962 = vadd.f32 0.0, %v4961
    %4963 = vdwg.mxu0
    %v4996 = vunpack.c.l.b16 %v4653
    %v4997 = vunpack.c.h.b16 %v4653
    %v4998 = vunpack.c.l.b16 %v4654
    %v4999 = vunpack.c.h.b16 %v4654
    %v5000 = vunpack.c.l.b16 %v4655
    %v5001 = vunpack.c.h.b16 %v4655
    %v5002 = vunpack.c.l.b16 %v4656
    %v5003 = vunpack.c.h.b16 %v4656
    %v5004 = vunpack.c.l.b16 %v4657
    %v5005 = vunpack.c.h.b16 %v4657
    %v5006 = vunpack.c.l.b16 %v4658
    %v5007 = vunpack.c.h.b16 %v4658
    %v5008 = vunpack.c.l.b16 %v4659
    %v5009 = vunpack.c.h.b16 %v4659
    %v5010 = vunpack.c.l.b16 %v4660
    %v5011 = vunpack.c.h.b16 %v4660
    %v5012 = vunpack.c.l.b16 %v4661
    %v5013 = vunpack.c.h.b16 %v4661
    %v5014 = vunpack.c.l.b16 %v4662
    %v5015 = vunpack.c.h.b16 %v4662
    %v5016 = vunpack.c.l.b16 %v4663
    %v5017 = vunpack.c.h.b16 %v4663
    %v5018 = vunpack.c.l.b16 %v4664
    %v5019 = vunpack.c.h.b16 %v4664
    %v5020 = vunpack.c.l.b16 %v4665
    %v5021 = vunpack.c.h.b16 %v4665
    %v5022 = vunpack.c.l.b16 %v4666
    %v5023 = vunpack.c.h.b16 %v4666
    %v5024 = vunpack.c.l.b16 %v4667
    %v5025 = vunpack.c.h.b16 %v4667
    %v5026 = vunpack.c.l.b16 %v4668
    %v5027 = vunpack.c.h.b16 %v4668
    %v5028 = vunpack.c.l.b16 %v4669
    %v5029 = vunpack.c.h.b16 %v4669
    %v5030 = vunpack.c.l.b16 %v4670
    %v5031 = vunpack.c.h.b16 %v4670
    %v5032 = vunpack.c.l.b16 %v4671
    %v5033 = vunpack.c.h.b16 %v4671
    %v5034 = vunpack.c.l.b16 %v4672
    %v5035 = vunpack.c.h.b16 %v4672
    %v5036 = vunpack.c.l.b16 %v4673
    %v5037 = vunpack.c.h.b16 %v4673
    %v5038 = vunpack.c.l.b16 %v4674
    %v5039 = vunpack.c.h.b16 %v4674
    %v5040 = vunpack.c.l.b16 %v4675
    %v5041 = vunpack.c.h.b16 %v4675
    %v5042 = vunpack.c.l.b16 %v4676
    %v5043 = vunpack.c.h.b16 %v4676
    %v5044 = vunpack.c.l.b16 %v4677
    %v5045 = vunpack.c.h.b16 %v4677
    %v5046 = vunpack.c.l.b16 %v4678
    %v5047 = vunpack.c.h.b16 %v4678
    %v5048 = vunpack.c.l.b16 %v4679
    %v5049 = vunpack.c.h.b16 %v4679
    %v5050 = vunpack.c.l.b16 %v4680
    %v5051 = vunpack.c.h.b16 %v4680
    %v5052 = vunpack.c.l.b16 %v4681
    %v5053 = vunpack.c.h.b16 %v4681
    %v5054 = vunpack.c.l.b16 %v4682
    %v5055 = vunpack.c.h.b16 %v4682
    %v5056 = vunpack.c.l.b16 %v4683
    %v5057 = vunpack.c.h.b16 %v4683
    %v5058 = vunpack.c.l.b16 %v4684
    %v5059 = vunpack.c.h.b16 %v4684
    %v5060 = vpack.c.b16 %v5000, %v4996
    %v5061 = vpack.c.b16 %v5001, %v4997
    %v5062 = vpack.c.b16 %v5002, %v4998
    %v5063 = vpack.c.b16 %v5003, %v4999
    %v5064 = vpack.c.b16 %v5008, %v5004
    %v5065 = vpack.c.b16 %v5009, %v5005
    %v5066 = vpack.c.b16 %v5010, %v5006
    %v5067 = vpack.c.b16 %v5011, %v5007
    %v5068 = vpack.c.b16 %v5016, %v5012
    %v5069 = vpack.c.b16 %v5017, %v5013
    %v5070 = vpack.c.b16 %v5018, %v5014
    %v5071 = vpack.c.b16 %v5019, %v5015
    %v5072 = vpack.c.b16 %v5024, %v5020
    %v5073 = vpack.c.b16 %v5025, %v5021
    %v5074 = vpack.c.b16 %v5026, %v5022
    %v5075 = vpack.c.b16 %v5027, %v5023
    %v5076 = vpack.c.b16 %v5032, %v5028
    %v5077 = vpack.c.b16 %v5033, %v5029
    %v5078 = vpack.c.b16 %v5034, %v5030
    %v5079 = vpack.c.b16 %v5035, %v5031
    %v5080 = vpack.c.b16 %v5040, %v5036
    %v5081 = vpack.c.b16 %v5041, %v5037
    %v5082 = vpack.c.b16 %v5042, %v5038
    %v5083 = vpack.c.b16 %v5043, %v5039
    %v5084 = vpack.c.b16 %v5048, %v5044
    %v5085 = vpack.c.b16 %v5049, %v5045
    %v5086 = vpack.c.b16 %v5050, %v5046
    %v5087 = vpack.c.b16 %v5051, %v5047
    %v5088 = vpack.c.b16 %v5056, %v5052
    %v5089 = vpack.c.b16 %v5057, %v5053
    %v5090 = vpack.c.b16 %v5058, %v5054
    %v5091 = vpack.c.b16 %v5059, %v5055
    %5124 = vmatprep.subr.bf16.mxu0 %v5061
    %5125 = vmatpush1.bf16.msra.mxu0 %v5060
    %5126 = vmatprep.subr.bf16.mxu0 %v5065
    %5127 = vmatpush1.bf16.msra.mxu0 %v5064
    %5128 = vmatprep.subr.bf16.mxu0 %v5069
    %5129 = vmatpush1.bf16.msra.mxu0 %v5068
    %5130 = vmatprep.subr.bf16.mxu0 %v5073
    %5131 = vmatpush1.bf16.msra.mxu0 %v5072
    %5132 = vmatprep.subr.bf16.mxu0 %v5077
    %5133 = vmatpush1.bf16.msra.mxu0 %v5076
    %5134 = vmatprep.subr.bf16.mxu0 %v5081
    %5135 = vmatpush1.bf16.msra.mxu0 %v5080
    %5136 = vmatprep.subr.bf16.mxu0 %v5085
    %5137 = vmatpush1.bf16.msra.mxu0 %v5084
    %5138 = vmatprep.subr.bf16.mxu0 %v5089
    %5139 = vmatpush1.bf16.msra.mxu0 %v5088
    %5140 = vmatprep.subr.bf16.mxu0 0
    %5141 = vmatpush1.bf16.msra.mxu0 0
    %5142 = vmatprep.subr.bf16.mxu0 0
    %5143 = vmatpush1.bf16.msra.mxu0 0
    %5144 = vmatprep.subr.bf16.mxu0 0
    %5145 = vmatpush1.bf16.msra.mxu0 0
    %5146 = vmatprep.subr.bf16.mxu0 0
    %5147 = vmatpush1.bf16.msra.mxu0 0
    %5148 = vmatprep.subr.bf16.mxu0 0
    %5149 = vmatpush1.bf16.msra.mxu0 0
    %5150 = vmatprep.subr.bf16.mxu0 0
    %5151 = vmatpush1.bf16.msra.mxu0 0
    %5152 = vmatprep.subr.bf16.mxu0 0
    %5153 = vmatpush1.bf16.msra.mxu0 0
    %5154 = vmatprep.subr.bf16.mxu0 0
    %5155 = vmatpush1.bf16.msra.mxu0 0
    %5156 = vmatprep.mubr.bf16.mxu0 0
    %5157 = vmatmul.mubr.bf16.gmra.mrb[0].mxu0 %v4648
    %v5158 = vpop.f32.mrb[0].mxu0
    %v5159 = vadd.f32 %v4913, %v5158
    %v5160 = vpop.f32.mrb[0].mxu0
    %v5161 = vadd.f32 %v4915, %v5160
    %v5162 = vpop.f32.mrb[0].mxu0
    %v5163 = vadd.f32 %v4917, %v5162
    %v5164 = vpop.f32.mrb[0].mxu0
    %v5165 = vadd.f32 %v4919, %v5164
    %5166 = vdwg.mxu0
    %5167 = vmatprep.subr.bf16.mxu0 %v5063
    %5168 = vmatpush1.bf16.msra.mxu0 %v5062
    %5169 = vmatprep.subr.bf16.mxu0 %v5067
    %5170 = vmatpush1.bf16.msra.mxu0 %v5066
    %5171 = vmatprep.subr.bf16.mxu0 %v5071
    %5172 = vmatpush1.bf16.msra.mxu0 %v5070
    %5173 = vmatprep.subr.bf16.mxu0 %v5075
    %5174 = vmatpush1.bf16.msra.mxu0 %v5074
    %5175 = vmatprep.subr.bf16.mxu0 %v5079
    %5176 = vmatpush1.bf16.msra.mxu0 %v5078
    %5177 = vmatprep.subr.bf16.mxu0 %v5083
    %5178 = vmatpush1.bf16.msra.mxu0 %v5082
    %5179 = vmatprep.subr.bf16.mxu0 %v5087
    %5180 = vmatpush1.bf16.msra.mxu0 %v5086
    %5181 = vmatprep.subr.bf16.mxu0 %v5091
    %5182 = vmatpush1.bf16.msra.mxu0 %v5090
    %5183 = vmatprep.subr.bf16.mxu0 0
    %5184 = vmatpush1.bf16.msra.mxu0 0
    %5185 = vmatprep.subr.bf16.mxu0 0
    %5186 = vmatpush1.bf16.msra.mxu0 0
    %5187 = vmatprep.subr.bf16.mxu0 0
    %5188 = vmatpush1.bf16.msra.mxu0 0
    %5189 = vmatprep.subr.bf16.mxu0 0
    %5190 = vmatpush1.bf16.msra.mxu0 0
    %5191 = vmatprep.subr.bf16.mxu0 0
    %5192 = vmatpush1.bf16.msra.mxu0 0
    %5193 = vmatprep.subr.bf16.mxu0 0
    %5194 = vmatpush1.bf16.msra.mxu0 0
    %5195 = vmatprep.subr.bf16.mxu0 0
    %5196 = vmatpush1.bf16.msra.mxu0 0
    %5197 = vmatprep.subr.bf16.mxu0 0
    %5198 = vmatpush1.bf16.msra.mxu0 0
    %5199 = vmatprep.mubr.bf16.mxu0 0
    %5200 = vmatmul.mubr.bf16.gmra.mrb[0].mxu0 %v4648
    %v5201 = vpop.f32.mrb[0].mxu0
    %v5202 = vadd.f32 %v4956, %v5201
    %v5203 = vpop.f32.mrb[0].mxu0
    %v5204 = vadd.f32 %v4958, %v5203
    %v5205 = vpop.f32.mrb[0].mxu0
    %v5206 = vadd.f32 %v4960, %v5205
    %v5207 = vpop.f32.mrb[0].mxu0
    %v5208 = vadd.f32 %v4962, %v5207
    %5209 = vdwg.mxu0
    %v5210 = vld [vmem:[%s6] sm:$0xf]
    %v5212 = vlaneseq
    %v5213 = vshrl.u32 %v5212, 7
    %v5214 = vsub.s32 0, %v5213
    %v5215 = vrot.slane %v5210, %v5214
    %v5216 = vlaneseq
    %v5217 = vshrl.u32 %v5216, 7
    %v5218 = vsub.s32 1, %v5217
    %v5219 = vrot.slane %v5210, %v5218
    %v5220 = vlaneseq
    %v5221 = vshrl.u32 %v5220, 7
    %v5222 = vsub.s32 2, %v5221
    %v5223 = vrot.slane %v5210, %v5222
    %v5224 = vlaneseq
    %v5225 = vshrl.u32 %v5224, 7
    %v5226 = vsub.s32 3, %v5225
    %v5227 = vrot.slane %v5210, %v5226
    %v5232 = vadd.f32 %v5159, %v5215
    %v5233 = vadd.f32 %v5161, %v5219
    %v5234 = vadd.f32 %v5202, %v5223
    %v5235 = vadd.f32 %v5204, %v5227
    %v5236 = vadd.f32 %v5163, %v5215
    %v5237 = vadd.f32 %v5165, %v5219
    %v5238 = vadd.f32 %v5206, %v5223
    %v5239 = vadd.f32 %v5208, %v5227
    %v5240 = vxor.u32 %v5232, 2147483648
    %v5241 = vxor.u32 %v5236, 2147483648
    %v5242 = vmul.f32 %v5240, 1.442695
    %v5243 = vpow.pop %v5242
    %v5244 = vmul.f32 %v5241, 1.442695
    %v5245 = vpow.pop %v5244
    %v5246 = vadd.f32 %v5243, 1.0
    %v5247 = vadd.f32 %v5245, 1.0
    %v5248 = vrcp.pop %v5246
    %v5249 = vmul.f32 1.0, %v5248
    %v5250 = vrcp.pop %v5247
    %v5251 = vmul.f32 1.0, %v5250
    %v5252 = vxor.u32 %v5233, 2147483648
    %v5253 = vxor.u32 %v5237, 2147483648
    %v5254 = vmul.f32 %v5252, 1.442695
    %v5255 = vpow.pop %v5254
    %v5256 = vmul.f32 %v5253, 1.442695
    %v5257 = vpow.pop %v5256
    %v5258 = vadd.f32 %v5255, 1.0
    %v5259 = vadd.f32 %v5257, 1.0
    %v5260 = vrcp.pop %v5258
    %v5261 = vmul.f32 1.0, %v5260
    %v5262 = vrcp.pop %v5259
    %v5263 = vmul.f32 1.0, %v5262
    %v5264 = vtanh.pop %v5234
    %v5265 = vtanh.pop %v5238
    %v5266 = vxor.u32 %v5235, 2147483648
    %v5267 = vxor.u32 %v5239, 2147483648
    %v5268 = vmul.f32 %v5266, 1.442695
    %v5269 = vpow.pop %v5268
    %v5270 = vmul.f32 %v5267, 1.442695
    %v5271 = vpow.pop %v5270
    %v5272 = vadd.f32 %v5269, 1.0
    %v5273 = vadd.f32 %v5271, 1.0
    %v5274 = vrcp.pop %v5272
    %v5275 = vmul.f32 1.0, %v5274
    %v5276 = vrcp.pop %v5273
    %v5277 = vmul.f32 1.0, %v5276
    %v5278 = vmul.f32 %v5261, %v4651
    %v5279 = vmul.f32 %v5263, %v4652
    %v5280 = vmul.f32 %v5249, %v5264
    %v5281 = vmul.f32 %v5251, %v5265
    %v5282 = vadd.f32 %v5278, %v5280
    %v5283 = vadd.f32 %v5279, %v5281
    %v5284 = vtanh.pop %v5282
    %v5285 = vtanh.pop %v5283
    %v5286 = vmul.f32 %v5275, %v5284
    %v5287 = vmul.f32 %v5277, %v5285
    %5288 = vst [vmem:[%s759] sm:$0xff] %v5286
    %5289 = vst [vmem:[%s759 + $0x8] sm:$0xff] %v5287
    %5290 = vst [vmem:[%s762] sm:$0xff] %v5282
    %5291 = vst [vmem:[%s762 + $0x8] sm:$0xff] %v5283
    %s5292 = scalar_lea.vmem [#allocation4], 32
    %v5293 = vld [vmem:[%s5292] sm:$0xf]
    %v5294 = vld [vmem:[%s5292 + $0x4] sm:$0xf]
    %v5295 = vld [vmem:[#allocation2] sm:$0xff]
    %v5296 = vld [vmem:[#allocation2 + $0x8] sm:$0xff]
    %v5297 = vld [vmem:[#allocation3] sm:$0xff]
    %v5298 = vld [vmem:[#allocation3 + $0x8] sm:$0xff]
    %v5299 = vld [vmem:[#allocation7] sm:$0xff]
    %v5300 = vld [vmem:[#allocation7 + $0x8] sm:$0xff]
    %v5301 = vld [vmem:[#allocation7 + $0x10] sm:$0xff]
    %v5302 = vld [vmem:[#allocation7 + $0x18] sm:$0xff]
    %v5303 = vld [vmem:[#allocation7 + $0x20] sm:$0xff]
    %v5304 = vld [vmem:[#allocation7 + $0x28] sm:$0xff]
    %v5305 = vld [vmem:[#allocation7 + $0x30] sm:$0xff]
    %v5306 = vld [vmem:[#allocation7 + $0x38] sm:$0xff]
    %v5307 = vld [vmem:[#allocation7 + $0x40] sm:$0xff]
    %v5308 = vld [vmem:[#allocation7 + $0x48] sm:$0xff]
    %v5309 = vld [vmem:[#allocation7 + $0x50] sm:$0xff]
    %v5310 = vld [vmem:[#allocation7 + $0x58] sm:$0xff]
    %v5311 = vld [vmem:[#allocation7 + $0x60] sm:$0xff]
    %v5312 = vld [vmem:[#allocation7 + $0x68] sm:$0xff]
    %v5313 = vld [vmem:[#allocation7 + $0x70] sm:$0xff]
    %v5314 = vld [vmem:[#allocation7 + $0x78] sm:$0xff]
    %v5315 = vld [vmem:[#allocation7 + $0x80] sm:$0xff]
    %v5316 = vld [vmem:[#allocation7 + $0x88] sm:$0xff]
    %v5317 = vld [vmem:[#allocation7 + $0x90] sm:$0xff]
    %v5318 = vld [vmem:[#allocation7 + $0x98] sm:$0xff]
    %v5319 = vld [vmem:[#allocation7 + $0xa0] sm:$0xff]
    %v5320 = vld [vmem:[#allocation7 + $0xa8] sm:$0xff]
    %v5321 = vld [vmem:[#allocation7 + $0xb0] sm:$0xff]
    %v5322 = vld [vmem:[#allocation7 + $0xb8] sm:$0xff]
    %v5323 = vld [vmem:[#allocation7 + $0xc0] sm:$0xff]
    %v5324 = vld [vmem:[#allocation7 + $0xc8] sm:$0xff]
    %v5325 = vld [vmem:[#allocation7 + $0xd0] sm:$0xff]
    %v5326 = vld [vmem:[#allocation7 + $0xd8] sm:$0xff]
    %v5327 = vld [vmem:[#allocation7 + $0xe0] sm:$0xff]
    %v5328 = vld [vmem:[#allocation7 + $0xe8] sm:$0xff]
    %v5329 = vld [vmem:[#allocation7 + $0xf0] sm:$0xff]
    %v5330 = vld [vmem:[#allocation7 + $0xf8] sm:$0xff]
    %v5331 = vpack.c.bf16 %v5296, %v5295
    %v5332 = vld [vmem:[#allocation9] sm:$0xff]
    %v5333 = vld [vmem:[#allocation9 + $0x8] sm:$0xff]
    %v5334 = vld [vmem:[#allocation9 + $0x10] sm:$0xff]
    %v5335 = vld [vmem:[#allocation9 + $0x18] sm:$0xff]
    %v5336 = vld [vmem:[#allocation9 + $0x20] sm:$0xff]
    %v5337 = vld [vmem:[#allocation9 + $0x28] sm:$0xff]
    %v5338 = vld [vmem:[#allocation9 + $0x30] sm:$0xff]
    %v5339 = vld [vmem:[#allocation9 + $0x38] sm:$0xff]
    %v5340 = vld [vmem:[#allocation9 + $0x40] sm:$0xff]
    %v5341 = vld [vmem:[#allocation9 + $0x48] sm:$0xff]
    %v5342 = vld [vmem:[#allocation9 + $0x50] sm:$0xff]
    %v5343 = vld [vmem:[#allocation9 + $0x58] sm:$0xff]
    %v5344 = vld [vmem:[#allocation9 + $0x60] sm:$0xff]
    %v5345 = vld [vmem:[#allocation9 + $0x68] sm:$0xff]
    %v5346 = vld [vmem:[#allocation9 + $0x70] sm:$0xff]
    %v5347 = vld [vmem:[#allocation9 + $0x78] sm:$0xff]
    %v5348 = vld [vmem:[#allocation9 + $0x80] sm:$0xff]
    %v5349 = vld [vmem:[#allocation9 + $0x88] sm:$0xff]
    %v5350 = vld [vmem:[#allocation9 + $0x90] sm:$0xff]
    %v5351 = vld [vmem:[#allocation9 + $0x98] sm:$0xff]
    %v5352 = vld [vmem:[#allocation9 + $0xa0] sm:$0xff]
    %v5353 = vld [vmem:[#allocation9 + $0xa8] sm:$0xff]
    %v5354 = vld [vmem:[#allocation9 + $0xb0] sm:$0xff]
    %v5355 = vld [vmem:[#allocation9 + $0xb8] sm:$0xff]
    %v5356 = vld [vmem:[#allocation9 + $0xc0] sm:$0xff]
    %v5357 = vld [vmem:[#allocation9 + $0xc8] sm:$0xff]
    %v5358 = vld [vmem:[#allocation9 + $0xd0] sm:$0xff]
    %v5359 = vld [vmem:[#allocation9 + $0xd8] sm:$0xff]
    %v5360 = vld [vmem:[#allocation9 + $0xe0] sm:$0xff]
    %v5361 = vld [vmem:[#allocation9 + $0xe8] sm:$0xff]
    %v5362 = vld [vmem:[#allocation9 + $0xf0] sm:$0xff]
    %v5363 = vld [vmem:[#allocation9 + $0xf8] sm:$0xff]
    %v5396 = vunpack.c.l.b16 %v5332
    %v5397 = vunpack.c.h.b16 %v5332
    %v5398 = vunpack.c.l.b16 %v5333
    %v5399 = vunpack.c.h.b16 %v5333
    %v5400 = vunpack.c.l.b16 %v5334
    %v5401 = vunpack.c.h.b16 %v5334
    %v5402 = vunpack.c.l.b16 %v5335
    %v5403 = vunpack.c.h.b16 %v5335
    %v5404 = vunpack.c.l.b16 %v5336
    %v5405 = vunpack.c.h.b16 %v5336
    %v5406 = vunpack.c.l.b16 %v5337
    %v5407 = vunpack.c.h.b16 %v5337
    %v5408 = vunpack.c.l.b16 %v5338
    %v5409 = vunpack.c.h.b16 %v5338
    %v5410 = vunpack.c.l.b16 %v5339
    %v5411 = vunpack.c.h.b16 %v5339
    %v5412 = vunpack.c.l.b16 %v5340
    %v5413 = vunpack.c.h.b16 %v5340
    %v5414 = vunpack.c.l.b16 %v5341
    %v5415 = vunpack.c.h.b16 %v5341
    %v5416 = vunpack.c.l.b16 %v5342
    %v5417 = vunpack.c.h.b16 %v5342
    %v5418 = vunpack.c.l.b16 %v5343
    %v5419 = vunpack.c.h.b16 %v5343
    %v5420 = vunpack.c.l.b16 %v5344
    %v5421 = vunpack.c.h.b16 %v5344
    %v5422 = vunpack.c.l.b16 %v5345
    %v5423 = vunpack.c.h.b16 %v5345
    %v5424 = vunpack.c.l.b16 %v5346
    %v5425 = vunpack.c.h.b16 %v5346
    %v5426 = vunpack.c.l.b16 %v5347
    %v5427 = vunpack.c.h.b16 %v5347
    %v5428 = vunpack.c.l.b16 %v5348
    %v5429 = vunpack.c.h.b16 %v5348
    %v5430 = vunpack.c.l.b16 %v5349
    %v5431 = vunpack.c.h.b16 %v5349
    %v5432 = vunpack.c.l.b16 %v5350
    %v5433 = vunpack.c.h.b16 %v5350
    %v5434 = vunpack.c.l.b16 %v5351
    %v5435 = vunpack.c.h.b16 %v5351
    %v5436 = vunpack.c.l.b16 %v5352
    %v5437 = vunpack.c.h.b16 %v5352
    %v5438 = vunpack.c.l.b16 %v5353
    %v5439 = vunpack.c.h.b16 %v5353
    %v5440 = vunpack.c.l.b16 %v5354
    %v5441 = vunpack.c.h.b16 %v5354
    %v5442 = vunpack.c.l.b16 %v5355
    %v5443 = vunpack.c.h.b16 %v5355
    %v5444 = vunpack.c.l.b16 %v5356
    %v5445 = vunpack.c.h.b16 %v5356
    %v5446 = vunpack.c.l.b16 %v5357
    %v5447 = vunpack.c.h.b16 %v5357
    %v5448 = vunpack.c.l.b16 %v5358
    %v5449 = vunpack.c.h.b16 %v5358
    %v5450 = vunpack.c.l.b16 %v5359
    %v5451 = vunpack.c.h.b16 %v5359
    %v5452 = vunpack.c.l.b16 %v5360
    %v5453 = vunpack.c.h.b16 %v5360
    %v5454 = vunpack.c.l.b16 %v5361
    %v5455 = vunpack.c.h.b16 %v5361
    %v5456 = vunpack.c.l.b16 %v5362
    %v5457 = vunpack.c.h.b16 %v5362
    %v5458 = vunpack.c.l.b16 %v5363
    %v5459 = vunpack.c.h.b16 %v5363
    %v5460 = vpack.c.b16 %v5400, %v5396
    %v5461 = vpack.c.b16 %v5401, %v5397
    %v5462 = vpack.c.b16 %v5402, %v5398
    %v5463 = vpack.c.b16 %v5403, %v5399
    %v5464 = vpack.c.b16 %v5408, %v5404
    %v5465 = vpack.c.b16 %v5409, %v5405
    %v5466 = vpack.c.b16 %v5410, %v5406
    %v5467 = vpack.c.b16 %v5411, %v5407
    %v5468 = vpack.c.b16 %v5416, %v5412
    %v5469 = vpack.c.b16 %v5417, %v5413
    %v5470 = vpack.c.b16 %v5418, %v5414
    %v5471 = vpack.c.b16 %v5419, %v5415
    %v5472 = vpack.c.b16 %v5424, %v5420
    %v5473 = vpack.c.b16 %v5425, %v5421
    %v5474 = vpack.c.b16 %v5426, %v5422
    %v5475 = vpack.c.b16 %v5427, %v5423
    %v5476 = vpack.c.b16 %v5432, %v5428
    %v5477 = vpack.c.b16 %v5433, %v5429
    %v5478 = vpack.c.b16 %v5434, %v5430
    %v5479 = vpack.c.b16 %v5435, %v5431
    %v5480 = vpack.c.b16 %v5440, %v5436
    %v5481 = vpack.c.b16 %v5441, %v5437
    %v5482 = vpack.c.b16 %v5442, %v5438
    %v5483 = vpack.c.b16 %v5443, %v5439
    %v5484 = vpack.c.b16 %v5448, %v5444
    %v5485 = vpack.c.b16 %v5449, %v5445
    %v5486 = vpack.c.b16 %v5450, %v5446
    %v5487 = vpack.c.b16 %v5451, %v5447
    %v5488 = vpack.c.b16 %v5456, %v5452
    %v5489 = vpack.c.b16 %v5457, %v5453
    %v5490 = vpack.c.b16 %v5458, %v5454
    %v5491 = vpack.c.b16 %v5459, %v5455
    %5524 = vmatprep.subr.bf16.mxu0 %v5461
    %5525 = vmatpush1.bf16.msra.mxu0 %v5460
    %5526 = vmatprep.subr.bf16.mxu0 %v5465
    %5527 = vmatpush1.bf16.msra.mxu0 %v5464
    %5528 = vmatprep.subr.bf16.mxu0 %v5469
    %5529 = vmatpush1.bf16.msra.mxu0 %v5468
    %5530 = vmatprep.subr.bf16.mxu0 %v5473
    %5531 = vmatpush1.bf16.msra.mxu0 %v5472
    %5532 = vmatprep.subr.bf16.mxu0 %v5477
    %5533 = vmatpush1.bf16.msra.mxu0 %v5476
    %5534 = vmatprep.subr.bf16.mxu0 %v5481
    %5535 = vmatpush1.bf16.msra.mxu0 %v5480
    %5536 = vmatprep.subr.bf16.mxu0 %v5485
    %5537 = vmatpush1.bf16.msra.mxu0 %v5484
    %5538 = vmatprep.subr.bf16.mxu0 %v5489
    %5539 = vmatpush1.bf16.msra.mxu0 %v5488
    %5540 = vmatprep.subr.bf16.mxu0 0
    %5541 = vmatpush1.bf16.msra.mxu0 0
    %5542 = vmatprep.subr.bf16.mxu0 0
    %5543 = vmatpush1.bf16.msra.mxu0 0
    %5544 = vmatprep.subr.bf16.mxu0 0
    %5545 = vmatpush1.bf16.msra.mxu0 0
    %5546 = vmatprep.subr.bf16.mxu0 0
    %5547 = vmatpush1.bf16.msra.mxu0 0
    %5548 = vmatprep.subr.bf16.mxu0 0
    %5549 = vmatpush1.bf16.msra.mxu0 0
    %5550 = vmatprep.subr.bf16.mxu0 0
    %5551 = vmatpush1.bf16.msra.mxu0 0
    %5552 = vmatprep.subr.bf16.mxu0 0
    %5553 = vmatpush1.bf16.msra.mxu0 0
    %5554 = vmatprep.subr.bf16.mxu0 0
    %5555 = vmatpush1.bf16.msra.mxu0 0
    %5556 = vmatprep.mubr.bf16.mxu0 0
    %5557 = vmatmul.mubr.bf16.gmra.mrb[0].mxu0 %v5331
    %v5558 = vpop.f32.mrb[0].mxu0
    %v5559 = vadd.f32 0.0, %v5558
    %v5560 = vpop.f32.mrb[0].mxu0
    %v5561 = vadd.f32 0.0, %v5560
    %v5562 = vpop.f32.mrb[0].mxu0
    %v5563 = vadd.f32 0.0, %v5562
    %v5564 = vpop.f32.mrb[0].mxu0
    %v5565 = vadd.f32 0.0, %v5564
    %5566 = vdwg.mxu0
    %5567 = vmatprep.subr.bf16.mxu0 %v5463
    %5568 = vmatpush1.bf16.msra.mxu0 %v5462
    %5569 = vmatprep.subr.bf16.mxu0 %v5467
    %5570 = vmatpush1.bf16.msra.mxu0 %v5466
    %5571 = vmatprep.subr.bf16.mxu0 %v5471
    %5572 = vmatpush1.bf16.msra.mxu0 %v5470
    %5573 = vmatprep.subr.bf16.mxu0 %v5475
    %5574 = vmatpush1.bf16.msra.mxu0 %v5474
    %5575 = vmatprep.subr.bf16.mxu0 %v5479
    %5576 = vmatpush1.bf16.msra.mxu0 %v5478
    %5577 = vmatprep.subr.bf16.mxu0 %v5483
    %5578 = vmatpush1.bf16.msra.mxu0 %v5482
    %5579 = vmatprep.subr.bf16.mxu0 %v5487
    %5580 = vmatpush1.bf16.msra.mxu0 %v5486
    %5581 = vmatprep.subr.bf16.mxu0 %v5491
    %5582 = vmatpush1.bf16.msra.mxu0 %v5490
    %5583 = vmatprep.subr.bf16.mxu0 0
    %5584 = vmatpush1.bf16.msra.mxu0 0
    %5585 = vmatprep.subr.bf16.mxu0 0
    %5586 = vmatpush1.bf16.msra.mxu0 0
    %5587 = vmatprep.subr.bf16.mxu0 0
    %5588 = vmatpush1.bf16.msra.mxu0 0
    %5589 = vmatprep.subr.bf16.mxu0 0
    %5590 = vmatpush1.bf16.msra.mxu0 0
    %5591 = vmatprep.subr.bf16.mxu0 0
    %5592 = vmatpush1.bf16.msra.mxu0 0
    %5593 = vmatprep.subr.bf16.mxu0 0
    %5594 = vmatpush1.bf16.msra.mxu0 0
    %5595 = vmatprep.subr.bf16.mxu0 0
    %5596 = vmatpush1.bf16.msra.mxu0 0
    %5597 = vmatprep.subr.bf16.mxu0 0
    %5598 = vmatpush1.bf16.msra.mxu0 0
    %5599 = vmatprep.mubr.bf16.mxu0 0
    %5600 = vmatmul.mubr.bf16.gmra.mrb[0].mxu0 %v5331
    %v5601 = vpop.f32.mrb[0].mxu0
    %v5602 = vadd.f32 0.0, %v5601
    %v5603 = vpop.f32.mrb[0].mxu0
    %v5604 = vadd.f32 0.0, %v5603
    %v5605 = vpop.f32.mrb[0].mxu0
    %v5606 = vadd.f32 0.0, %v5605
    %v5607 = vpop.f32.mrb[0].mxu0
    %v5608 = vadd.f32 0.0, %v5607
    %5609 = vdwg.mxu0
    %v5612 = vunpack.c.l.b16 %v5293
    %v5613 = vunpack.c.l.b16 %v5294
    %v5614 = vpack.c.b16 %v5613, %v5612
    %v5648 = vunpack.c.l.b16 %v5299
    %v5649 = vunpack.c.h.b16 %v5299
    %v5650 = vunpack.c.l.b16 %v5300
    %v5651 = vunpack.c.h.b16 %v5300
    %v5652 = vunpack.c.l.b16 %v5301
    %v5653 = vunpack.c.h.b16 %v5301
    %v5654 = vunpack.c.l.b16 %v5302
    %v5655 = vunpack.c.h.b16 %v5302
    %v5656 = vunpack.c.l.b16 %v5303
    %v5657 = vunpack.c.h.b16 %v5303
    %v5658 = vunpack.c.l.b16 %v5304
    %v5659 = vunpack.c.h.b16 %v5304
    %v5660 = vunpack.c.l.b16 %v5305
    %v5661 = vunpack.c.h.b16 %v5305
    %v5662 = vunpack.c.l.b16 %v5306
    %v5663 = vunpack.c.h.b16 %v5306
    %v5664 = vunpack.c.l.b16 %v5307
    %v5665 = vunpack.c.h.b16 %v5307
    %v5666 = vunpack.c.l.b16 %v5308
    %v5667 = vunpack.c.h.b16 %v5308
    %v5668 = vunpack.c.l.b16 %v5309
    %v5669 = vunpack.c.h.b16 %v5309
    %v5670 = vunpack.c.l.b16 %v5310
    %v5671 = vunpack.c.h.b16 %v5310
    %v5672 = vunpack.c.l.b16 %v5311
    %v5673 = vunpack.c.h.b16 %v5311
    %v5674 = vunpack.c.l.b16 %v5312
    %v5675 = vunpack.c.h.b16 %v5312
    %v5676 = vunpack.c.l.b16 %v5313
    %v5677 = vunpack.c.h.b16 %v5313
    %v5678 = vunpack.c.l.b16 %v5314
    %v5679 = vunpack.c.h.b16 %v5314
    %v5680 = vunpack.c.l.b16 %v5315
    %v5681 = vunpack.c.h.b16 %v5315
    %v5682 = vunpack.c.l.b16 %v5316
    %v5683 = vunpack.c.h.b16 %v5316
    %v5684 = vunpack.c.l.b16 %v5317
    %v5685 = vunpack.c.h.b16 %v5317
    %v5686 = vunpack.c.l.b16 %v5318
    %v5687 = vunpack.c.h.b16 %v5318
    %v5688 = vunpack.c.l.b16 %v5319
    %v5689 = vunpack.c.h.b16 %v5319
    %v5690 = vunpack.c.l.b16 %v5320
    %v5691 = vunpack.c.h.b16 %v5320
    %v5692 = vunpack.c.l.b16 %v5321
    %v5693 = vunpack.c.h.b16 %v5321
    %v5694 = vunpack.c.l.b16 %v5322
    %v5695 = vunpack.c.h.b16 %v5322
    %v5696 = vunpack.c.l.b16 %v5323
    %v5697 = vunpack.c.h.b16 %v5323
    %v5698 = vunpack.c.l.b16 %v5324
    %v5699 = vunpack.c.h.b16 %v5324
    %v5700 = vunpack.c.l.b16 %v5325
    %v5701 = vunpack.c.h.b16 %v5325
    %v5702 = vunpack.c.l.b16 %v5326
    %v5703 = vunpack.c.h.b16 %v5326
    %v5704 = vunpack.c.l.b16 %v5327
    %v5705 = vunpack.c.h.b16 %v5327
    %v5706 = vunpack.c.l.b16 %v5328
    %v5707 = vunpack.c.h.b16 %v5328
    %v5708 = vunpack.c.l.b16 %v5329
    %v5709 = vunpack.c.h.b16 %v5329
    %v5710 = vunpack.c.l.b16 %v5330
    %v5711 = vunpack.c.h.b16 %v5330
    %v5712 = vpack.c.b16 %v5652, %v5648
    %v5713 = vpack.c.b16 %v5653, %v5649
    %v5714 = vpack.c.b16 %v5654, %v5650
    %v5715 = vpack.c.b16 %v5655, %v5651
    %v5716 = vpack.c.b16 %v5660, %v5656
    %v5717 = vpack.c.b16 %v5661, %v5657
    %v5718 = vpack.c.b16 %v5662, %v5658
    %v5719 = vpack.c.b16 %v5663, %v5659
    %v5720 = vpack.c.b16 %v5668, %v5664
    %v5721 = vpack.c.b16 %v5669, %v5665
    %v5722 = vpack.c.b16 %v5670, %v5666
    %v5723 = vpack.c.b16 %v5671, %v5667
    %v5724 = vpack.c.b16 %v5676, %v5672
    %v5725 = vpack.c.b16 %v5677, %v5673
    %v5726 = vpack.c.b16 %v5678, %v5674
    %v5727 = vpack.c.b16 %v5679, %v5675
    %v5728 = vpack.c.b16 %v5684, %v5680
    %v5729 = vpack.c.b16 %v5685, %v5681
    %v5730 = vpack.c.b16 %v5686, %v5682
    %v5731 = vpack.c.b16 %v5687, %v5683
    %v5732 = vpack.c.b16 %v5692, %v5688
    %v5733 = vpack.c.b16 %v5693, %v5689
    %v5734 = vpack.c.b16 %v5694, %v5690
    %v5735 = vpack.c.b16 %v5695, %v5691
    %v5736 = vpack.c.b16 %v5700, %v5696
    %v5737 = vpack.c.b16 %v5701, %v5697
    %v5738 = vpack.c.b16 %v5702, %v5698
    %v5739 = vpack.c.b16 %v5703, %v5699
    %v5740 = vpack.c.b16 %v5708, %v5704
    %v5741 = vpack.c.b16 %v5709, %v5705
    %v5742 = vpack.c.b16 %v5710, %v5706
    %v5743 = vpack.c.b16 %v5711, %v5707
    %5776 = vmatprep.subr.bf16.mxu0 %v5713
    %5777 = vmatpush1.bf16.msra.mxu0 %v5712
    %5778 = vmatprep.subr.bf16.mxu0 %v5717
    %5779 = vmatpush1.bf16.msra.mxu0 %v5716
    %5780 = vmatprep.subr.bf16.mxu0 %v5721
    %5781 = vmatpush1.bf16.msra.mxu0 %v5720
    %5782 = vmatprep.subr.bf16.mxu0 %v5725
    %5783 = vmatpush1.bf16.msra.mxu0 %v5724
    %5784 = vmatprep.subr.bf16.mxu0 %v5729
    %5785 = vmatpush1.bf16.msra.mxu0 %v5728
    %5786 = vmatprep.subr.bf16.mxu0 %v5733
    %5787 = vmatpush1.bf16.msra.mxu0 %v5732
    %5788 = vmatprep.subr.bf16.mxu0 %v5737
    %5789 = vmatpush1.bf16.msra.mxu0 %v5736
    %5790 = vmatprep.subr.bf16.mxu0 %v5741
    %5791 = vmatpush1.bf16.msra.mxu0 %v5740
    %5792 = vmatprep.subr.bf16.mxu0 0
    %5793 = vmatpush1.bf16.msra.mxu0 0
    %5794 = vmatprep.subr.bf16.mxu0 0
    %5795 = vmatpush1.bf16.msra.mxu0 0
    %5796 = vmatprep.subr.bf16.mxu0 0
    %5797 = vmatpush1.bf16.msra.mxu0 0
    %5798 = vmatprep.subr.bf16.mxu0 0
    %5799 = vmatpush1.bf16.msra.mxu0 0
    %5800 = vmatprep.subr.bf16.mxu0 0
    %5801 = vmatpush1.bf16.msra.mxu0 0
    %5802 = vmatprep.subr.bf16.mxu0 0
    %5803 = vmatpush1.bf16.msra.mxu0 0
    %5804 = vmatprep.subr.bf16.mxu0 0
    %5805 = vmatpush1.bf16.msra.mxu0 0
    %5806 = vmatprep.subr.bf16.mxu0 0
    %5807 = vmatpush1.bf16.msra.mxu0 0
    %5808 = vmatprep.mubr.bf16.mxu0 0
    %5809 = vmatmul.mubr.bf16.gmra.mrb[0].mxu0 %v5614
    %v5810 = vpop.f32.mrb[0].mxu0
    %v5811 = vadd.f32 %v5559, %v5810
    %v5812 = vpop.f32.mrb[0].mxu0
    %v5813 = vadd.f32 %v5561, %v5812
    %v5814 = vpop.f32.mrb[0].mxu0
    %v5815 = vadd.f32 %v5563, %v5814
    %v5816 = vpop.f32.mrb[0].mxu0
    %v5817 = vadd.f32 %v5565, %v5816
    %5818 = vdwg.mxu0
    %5819 = vmatprep.subr.bf16.mxu0 %v5715
    %5820 = vmatpush1.bf16.msra.mxu0 %v5714
    %5821 = vmatprep.subr.bf16.mxu0 %v5719
    %5822 = vmatpush1.bf16.msra.mxu0 %v5718
    %5823 = vmatprep.subr.bf16.mxu0 %v5723
    %5824 = vmatpush1.bf16.msra.mxu0 %v5722
    %5825 = vmatprep.subr.bf16.mxu0 %v5727
    %5826 = vmatpush1.bf16.msra.mxu0 %v5726
    %5827 = vmatprep.subr.bf16.mxu0 %v5731
    %5828 = vmatpush1.bf16.msra.mxu0 %v5730
    %5829 = vmatprep.subr.bf16.mxu0 %v5735
    %5830 = vmatpush1.bf16.msra.mxu0 %v5734
    %5831 = vmatprep.subr.bf16.mxu0 %v5739
    %5832 = vmatpush1.bf16.msra.mxu0 %v5738
    %5833 = vmatprep.subr.bf16.mxu0 %v5743
    %5834 = vmatpush1.bf16.msra.mxu0 %v5742
    %5835 = vmatprep.subr.bf16.mxu0 0
    %5836 = vmatpush1.bf16.msra.mxu0 0
    %5837 = vmatprep.subr.bf16.mxu0 0
    %5838 = vmatpush1.bf16.msra.mxu0 0
    %5839 = vmatprep.subr.bf16.mxu0 0
    %5840 = vmatpush1.bf16.msra.mxu0 0
    %5841 = vmatprep.subr.bf16.mxu0 0
    %5842 = vmatpush1.bf16.msra.mxu0 0
    %5843 = vmatprep.subr.bf16.mxu0 0
    %5844 = vmatpush1.bf16.msra.mxu0 0
    %5845 = vmatprep.subr.bf16.mxu0 0
    %5846 = vmatpush1.bf16.msra.mxu0 0
    %5847 = vmatprep.subr.bf16.mxu0 0
    %5848 = vmatpush1.bf16.msra.mxu0 0
    %5849 = vmatprep.subr.bf16.mxu0 0
    %5850 = vmatpush1.bf16.msra.mxu0 0
    %5851 = vmatprep.mubr.bf16.mxu0 0
    %5852 = vmatmul.mubr.bf16.gmra.mrb[0].mxu0 %v5614
    %v5853 = vpop.f32.mrb[0].mxu0
    %v5854 = vadd.f32 %v5602, %v5853
    %v5855 = vpop.f32.mrb[0].mxu0
    %v5856 = vadd.f32 %v5604, %v5855
    %v5857 = vpop.f32.mrb[0].mxu0
    %v5858 = vadd.f32 %v5606, %v5857
    %v5859 = vpop.f32.mrb[0].mxu0
    %v5860 = vadd.f32 %v5608, %v5859
    %5861 = vdwg.mxu0
    %v5862 = vld [vmem:[%s3] sm:$0xf]
    %v5864 = vlaneseq
    %v5865 = vshrl.u32 %v5864, 7
    %v5866 = vsub.s32 0, %v5865
    %v5867 = vrot.slane %v5862, %v5866
    %v5868 = vlaneseq
    %v5869 = vshrl.u32 %v5868, 7
    %v5870 = vsub.s32 1, %v5869
    %v5871 = vrot.slane %v5862, %v5870
    %v5872 = vlaneseq
    %v5873 = vshrl.u32 %v5872, 7
    %v5874 = vsub.s32 2, %v5873
    %v5875 = vrot.slane %v5862, %v5874
    %v5876 = vlaneseq
    %v5877 = vshrl.u32 %v5876, 7
    %v5878 = vsub.s32 3, %v5877
    %v5879 = vrot.slane %v5862, %v5878
    %v5884 = vadd.f32 %v5811, %v5867
    %v5885 = vadd.f32 %v5813, %v5871
    %v5886 = vadd.f32 %v5854, %v5875
    %v5887 = vadd.f32 %v5856, %v5879
    %v5888 = vadd.f32 %v5815, %v5867
    %v5889 = vadd.f32 %v5817, %v5871
    %v5890 = vadd.f32 %v5858, %v5875
    %v5891 = vadd.f32 %v5860, %v5879
    %v5892 = vxor.u32 %v5884, 2147483648
    %v5893 = vxor.u32 %v5888, 2147483648
    %v5894 = vmul.f32 %v5892, 1.442695
    %v5895 = vpow.pop %v5894
    %v5896 = vmul.f32 %v5893, 1.442695
    %v5897 = vpow.pop %v5896
    %v5898 = vadd.f32 %v5895, 1.0
    %v5899 = vadd.f32 %v5897, 1.0
    %v5900 = vrcp.pop %v5898
    %v5901 = vmul.f32 1.0, %v5900
    %v5902 = vrcp.pop %v5899
    %v5903 = vmul.f32 1.0, %v5902
    %v5904 = vxor.u32 %v5885, 2147483648
    %v5905 = vxor.u32 %v5889, 2147483648
    %v5906 = vmul.f32 %v5904, 1.442695
    %v5907 = vpow.pop %v5906
    %v5908 = vmul.f32 %v5905, 1.442695
    %v5909 = vpow.pop %v5908
    %v5910 = vadd.f32 %v5907, 1.0
    %v5911 = vadd.f32 %v5909, 1.0
    %v5912 = vrcp.pop %v5910
    %v5913 = vmul.f32 1.0, %v5912
    %v5914 = vrcp.pop %v5911
    %v5915 = vmul.f32 1.0, %v5914
    %v5916 = vtanh.pop %v5886
    %v5917 = vtanh.pop %v5890
    %v5918 = vxor.u32 %v5887, 2147483648
    %v5919 = vxor.u32 %v5891, 2147483648
    %v5920 = vmul.f32 %v5918, 1.442695
    %v5921 = vpow.pop %v5920
    %v5922 = vmul.f32 %v5919, 1.442695
    %v5923 = vpow.pop %v5922
    %v5924 = vadd.f32 %v5921, 1.0
    %v5925 = vadd.f32 %v5923, 1.0
    %v5926 = vrcp.pop %v5924
    %v5927 = vmul.f32 1.0, %v5926
    %v5928 = vrcp.pop %v5925
    %v5929 = vmul.f32 1.0, %v5928
    %v5930 = vmul.f32 %v5913, %v5297
    %v5931 = vmul.f32 %v5915, %v5298
    %v5932 = vmul.f32 %v5901, %v5916
    %v5933 = vmul.f32 %v5903, %v5917
    %v5934 = vadd.f32 %v5930, %v5932
    %v5935 = vadd.f32 %v5931, %v5933
    %v5936 = vtanh.pop %v5934
    %v5937 = vtanh.pop %v5935
    %v5938 = vmul.f32 %v5927, %v5936
    %v5939 = vmul.f32 %v5929, %v5937
    %5940 = vst [vmem:[#allocation2] sm:$0xff] %v5938
    %5941 = vst [vmem:[#allocation2 + $0x8] sm:$0xff] %v5939
    %5942 = vst [vmem:[#allocation3] sm:$0xff] %v5934
    %5943 = vst [vmem:[#allocation3 + $0x8] sm:$0xff] %v5935
    %v5944 = vpack.c.bf16 %v5939, %v5938
    %v5945 = vld [vmem:[%s759] sm:$0xff]
    %v5946 = vld [vmem:[%s759 + $0x8] sm:$0xff]
    %v5947 = vld [vmem:[%s762] sm:$0xff]
    %v5948 = vld [vmem:[%s762 + $0x8] sm:$0xff]
    %v5949 = vld [vmem:[#allocation10] sm:$0xff]
    %v5950 = vld [vmem:[#allocation10 + $0x8] sm:$0xff]
    %v5951 = vld [vmem:[#allocation10 + $0x10] sm:$0xff]
    %v5952 = vld [vmem:[#allocation10 + $0x18] sm:$0xff]
    %v5953 = vld [vmem:[#allocation10 + $0x20] sm:$0xff]
    %v5954 = vld [vmem:[#allocation10 + $0x28] sm:$0xff]
    %v5955 = vld [vmem:[#allocation10 + $0x30] sm:$0xff]
    %v5956 = vld [vmem:[#allocation10 + $0x38] sm:$0xff]
    %v5957 = vld [vmem:[#allocation10 + $0x40] sm:$0xff]
    %v5958 = vld [vmem:[#allocation10 + $0x48] sm:$0xff]
    %v5959 = vld [vmem:[#allocation10 + $0x50] sm:$0xff]
    %v5960 = vld [vmem:[#allocation10 + $0x58] sm:$0xff]
    %v5961 = vld [vmem:[#allocation10 + $0x60] sm:$0xff]
    %v5962 = vld [vmem:[#allocation10 + $0x68] sm:$0xff]
    %v5963 = vld [vmem:[#allocation10 + $0x70] sm:$0xff]
    %v5964 = vld [vmem:[#allocation10 + $0x78] sm:$0xff]
    %v5965 = vld [vmem:[#allocation10 + $0x80] sm:$0xff]
    %v5966 = vld [vmem:[#allocation10 + $0x88] sm:$0xff]
    %v5967 = vld [vmem:[#allocation10 + $0x90] sm:$0xff]
    %v5968 = vld [vmem:[#allocation10 + $0x98] sm:$0xff]
    %v5969 = vld [vmem:[#allocation10 + $0xa0] sm:$0xff]
    %v5970 = vld [vmem:[#allocation10 + $0xa8] sm:$0xff]
    %v5971 = vld [vmem:[#allocation10 + $0xb0] sm:$0xff]
    %v5972 = vld [vmem:[#allocation10 + $0xb8] sm:$0xff]
    %v5973 = vld [vmem:[#allocation10 + $0xc0] sm:$0xff]
    %v5974 = vld [vmem:[#allocation10 + $0xc8] sm:$0xff]
    %v5975 = vld [vmem:[#allocation10 + $0xd0] sm:$0xff]
    %v5976 = vld [vmem:[#allocation10 + $0xd8] sm:$0xff]
    %v5977 = vld [vmem:[#allocation10 + $0xe0] sm:$0xff]
    %v5978 = vld [vmem:[#allocation10 + $0xe8] sm:$0xff]
    %v5979 = vld [vmem:[#allocation10 + $0xf0] sm:$0xff]
    %v5980 = vld [vmem:[#allocation10 + $0xf8] sm:$0xff]
    %v5981 = vpack.c.bf16 %v5946, %v5945
    %v5982 = vld [vmem:[#allocation12] sm:$0xff]
    %v5983 = vld [vmem:[#allocation12 + $0x8] sm:$0xff]
    %v5984 = vld [vmem:[#allocation12 + $0x10] sm:$0xff]
    %v5985 = vld [vmem:[#allocation12 + $0x18] sm:$0xff]
    %v5986 = vld [vmem:[#allocation12 + $0x20] sm:$0xff]
    %v5987 = vld [vmem:[#allocation12 + $0x28] sm:$0xff]
    %v5988 = vld [vmem:[#allocation12 + $0x30] sm:$0xff]
    %v5989 = vld [vmem:[#allocation12 + $0x38] sm:$0xff]
    %v5990 = vld [vmem:[#allocation12 + $0x40] sm:$0xff]
    %v5991 = vld [vmem:[#allocation12 + $0x48] sm:$0xff]
    %v5992 = vld [vmem:[#allocation12 + $0x50] sm:$0xff]
    %v5993 = vld [vmem:[#allocation12 + $0x58] sm:$0xff]
    %v5994 = vld [vmem:[#allocation12 + $0x60] sm:$0xff]
    %v5995 = vld [vmem:[#allocation12 + $0x68] sm:$0xff]
    %v5996 = vld [vmem:[#allocation12 + $0x70] sm:$0xff]
    %v5997 = vld [vmem:[#allocation12 + $0x78] sm:$0xff]
    %v5998 = vld [vmem:[#allocation12 + $0x80] sm:$0xff]
    %v5999 = vld [vmem:[#allocation12 + $0x88] sm:$0xff]
    %v6000 = vld [vmem:[#allocation12 + $0x90] sm:$0xff]
    %v6001 = vld [vmem:[#allocation12 + $0x98] sm:$0xff]
    %v6002 = vld [vmem:[#allocation12 + $0xa0] sm:$0xff]
    %v6003 = vld [vmem:[#allocation12 + $0xa8] sm:$0xff]
    %v6004 = vld [vmem:[#allocation12 + $0xb0] sm:$0xff]
    %v6005 = vld [vmem:[#allocation12 + $0xb8] sm:$0xff]
    %v6006 = vld [vmem:[#allocation12 + $0xc0] sm:$0xff]
    %v6007 = vld [vmem:[#allocation12 + $0xc8] sm:$0xff]
    %v6008 = vld [vmem:[#allocation12 + $0xd0] sm:$0xff]
    %v6009 = vld [vmem:[#allocation12 + $0xd8] sm:$0xff]
    %v6010 = vld [vmem:[#allocation12 + $0xe0] sm:$0xff]
    %v6011 = vld [vmem:[#allocation12 + $0xe8] sm:$0xff]
    %v6012 = vld [vmem:[#allocation12 + $0xf0] sm:$0xff]
    %v6013 = vld [vmem:[#allocation12 + $0xf8] sm:$0xff]
    %v6046 = vunpack.c.l.b16 %v5982
    %v6047 = vunpack.c.h.b16 %v5982
    %v6048 = vunpack.c.l.b16 %v5983
    %v6049 = vunpack.c.h.b16 %v5983
    %v6050 = vunpack.c.l.b16 %v5984
    %v6051 = vunpack.c.h.b16 %v5984
    %v6052 = vunpack.c.l.b16 %v5985
    %v6053 = vunpack.c.h.b16 %v5985
    %v6054 = vunpack.c.l.b16 %v5986
    %v6055 = vunpack.c.h.b16 %v5986
    %v6056 = vunpack.c.l.b16 %v5987
    %v6057 = vunpack.c.h.b16 %v5987
    %v6058 = vunpack.c.l.b16 %v5988
    %v6059 = vunpack.c.h.b16 %v5988
    %v6060 = vunpack.c.l.b16 %v5989
    %v6061 = vunpack.c.h.b16 %v5989
    %v6062 = vunpack.c.l.b16 %v5990
    %v6063 = vunpack.c.h.b16 %v5990
    %v6064 = vunpack.c.l.b16 %v5991
    %v6065 = vunpack.c.h.b16 %v5991
    %v6066 = vunpack.c.l.b16 %v5992
    %v6067 = vunpack.c.h.b16 %v5992
    %v6068 = vunpack.c.l.b16 %v5993
    %v6069 = vunpack.c.h.b16 %v5993
    %v6070 = vunpack.c.l.b16 %v5994
    %v6071 = vunpack.c.h.b16 %v5994
    %v6072 = vunpack.c.l.b16 %v5995
    %v6073 = vunpack.c.h.b16 %v5995
    %v6074 = vunpack.c.l.b16 %v5996
    %v6075 = vunpack.c.h.b16 %v5996
    %v6076 = vunpack.c.l.b16 %v5997
    %v6077 = vunpack.c.h.b16 %v5997
    %v6078 = vunpack.c.l.b16 %v5998
    %v6079 = vunpack.c.h.b16 %v5998
    %v6080 = vunpack.c.l.b16 %v5999
    %v6081 = vunpack.c.h.b16 %v5999
    %v6082 = vunpack.c.l.b16 %v6000
    %v6083 = vunpack.c.h.b16 %v6000
    %v6084 = vunpack.c.l.b16 %v6001
    %v6085 = vunpack.c.h.b16 %v6001
    %v6086 = vunpack.c.l.b16 %v6002
    %v6087 = vunpack.c.h.b16 %v6002
    %v6088 = vunpack.c.l.b16 %v6003
    %v6089 = vunpack.c.h.b16 %v6003
    %v6090 = vunpack.c.l.b16 %v6004
    %v6091 = vunpack.c.h.b16 %v6004
    %v6092 = vunpack.c.l.b16 %v6005
    %v6093 = vunpack.c.h.b16 %v6005
    %v6094 = vunpack.c.l.b16 %v6006
    %v6095 = vunpack.c.h.b16 %v6006
    %v6096 = vunpack.c.l.b16 %v6007
    %v6097 = vunpack.c.h.b16 %v6007
    %v6098 = vunpack.c.l.b16 %v6008
    %v6099 = vunpack.c.h.b16 %v6008
    %v6100 = vunpack.c.l.b16 %v6009
    %v6101 = vunpack.c.h.b16 %v6009
    %v6102 = vunpack.c.l.b16 %v6010
    %v6103 = vunpack.c.h.b16 %v6010
    %v6104 = vunpack.c.l.b16 %v6011
    %v6105 = vunpack.c.h.b16 %v6011
    %v6106 = vunpack.c.l.b16 %v6012
    %v6107 = vunpack.c.h.b16 %v6012
    %v6108 = vunpack.c.l.b16 %v6013
    %v6109 = vunpack.c.h.b16 %v6013
    %v6110 = vpack.c.b16 %v6050, %v6046
    %v6111 = vpack.c.b16 %v6051, %v6047
    %v6112 = vpack.c.b16 %v6052, %v6048
    %v6113 = vpack.c.b16 %v6053, %v6049
    %v6114 = vpack.c.b16 %v6058, %v6054
    %v6115 = vpack.c.b16 %v6059, %v6055
    %v6116 = vpack.c.b16 %v6060, %v6056
    %v6117 = vpack.c.b16 %v6061, %v6057
    %v6118 = vpack.c.b16 %v6066, %v6062
    %v6119 = vpack.c.b16 %v6067, %v6063
    %v6120 = vpack.c.b16 %v6068, %v6064
    %v6121 = vpack.c.b16 %v6069, %v6065
    %v6122 = vpack.c.b16 %v6074, %v6070
    %v6123 = vpack.c.b16 %v6075, %v6071
    %v6124 = vpack.c.b16 %v6076, %v6072
    %v6125 = vpack.c.b16 %v6077, %v6073
    %v6126 = vpack.c.b16 %v6082, %v6078
    %v6127 = vpack.c.b16 %v6083, %v6079
    %v6128 = vpack.c.b16 %v6084, %v6080
    %v6129 = vpack.c.b16 %v6085, %v6081
    %v6130 = vpack.c.b16 %v6090, %v6086
    %v6131 = vpack.c.b16 %v6091, %v6087
    %v6132 = vpack.c.b16 %v6092, %v6088
    %v6133 = vpack.c.b16 %v6093, %v6089
    %v6134 = vpack.c.b16 %v6098, %v6094
    %v6135 = vpack.c.b16 %v6099, %v6095
    %v6136 = vpack.c.b16 %v6100, %v6096
    %v6137 = vpack.c.b16 %v6101, %v6097
    %v6138 = vpack.c.b16 %v6106, %v6102
    %v6139 = vpack.c.b16 %v6107, %v6103
    %v6140 = vpack.c.b16 %v6108, %v6104
    %v6141 = vpack.c.b16 %v6109, %v6105
    %6174 = vmatprep.subr.bf16.mxu0 %v6111
    %6175 = vmatpush1.bf16.msra.mxu0 %v6110
    %6176 = vmatprep.subr.bf16.mxu0 %v6115
    %6177 = vmatpush1.bf16.msra.mxu0 %v6114
    %6178 = vmatprep.subr.bf16.mxu0 %v6119
    %6179 = vmatpush1.bf16.msra.mxu0 %v6118
    %6180 = vmatprep.subr.bf16.mxu0 %v6123
    %6181 = vmatpush1.bf16.msra.mxu0 %v6122
    %6182 = vmatprep.subr.bf16.mxu0 %v6127
    %6183 = vmatpush1.bf16.msra.mxu0 %v6126
    %6184 = vmatprep.subr.bf16.mxu0 %v6131
    %6185 = vmatpush1.bf16.msra.mxu0 %v6130
    %6186 = vmatprep.subr.bf16.mxu0 %v6135
    %6187 = vmatpush1.bf16.msra.mxu0 %v6134
    %6188 = vmatprep.subr.bf16.mxu0 %v6139
    %6189 = vmatpush1.bf16.msra.mxu0 %v6138
    %6190 = vmatprep.subr.bf16.mxu0 0
    %6191 = vmatpush1.bf16.msra.mxu0 0
    %6192 = vmatprep.subr.bf16.mxu0 0
    %6193 = vmatpush1.bf16.msra.mxu0 0
    %6194 = vmatprep.subr.bf16.mxu0 0
    %6195 = vmatpush1.bf16.msra.mxu0 0
    %6196 = vmatprep.subr.bf16.mxu0 0
    %6197 = vmatpush1.bf16.msra.mxu0 0
    %6198 = vmatprep.subr.bf16.mxu0 0
    %6199 = vmatpush1.bf16.msra.mxu0 0
    %6200 = vmatprep.subr.bf16.mxu0 0
    %6201 = vmatpush1.bf16.msra.mxu0 0
    %6202 = vmatprep.subr.bf16.mxu0 0
    %6203 = vmatpush1.bf16.msra.mxu0 0
    %6204 = vmatprep.subr.bf16.mxu0 0
    %6205 = vmatpush1.bf16.msra.mxu0 0
    %6206 = vmatprep.mubr.bf16.mxu0 0
    %6207 = vmatmul.mubr.bf16.gmra.mrb[0].mxu0 %v5981
    %v6208 = vpop.f32.mrb[0].mxu0
    %v6209 = vadd.f32 0.0, %v6208
    %v6210 = vpop.f32.mrb[0].mxu0
    %v6211 = vadd.f32 0.0, %v6210
    %v6212 = vpop.f32.mrb[0].mxu0
    %v6213 = vadd.f32 0.0, %v6212
    %v6214 = vpop.f32.mrb[0].mxu0
    %v6215 = vadd.f32 0.0, %v6214
    %6216 = vdwg.mxu0
    %6217 = vmatprep.subr.bf16.mxu0 %v6113
    %6218 = vmatpush1.bf16.msra.mxu0 %v6112
    %6219 = vmatprep.subr.bf16.mxu0 %v6117
    %6220 = vmatpush1.bf16.msra.mxu0 %v6116
    %6221 = vmatprep.subr.bf16.mxu0 %v6121
    %6222 = vmatpush1.bf16.msra.mxu0 %v6120
    %6223 = vmatprep.subr.bf16.mxu0 %v6125
    %6224 = vmatpush1.bf16.msra.mxu0 %v6124
    %6225 = vmatprep.subr.bf16.mxu0 %v6129
    %6226 = vmatpush1.bf16.msra.mxu0 %v6128
    %6227 = vmatprep.subr.bf16.mxu0 %v6133
    %6228 = vmatpush1.bf16.msra.mxu0 %v6132
    %6229 = vmatprep.subr.bf16.mxu0 %v6137
    %6230 = vmatpush1.bf16.msra.mxu0 %v6136
    %6231 = vmatprep.subr.bf16.mxu0 %v6141
    %6232 = vmatpush1.bf16.msra.mxu0 %v6140
    %6233 = vmatprep.subr.bf16.mxu0 0
    %6234 = vmatpush1.bf16.msra.mxu0 0
    %6235 = vmatprep.subr.bf16.mxu0 0
    %6236 = vmatpush1.bf16.msra.mxu0 0
    %6237 = vmatprep.subr.bf16.mxu0 0
    %6238 = vmatpush1.bf16.msra.mxu0 0
    %6239 = vmatprep.subr.bf16.mxu0 0
    %6240 = vmatpush1.bf16.msra.mxu0 0
    %6241 = vmatprep.subr.bf16.mxu0 0
    %6242 = vmatpush1.bf16.msra.mxu0 0
    %6243 = vmatprep.subr.bf16.mxu0 0
    %6244 = vmatpush1.bf16.msra.mxu0 0
    %6245 = vmatprep.subr.bf16.mxu0 0
    %6246 = vmatpush1.bf16.msra.mxu0 0
    %6247 = vmatprep.subr.bf16.mxu0 0
    %6248 = vmatpush1.bf16.msra.mxu0 0
    %6249 = vmatprep.mubr.bf16.mxu0 0
    %6250 = vmatmul.mubr.bf16.gmra.mrb[0].mxu0 %v5981
    %v6251 = vpop.f32.mrb[0].mxu0
    %v6252 = vadd.f32 0.0, %v6251
    %v6253 = vpop.f32.mrb[0].mxu0
    %v6254 = vadd.f32 0.0, %v6253
    %v6255 = vpop.f32.mrb[0].mxu0
    %v6256 = vadd.f32 0.0, %v6255
    %v6257 = vpop.f32.mrb[0].mxu0
    %v6258 = vadd.f32 0.0, %v6257
    %6259 = vdwg.mxu0
    %v6292 = vunpack.c.l.b16 %v5949
    %v6293 = vunpack.c.h.b16 %v5949
    %v6294 = vunpack.c.l.b16 %v5950
    %v6295 = vunpack.c.h.b16 %v5950
    %v6296 = vunpack.c.l.b16 %v5951
    %v6297 = vunpack.c.h.b16 %v5951
    %v6298 = vunpack.c.l.b16 %v5952
    %v6299 = vunpack.c.h.b16 %v5952
    %v6300 = vunpack.c.l.b16 %v5953
    %v6301 = vunpack.c.h.b16 %v5953
    %v6302 = vunpack.c.l.b16 %v5954
    %v6303 = vunpack.c.h.b16 %v5954
    %v6304 = vunpack.c.l.b16 %v5955
    %v6305 = vunpack.c.h.b16 %v5955
    %v6306 = vunpack.c.l.b16 %v5956
    %v6307 = vunpack.c.h.b16 %v5956
    %v6308 = vunpack.c.l.b16 %v5957
    %v6309 = vunpack.c.h.b16 %v5957
    %v6310 = vunpack.c.l.b16 %v5958
    %v6311 = vunpack.c.h.b16 %v5958
    %v6312 = vunpack.c.l.b16 %v5959
    %v6313 = vunpack.c.h.b16 %v5959
    %v6314 = vunpack.c.l.b16 %v5960
    %v6315 = vunpack.c.h.b16 %v5960
    %v6316 = vunpack.c.l.b16 %v5961
    %v6317 = vunpack.c.h.b16 %v5961
    %v6318 = vunpack.c.l.b16 %v5962
    %v6319 = vunpack.c.h.b16 %v5962
    %v6320 = vunpack.c.l.b16 %v5963
    %v6321 = vunpack.c.h.b16 %v5963
    %v6322 = vunpack.c.l.b16 %v5964
    %v6323 = vunpack.c.h.b16 %v5964
    %v6324 = vunpack.c.l.b16 %v5965
    %v6325 = vunpack.c.h.b16 %v5965
    %v6326 = vunpack.c.l.b16 %v5966
    %v6327 = vunpack.c.h.b16 %v5966
    %v6328 = vunpack.c.l.b16 %v5967
    %v6329 = vunpack.c.h.b16 %v5967
    %v6330 = vunpack.c.l.b16 %v5968
    %v6331 = vunpack.c.h.b16 %v5968
    %v6332 = vunpack.c.l.b16 %v5969
    %v6333 = vunpack.c.h.b16 %v5969
    %v6334 = vunpack.c.l.b16 %v5970
    %v6335 = vunpack.c.h.b16 %v5970
    %v6336 = vunpack.c.l.b16 %v5971
    %v6337 = vunpack.c.h.b16 %v5971
    %v6338 = vunpack.c.l.b16 %v5972
    %v6339 = vunpack.c.h.b16 %v5972
    %v6340 = vunpack.c.l.b16 %v5973
    %v6341 = vunpack.c.h.b16 %v5973
    %v6342 = vunpack.c.l.b16 %v5974
    %v6343 = vunpack.c.h.b16 %v5974
    %v6344 = vunpack.c.l.b16 %v5975
    %v6345 = vunpack.c.h.b16 %v5975
    %v6346 = vunpack.c.l.b16 %v5976
    %v6347 = vunpack.c.h.b16 %v5976
    %v6348 = vunpack.c.l.b16 %v5977
    %v6349 = vunpack.c.h.b16 %v5977
    %v6350 = vunpack.c.l.b16 %v5978
    %v6351 = vunpack.c.h.b16 %v5978
    %v6352 = vunpack.c.l.b16 %v5979
    %v6353 = vunpack.c.h.b16 %v5979
    %v6354 = vunpack.c.l.b16 %v5980
    %v6355 = vunpack.c.h.b16 %v5980
    %v6356 = vpack.c.b16 %v6296, %v6292
    %v6357 = vpack.c.b16 %v6297, %v6293
    %v6358 = vpack.c.b16 %v6298, %v6294
    %v6359 = vpack.c.b16 %v6299, %v6295
    %v6360 = vpack.c.b16 %v6304, %v6300
    %v6361 = vpack.c.b16 %v6305, %v6301
    %v6362 = vpack.c.b16 %v6306, %v6302
    %v6363 = vpack.c.b16 %v6307, %v6303
    %v6364 = vpack.c.b16 %v6312, %v6308
    %v6365 = vpack.c.b16 %v6313, %v6309
    %v6366 = vpack.c.b16 %v6314, %v6310
    %v6367 = vpack.c.b16 %v6315, %v6311
    %v6368 = vpack.c.b16 %v6320, %v6316
    %v6369 = vpack.c.b16 %v6321, %v6317
    %v6370 = vpack.c.b16 %v6322, %v6318
    %v6371 = vpack.c.b16 %v6323, %v6319
    %v6372 = vpack.c.b16 %v6328, %v6324
    %v6373 = vpack.c.b16 %v6329, %v6325
    %v6374 = vpack.c.b16 %v6330, %v6326
    %v6375 = vpack.c.b16 %v6331, %v6327
    %v6376 = vpack.c.b16 %v6336, %v6332
    %v6377 = vpack.c.b16 %v6337, %v6333
    %v6378 = vpack.c.b16 %v6338, %v6334
    %v6379 = vpack.c.b16 %v6339, %v6335
    %v6380 = vpack.c.b16 %v6344, %v6340
    %v6381 = vpack.c.b16 %v6345, %v6341
    %v6382 = vpack.c.b16 %v6346, %v6342
    %v6383 = vpack.c.b16 %v6347, %v6343
    %v6384 = vpack.c.b16 %v6352, %v6348
    %v6385 = vpack.c.b16 %v6353, %v6349
    %v6386 = vpack.c.b16 %v6354, %v6350
    %v6387 = vpack.c.b16 %v6355, %v6351
    %6420 = vmatprep.subr.bf16.mxu0 %v6357
    %6421 = vmatpush1.bf16.msra.mxu0 %v6356
    %6422 = vmatprep.subr.bf16.mxu0 %v6361
    %6423 = vmatpush1.bf16.msra.mxu0 %v6360
    %6424 = vmatprep.subr.bf16.mxu0 %v6365
    %6425 = vmatpush1.bf16.msra.mxu0 %v6364
    %6426 = vmatprep.subr.bf16.mxu0 %v6369
    %6427 = vmatpush1.bf16.msra.mxu0 %v6368
    %6428 = vmatprep.subr.bf16.mxu0 %v6373
    %6429 = vmatpush1.bf16.msra.mxu0 %v6372
    %6430 = vmatprep.subr.bf16.mxu0 %v6377
    %6431 = vmatpush1.bf16.msra.mxu0 %v6376
    %6432 = vmatprep.subr.bf16.mxu0 %v6381
    %6433 = vmatpush1.bf16.msra.mxu0 %v6380
    %6434 = vmatprep.subr.bf16.mxu0 %v6385
    %6435 = vmatpush1.bf16.msra.mxu0 %v6384
    %6436 = vmatprep.subr.bf16.mxu0 0
    %6437 = vmatpush1.bf16.msra.mxu0 0
    %6438 = vmatprep.subr.bf16.mxu0 0
    %6439 = vmatpush1.bf16.msra.mxu0 0
    %6440 = vmatprep.subr.bf16.mxu0 0
    %6441 = vmatpush1.bf16.msra.mxu0 0
    %6442 = vmatprep.subr.bf16.mxu0 0
    %6443 = vmatpush1.bf16.msra.mxu0 0
    %6444 = vmatprep.subr.bf16.mxu0 0
    %6445 = vmatpush1.bf16.msra.mxu0 0
    %6446 = vmatprep.subr.bf16.mxu0 0
    %6447 = vmatpush1.bf16.msra.mxu0 0
    %6448 = vmatprep.subr.bf16.mxu0 0
    %6449 = vmatpush1.bf16.msra.mxu0 0
    %6450 = vmatprep.subr.bf16.mxu0 0
    %6451 = vmatpush1.bf16.msra.mxu0 0
    %6452 = vmatprep.mubr.bf16.mxu0 0
    %6453 = vmatmul.mubr.bf16.gmra.mrb[0].mxu0 %v5944
    %v6454 = vpop.f32.mrb[0].mxu0
    %v6455 = vadd.f32 %v6209, %v6454
    %v6456 = vpop.f32.mrb[0].mxu0
    %v6457 = vadd.f32 %v6211, %v6456
    %v6458 = vpop.f32.mrb[0].mxu0
    %v6459 = vadd.f32 %v6213, %v6458
    %v6460 = vpop.f32.mrb[0].mxu0
    %v6461 = vadd.f32 %v6215, %v6460
    %6462 = vdwg.mxu0
    %6463 = vmatprep.subr.bf16.mxu0 %v6359
    %6464 = vmatpush1.bf16.msra.mxu0 %v6358
    %6465 = vmatprep.subr.bf16.mxu0 %v6363
    %6466 = vmatpush1.bf16.msra.mxu0 %v6362
    %6467 = vmatprep.subr.bf16.mxu0 %v6367
    %6468 = vmatpush1.bf16.msra.mxu0 %v6366
    %6469 = vmatprep.subr.bf16.mxu0 %v6371
    %6470 = vmatpush1.bf16.msra.mxu0 %v6370
    %6471 = vmatprep.subr.bf16.mxu0 %v6375
    %6472 = vmatpush1.bf16.msra.mxu0 %v6374
    %6473 = vmatprep.subr.bf16.mxu0 %v6379
    %6474 = vmatpush1.bf16.msra.mxu0 %v6378
    %6475 = vmatprep.subr.bf16.mxu0 %v6383
    %6476 = vmatpush1.bf16.msra.mxu0 %v6382
    %6477 = vmatprep.subr.bf16.mxu0 %v6387
    %6478 = vmatpush1.bf16.msra.mxu0 %v6386
    %6479 = vmatprep.subr.bf16.mxu0 0
    %6480 = vmatpush1.bf16.msra.mxu0 0
    %6481 = vmatprep.subr.bf16.mxu0 0
    %6482 = vmatpush1.bf16.msra.mxu0 0
    %6483 = vmatprep.subr.bf16.mxu0 0
    %6484 = vmatpush1.bf16.msra.mxu0 0
    %6485 = vmatprep.subr.bf16.mxu0 0
    %6486 = vmatpush1.bf16.msra.mxu0 0
    %6487 = vmatprep.subr.bf16.mxu0 0
    %6488 = vmatpush1.bf16.msra.mxu0 0
    %6489 = vmatprep.subr.bf16.mxu0 0
    %6490 = vmatpush1.bf16.msra.mxu0 0
    %6491 = vmatprep.subr.bf16.mxu0 0
    %6492 = vmatpush1.bf16.msra.mxu0 0
    %6493 = vmatprep.subr.bf16.mxu0 0
    %6494 = vmatpush1.bf16.msra.mxu0 0
    %6495 = vmatprep.mubr.bf16.mxu0 0
    %6496 = vmatmul.mubr.bf16.gmra.mrb[0].mxu0 %v5944
    %v6497 = vpop.f32.mrb[0].mxu0
    %v6498 = vadd.f32 %v6252, %v6497
    %v6499 = vpop.f32.mrb[0].mxu0
    %v6500 = vadd.f32 %v6254, %v6499
    %v6501 = vpop.f32.mrb[0].mxu0
    %v6502 = vadd.f32 %v6256, %v6501
    %v6503 = vpop.f32.mrb[0].mxu0
    %v6504 = vadd.f32 %v6258, %v6503
    %6505 = vdwg.mxu0
    %v6506 = vld [vmem:[%s6] sm:$0xf]
    %v6508 = vlaneseq
    %v6509 = vshrl.u32 %v6508, 7
    %v6510 = vsub.s32 0, %v6509
    %v6511 = vrot.slane %v6506, %v6510
    %v6512 = vlaneseq
    %v6513 = vshrl.u32 %v6512, 7
    %v6514 = vsub.s32 1, %v6513
    %v6515 = vrot.slane %v6506, %v6514
    %v6516 = vlaneseq
    %v6517 = vshrl.u32 %v6516, 7
    %v6518 = vsub.s32 2, %v6517
    %v6519 = vrot.slane %v6506, %v6518
    %v6520 = vlaneseq
    %v6521 = vshrl.u32 %v6520, 7
    %v6522 = vsub.s32 3, %v6521
    %v6523 = vrot.slane %v6506, %v6522
    %v6528 = vadd.f32 %v6455, %v6511
    %v6529 = vadd.f32 %v6457, %v6515
    %v6530 = vadd.f32 %v6498, %v6519
    %v6531 = vadd.f32 %v6500, %v6523
    %v6532 = vadd.f32 %v6459, %v6511
    %v6533 = vadd.f32 %v6461, %v6515
    %v6534 = vadd.f32 %v6502, %v6519
    %v6535 = vadd.f32 %v6504, %v6523
    %v6536 = vxor.u32 %v6528, 2147483648
    %v6537 = vxor.u32 %v6532, 2147483648
    %v6538 = vmul.f32 %v6536, 1.442695
    %v6539 = vpow.pop %v6538
    %v6540 = vmul.f32 %v6537, 1.442695
    %v6541 = vpow.pop %v6540
    %v6542 = vadd.f32 %v6539, 1.0
    %v6543 = vadd.f32 %v6541, 1.0
    %v6544 = vrcp.pop %v6542
    %v6545 = vmul.f32 1.0, %v6544
    %v6546 = vrcp.pop %v6543
    %v6547 = vmul.f32 1.0, %v6546
    %v6548 = vxor.u32 %v6529, 2147483648
    %v6549 = vxor.u32 %v6533, 2147483648
    %v6550 = vmul.f32 %v6548, 1.442695
    %v6551 = vpow.pop %v6550
    %v6552 = vmul.f32 %v6549, 1.442695
    %v6553 = vpow.pop %v6552
    %v6554 = vadd.f32 %v6551, 1.0
    %v6555 = vadd.f32 %v6553, 1.0
    %v6556 = vrcp.pop %v6554
    %v6557 = vmul.f32 1.0, %v6556
    %v6558 = vrcp.pop %v6555
    %v6559 = vmul.f32 1.0, %v6558
    %v6560 = vtanh.pop %v6530
    %v6561 = vtanh.pop %v6534
    %v6562 = vxor.u32 %v6531, 2147483648
    %v6563 = vxor.u32 %v6535, 2147483648
    %v6564 = vmul.f32 %v6562, 1.442695
    %v6565 = vpow.pop %v6564
    %v6566 = vmul.f32 %v6563, 1.442695
    %v6567 = vpow.pop %v6566
    %v6568 = vadd.f32 %v6565, 1.0
    %v6569 = vadd.f32 %v6567, 1.0
    %v6570 = vrcp.pop %v6568
    %v6571 = vmul.f32 1.0, %v6570
    %v6572 = vrcp.pop %v6569
    %v6573 = vmul.f32 1.0, %v6572
    %v6574 = vmul.f32 %v6557, %v5947
    %v6575 = vmul.f32 %v6559, %v5948
    %v6576 = vmul.f32 %v6545, %v6560
    %v6577 = vmul.f32 %v6547, %v6561
    %v6578 = vadd.f32 %v6574, %v6576
    %v6579 = vadd.f32 %v6575, %v6577
    %v6580 = vtanh.pop %v6578
    %v6581 = vtanh.pop %v6579
    %v6582 = vmul.f32 %v6571, %v6580
    %v6583 = vmul.f32 %v6573, %v6581
    %6584 = vst [vmem:[%s759] sm:$0xff] %v6582
    %6585 = vst [vmem:[%s759 + $0x8] sm:$0xff] %v6583
    %6586 = vst [vmem:[%s762] sm:$0xff] %v6578
    %6587 = vst [vmem:[%s762 + $0x8] sm:$0xff] %v6579
    %s6588 = scalar_lea.vmem [#allocation4], 40
    %v6589 = vld [vmem:[%s6588] sm:$0xf]
    %v6590 = vld [vmem:[%s6588 + $0x4] sm:$0xf]
    %v6591 = vld [vmem:[#allocation2] sm:$0xff]
    %v6592 = vld [vmem:[#allocation2 + $0x8] sm:$0xff]
    %v6593 = vld [vmem:[#allocation3] sm:$0xff]
    %v6594 = vld [vmem:[#allocation3 + $0x8] sm:$0xff]
    %v6595 = vld [vmem:[#allocation7] sm:$0xff]
    %v6596 = vld [vmem:[#allocation7 + $0x8] sm:$0xff]
    %v6597 = vld [vmem:[#allocation7 + $0x10] sm:$0xff]
    %v6598 = vld [vmem:[#allocation7 + $0x18] sm:$0xff]
    %v6599 = vld [vmem:[#allocation7 + $0x20] sm:$0xff]
    %v6600 = vld [vmem:[#allocation7 + $0x28] sm:$0xff]
    %v6601 = vld [vmem:[#allocation7 + $0x30] sm:$0xff]
    %v6602 = vld [vmem:[#allocation7 + $0x38] sm:$0xff]
    %v6603 = vld [vmem:[#allocation7 + $0x40] sm:$0xff]
    %v6604 = vld [vmem:[#allocation7 + $0x48] sm:$0xff]
    %v6605 = vld [vmem:[#allocation7 + $0x50] sm:$0xff]
    %v6606 = vld [vmem:[#allocation7 + $0x58] sm:$0xff]
    %v6607 = vld [vmem:[#allocation7 + $0x60] sm:$0xff]
    %v6608 = vld [vmem:[#allocation7 + $0x68] sm:$0xff]
    %v6609 = vld [vmem:[#allocation7 + $0x70] sm:$0xff]
    %v6610 = vld [vmem:[#allocation7 + $0x78] sm:$0xff]
    %v6611 = vld [vmem:[#allocation7 + $0x80] sm:$0xff]
    %v6612 = vld [vmem:[#allocation7 + $0x88] sm:$0xff]
    %v6613 = vld [vmem:[#allocation7 + $0x90] sm:$0xff]
    %v6614 = vld [vmem:[#allocation7 + $0x98] sm:$0xff]
    %v6615 = vld [vmem:[#allocation7 + $0xa0] sm:$0xff]
    %v6616 = vld [vmem:[#allocation7 + $0xa8] sm:$0xff]
    %v6617 = vld [vmem:[#allocation7 + $0xb0] sm:$0xff]
    %v6618 = vld [vmem:[#allocation7 + $0xb8] sm:$0xff]
    %v6619 = vld [vmem:[#allocation7 + $0xc0] sm:$0xff]
    %v6620 = vld [vmem:[#allocation7 + $0xc8] sm:$0xff]
    %v6621 = vld [vmem:[#allocation7 + $0xd0] sm:$0xff]
    %v6622 = vld [vmem:[#allocation7 + $0xd8] sm:$0xff]
    %v6623 = vld [vmem:[#allocation7 + $0xe0] sm:$0xff]
    %v6624 = vld [vmem:[#allocation7 + $0xe8] sm:$0xff]
    %v6625 = vld [vmem:[#allocation7 + $0xf0] sm:$0xff]
    %v6626 = vld [vmem:[#allocation7 + $0xf8] sm:$0xff]
    %v6627 = vpack.c.bf16 %v6592, %v6591
    %v6628 = vld [vmem:[#allocation9] sm:$0xff]
    %v6629 = vld [vmem:[#allocation9 + $0x8] sm:$0xff]
    %v6630 = vld [vmem:[#allocation9 + $0x10] sm:$0xff]
    %v6631 = vld [vmem:[#allocation9 + $0x18] sm:$0xff]
    %v6632 = vld [vmem:[#allocation9 + $0x20] sm:$0xff]
    %v6633 = vld [vmem:[#allocation9 + $0x28] sm:$0xff]
    %v6634 = vld [vmem:[#allocation9 + $0x30] sm:$0xff]
    %v6635 = vld [vmem:[#allocation9 + $0x38] sm:$0xff]
    %v6636 = vld [vmem:[#allocation9 + $0x40] sm:$0xff]
    %v6637 = vld [vmem:[#allocation9 + $0x48] sm:$0xff]
    %v6638 = vld [vmem:[#allocation9 + $0x50] sm:$0xff]
    %v6639 = vld [vmem:[#allocation9 + $0x58] sm:$0xff]
    %v6640 = vld [vmem:[#allocation9 + $0x60] sm:$0xff]
    %v6641 = vld [vmem:[#allocation9 + $0x68] sm:$0xff]
    %v6642 = vld [vmem:[#allocation9 + $0x70] sm:$0xff]
    %v6643 = vld [vmem:[#allocation9 + $0x78] sm:$0xff]
    %v6644 = vld [vmem:[#allocation9 + $0x80] sm:$0xff]
    %v6645 = vld [vmem:[#allocation9 + $0x88] sm:$0xff]
    %v6646 = vld [vmem:[#allocation9 + $0x90] sm:$0xff]
    %v6647 = vld [vmem:[#allocation9 + $0x98] sm:$0xff]
    %v6648 = vld [vmem:[#allocation9 + $0xa0] sm:$0xff]
    %v6649 = vld [vmem:[#allocation9 + $0xa8] sm:$0xff]
    %v6650 = vld [vmem:[#allocation9 + $0xb0] sm:$0xff]
    %v6651 = vld [vmem:[#allocation9 + $0xb8] sm:$0xff]
    %v6652 = vld [vmem:[#allocation9 + $0xc0] sm:$0xff]
    %v6653 = vld [vmem:[#allocation9 + $0xc8] sm:$0xff]
    %v6654 = vld [vmem:[#allocation9 + $0xd0] sm:$0xff]
    %v6655 = vld [vmem:[#allocation9 + $0xd8] sm:$0xff]
    %v6656 = vld [vmem:[#allocation9 + $0xe0] sm:$0xff]
    %v6657 = vld [vmem:[#allocation9 + $0xe8] sm:$0xff]
    %v6658 = vld [vmem:[#allocation9 + $0xf0] sm:$0xff]
    %v6659 = vld [vmem:[#allocation9 + $0xf8] sm:$0xff]
    %v6692 = vunpack.c.l.b16 %v6628
    %v6693 = vunpack.c.h.b16 %v6628
    %v6694 = vunpack.c.l.b16 %v6629
    %v6695 = vunpack.c.h.b16 %v6629
    %v6696 = vunpack.c.l.b16 %v6630
    %v6697 = vunpack.c.h.b16 %v6630
    %v6698 = vunpack.c.l.b16 %v6631
    %v6699 = vunpack.c.h.b16 %v6631
    %v6700 = vunpack.c.l.b16 %v6632
    %v6701 = vunpack.c.h.b16 %v6632
    %v6702 = vunpack.c.l.b16 %v6633
    %v6703 = vunpack.c.h.b16 %v6633
    %v6704 = vunpack.c.l.b16 %v6634
    %v6705 = vunpack.c.h.b16 %v6634
    %v6706 = vunpack.c.l.b16 %v6635
    %v6707 = vunpack.c.h.b16 %v6635
    %v6708 = vunpack.c.l.b16 %v6636
    %v6709 = vunpack.c.h.b16 %v6636
    %v6710 = vunpack.c.l.b16 %v6637
    %v6711 = vunpack.c.h.b16 %v6637
    %v6712 = vunpack.c.l.b16 %v6638
    %v6713 = vunpack.c.h.b16 %v6638
    %v6714 = vunpack.c.l.b16 %v6639
    %v6715 = vunpack.c.h.b16 %v6639
    %v6716 = vunpack.c.l.b16 %v6640
    %v6717 = vunpack.c.h.b16 %v6640
    %v6718 = vunpack.c.l.b16 %v6641
    %v6719 = vunpack.c.h.b16 %v6641
    %v6720 = vunpack.c.l.b16 %v6642
    %v6721 = vunpack.c.h.b16 %v6642
    %v6722 = vunpack.c.l.b16 %v6643
    %v6723 = vunpack.c.h.b16 %v6643
    %v6724 = vunpack.c.l.b16 %v6644
    %v6725 = vunpack.c.h.b16 %v6644
    %v6726 = vunpack.c.l.b16 %v6645
    %v6727 = vunpack.c.h.b16 %v6645
    %v6728 = vunpack.c.l.b16 %v6646
    %v6729 = vunpack.c.h.b16 %v6646
    %v6730 = vunpack.c.l.b16 %v6647
    %v6731 = vunpack.c.h.b16 %v6647
    %v6732 = vunpack.c.l.b16 %v6648
    %v6733 = vunpack.c.h.b16 %v6648
    %v6734 = vunpack.c.l.b16 %v6649
    %v6735 = vunpack.c.h.b16 %v6649
    %v6736 = vunpack.c.l.b16 %v6650
    %v6737 = vunpack.c.h.b16 %v6650
    %v6738 = vunpack.c.l.b16 %v6651
    %v6739 = vunpack.c.h.b16 %v6651
    %v6740 = vunpack.c.l.b16 %v6652
    %v6741 = vunpack.c.h.b16 %v6652
    %v6742 = vunpack.c.l.b16 %v6653
    %v6743 = vunpack.c.h.b16 %v6653
    %v6744 = vunpack.c.l.b16 %v6654
    %v6745 = vunpack.c.h.b16 %v6654
    %v6746 = vunpack.c.l.b16 %v6655
    %v6747 = vunpack.c.h.b16 %v6655
    %v6748 = vunpack.c.l.b16 %v6656
    %v6749 = vunpack.c.h.b16 %v6656
    %v6750 = vunpack.c.l.b16 %v6657
    %v6751 = vunpack.c.h.b16 %v6657
    %v6752 = vunpack.c.l.b16 %v6658
    %v6753 = vunpack.c.h.b16 %v6658
    %v6754 = vunpack.c.l.b16 %v6659
    %v6755 = vunpack.c.h.b16 %v6659
    %v6756 = vpack.c.b16 %v6696, %v6692
    %v6757 = vpack.c.b16 %v6697, %v6693
    %v6758 = vpack.c.b16 %v6698, %v6694
    %v6759 = vpack.c.b16 %v6699, %v6695
    %v6760 = vpack.c.b16 %v6704, %v6700
    %v6761 = vpack.c.b16 %v6705, %v6701
    %v6762 = vpack.c.b16 %v6706, %v6702
    %v6763 = vpack.c.b16 %v6707, %v6703
    %v6764 = vpack.c.b16 %v6712, %v6708
    %v6765 = vpack.c.b16 %v6713, %v6709
    %v6766 = vpack.c.b16 %v6714, %v6710
    %v6767 = vpack.c.b16 %v6715, %v6711
    %v6768 = vpack.c.b16 %v6720, %v6716
    %v6769 = vpack.c.b16 %v6721, %v6717
    %v6770 = vpack.c.b16 %v6722, %v6718
    %v6771 = vpack.c.b16 %v6723, %v6719
    %v6772 = vpack.c.b16 %v6728, %v6724
    %v6773 = vpack.c.b16 %v6729, %v6725
    %v6774 = vpack.c.b16 %v6730, %v6726
    %v6775 = vpack.c.b16 %v6731, %v6727
    %v6776 = vpack.c.b16 %v6736, %v6732
    %v6777 = vpack.c.b16 %v6737, %v6733
    %v6778 = vpack.c.b16 %v6738, %v6734
    %v6779 = vpack.c.b16 %v6739, %v6735
    %v6780 = vpack.c.b16 %v6744, %v6740
    %v6781 = vpack.c.b16 %v6745, %v6741
    %v6782 = vpack.c.b16 %v6746, %v6742
    %v6783 = vpack.c.b16 %v6747, %v6743
    %v6784 = vpack.c.b16 %v6752, %v6748
    %v6785 = vpack.c.b16 %v6753, %v6749
    %v6786 = vpack.c.b16 %v6754, %v6750
    %v6787 = vpack.c.b16 %v6755, %v6751
    %6820 = vmatprep.subr.bf16.mxu0 %v6757
    %6821 = vmatpush1.bf16.msra.mxu0 %v6756
    %6822 = vmatprep.subr.bf16.mxu0 %v6761
    %6823 = vmatpush1.bf16.msra.mxu0 %v6760
    %6824 = vmatprep.subr.bf16.mxu0 %v6765
    %6825 = vmatpush1.bf16.msra.mxu0 %v6764
    %6826 = vmatprep.subr.bf16.mxu0 %v6769
    %6827 = vmatpush1.bf16.msra.mxu0 %v6768
    %6828 = vmatprep.subr.bf16.mxu0 %v6773
    %6829 = vmatpush1.bf16.msra.mxu0 %v6772
    %6830 = vmatprep.subr.bf16.mxu0 %v6777
    %6831 = vmatpush1.bf16.msra.mxu0 %v6776
    %6832 = vmatprep.subr.bf16.mxu0 %v6781
    %6833 = vmatpush1.bf16.msra.mxu0 %v6780
    %6834 = vmatprep.subr.bf16.mxu0 %v6785
    %6835 = vmatpush1.bf16.msra.mxu0 %v6784
    %6836 = vmatprep.subr.bf16.mxu0 0
    %6837 = vmatpush1.bf16.msra.mxu0 0
    %6838 = vmatprep.subr.bf16.mxu0 0
    %6839 = vmatpush1.bf16.msra.mxu0 0
    %6840 = vmatprep.subr.bf16.mxu0 0
    %6841 = vmatpush1.bf16.msra.mxu0 0
    %6842 = vmatprep.subr.bf16.mxu0 0
    %6843 = vmatpush1.bf16.msra.mxu0 0
    %6844 = vmatprep.subr.bf16.mxu0 0
    %6845 = vmatpush1.bf16.msra.mxu0 0
    %6846 = vmatprep.subr.bf16.mxu0 0
    %6847 = vmatpush1.bf16.msra.mxu0 0
    %6848 = vmatprep.subr.bf16.mxu0 0
    %6849 = vmatpush1.bf16.msra.mxu0 0
    %6850 = vmatprep.subr.bf16.mxu0 0
    %6851 = vmatpush1.bf16.msra.mxu0 0
    %6852 = vmatprep.mubr.bf16.mxu0 0
    %6853 = vmatmul.mubr.bf16.gmra.mrb[0].mxu0 %v6627
    %v6854 = vpop.f32.mrb[0].mxu0
    %v6855 = vadd.f32 0.0, %v6854
    %v6856 = vpop.f32.mrb[0].mxu0
    %v6857 = vadd.f32 0.0, %v6856
    %v6858 = vpop.f32.mrb[0].mxu0
    %v6859 = vadd.f32 0.0, %v6858
    %v6860 = vpop.f32.mrb[0].mxu0
    %v6861 = vadd.f32 0.0, %v6860
    %6862 = vdwg.mxu0
    %6863 = vmatprep.subr.bf16.mxu0 %v6759
    %6864 = vmatpush1.bf16.msra.mxu0 %v6758
    %6865 = vmatprep.subr.bf16.mxu0 %v6763
    %6866 = vmatpush1.bf16.msra.mxu0 %v6762
    %6867 = vmatprep.subr.bf16.mxu0 %v6767
    %6868 = vmatpush1.bf16.msra.mxu0 %v6766
    %6869 = vmatprep.subr.bf16.mxu0 %v6771
    %6870 = vmatpush1.bf16.msra.mxu0 %v6770
    %6871 = vmatprep.subr.bf16.mxu0 %v6775
    %6872 = vmatpush1.bf16.msra.mxu0 %v6774
    %6873 = vmatprep.subr.bf16.mxu0 %v6779
    %6874 = vmatpush1.bf16.msra.mxu0 %v6778
    %6875 = vmatprep.subr.bf16.mxu0 %v6783
    %6876 = vmatpush1.bf16.msra.mxu0 %v6782
    %6877 = vmatprep.subr.bf16.mxu0 %v6787
    %6878 = vmatpush1.bf16.msra.mxu0 %v6786
    %6879 = vmatprep.subr.bf16.mxu0 0
    %6880 = vmatpush1.bf16.msra.mxu0 0
    %6881 = vmatprep.subr.bf16.mxu0 0
    %6882 = vmatpush1.bf16.msra.mxu0 0
    %6883 = vmatprep.subr.bf16.mxu0 0
    %6884 = vmatpush1.bf16.msra.mxu0 0
    %6885 = vmatprep.subr.bf16.mxu0 0
    %6886 = vmatpush1.bf16.msra.mxu0 0
    %6887 = vmatprep.subr.bf16.mxu0 0
    %6888 = vmatpush1.bf16.msra.mxu0 0
    %6889 = vmatprep.subr.bf16.mxu0 0
    %6890 = vmatpush1.bf16.msra.mxu0 0
    %6891 = vmatprep.subr.bf16.mxu0 0
    %6892 = vmatpush1.bf16.msra.mxu0 0
    %6893 = vmatprep.subr.bf16.mxu0 0
    %6894 = vmatpush1.bf16.msra.mxu0 0
    %6895 = vmatprep.mubr.bf16.mxu0 0
    %6896 = vmatmul.mubr.bf16.gmra.mrb[0].mxu0 %v6627
    %v6897 = vpop.f32.mrb[0].mxu0
    %v6898 = vadd.f32 0.0, %v6897
    %v6899 = vpop.f32.mrb[0].mxu0
    %v6900 = vadd.f32 0.0, %v6899
    %v6901 = vpop.f32.mrb[0].mxu0
    %v6902 = vadd.f32 0.0, %v6901
    %v6903 = vpop.f32.mrb[0].mxu0
    %v6904 = vadd.f32 0.0, %v6903
    %6905 = vdwg.mxu0
    %v6908 = vunpack.c.l.b16 %v6589
    %v6909 = vunpack.c.l.b16 %v6590
    %v6910 = vpack.c.b16 %v6909, %v6908
    %v6944 = vunpack.c.l.b16 %v6595
    %v6945 = vunpack.c.h.b16 %v6595
    %v6946 = vunpack.c.l.b16 %v6596
    %v6947 = vunpack.c.h.b16 %v6596
    %v6948 = vunpack.c.l.b16 %v6597
    %v6949 = vunpack.c.h.b16 %v6597
    %v6950 = vunpack.c.l.b16 %v6598
    %v6951 = vunpack.c.h.b16 %v6598
    %v6952 = vunpack.c.l.b16 %v6599
    %v6953 = vunpack.c.h.b16 %v6599
    %v6954 = vunpack.c.l.b16 %v6600
    %v6955 = vunpack.c.h.b16 %v6600
    %v6956 = vunpack.c.l.b16 %v6601
    %v6957 = vunpack.c.h.b16 %v6601
    %v6958 = vunpack.c.l.b16 %v6602
    %v6959 = vunpack.c.h.b16 %v6602
    %v6960 = vunpack.c.l.b16 %v6603
    %v6961 = vunpack.c.h.b16 %v6603
    %v6962 = vunpack.c.l.b16 %v6604
    %v6963 = vunpack.c.h.b16 %v6604
    %v6964 = vunpack.c.l.b16 %v6605
    %v6965 = vunpack.c.h.b16 %v6605
    %v6966 = vunpack.c.l.b16 %v6606
    %v6967 = vunpack.c.h.b16 %v6606
    %v6968 = vunpack.c.l.b16 %v6607
    %v6969 = vunpack.c.h.b16 %v6607
    %v6970 = vunpack.c.l.b16 %v6608
    %v6971 = vunpack.c.h.b16 %v6608
    %v6972 = vunpack.c.l.b16 %v6609
    %v6973 = vunpack.c.h.b16 %v6609
    %v6974 = vunpack.c.l.b16 %v6610
    %v6975 = vunpack.c.h.b16 %v6610
    %v6976 = vunpack.c.l.b16 %v6611
    %v6977 = vunpack.c.h.b16 %v6611
    %v6978 = vunpack.c.l.b16 %v6612
    %v6979 = vunpack.c.h.b16 %v6612
    %v6980 = vunpack.c.l.b16 %v6613
    %v6981 = vunpack.c.h.b16 %v6613
    %v6982 = vunpack.c.l.b16 %v6614
    %v6983 = vunpack.c.h.b16 %v6614
    %v6984 = vunpack.c.l.b16 %v6615
    %v6985 = vunpack.c.h.b16 %v6615
    %v6986 = vunpack.c.l.b16 %v6616
    %v6987 = vunpack.c.h.b16 %v6616
    %v6988 = vunpack.c.l.b16 %v6617
    %v6989 = vunpack.c.h.b16 %v6617
    %v6990 = vunpack.c.l.b16 %v6618
    %v6991 = vunpack.c.h.b16 %v6618
    %v6992 = vunpack.c.l.b16 %v6619
    %v6993 = vunpack.c.h.b16 %v6619
    %v6994 = vunpack.c.l.b16 %v6620
    %v6995 = vunpack.c.h.b16 %v6620
    %v6996 = vunpack.c.l.b16 %v6621
    %v6997 = vunpack.c.h.b16 %v6621
    %v6998 = vunpack.c.l.b16 %v6622
    %v6999 = vunpack.c.h.b16 %v6622
    %v7000 = vunpack.c.l.b16 %v6623
    %v7001 = vunpack.c.h.b16 %v6623
    %v7002 = vunpack.c.l.b16 %v6624
    %v7003 = vunpack.c.h.b16 %v6624
    %v7004 = vunpack.c.l.b16 %v6625
    %v7005 = vunpack.c.h.b16 %v6625
    %v7006 = vunpack.c.l.b16 %v6626
    %v7007 = vunpack.c.h.b16 %v6626
    %v7008 = vpack.c.b16 %v6948, %v6944
    %v7009 = vpack.c.b16 %v6949, %v6945
    %v7010 = vpack.c.b16 %v6950, %v6946
    %v7011 = vpack.c.b16 %v6951, %v6947
    %v7012 = vpack.c.b16 %v6956, %v6952
    %v7013 = vpack.c.b16 %v6957, %v6953
    %v7014 = vpack.c.b16 %v6958, %v6954
    %v7015 = vpack.c.b16 %v6959, %v6955
    %v7016 = vpack.c.b16 %v6964, %v6960
    %v7017 = vpack.c.b16 %v6965, %v6961
    %v7018 = vpack.c.b16 %v6966, %v6962
    %v7019 = vpack.c.b16 %v6967, %v6963
    %v7020 = vpack.c.b16 %v6972, %v6968
    %v7021 = vpack.c.b16 %v6973, %v6969
    %v7022 = vpack.c.b16 %v6974, %v6970
    %v7023 = vpack.c.b16 %v6975, %v6971
    %v7024 = vpack.c.b16 %v6980, %v6976
    %v7025 = vpack.c.b16 %v6981, %v6977
    %v7026 = vpack.c.b16 %v6982, %v6978
    %v7027 = vpack.c.b16 %v6983, %v6979
    %v7028 = vpack.c.b16 %v6988, %v6984
    %v7029 = vpack.c.b16 %v6989, %v6985
    %v7030 = vpack.c.b16 %v6990, %v6986
    %v7031 = vpack.c.b16 %v6991, %v6987
    %v7032 = vpack.c.b16 %v6996, %v6992
    %v7033 = vpack.c.b16 %v6997, %v6993
    %v7034 = vpack.c.b16 %v6998, %v6994
    %v7035 = vpack.c.b16 %v6999, %v6995
    %v7036 = vpack.c.b16 %v7004, %v7000
    %v7037 = vpack.c.b16 %v7005, %v7001
    %v7038 = vpack.c.b16 %v7006, %v7002
    %v7039 = vpack.c.b16 %v7007, %v7003
    %7072 = vmatprep.subr.bf16.mxu0 %v7009
    %7073 = vmatpush1.bf16.msra.mxu0 %v7008
    %7074 = vmatprep.subr.bf16.mxu0 %v7013
    %7075 = vmatpush1.bf16.msra.mxu0 %v7012
    %7076 = vmatprep.subr.bf16.mxu0 %v7017
    %7077 = vmatpush1.bf16.msra.mxu0 %v7016
    %7078 = vmatprep.subr.bf16.mxu0 %v7021
    %7079 = vmatpush1.bf16.msra.mxu0 %v7020
    %7080 = vmatprep.subr.bf16.mxu0 %v7025
    %7081 = vmatpush1.bf16.msra.mxu0 %v7024
    %7082 = vmatprep.subr.bf16.mxu0 %v7029
    %7083 = vmatpush1.bf16.msra.mxu0 %v7028
    %7084 = vmatprep.subr.bf16.mxu0 %v7033
    %7085 = vmatpush1.bf16.msra.mxu0 %v7032
    %7086 = vmatprep.subr.bf16.mxu0 %v7037
    %7087 = vmatpush1.bf16.msra.mxu0 %v7036
    %7088 = vmatprep.subr.bf16.mxu0 0
    %7089 = vmatpush1.bf16.msra.mxu0 0
    %7090 = vmatprep.subr.bf16.mxu0 0
    %7091 = vmatpush1.bf16.msra.mxu0 0
    %7092 = vmatprep.subr.bf16.mxu0 0
    %7093 = vmatpush1.bf16.msra.mxu0 0
    %7094 = vmatprep.subr.bf16.mxu0 0
    %7095 = vmatpush1.bf16.msra.mxu0 0
    %7096 = vmatprep.subr.bf16.mxu0 0
    %7097 = vmatpush1.bf16.msra.mxu0 0
    %7098 = vmatprep.subr.bf16.mxu0 0
    %7099 = vmatpush1.bf16.msra.mxu0 0
    %7100 = vmatprep.subr.bf16.mxu0 0
    %7101 = vmatpush1.bf16.msra.mxu0 0
    %7102 = vmatprep.subr.bf16.mxu0 0
    %7103 = vmatpush1.bf16.msra.mxu0 0
    %7104 = vmatprep.mubr.bf16.mxu0 0
    %7105 = vmatmul.mubr.bf16.gmra.mrb[0].mxu0 %v6910
    %v7106 = vpop.f32.mrb[0].mxu0
    %v7107 = vadd.f32 %v6855, %v7106
    %v7108 = vpop.f32.mrb[0].mxu0
    %v7109 = vadd.f32 %v6857, %v7108
    %v7110 = vpop.f32.mrb[0].mxu0
    %v7111 = vadd.f32 %v6859, %v7110
    %v7112 = vpop.f32.mrb[0].mxu0
    %v7113 = vadd.f32 %v6861, %v7112
    %7114 = vdwg.mxu0
    %7115 = vmatprep.subr.bf16.mxu0 %v7011
    %7116 = vmatpush1.bf16.msra.mxu0 %v7010
    %7117 = vmatprep.subr.bf16.mxu0 %v7015
    %7118 = vmatpush1.bf16.msra.mxu0 %v7014
    %7119 = vmatprep.subr.bf16.mxu0 %v7019
    %7120 = vmatpush1.bf16.msra.mxu0 %v7018
    %7121 = vmatprep.subr.bf16.mxu0 %v7023
    %7122 = vmatpush1.bf16.msra.mxu0 %v7022
    %7123 = vmatprep.subr.bf16.mxu0 %v7027
    %7124 = vmatpush1.bf16.msra.mxu0 %v7026
    %7125 = vmatprep.subr.bf16.mxu0 %v7031
    %7126 = vmatpush1.bf16.msra.mxu0 %v7030
    %7127 = vmatprep.subr.bf16.mxu0 %v7035
    %7128 = vmatpush1.bf16.msra.mxu0 %v7034
    %7129 = vmatprep.subr.bf16.mxu0 %v7039
    %7130 = vmatpush1.bf16.msra.mxu0 %v7038
    %7131 = vmatprep.subr.bf16.mxu0 0
    %7132 = vmatpush1.bf16.msra.mxu0 0
    %7133 = vmatprep.subr.bf16.mxu0 0
    %7134 = vmatpush1.bf16.msra.mxu0 0
    %7135 = vmatprep.subr.bf16.mxu0 0
    %7136 = vmatpush1.bf16.msra.mxu0 0
    %7137 = vmatprep.subr.bf16.mxu0 0
    %7138 = vmatpush1.bf16.msra.mxu0 0
    %7139 = vmatprep.subr.bf16.mxu0 0
    %7140 = vmatpush1.bf16.msra.mxu0 0
    %7141 = vmatprep.subr.bf16.mxu0 0
    %7142 = vmatpush1.bf16.msra.mxu0 0
    %7143 = vmatprep.subr.bf16.mxu0 0
    %7144 = vmatpush1.bf16.msra.mxu0 0
    %7145 = vmatprep.subr.bf16.mxu0 0
    %7146 = vmatpush1.bf16.msra.mxu0 0
    %7147 = vmatprep.mubr.bf16.mxu0 0
    %7148 = vmatmul.mubr.bf16.gmra.mrb[0].mxu0 %v6910
    %v7149 = vpop.f32.mrb[0].mxu0
    %v7150 = vadd.f32 %v6898, %v7149
    %v7151 = vpop.f32.mrb[0].mxu0
    %v7152 = vadd.f32 %v6900, %v7151
    %v7153 = vpop.f32.mrb[0].mxu0
    %v7154 = vadd.f32 %v6902, %v7153
    %v7155 = vpop.f32.mrb[0].mxu0
    %v7156 = vadd.f32 %v6904, %v7155
    %7157 = vdwg.mxu0
    %v7158 = vld [vmem:[%s3] sm:$0xf]
    %v7160 = vlaneseq
    %v7161 = vshrl.u32 %v7160, 7
    %v7162 = vsub.s32 0, %v7161
    %v7163 = vrot.slane %v7158, %v7162
    %v7164 = vlaneseq
    %v7165 = vshrl.u32 %v7164, 7
    %v7166 = vsub.s32 1, %v7165
    %v7167 = vrot.slane %v7158, %v7166
    %v7168 = vlaneseq
    %v7169 = vshrl.u32 %v7168, 7
    %v7170 = vsub.s32 2, %v7169
    %v7171 = vrot.slane %v7158, %v7170
    %v7172 = vlaneseq
    %v7173 = vshrl.u32 %v7172, 7
    %v7174 = vsub.s32 3, %v7173
    %v7175 = vrot.slane %v7158, %v7174
    %v7180 = vadd.f32 %v7107, %v7163
    %v7181 = vadd.f32 %v7109, %v7167
    %v7182 = vadd.f32 %v7150, %v7171
    %v7183 = vadd.f32 %v7152, %v7175
    %v7184 = vadd.f32 %v7111, %v7163
    %v7185 = vadd.f32 %v7113, %v7167
    %v7186 = vadd.f32 %v7154, %v7171
    %v7187 = vadd.f32 %v7156, %v7175
    %v7188 = vxor.u32 %v7180, 2147483648
    %v7189 = vxor.u32 %v7184, 2147483648
    %v7190 = vmul.f32 %v7188, 1.442695
    %v7191 = vpow.pop %v7190
    %v7192 = vmul.f32 %v7189, 1.442695
    %v7193 = vpow.pop %v7192
    %v7194 = vadd.f32 %v7191, 1.0
    %v7195 = vadd.f32 %v7193, 1.0
    %v7196 = vrcp.pop %v7194
    %v7197 = vmul.f32 1.0, %v7196
    %v7198 = vrcp.pop %v7195
    %v7199 = vmul.f32 1.0, %v7198
    %v7200 = vxor.u32 %v7181, 2147483648
    %v7201 = vxor.u32 %v7185, 2147483648
    %v7202 = vmul.f32 %v7200, 1.442695
    %v7203 = vpow.pop %v7202
    %v7204 = vmul.f32 %v7201, 1.442695
    %v7205 = vpow.pop %v7204
    %v7206 = vadd.f32 %v7203, 1.0
    %v7207 = vadd.f32 %v7205, 1.0
    %v7208 = vrcp.pop %v7206
    %v7209 = vmul.f32 1.0, %v7208
    %v7210 = vrcp.pop %v7207
    %v7211 = vmul.f32 1.0, %v7210
    %v7212 = vtanh.pop %v7182
    %v7213 = vtanh.pop %v7186
    %v7214 = vxor.u32 %v7183, 2147483648
    %v7215 = vxor.u32 %v7187, 2147483648
    %v7216 = vmul.f32 %v7214, 1.442695
    %v7217 = vpow.pop %v7216
    %v7218 = vmul.f32 %v7215, 1.442695
    %v7219 = vpow.pop %v7218
    %v7220 = vadd.f32 %v7217, 1.0
    %v7221 = vadd.f32 %v7219, 1.0
    %v7222 = vrcp.pop %v7220
    %v7223 = vmul.f32 1.0, %v7222
    %v7224 = vrcp.pop %v7221
    %v7225 = vmul.f32 1.0, %v7224
    %v7226 = vmul.f32 %v7209, %v6593
    %v7227 = vmul.f32 %v7211, %v6594
    %v7228 = vmul.f32 %v7197, %v7212
    %v7229 = vmul.f32 %v7199, %v7213
    %v7230 = vadd.f32 %v7226, %v7228
    %v7231 = vadd.f32 %v7227, %v7229
    %v7232 = vtanh.pop %v7230
    %v7233 = vtanh.pop %v7231
    %v7234 = vmul.f32 %v7223, %v7232
    %v7235 = vmul.f32 %v7225, %v7233
    %7236 = vst [vmem:[#allocation2] sm:$0xff] %v7234
    %7237 = vst [vmem:[#allocation2 + $0x8] sm:$0xff] %v7235
    %7238 = vst [vmem:[#allocation3] sm:$0xff] %v7230
    %7239 = vst [vmem:[#allocation3 + $0x8] sm:$0xff] %v7231
    %v7240 = vpack.c.bf16 %v7235, %v7234
    %v7241 = vld [vmem:[%s759] sm:$0xff]
    %v7242 = vld [vmem:[%s759 + $0x8] sm:$0xff]
    %v7243 = vld [vmem:[%s762] sm:$0xff]
    %v7244 = vld [vmem:[%s762 + $0x8] sm:$0xff]
    %v7245 = vld [vmem:[#allocation10] sm:$0xff]
    %v7246 = vld [vmem:[#allocation10 + $0x8] sm:$0xff]
    %v7247 = vld [vmem:[#allocation10 + $0x10] sm:$0xff]
    %v7248 = vld [vmem:[#allocation10 + $0x18] sm:$0xff]
    %v7249 = vld [vmem:[#allocation10 + $0x20] sm:$0xff]
    %v7250 = vld [vmem:[#allocation10 + $0x28] sm:$0xff]
    %v7251 = vld [vmem:[#allocation10 + $0x30] sm:$0xff]
    %v7252 = vld [vmem:[#allocation10 + $0x38] sm:$0xff]
    %v7253 = vld [vmem:[#allocation10 + $0x40] sm:$0xff]
    %v7254 = vld [vmem:[#allocation10 + $0x48] sm:$0xff]
    %v7255 = vld [vmem:[#allocation10 + $0x50] sm:$0xff]
    %v7256 = vld [vmem:[#allocation10 + $0x58] sm:$0xff]
    %v7257 = vld [vmem:[#allocation10 + $0x60] sm:$0xff]
    %v7258 = vld [vmem:[#allocation10 + $0x68] sm:$0xff]
    %v7259 = vld [vmem:[#allocation10 + $0x70] sm:$0xff]
    %v7260 = vld [vmem:[#allocation10 + $0x78] sm:$0xff]
    %v7261 = vld [vmem:[#allocation10 + $0x80] sm:$0xff]
    %v7262 = vld [vmem:[#allocation10 + $0x88] sm:$0xff]
    %v7263 = vld [vmem:[#allocation10 + $0x90] sm:$0xff]
    %v7264 = vld [vmem:[#allocation10 + $0x98] sm:$0xff]
    %v7265 = vld [vmem:[#allocation10 + $0xa0] sm:$0xff]
    %v7266 = vld [vmem:[#allocation10 + $0xa8] sm:$0xff]
    %v7267 = vld [vmem:[#allocation10 + $0xb0] sm:$0xff]
    %v7268 = vld [vmem:[#allocation10 + $0xb8] sm:$0xff]
    %v7269 = vld [vmem:[#allocation10 + $0xc0] sm:$0xff]
    %v7270 = vld [vmem:[#allocation10 + $0xc8] sm:$0xff]
    %v7271 = vld [vmem:[#allocation10 + $0xd0] sm:$0xff]
    %v7272 = vld [vmem:[#allocation10 + $0xd8] sm:$0xff]
    %v7273 = vld [vmem:[#allocation10 + $0xe0] sm:$0xff]
    %v7274 = vld [vmem:[#allocation10 + $0xe8] sm:$0xff]
    %v7275 = vld [vmem:[#allocation10 + $0xf0] sm:$0xff]
    %v7276 = vld [vmem:[#allocation10 + $0xf8] sm:$0xff]
    %v7277 = vpack.c.bf16 %v7242, %v7241
    %v7278 = vld [vmem:[#allocation12] sm:$0xff]
    %v7279 = vld [vmem:[#allocation12 + $0x8] sm:$0xff]
    %v7280 = vld [vmem:[#allocation12 + $0x10] sm:$0xff]
    %v7281 = vld [vmem:[#allocation12 + $0x18] sm:$0xff]
    %v7282 = vld [vmem:[#allocation12 + $0x20] sm:$0xff]
    %v7283 = vld [vmem:[#allocation12 + $0x28] sm:$0xff]
    %v7284 = vld [vmem:[#allocation12 + $0x30] sm:$0xff]
    %v7285 = vld [vmem:[#allocation12 + $0x38] sm:$0xff]
    %v7286 = vld [vmem:[#allocation12 + $0x40] sm:$0xff]
    %v7287 = vld [vmem:[#allocation12 + $0x48] sm:$0xff]
    %v7288 = vld [vmem:[#allocation12 + $0x50] sm:$0xff]
    %v7289 = vld [vmem:[#allocation12 + $0x58] sm:$0xff]
    %v7290 = vld [vmem:[#allocation12 + $0x60] sm:$0xff]
    %v7291 = vld [vmem:[#allocation12 + $0x68] sm:$0xff]
    %v7292 = vld [vmem:[#allocation12 + $0x70] sm:$0xff]
    %v7293 = vld [vmem:[#allocation12 + $0x78] sm:$0xff]
    %v7294 = vld [vmem:[#allocation12 + $0x80] sm:$0xff]
    %v7295 = vld [vmem:[#allocation12 + $0x88] sm:$0xff]
    %v7296 = vld [vmem:[#allocation12 + $0x90] sm:$0xff]
    %v7297 = vld [vmem:[#allocation12 + $0x98] sm:$0xff]
    %v7298 = vld [vmem:[#allocation12 + $0xa0] sm:$0xff]
    %v7299 = vld [vmem:[#allocation12 + $0xa8] sm:$0xff]
    %v7300 = vld [vmem:[#allocation12 + $0xb0] sm:$0xff]
    %v7301 = vld [vmem:[#allocation12 + $0xb8] sm:$0xff]
    %v7302 = vld [vmem:[#allocation12 + $0xc0] sm:$0xff]
    %v7303 = vld [vmem:[#allocation12 + $0xc8] sm:$0xff]
    %v7304 = vld [vmem:[#allocation12 + $0xd0] sm:$0xff]
    %v7305 = vld [vmem:[#allocation12 + $0xd8] sm:$0xff]
    %v7306 = vld [vmem:[#allocation12 + $0xe0] sm:$0xff]
    %v7307 = vld [vmem:[#allocation12 + $0xe8] sm:$0xff]
    %v7308 = vld [vmem:[#allocation12 + $0xf0] sm:$0xff]
    %v7309 = vld [vmem:[#allocation12 + $0xf8] sm:$0xff]
    %v7342 = vunpack.c.l.b16 %v7278
    %v7343 = vunpack.c.h.b16 %v7278
    %v7344 = vunpack.c.l.b16 %v7279
    %v7345 = vunpack.c.h.b16 %v7279
    %v7346 = vunpack.c.l.b16 %v7280
    %v7347 = vunpack.c.h.b16 %v7280
    %v7348 = vunpack.c.l.b16 %v7281
    %v7349 = vunpack.c.h.b16 %v7281
    %v7350 = vunpack.c.l.b16 %v7282
    %v7351 = vunpack.c.h.b16 %v7282
    %v7352 = vunpack.c.l.b16 %v7283
    %v7353 = vunpack.c.h.b16 %v7283
    %v7354 = vunpack.c.l.b16 %v7284
    %v7355 = vunpack.c.h.b16 %v7284
    %v7356 = vunpack.c.l.b16 %v7285
    %v7357 = vunpack.c.h.b16 %v7285
    %v7358 = vunpack.c.l.b16 %v7286
    %v7359 = vunpack.c.h.b16 %v7286
    %v7360 = vunpack.c.l.b16 %v7287
    %v7361 = vunpack.c.h.b16 %v7287
    %v7362 = vunpack.c.l.b16 %v7288
    %v7363 = vunpack.c.h.b16 %v7288
    %v7364 = vunpack.c.l.b16 %v7289
    %v7365 = vunpack.c.h.b16 %v7289
    %v7366 = vunpack.c.l.b16 %v7290
    %v7367 = vunpack.c.h.b16 %v7290
    %v7368 = vunpack.c.l.b16 %v7291
    %v7369 = vunpack.c.h.b16 %v7291
    %v7370 = vunpack.c.l.b16 %v7292
    %v7371 = vunpack.c.h.b16 %v7292
    %v7372 = vunpack.c.l.b16 %v7293
    %v7373 = vunpack.c.h.b16 %v7293
    %v7374 = vunpack.c.l.b16 %v7294
    %v7375 = vunpack.c.h.b16 %v7294
    %v7376 = vunpack.c.l.b16 %v7295
    %v7377 = vunpack.c.h.b16 %v7295
    %v7378 = vunpack.c.l.b16 %v7296
    %v7379 = vunpack.c.h.b16 %v7296
    %v7380 = vunpack.c.l.b16 %v7297
    %v7381 = vunpack.c.h.b16 %v7297
    %v7382 = vunpack.c.l.b16 %v7298
    %v7383 = vunpack.c.h.b16 %v7298
    %v7384 = vunpack.c.l.b16 %v7299
    %v7385 = vunpack.c.h.b16 %v7299
    %v7386 = vunpack.c.l.b16 %v7300
    %v7387 = vunpack.c.h.b16 %v7300
    %v7388 = vunpack.c.l.b16 %v7301
    %v7389 = vunpack.c.h.b16 %v7301
    %v7390 = vunpack.c.l.b16 %v7302
    %v7391 = vunpack.c.h.b16 %v7302
    %v7392 = vunpack.c.l.b16 %v7303
    %v7393 = vunpack.c.h.b16 %v7303
    %v7394 = vunpack.c.l.b16 %v7304
    %v7395 = vunpack.c.h.b16 %v7304
    %v7396 = vunpack.c.l.b16 %v7305
    %v7397 = vunpack.c.h.b16 %v7305
    %v7398 = vunpack.c.l.b16 %v7306
    %v7399 = vunpack.c.h.b16 %v7306
    %v7400 = vunpack.c.l.b16 %v7307
    %v7401 = vunpack.c.h.b16 %v7307
    %v7402 = vunpack.c.l.b16 %v7308
    %v7403 = vunpack.c.h.b16 %v7308
    %v7404 = vunpack.c.l.b16 %v7309
    %v7405 = vunpack.c.h.b16 %v7309
    %v7406 = vpack.c.b16 %v7346, %v7342
    %v7407 = vpack.c.b16 %v7347, %v7343
    %v7408 = vpack.c.b16 %v7348, %v7344
    %v7409 = vpack.c.b16 %v7349, %v7345
    %v7410 = vpack.c.b16 %v7354, %v7350
    %v7411 = vpack.c.b16 %v7355, %v7351
    %v7412 = vpack.c.b16 %v7356, %v7352
    %v7413 = vpack.c.b16 %v7357, %v7353
    %v7414 = vpack.c.b16 %v7362, %v7358
    %v7415 = vpack.c.b16 %v7363, %v7359
    %v7416 = vpack.c.b16 %v7364, %v7360
    %v7417 = vpack.c.b16 %v7365, %v7361
    %v7418 = vpack.c.b16 %v7370, %v7366
    %v7419 = vpack.c.b16 %v7371, %v7367
    %v7420 = vpack.c.b16 %v7372, %v7368
    %v7421 = vpack.c.b16 %v7373, %v7369
    %v7422 = vpack.c.b16 %v7378, %v7374
    %v7423 = vpack.c.b16 %v7379, %v7375
    %v7424 = vpack.c.b16 %v7380, %v7376
    %v7425 = vpack.c.b16 %v7381, %v7377
    %v7426 = vpack.c.b16 %v7386, %v7382
    %v7427 = vpack.c.b16 %v7387, %v7383
    %v7428 = vpack.c.b16 %v7388, %v7384
    %v7429 = vpack.c.b16 %v7389, %v7385
    %v7430 = vpack.c.b16 %v7394, %v7390
    %v7431 = vpack.c.b16 %v7395, %v7391
    %v7432 = vpack.c.b16 %v7396, %v7392
    %v7433 = vpack.c.b16 %v7397, %v7393
    %v7434 = vpack.c.b16 %v7402, %v7398
    %v7435 = vpack.c.b16 %v7403, %v7399
    %v7436 = vpack.c.b16 %v7404, %v7400
    %v7437 = vpack.c.b16 %v7405, %v7401
    %7470 = vmatprep.subr.bf16.mxu0 %v7407
    %7471 = vmatpush1.bf16.msra.mxu0 %v7406
    %7472 = vmatprep.subr.bf16.mxu0 %v7411
    %7473 = vmatpush1.bf16.msra.mxu0 %v7410
    %7474 = vmatprep.subr.bf16.mxu0 %v7415
    %7475 = vmatpush1.bf16.msra.mxu0 %v7414
    %7476 = vmatprep.subr.bf16.mxu0 %v7419
    %7477 = vmatpush1.bf16.msra.mxu0 %v7418
    %7478 = vmatprep.subr.bf16.mxu0 %v7423
    %7479 = vmatpush1.bf16.msra.mxu0 %v7422
    %7480 = vmatprep.subr.bf16.mxu0 %v7427
    %7481 = vmatpush1.bf16.msra.mxu0 %v7426
    %7482 = vmatprep.subr.bf16.mxu0 %v7431
    %7483 = vmatpush1.bf16.msra.mxu0 %v7430
    %7484 = vmatprep.subr.bf16.mxu0 %v7435
    %7485 = vmatpush1.bf16.msra.mxu0 %v7434
    %7486 = vmatprep.subr.bf16.mxu0 0
    %7487 = vmatpush1.bf16.msra.mxu0 0
    %7488 = vmatprep.subr.bf16.mxu0 0
    %7489 = vmatpush1.bf16.msra.mxu0 0
    %7490 = vmatprep.subr.bf16.mxu0 0
    %7491 = vmatpush1.bf16.msra.mxu0 0
    %7492 = vmatprep.subr.bf16.mxu0 0
    %7493 = vmatpush1.bf16.msra.mxu0 0
    %7494 = vmatprep.subr.bf16.mxu0 0
    %7495 = vmatpush1.bf16.msra.mxu0 0
    %7496 = vmatprep.subr.bf16.mxu0 0
    %7497 = vmatpush1.bf16.msra.mxu0 0
    %7498 = vmatprep.subr.bf16.mxu0 0
    %7499 = vmatpush1.bf16.msra.mxu0 0
    %7500 = vmatprep.subr.bf16.mxu0 0
    %7501 = vmatpush1.bf16.msra.mxu0 0
    %7502 = vmatprep.mubr.bf16.mxu0 0
    %7503 = vmatmul.mubr.bf16.gmra.mrb[0].mxu0 %v7277
    %v7504 = vpop.f32.mrb[0].mxu0
    %v7505 = vadd.f32 0.0, %v7504
    %v7506 = vpop.f32.mrb[0].mxu0
    %v7507 = vadd.f32 0.0, %v7506
    %v7508 = vpop.f32.mrb[0].mxu0
    %v7509 = vadd.f32 0.0, %v7508
    %v7510 = vpop.f32.mrb[0].mxu0
    %v7511 = vadd.f32 0.0, %v7510
    %7512 = vdwg.mxu0
    %7513 = vmatprep.subr.bf16.mxu0 %v7409
    %7514 = vmatpush1.bf16.msra.mxu0 %v7408
    %7515 = vmatprep.subr.bf16.mxu0 %v7413
    %7516 = vmatpush1.bf16.msra.mxu0 %v7412
    %7517 = vmatprep.subr.bf16.mxu0 %v7417
    %7518 = vmatpush1.bf16.msra.mxu0 %v7416
    %7519 = vmatprep.subr.bf16.mxu0 %v7421
    %7520 = vmatpush1.bf16.msra.mxu0 %v7420
    %7521 = vmatprep.subr.bf16.mxu0 %v7425
    %7522 = vmatpush1.bf16.msra.mxu0 %v7424
    %7523 = vmatprep.subr.bf16.mxu0 %v7429
    %7524 = vmatpush1.bf16.msra.mxu0 %v7428
    %7525 = vmatprep.subr.bf16.mxu0 %v7433
    %7526 = vmatpush1.bf16.msra.mxu0 %v7432
    %7527 = vmatprep.subr.bf16.mxu0 %v7437
    %7528 = vmatpush1.bf16.msra.mxu0 %v7436
    %7529 = vmatprep.subr.bf16.mxu0 0
    %7530 = vmatpush1.bf16.msra.mxu0 0
    %7531 = vmatprep.subr.bf16.mxu0 0
    %7532 = vmatpush1.bf16.msra.mxu0 0
    %7533 = vmatprep.subr.bf16.mxu0 0
    %7534 = vmatpush1.bf16.msra.mxu0 0
    %7535 = vmatprep.subr.bf16.mxu0 0
    %7536 = vmatpush1.bf16.msra.mxu0 0
    %7537 = vmatprep.subr.bf16.mxu0 0
    %7538 = vmatpush1.bf16.msra.mxu0 0
    %7539 = vmatprep.subr.bf16.mxu0 0
    %7540 = vmatpush1.bf16.msra.mxu0 0
    %7541 = vmatprep.subr.bf16.mxu0 0
    %7542 = vmatpush1.bf16.msra.mxu0 0
    %7543 = vmatprep.subr.bf16.mxu0 0
    %7544 = vmatpush1.bf16.msra.mxu0 0
    %7545 = vmatprep.mubr.bf16.mxu0 0
    %7546 = vmatmul.mubr.bf16.gmra.mrb[0].mxu0 %v7277
    %v7547 = vpop.f32.mrb[0].mxu0
    %v7548 = vadd.f32 0.0, %v7547
    %v7549 = vpop.f32.mrb[0].mxu0
    %v7550 = vadd.f32 0.0, %v7549
    %v7551 = vpop.f32.mrb[0].mxu0
    %v7552 = vadd.f32 0.0, %v7551
    %v7553 = vpop.f32.mrb[0].mxu0
    %v7554 = vadd.f32 0.0, %v7553
    %7555 = vdwg.mxu0
    %v7588 = vunpack.c.l.b16 %v7245
    %v7589 = vunpack.c.h.b16 %v7245
    %v7590 = vunpack.c.l.b16 %v7246
    %v7591 = vunpack.c.h.b16 %v7246
    %v7592 = vunpack.c.l.b16 %v7247
    %v7593 = vunpack.c.h.b16 %v7247
    %v7594 = vunpack.c.l.b16 %v7248
    %v7595 = vunpack.c.h.b16 %v7248
    %v7596 = vunpack.c.l.b16 %v7249
    %v7597 = vunpack.c.h.b16 %v7249
    %v7598 = vunpack.c.l.b16 %v7250
    %v7599 = vunpack.c.h.b16 %v7250
    %v7600 = vunpack.c.l.b16 %v7251
    %v7601 = vunpack.c.h.b16 %v7251
    %v7602 = vunpack.c.l.b16 %v7252
    %v7603 = vunpack.c.h.b16 %v7252
    %v7604 = vunpack.c.l.b16 %v7253
    %v7605 = vunpack.c.h.b16 %v7253
    %v7606 = vunpack.c.l.b16 %v7254
    %v7607 = vunpack.c.h.b16 %v7254
    %v7608 = vunpack.c.l.b16 %v7255
    %v7609 = vunpack.c.h.b16 %v7255
    %v7610 = vunpack.c.l.b16 %v7256
    %v7611 = vunpack.c.h.b16 %v7256
    %v7612 = vunpack.c.l.b16 %v7257
    %v7613 = vunpack.c.h.b16 %v7257
    %v7614 = vunpack.c.l.b16 %v7258
    %v7615 = vunpack.c.h.b16 %v7258
    %v7616 = vunpack.c.l.b16 %v7259
    %v7617 = vunpack.c.h.b16 %v7259
    %v7618 = vunpack.c.l.b16 %v7260
    %v7619 = vunpack.c.h.b16 %v7260
    %v7620 = vunpack.c.l.b16 %v7261
    %v7621 = vunpack.c.h.b16 %v7261
    %v7622 = vunpack.c.l.b16 %v7262
    %v7623 = vunpack.c.h.b16 %v7262
    %v7624 = vunpack.c.l.b16 %v7263
    %v7625 = vunpack.c.h.b16 %v7263
    %v7626 = vunpack.c.l.b16 %v7264
    %v7627 = vunpack.c.h.b16 %v7264
    %v7628 = vunpack.c.l.b16 %v7265
    %v7629 = vunpack.c.h.b16 %v7265
    %v7630 = vunpack.c.l.b16 %v7266
    %v7631 = vunpack.c.h.b16 %v7266
    %v7632 = vunpack.c.l.b16 %v7267
    %v7633 = vunpack.c.h.b16 %v7267
    %v7634 = vunpack.c.l.b16 %v7268
    %v7635 = vunpack.c.h.b16 %v7268
    %v7636 = vunpack.c.l.b16 %v7269
    %v7637 = vunpack.c.h.b16 %v7269
    %v7638 = vunpack.c.l.b16 %v7270
    %v7639 = vunpack.c.h.b16 %v7270
    %v7640 = vunpack.c.l.b16 %v7271
    %v7641 = vunpack.c.h.b16 %v7271
    %v7642 = vunpack.c.l.b16 %v7272
    %v7643 = vunpack.c.h.b16 %v7272
    %v7644 = vunpack.c.l.b16 %v7273
    %v7645 = vunpack.c.h.b16 %v7273
    %v7646 = vunpack.c.l.b16 %v7274
    %v7647 = vunpack.c.h.b16 %v7274
    %v7648 = vunpack.c.l.b16 %v7275
    %v7649 = vunpack.c.h.b16 %v7275
    %v7650 = vunpack.c.l.b16 %v7276
    %v7651 = vunpack.c.h.b16 %v7276
    %v7652 = vpack.c.b16 %v7592, %v7588
    %v7653 = vpack.c.b16 %v7593, %v7589
    %v7654 = vpack.c.b16 %v7594, %v7590
    %v7655 = vpack.c.b16 %v7595, %v7591
    %v7656 = vpack.c.b16 %v7600, %v7596
    %v7657 = vpack.c.b16 %v7601, %v7597
    %v7658 = vpack.c.b16 %v7602, %v7598
    %v7659 = vpack.c.b16 %v7603, %v7599
    %v7660 = vpack.c.b16 %v7608, %v7604
    %v7661 = vpack.c.b16 %v7609, %v7605
    %v7662 = vpack.c.b16 %v7610, %v7606
    %v7663 = vpack.c.b16 %v7611, %v7607
    %v7664 = vpack.c.b16 %v7616, %v7612
    %v7665 = vpack.c.b16 %v7617, %v7613
    %v7666 = vpack.c.b16 %v7618, %v7614
    %v7667 = vpack.c.b16 %v7619, %v7615
    %v7668 = vpack.c.b16 %v7624, %v7620
    %v7669 = vpack.c.b16 %v7625, %v7621
    %v7670 = vpack.c.b16 %v7626, %v7622
    %v7671 = vpack.c.b16 %v7627, %v7623
    %v7672 = vpack.c.b16 %v7632, %v7628
    %v7673 = vpack.c.b16 %v7633, %v7629
    %v7674 = vpack.c.b16 %v7634, %v7630
    %v7675 = vpack.c.b16 %v7635, %v7631
    %v7676 = vpack.c.b16 %v7640, %v7636
    %v7677 = vpack.c.b16 %v7641, %v7637
    %v7678 = vpack.c.b16 %v7642, %v7638
    %v7679 = vpack.c.b16 %v7643, %v7639
    %v7680 = vpack.c.b16 %v7648, %v7644
    %v7681 = vpack.c.b16 %v7649, %v7645
    %v7682 = vpack.c.b16 %v7650, %v7646
    %v7683 = vpack.c.b16 %v7651, %v7647
    %7716 = vmatprep.subr.bf16.mxu0 %v7653
    %7717 = vmatpush1.bf16.msra.mxu0 %v7652
    %7718 = vmatprep.subr.bf16.mxu0 %v7657
    %7719 = vmatpush1.bf16.msra.mxu0 %v7656
    %7720 = vmatprep.subr.bf16.mxu0 %v7661
    %7721 = vmatpush1.bf16.msra.mxu0 %v7660
    %7722 = vmatprep.subr.bf16.mxu0 %v7665
    %7723 = vmatpush1.bf16.msra.mxu0 %v7664
    %7724 = vmatprep.subr.bf16.mxu0 %v7669
    %7725 = vmatpush1.bf16.msra.mxu0 %v7668
    %7726 = vmatprep.subr.bf16.mxu0 %v7673
    %7727 = vmatpush1.bf16.msra.mxu0 %v7672
    %7728 = vmatprep.subr.bf16.mxu0 %v7677
    %7729 = vmatpush1.bf16.msra.mxu0 %v7676
    %7730 = vmatprep.subr.bf16.mxu0 %v7681
    %7731 = vmatpush1.bf16.msra.mxu0 %v7680
    %7732 = vmatprep.subr.bf16.mxu0 0
    %7733 = vmatpush1.bf16.msra.mxu0 0
    %7734 = vmatprep.subr.bf16.mxu0 0
    %7735 = vmatpush1.bf16.msra.mxu0 0
    %7736 = vmatprep.subr.bf16.mxu0 0
    %7737 = vmatpush1.bf16.msra.mxu0 0
    %7738 = vmatprep.subr.bf16.mxu0 0
    %7739 = vmatpush1.bf16.msra.mxu0 0
    %7740 = vmatprep.subr.bf16.mxu0 0
    %7741 = vmatpush1.bf16.msra.mxu0 0
    %7742 = vmatprep.subr.bf16.mxu0 0
    %7743 = vmatpush1.bf16.msra.mxu0 0
    %7744 = vmatprep.subr.bf16.mxu0 0
    %7745 = vmatpush1.bf16.msra.mxu0 0
    %7746 = vmatprep.subr.bf16.mxu0 0
    %7747 = vmatpush1.bf16.msra.mxu0 0
    %7748 = vmatprep.mubr.bf16.mxu0 0
    %7749 = vmatmul.mubr.bf16.gmra.mrb[0].mxu0 %v7240
    %v7750 = vpop.f32.mrb[0].mxu0
    %v7751 = vadd.f32 %v7505, %v7750
    %v7752 = vpop.f32.mrb[0].mxu0
    %v7753 = vadd.f32 %v7507, %v7752
    %v7754 = vpop.f32.mrb[0].mxu0
    %v7755 = vadd.f32 %v7509, %v7754
    %v7756 = vpop.f32.mrb[0].mxu0
    %v7757 = vadd.f32 %v7511, %v7756
    %7758 = vdwg.mxu0
    %7759 = vmatprep.subr.bf16.mxu0 %v7655
    %7760 = vmatpush1.bf16.msra.mxu0 %v7654
    %7761 = vmatprep.subr.bf16.mxu0 %v7659
    %7762 = vmatpush1.bf16.msra.mxu0 %v7658
    %7763 = vmatprep.subr.bf16.mxu0 %v7663
    %7764 = vmatpush1.bf16.msra.mxu0 %v7662
    %7765 = vmatprep.subr.bf16.mxu0 %v7667
    %7766 = vmatpush1.bf16.msra.mxu0 %v7666
    %7767 = vmatprep.subr.bf16.mxu0 %v7671
    %7768 = vmatpush1.bf16.msra.mxu0 %v7670
    %7769 = vmatprep.subr.bf16.mxu0 %v7675
    %7770 = vmatpush1.bf16.msra.mxu0 %v7674
    %7771 = vmatprep.subr.bf16.mxu0 %v7679
    %7772 = vmatpush1.bf16.msra.mxu0 %v7678
    %7773 = vmatprep.subr.bf16.mxu0 %v7683
    %7774 = vmatpush1.bf16.msra.mxu0 %v7682
    %7775 = vmatprep.subr.bf16.mxu0 0
    %7776 = vmatpush1.bf16.msra.mxu0 0
    %7777 = vmatprep.subr.bf16.mxu0 0
    %7778 = vmatpush1.bf16.msra.mxu0 0
    %7779 = vmatprep.subr.bf16.mxu0 0
    %7780 = vmatpush1.bf16.msra.mxu0 0
    %7781 = vmatprep.subr.bf16.mxu0 0
    %7782 = vmatpush1.bf16.msra.mxu0 0
    %7783 = vmatprep.subr.bf16.mxu0 0
    %7784 = vmatpush1.bf16.msra.mxu0 0
    %7785 = vmatprep.subr.bf16.mxu0 0
    %7786 = vmatpush1.bf16.msra.mxu0 0
    %7787 = vmatprep.subr.bf16.mxu0 0
    %7788 = vmatpush1.bf16.msra.mxu0 0
    %7789 = vmatprep.subr.bf16.mxu0 0
    %7790 = vmatpush1.bf16.msra.mxu0 0
    %7791 = vmatprep.mubr.bf16.mxu0 0
    %7792 = vmatmul.mubr.bf16.gmra.mrb[0].mxu0 %v7240
    %v7793 = vpop.f32.mrb[0].mxu0
    %v7794 = vadd.f32 %v7548, %v7793
    %v7795 = vpop.f32.mrb[0].mxu0
    %v7796 = vadd.f32 %v7550, %v7795
    %v7797 = vpop.f32.mrb[0].mxu0
    %v7798 = vadd.f32 %v7552, %v7797
    %v7799 = vpop.f32.mrb[0].mxu0
    %v7800 = vadd.f32 %v7554, %v7799
    %7801 = vdwg.mxu0
    %v7802 = vld [vmem:[%s6] sm:$0xf]
    %v7804 = vlaneseq
    %v7805 = vshrl.u32 %v7804, 7
    %v7806 = vsub.s32 0, %v7805
    %v7807 = vrot.slane %v7802, %v7806
    %v7808 = vlaneseq
    %v7809 = vshrl.u32 %v7808, 7
    %v7810 = vsub.s32 1, %v7809
    %v7811 = vrot.slane %v7802, %v7810
    %v7812 = vlaneseq
    %v7813 = vshrl.u32 %v7812, 7
    %v7814 = vsub.s32 2, %v7813
    %v7815 = vrot.slane %v7802, %v7814
    %v7816 = vlaneseq
    %v7817 = vshrl.u32 %v7816, 7
    %v7818 = vsub.s32 3, %v7817
    %v7819 = vrot.slane %v7802, %v7818
    %v7824 = vadd.f32 %v7751, %v7807
    %v7825 = vadd.f32 %v7753, %v7811
    %v7826 = vadd.f32 %v7794, %v7815
    %v7827 = vadd.f32 %v7796, %v7819
    %v7828 = vadd.f32 %v7755, %v7807
    %v7829 = vadd.f32 %v7757, %v7811
    %v7830 = vadd.f32 %v7798, %v7815
    %v7831 = vadd.f32 %v7800, %v7819
    %v7832 = vxor.u32 %v7824, 2147483648
    %v7833 = vxor.u32 %v7828, 2147483648
    %v7834 = vmul.f32 %v7832, 1.442695
    %v7835 = vpow.pop %v7834
    %v7836 = vmul.f32 %v7833, 1.442695
    %v7837 = vpow.pop %v7836
    %v7838 = vadd.f32 %v7835, 1.0
    %v7839 = vadd.f32 %v7837, 1.0
    %v7840 = vrcp.pop %v7838
    %v7841 = vmul.f32 1.0, %v7840
    %v7842 = vrcp.pop %v7839
    %v7843 = vmul.f32 1.0, %v7842
    %v7844 = vxor.u32 %v7825, 2147483648
    %v7845 = vxor.u32 %v7829, 2147483648
    %v7846 = vmul.f32 %v7844, 1.442695
    %v7847 = vpow.pop %v7846
    %v7848 = vmul.f32 %v7845, 1.442695
    %v7849 = vpow.pop %v7848
    %v7850 = vadd.f32 %v7847, 1.0
    %v7851 = vadd.f32 %v7849, 1.0
    %v7852 = vrcp.pop %v7850
    %v7853 = vmul.f32 1.0, %v7852
    %v7854 = vrcp.pop %v7851
    %v7855 = vmul.f32 1.0, %v7854
    %v7856 = vtanh.pop %v7826
    %v7857 = vtanh.pop %v7830
    %v7858 = vxor.u32 %v7827, 2147483648
    %v7859 = vxor.u32 %v7831, 2147483648
    %v7860 = vmul.f32 %v7858, 1.442695
    %v7861 = vpow.pop %v7860
    %v7862 = vmul.f32 %v7859, 1.442695
    %v7863 = vpow.pop %v7862
    %v7864 = vadd.f32 %v7861, 1.0
    %v7865 = vadd.f32 %v7863, 1.0
    %v7866 = vrcp.pop %v7864
    %v7867 = vmul.f32 1.0, %v7866
    %v7868 = vrcp.pop %v7865
    %v7869 = vmul.f32 1.0, %v7868
    %v7870 = vmul.f32 %v7853, %v7243
    %v7871 = vmul.f32 %v7855, %v7244
    %v7872 = vmul.f32 %v7841, %v7856
    %v7873 = vmul.f32 %v7843, %v7857
    %v7874 = vadd.f32 %v7870, %v7872
    %v7875 = vadd.f32 %v7871, %v7873
    %v7876 = vtanh.pop %v7874
    %v7877 = vtanh.pop %v7875
    %v7878 = vmul.f32 %v7867, %v7876
    %v7879 = vmul.f32 %v7869, %v7877
    %7880 = vst [vmem:[%s759] sm:$0xff] %v7878
    %7881 = vst [vmem:[%s759 + $0x8] sm:$0xff] %v7879
    %7882 = vst [vmem:[%s762] sm:$0xff] %v7874
    %7883 = vst [vmem:[%s762 + $0x8] sm:$0xff] %v7875
    %s7884 = scalar_lea.vmem [#allocation4], 48
    %v7885 = vld [vmem:[%s7884] sm:$0xf]
    %v7886 = vld [vmem:[%s7884 + $0x4] sm:$0xf]
    %v7887 = vld [vmem:[#allocation2] sm:$0xff]
    %v7888 = vld [vmem:[#allocation2 + $0x8] sm:$0xff]
    %v7889 = vld [vmem:[#allocation3] sm:$0xff]
    %v7890 = vld [vmem:[#allocation3 + $0x8] sm:$0xff]
    %v7891 = vld [vmem:[#allocation7] sm:$0xff]
    %v7892 = vld [vmem:[#allocation7 + $0x8] sm:$0xff]
    %v7893 = vld [vmem:[#allocation7 + $0x10] sm:$0xff]
    %v7894 = vld [vmem:[#allocation7 + $0x18] sm:$0xff]
    %v7895 = vld [vmem:[#allocation7 + $0x20] sm:$0xff]
    %v7896 = vld [vmem:[#allocation7 + $0x28] sm:$0xff]
    %v7897 = vld [vmem:[#allocation7 + $0x30] sm:$0xff]
    %v7898 = vld [vmem:[#allocation7 + $0x38] sm:$0xff]
    %v7899 = vld [vmem:[#allocation7 + $0x40] sm:$0xff]
    %v7900 = vld [vmem:[#allocation7 + $0x48] sm:$0xff]
    %v7901 = vld [vmem:[#allocation7 + $0x50] sm:$0xff]
    %v7902 = vld [vmem:[#allocation7 + $0x58] sm:$0xff]
    %v7903 = vld [vmem:[#allocation7 + $0x60] sm:$0xff]
    %v7904 = vld [vmem:[#allocation7 + $0x68] sm:$0xff]
    %v7905 = vld [vmem:[#allocation7 + $0x70] sm:$0xff]
    %v7906 = vld [vmem:[#allocation7 + $0x78] sm:$0xff]
    %v7907 = vld [vmem:[#allocation7 + $0x80] sm:$0xff]
    %v7908 = vld [vmem:[#allocation7 + $0x88] sm:$0xff]
    %v7909 = vld [vmem:[#allocation7 + $0x90] sm:$0xff]
    %v7910 = vld [vmem:[#allocation7 + $0x98] sm:$0xff]
    %v7911 = vld [vmem:[#allocation7 + $0xa0] sm:$0xff]
    %v7912 = vld [vmem:[#allocation7 + $0xa8] sm:$0xff]
    %v7913 = vld [vmem:[#allocation7 + $0xb0] sm:$0xff]
    %v7914 = vld [vmem:[#allocation7 + $0xb8] sm:$0xff]
    %v7915 = vld [vmem:[#allocation7 + $0xc0] sm:$0xff]
    %v7916 = vld [vmem:[#allocation7 + $0xc8] sm:$0xff]
    %v7917 = vld [vmem:[#allocation7 + $0xd0] sm:$0xff]
    %v7918 = vld [vmem:[#allocation7 + $0xd8] sm:$0xff]
    %v7919 = vld [vmem:[#allocation7 + $0xe0] sm:$0xff]
    %v7920 = vld [vmem:[#allocation7 + $0xe8] sm:$0xff]
    %v7921 = vld [vmem:[#allocation7 + $0xf0] sm:$0xff]
    %v7922 = vld [vmem:[#allocation7 + $0xf8] sm:$0xff]
    %v7923 = vpack.c.bf16 %v7888, %v7887
    %v7924 = vld [vmem:[#allocation9] sm:$0xff]
    %v7925 = vld [vmem:[#allocation9 + $0x8] sm:$0xff]
    %v7926 = vld [vmem:[#allocation9 + $0x10] sm:$0xff]
    %v7927 = vld [vmem:[#allocation9 + $0x18] sm:$0xff]
    %v7928 = vld [vmem:[#allocation9 + $0x20] sm:$0xff]
    %v7929 = vld [vmem:[#allocation9 + $0x28] sm:$0xff]
    %v7930 = vld [vmem:[#allocation9 + $0x30] sm:$0xff]
    %v7931 = vld [vmem:[#allocation9 + $0x38] sm:$0xff]
    %v7932 = vld [vmem:[#allocation9 + $0x40] sm:$0xff]
    %v7933 = vld [vmem:[#allocation9 + $0x48] sm:$0xff]
    %v7934 = vld [vmem:[#allocation9 + $0x50] sm:$0xff]
    %v7935 = vld [vmem:[#allocation9 + $0x58] sm:$0xff]
    %v7936 = vld [vmem:[#allocation9 + $0x60] sm:$0xff]
    %v7937 = vld [vmem:[#allocation9 + $0x68] sm:$0xff]
    %v7938 = vld [vmem:[#allocation9 + $0x70] sm:$0xff]
    %v7939 = vld [vmem:[#allocation9 + $0x78] sm:$0xff]
    %v7940 = vld [vmem:[#allocation9 + $0x80] sm:$0xff]
    %v7941 = vld [vmem:[#allocation9 + $0x88] sm:$0xff]
    %v7942 = vld [vmem:[#allocation9 + $0x90] sm:$0xff]
    %v7943 = vld [vmem:[#allocation9 + $0x98] sm:$0xff]
    %v7944 = vld [vmem:[#allocation9 + $0xa0] sm:$0xff]
    %v7945 = vld [vmem:[#allocation9 + $0xa8] sm:$0xff]
    %v7946 = vld [vmem:[#allocation9 + $0xb0] sm:$0xff]
    %v7947 = vld [vmem:[#allocation9 + $0xb8] sm:$0xff]
    %v7948 = vld [vmem:[#allocation9 + $0xc0] sm:$0xff]
    %v7949 = vld [vmem:[#allocation9 + $0xc8] sm:$0xff]
    %v7950 = vld [vmem:[#allocation9 + $0xd0] sm:$0xff]
    %v7951 = vld [vmem:[#allocation9 + $0xd8] sm:$0xff]
    %v7952 = vld [vmem:[#allocation9 + $0xe0] sm:$0xff]
    %v7953 = vld [vmem:[#allocation9 + $0xe8] sm:$0xff]
    %v7954 = vld [vmem:[#allocation9 + $0xf0] sm:$0xff]
    %v7955 = vld [vmem:[#allocation9 + $0xf8] sm:$0xff]
    %v7988 = vunpack.c.l.b16 %v7924
    %v7989 = vunpack.c.h.b16 %v7924
    %v7990 = vunpack.c.l.b16 %v7925
    %v7991 = vunpack.c.h.b16 %v7925
    %v7992 = vunpack.c.l.b16 %v7926
    %v7993 = vunpack.c.h.b16 %v7926
    %v7994 = vunpack.c.l.b16 %v7927
    %v7995 = vunpack.c.h.b16 %v7927
    %v7996 = vunpack.c.l.b16 %v7928
    %v7997 = vunpack.c.h.b16 %v7928
    %v7998 = vunpack.c.l.b16 %v7929
    %v7999 = vunpack.c.h.b16 %v7929
    %v8000 = vunpack.c.l.b16 %v7930
    %v8001 = vunpack.c.h.b16 %v7930
    %v8002 = vunpack.c.l.b16 %v7931
    %v8003 = vunpack.c.h.b16 %v7931
    %v8004 = vunpack.c.l.b16 %v7932
    %v8005 = vunpack.c.h.b16 %v7932
    %v8006 = vunpack.c.l.b16 %v7933
    %v8007 = vunpack.c.h.b16 %v7933
    %v8008 = vunpack.c.l.b16 %v7934
    %v8009 = vunpack.c.h.b16 %v7934
    %v8010 = vunpack.c.l.b16 %v7935
    %v8011 = vunpack.c.h.b16 %v7935
    %v8012 = vunpack.c.l.b16 %v7936
    %v8013 = vunpack.c.h.b16 %v7936
    %v8014 = vunpack.c.l.b16 %v7937
    %v8015 = vunpack.c.h.b16 %v7937
    %v8016 = vunpack.c.l.b16 %v7938
    %v8017 = vunpack.c.h.b16 %v7938
    %v8018 = vunpack.c.l.b16 %v7939
    %v8019 = vunpack.c.h.b16 %v7939
    %v8020 = vunpack.c.l.b16 %v7940
    %v8021 = vunpack.c.h.b16 %v7940
    %v8022 = vunpack.c.l.b16 %v7941
    %v8023 = vunpack.c.h.b16 %v7941
    %v8024 = vunpack.c.l.b16 %v7942
    %v8025 = vunpack.c.h.b16 %v7942
    %v8026 = vunpack.c.l.b16 %v7943
    %v8027 = vunpack.c.h.b16 %v7943
    %v8028 = vunpack.c.l.b16 %v7944
    %v8029 = vunpack.c.h.b16 %v7944
    %v8030 = vunpack.c.l.b16 %v7945
    %v8031 = vunpack.c.h.b16 %v7945
    %v8032 = vunpack.c.l.b16 %v7946
    %v8033 = vunpack.c.h.b16 %v7946
    %v8034 = vunpack.c.l.b16 %v7947
    %v8035 = vunpack.c.h.b16 %v7947
    %v8036 = vunpack.c.l.b16 %v7948
    %v8037 = vunpack.c.h.b16 %v7948
    %v8038 = vunpack.c.l.b16 %v7949
    %v8039 = vunpack.c.h.b16 %v7949
    %v8040 = vunpack.c.l.b16 %v7950
    %v8041 = vunpack.c.h.b16 %v7950
    %v8042 = vunpack.c.l.b16 %v7951
    %v8043 = vunpack.c.h.b16 %v7951
    %v8044 = vunpack.c.l.b16 %v7952
    %v8045 = vunpack.c.h.b16 %v7952
    %v8046 = vunpack.c.l.b16 %v7953
    %v8047 = vunpack.c.h.b16 %v7953
    %v8048 = vunpack.c.l.b16 %v7954
    %v8049 = vunpack.c.h.b16 %v7954
    %v8050 = vunpack.c.l.b16 %v7955
    %v8051 = vunpack.c.h.b16 %v7955
    %v8052 = vpack.c.b16 %v7992, %v7988
    %v8053 = vpack.c.b16 %v7993, %v7989
    %v8054 = vpack.c.b16 %v7994, %v7990
    %v8055 = vpack.c.b16 %v7995, %v7991
    %v8056 = vpack.c.b16 %v8000, %v7996
    %v8057 = vpack.c.b16 %v8001, %v7997
    %v8058 = vpack.c.b16 %v8002, %v7998
    %v8059 = vpack.c.b16 %v8003, %v7999
    %v8060 = vpack.c.b16 %v8008, %v8004
    %v8061 = vpack.c.b16 %v8009, %v8005
    %v8062 = vpack.c.b16 %v8010, %v8006
    %v8063 = vpack.c.b16 %v8011, %v8007
    %v8064 = vpack.c.b16 %v8016, %v8012
    %v8065 = vpack.c.b16 %v8017, %v8013
    %v8066 = vpack.c.b16 %v8018, %v8014
    %v8067 = vpack.c.b16 %v8019, %v8015
    %v8068 = vpack.c.b16 %v8024, %v8020
    %v8069 = vpack.c.b16 %v8025, %v8021
    %v8070 = vpack.c.b16 %v8026, %v8022
    %v8071 = vpack.c.b16 %v8027, %v8023
    %v8072 = vpack.c.b16 %v8032, %v8028
    %v8073 = vpack.c.b16 %v8033, %v8029
    %v8074 = vpack.c.b16 %v8034, %v8030
    %v8075 = vpack.c.b16 %v8035, %v8031
    %v8076 = vpack.c.b16 %v8040, %v8036
    %v8077 = vpack.c.b16 %v8041, %v8037
    %v8078 = vpack.c.b16 %v8042, %v8038
    %v8079 = vpack.c.b16 %v8043, %v8039
    %v8080 = vpack.c.b16 %v8048, %v8044
    %v8081 = vpack.c.b16 %v8049, %v8045
    %v8082 = vpack.c.b16 %v8050, %v8046
    %v8083 = vpack.c.b16 %v8051, %v8047
    %8116 = vmatprep.subr.bf16.mxu0 %v8053
    %8117 = vmatpush1.bf16.msra.mxu0 %v8052
    %8118 = vmatprep.subr.bf16.mxu0 %v8057
    %8119 = vmatpush1.bf16.msra.mxu0 %v8056
    %8120 = vmatprep.subr.bf16.mxu0 %v8061
    %8121 = vmatpush1.bf16.msra.mxu0 %v8060
    %8122 = vmatprep.subr.bf16.mxu0 %v8065
    %8123 = vmatpush1.bf16.msra.mxu0 %v8064
    %8124 = vmatprep.subr.bf16.mxu0 %v8069
    %8125 = vmatpush1.bf16.msra.mxu0 %v8068
    %8126 = vmatprep.subr.bf16.mxu0 %v8073
    %8127 = vmatpush1.bf16.msra.mxu0 %v8072
    %8128 = vmatprep.subr.bf16.mxu0 %v8077
    %8129 = vmatpush1.bf16.msra.mxu0 %v8076
    %8130 = vmatprep.subr.bf16.mxu0 %v8081
    %8131 = vmatpush1.bf16.msra.mxu0 %v8080
    %8132 = vmatprep.subr.bf16.mxu0 0
    %8133 = vmatpush1.bf16.msra.mxu0 0
    %8134 = vmatprep.subr.bf16.mxu0 0
    %8135 = vmatpush1.bf16.msra.mxu0 0
    %8136 = vmatprep.subr.bf16.mxu0 0
    %8137 = vmatpush1.bf16.msra.mxu0 0
    %8138 = vmatprep.subr.bf16.mxu0 0
    %8139 = vmatpush1.bf16.msra.mxu0 0
    %8140 = vmatprep.subr.bf16.mxu0 0
    %8141 = vmatpush1.bf16.msra.mxu0 0
    %8142 = vmatprep.subr.bf16.mxu0 0
    %8143 = vmatpush1.bf16.msra.mxu0 0
    %8144 = vmatprep.subr.bf16.mxu0 0
    %8145 = vmatpush1.bf16.msra.mxu0 0
    %8146 = vmatprep.subr.bf16.mxu0 0
    %8147 = vmatpush1.bf16.msra.mxu0 0
    %8148 = vmatprep.mubr.bf16.mxu0 0
    %8149 = vmatmul.mubr.bf16.gmra.mrb[0].mxu0 %v7923
    %v8150 = vpop.f32.mrb[0].mxu0
    %v8151 = vadd.f32 0.0, %v8150
    %v8152 = vpop.f32.mrb[0].mxu0
    %v8153 = vadd.f32 0.0, %v8152
    %v8154 = vpop.f32.mrb[0].mxu0
    %v8155 = vadd.f32 0.0, %v8154
    %v8156 = vpop.f32.mrb[0].mxu0
    %v8157 = vadd.f32 0.0, %v8156
    %8158 = vdwg.mxu0
    %8159 = vmatprep.subr.bf16.mxu0 %v8055
    %8160 = vmatpush1.bf16.msra.mxu0 %v8054
    %8161 = vmatprep.subr.bf16.mxu0 %v8059
    %8162 = vmatpush1.bf16.msra.mxu0 %v8058
    %8163 = vmatprep.subr.bf16.mxu0 %v8063
    %8164 = vmatpush1.bf16.msra.mxu0 %v8062
    %8165 = vmatprep.subr.bf16.mxu0 %v8067
    %8166 = vmatpush1.bf16.msra.mxu0 %v8066
    %8167 = vmatprep.subr.bf16.mxu0 %v8071
    %8168 = vmatpush1.bf16.msra.mxu0 %v8070
    %8169 = vmatprep.subr.bf16.mxu0 %v8075
    %8170 = vmatpush1.bf16.msra.mxu0 %v8074
    %8171 = vmatprep.subr.bf16.mxu0 %v8079
    %8172 = vmatpush1.bf16.msra.mxu0 %v8078
    %8173 = vmatprep.subr.bf16.mxu0 %v8083
    %8174 = vmatpush1.bf16.msra.mxu0 %v8082
    %8175 = vmatprep.subr.bf16.mxu0 0
    %8176 = vmatpush1.bf16.msra.mxu0 0
    %8177 = vmatprep.subr.bf16.mxu0 0
    %8178 = vmatpush1.bf16.msra.mxu0 0
    %8179 = vmatprep.subr.bf16.mxu0 0
    %8180 = vmatpush1.bf16.msra.mxu0 0
    %8181 = vmatprep.subr.bf16.mxu0 0
    %8182 = vmatpush1.bf16.msra.mxu0 0
    %8183 = vmatprep.subr.bf16.mxu0 0
    %8184 = vmatpush1.bf16.msra.mxu0 0
    %8185 = vmatprep.subr.bf16.mxu0 0
    %8186 = vmatpush1.bf16.msra.mxu0 0
    %8187 = vmatprep.subr.bf16.mxu0 0
    %8188 = vmatpush1.bf16.msra.mxu0 0
    %8189 = vmatprep.subr.bf16.mxu0 0
    %8190 = vmatpush1.bf16.msra.mxu0 0
    %8191 = vmatprep.mubr.bf16.mxu0 0
    %8192 = vmatmul.mubr.bf16.gmra.mrb[0].mxu0 %v7923
    %v8193 = vpop.f32.mrb[0].mxu0
    %v8194 = vadd.f32 0.0, %v8193
    %v8195 = vpop.f32.mrb[0].mxu0
    %v8196 = vadd.f32 0.0, %v8195
    %v8197 = vpop.f32.mrb[0].mxu0
    %v8198 = vadd.f32 0.0, %v8197
    %v8199 = vpop.f32.mrb[0].mxu0
    %v8200 = vadd.f32 0.0, %v8199
    %8201 = vdwg.mxu0
    %v8204 = vunpack.c.l.b16 %v7885
    %v8205 = vunpack.c.l.b16 %v7886
    %v8206 = vpack.c.b16 %v8205, %v8204
    %v8240 = vunpack.c.l.b16 %v7891
    %v8241 = vunpack.c.h.b16 %v7891
    %v8242 = vunpack.c.l.b16 %v7892
    %v8243 = vunpack.c.h.b16 %v7892
    %v8244 = vunpack.c.l.b16 %v7893
    %v8245 = vunpack.c.h.b16 %v7893
    %v8246 = vunpack.c.l.b16 %v7894
    %v8247 = vunpack.c.h.b16 %v7894
    %v8248 = vunpack.c.l.b16 %v7895
    %v8249 = vunpack.c.h.b16 %v7895
    %v8250 = vunpack.c.l.b16 %v7896
    %v8251 = vunpack.c.h.b16 %v7896
    %v8252 = vunpack.c.l.b16 %v7897
    %v8253 = vunpack.c.h.b16 %v7897
    %v8254 = vunpack.c.l.b16 %v7898
    %v8255 = vunpack.c.h.b16 %v7898
    %v8256 = vunpack.c.l.b16 %v7899
    %v8257 = vunpack.c.h.b16 %v7899
    %v8258 = vunpack.c.l.b16 %v7900
    %v8259 = vunpack.c.h.b16 %v7900
    %v8260 = vunpack.c.l.b16 %v7901
    %v8261 = vunpack.c.h.b16 %v7901
    %v8262 = vunpack.c.l.b16 %v7902
    %v8263 = vunpack.c.h.b16 %v7902
    %v8264 = vunpack.c.l.b16 %v7903
    %v8265 = vunpack.c.h.b16 %v7903
    %v8266 = vunpack.c.l.b16 %v7904
    %v8267 = vunpack.c.h.b16 %v7904
    %v8268 = vunpack.c.l.b16 %v7905
    %v8269 = vunpack.c.h.b16 %v7905
    %v8270 = vunpack.c.l.b16 %v7906
    %v8271 = vunpack.c.h.b16 %v7906
    %v8272 = vunpack.c.l.b16 %v7907
    %v8273 = vunpack.c.h.b16 %v7907
    %v8274 = vunpack.c.l.b16 %v7908
    %v8275 = vunpack.c.h.b16 %v7908
    %v8276 = vunpack.c.l.b16 %v7909
    %v8277 = vunpack.c.h.b16 %v7909
    %v8278 = vunpack.c.l.b16 %v7910
    %v8279 = vunpack.c.h.b16 %v7910
    %v8280 = vunpack.c.l.b16 %v7911
    %v8281 = vunpack.c.h.b16 %v7911
    %v8282 = vunpack.c.l.b16 %v7912
    %v8283 = vunpack.c.h.b16 %v7912
    %v8284 = vunpack.c.l.b16 %v7913
    %v8285 = vunpack.c.h.b16 %v7913
    %v8286 = vunpack.c.l.b16 %v7914
    %v8287 = vunpack.c.h.b16 %v7914
    %v8288 = vunpack.c.l.b16 %v7915
    %v8289 = vunpack.c.h.b16 %v7915
    %v8290 = vunpack.c.l.b16 %v7916
    %v8291 = vunpack.c.h.b16 %v7916
    %v8292 = vunpack.c.l.b16 %v7917
    %v8293 = vunpack.c.h.b16 %v7917
    %v8294 = vunpack.c.l.b16 %v7918
    %v8295 = vunpack.c.h.b16 %v7918
    %v8296 = vunpack.c.l.b16 %v7919
    %v8297 = vunpack.c.h.b16 %v7919
    %v8298 = vunpack.c.l.b16 %v7920
    %v8299 = vunpack.c.h.b16 %v7920
    %v8300 = vunpack.c.l.b16 %v7921
    %v8301 = vunpack.c.h.b16 %v7921
    %v8302 = vunpack.c.l.b16 %v7922
    %v8303 = vunpack.c.h.b16 %v7922
    %v8304 = vpack.c.b16 %v8244, %v8240
    %v8305 = vpack.c.b16 %v8245, %v8241
    %v8306 = vpack.c.b16 %v8246, %v8242
    %v8307 = vpack.c.b16 %v8247, %v8243
    %v8308 = vpack.c.b16 %v8252, %v8248
    %v8309 = vpack.c.b16 %v8253, %v8249
    %v8310 = vpack.c.b16 %v8254, %v8250
    %v8311 = vpack.c.b16 %v8255, %v8251
    %v8312 = vpack.c.b16 %v8260, %v8256
    %v8313 = vpack.c.b16 %v8261, %v8257
    %v8314 = vpack.c.b16 %v8262, %v8258
    %v8315 = vpack.c.b16 %v8263, %v8259
    %v8316 = vpack.c.b16 %v8268, %v8264
    %v8317 = vpack.c.b16 %v8269, %v8265
    %v8318 = vpack.c.b16 %v8270, %v8266
    %v8319 = vpack.c.b16 %v8271, %v8267
    %v8320 = vpack.c.b16 %v8276, %v8272
    %v8321 = vpack.c.b16 %v8277, %v8273
    %v8322 = vpack.c.b16 %v8278, %v8274
    %v8323 = vpack.c.b16 %v8279, %v8275
    %v8324 = vpack.c.b16 %v8284, %v8280
    %v8325 = vpack.c.b16 %v8285, %v8281
    %v8326 = vpack.c.b16 %v8286, %v8282
    %v8327 = vpack.c.b16 %v8287, %v8283
    %v8328 = vpack.c.b16 %v8292, %v8288
    %v8329 = vpack.c.b16 %v8293, %v8289
    %v8330 = vpack.c.b16 %v8294, %v8290
    %v8331 = vpack.c.b16 %v8295, %v8291
    %v8332 = vpack.c.b16 %v8300, %v8296
    %v8333 = vpack.c.b16 %v8301, %v8297
    %v8334 = vpack.c.b16 %v8302, %v8298
    %v8335 = vpack.c.b16 %v8303, %v8299
    %8368 = vmatprep.subr.bf16.mxu0 %v8305
    %8369 = vmatpush1.bf16.msra.mxu0 %v8304
    %8370 = vmatprep.subr.bf16.mxu0 %v8309
    %8371 = vmatpush1.bf16.msra.mxu0 %v8308
    %8372 = vmatprep.subr.bf16.mxu0 %v8313
    %8373 = vmatpush1.bf16.msra.mxu0 %v8312
    %8374 = vmatprep.subr.bf16.mxu0 %v8317
    %8375 = vmatpush1.bf16.msra.mxu0 %v8316
    %8376 = vmatprep.subr.bf16.mxu0 %v8321
    %8377 = vmatpush1.bf16.msra.mxu0 %v8320
    %8378 = vmatprep.subr.bf16.mxu0 %v8325
    %8379 = vmatpush1.bf16.msra.mxu0 %v8324
    %8380 = vmatprep.subr.bf16.mxu0 %v8329
    %8381 = vmatpush1.bf16.msra.mxu0 %v8328
    %8382 = vmatprep.subr.bf16.mxu0 %v8333
    %8383 = vmatpush1.bf16.msra.mxu0 %v8332
    %8384 = vmatprep.subr.bf16.mxu0 0
    %8385 = vmatpush1.bf16.msra.mxu0 0
    %8386 = vmatprep.subr.bf16.mxu0 0
    %8387 = vmatpush1.bf16.msra.mxu0 0
    %8388 = vmatprep.subr.bf16.mxu0 0
    %8389 = vmatpush1.bf16.msra.mxu0 0
    %8390 = vmatprep.subr.bf16.mxu0 0
    %8391 = vmatpush1.bf16.msra.mxu0 0
    %8392 = vmatprep.subr.bf16.mxu0 0
    %8393 = vmatpush1.bf16.msra.mxu0 0
    %8394 = vmatprep.subr.bf16.mxu0 0
    %8395 = vmatpush1.bf16.msra.mxu0 0
    %8396 = vmatprep.subr.bf16.mxu0 0
    %8397 = vmatpush1.bf16.msra.mxu0 0
    %8398 = vmatprep.subr.bf16.mxu0 0
    %8399 = vmatpush1.bf16.msra.mxu0 0
    %8400 = vmatprep.mubr.bf16.mxu0 0
    %8401 = vmatmul.mubr.bf16.gmra.mrb[0].mxu0 %v8206
    %v8402 = vpop.f32.mrb[0].mxu0
    %v8403 = vadd.f32 %v8151, %v8402
    %v8404 = vpop.f32.mrb[0].mxu0
    %v8405 = vadd.f32 %v8153, %v8404
    %v8406 = vpop.f32.mrb[0].mxu0
    %v8407 = vadd.f32 %v8155, %v8406
    %v8408 = vpop.f32.mrb[0].mxu0
    %v8409 = vadd.f32 %v8157, %v8408
    %8410 = vdwg.mxu0
    %8411 = vmatprep.subr.bf16.mxu0 %v8307
    %8412 = vmatpush1.bf16.msra.mxu0 %v8306
    %8413 = vmatprep.subr.bf16.mxu0 %v8311
    %8414 = vmatpush1.bf16.msra.mxu0 %v8310
    %8415 = vmatprep.subr.bf16.mxu0 %v8315
    %8416 = vmatpush1.bf16.msra.mxu0 %v8314
    %8417 = vmatprep.subr.bf16.mxu0 %v8319
    %8418 = vmatpush1.bf16.msra.mxu0 %v8318
    %8419 = vmatprep.subr.bf16.mxu0 %v8323
    %8420 = vmatpush1.bf16.msra.mxu0 %v8322
    %8421 = vmatprep.subr.bf16.mxu0 %v8327
    %8422 = vmatpush1.bf16.msra.mxu0 %v8326
    %8423 = vmatprep.subr.bf16.mxu0 %v8331
    %8424 = vmatpush1.bf16.msra.mxu0 %v8330
    %8425 = vmatprep.subr.bf16.mxu0 %v8335
    %8426 = vmatpush1.bf16.msra.mxu0 %v8334
    %8427 = vmatprep.subr.bf16.mxu0 0
    %8428 = vmatpush1.bf16.msra.mxu0 0
    %8429 = vmatprep.subr.bf16.mxu0 0
    %8430 = vmatpush1.bf16.msra.mxu0 0
    %8431 = vmatprep.subr.bf16.mxu0 0
    %8432 = vmatpush1.bf16.msra.mxu0 0
    %8433 = vmatprep.subr.bf16.mxu0 0
    %8434 = vmatpush1.bf16.msra.mxu0 0
    %8435 = vmatprep.subr.bf16.mxu0 0
    %8436 = vmatpush1.bf16.msra.mxu0 0
    %8437 = vmatprep.subr.bf16.mxu0 0
    %8438 = vmatpush1.bf16.msra.mxu0 0
    %8439 = vmatprep.subr.bf16.mxu0 0
    %8440 = vmatpush1.bf16.msra.mxu0 0
    %8441 = vmatprep.subr.bf16.mxu0 0
    %8442 = vmatpush1.bf16.msra.mxu0 0
    %8443 = vmatprep.mubr.bf16.mxu0 0
    %8444 = vmatmul.mubr.bf16.gmra.mrb[0].mxu0 %v8206
    %v8445 = vpop.f32.mrb[0].mxu0
    %v8446 = vadd.f32 %v8194, %v8445
    %v8447 = vpop.f32.mrb[0].mxu0
    %v8448 = vadd.f32 %v8196, %v8447
    %v8449 = vpop.f32.mrb[0].mxu0
    %v8450 = vadd.f32 %v8198, %v8449
    %v8451 = vpop.f32.mrb[0].mxu0
    %v8452 = vadd.f32 %v8200, %v8451
    %8453 = vdwg.mxu0
    %v8454 = vld [vmem:[%s3] sm:$0xf]
    %v8456 = vlaneseq
    %v8457 = vshrl.u32 %v8456, 7
    %v8458 = vsub.s32 0, %v8457
    %v8459 = vrot.slane %v8454, %v8458
    %v8460 = vlaneseq
    %v8461 = vshrl.u32 %v8460, 7
    %v8462 = vsub.s32 1, %v8461
    %v8463 = vrot.slane %v8454, %v8462
    %v8464 = vlaneseq
    %v8465 = vshrl.u32 %v8464, 7
    %v8466 = vsub.s32 2, %v8465
    %v8467 = vrot.slane %v8454, %v8466
    %v8468 = vlaneseq
    %v8469 = vshrl.u32 %v8468, 7
    %v8470 = vsub.s32 3, %v8469
    %v8471 = vrot.slane %v8454, %v8470
    %v8476 = vadd.f32 %v8403, %v8459
    %v8477 = vadd.f32 %v8405, %v8463
    %v8478 = vadd.f32 %v8446, %v8467
    %v8479 = vadd.f32 %v8448, %v8471
    %v8480 = vadd.f32 %v8407, %v8459
    %v8481 = vadd.f32 %v8409, %v8463
    %v8482 = vadd.f32 %v8450, %v8467
    %v8483 = vadd.f32 %v8452, %v8471
    %v8484 = vxor.u32 %v8476, 2147483648
    %v8485 = vxor.u32 %v8480, 2147483648
    %v8486 = vmul.f32 %v8484, 1.442695
    %v8487 = vpow.pop %v8486
    %v8488 = vmul.f32 %v8485, 1.442695
    %v8489 = vpow.pop %v8488
    %v8490 = vadd.f32 %v8487, 1.0
    %v8491 = vadd.f32 %v8489, 1.0
    %v8492 = vrcp.pop %v8490
    %v8493 = vmul.f32 1.0, %v8492
    %v8494 = vrcp.pop %v8491
    %v8495 = vmul.f32 1.0, %v8494
    %v8496 = vxor.u32 %v8477, 2147483648
    %v8497 = vxor.u32 %v8481, 2147483648
    %v8498 = vmul.f32 %v8496, 1.442695
    %v8499 = vpow.pop %v8498
    %v8500 = vmul.f32 %v8497, 1.442695
    %v8501 = vpow.pop %v8500
    %v8502 = vadd.f32 %v8499, 1.0
    %v8503 = vadd.f32 %v8501, 1.0
    %v8504 = vrcp.pop %v8502
    %v8505 = vmul.f32 1.0, %v8504
    %v8506 = vrcp.pop %v8503
    %v8507 = vmul.f32 1.0, %v8506
    %v8508 = vtanh.pop %v8478
    %v8509 = vtanh.pop %v8482
    %v8510 = vxor.u32 %v8479, 2147483648
    %v8511 = vxor.u32 %v8483, 2147483648
    %v8512 = vmul.f32 %v8510, 1.442695
    %v8513 = vpow.pop %v8512
    %v8514 = vmul.f32 %v8511, 1.442695
    %v8515 = vpow.pop %v8514
    %v8516 = vadd.f32 %v8513, 1.0
    %v8517 = vadd.f32 %v8515, 1.0
    %v8518 = vrcp.pop %v8516
    %v8519 = vmul.f32 1.0, %v8518
    %v8520 = vrcp.pop %v8517
    %v8521 = vmul.f32 1.0, %v8520
    %v8522 = vmul.f32 %v8505, %v7889
    %v8523 = vmul.f32 %v8507, %v7890
    %v8524 = vmul.f32 %v8493, %v8508
    %v8525 = vmul.f32 %v8495, %v8509
    %v8526 = vadd.f32 %v8522, %v8524
    %v8527 = vadd.f32 %v8523, %v8525
    %v8528 = vtanh.pop %v8526
    %v8529 = vtanh.pop %v8527
    %v8530 = vmul.f32 %v8519, %v8528
    %v8531 = vmul.f32 %v8521, %v8529
    %8532 = vst [vmem:[#allocation2] sm:$0xff] %v8530
    %8533 = vst [vmem:[#allocation2 + $0x8] sm:$0xff] %v8531
    %8534 = vst [vmem:[#allocation3] sm:$0xff] %v8526
    %8535 = vst [vmem:[#allocation3 + $0x8] sm:$0xff] %v8527
    %v8536 = vpack.c.bf16 %v8531, %v8530
    %v8537 = vld [vmem:[%s759] sm:$0xff]
    %v8538 = vld [vmem:[%s759 + $0x8] sm:$0xff]
    %v8539 = vld [vmem:[%s762] sm:$0xff]
    %v8540 = vld [vmem:[%s762 + $0x8] sm:$0xff]
    %v8541 = vld [vmem:[#allocation10] sm:$0xff]
    %v8542 = vld [vmem:[#allocation10 + $0x8] sm:$0xff]
    %v8543 = vld [vmem:[#allocation10 + $0x10] sm:$0xff]
    %v8544 = vld [vmem:[#allocation10 + $0x18] sm:$0xff]
    %v8545 = vld [vmem:[#allocation10 + $0x20] sm:$0xff]
    %v8546 = vld [vmem:[#allocation10 + $0x28] sm:$0xff]
    %v8547 = vld [vmem:[#allocation10 + $0x30] sm:$0xff]
    %v8548 = vld [vmem:[#allocation10 + $0x38] sm:$0xff]
    %v8549 = vld [vmem:[#allocation10 + $0x40] sm:$0xff]
    %v8550 = vld [vmem:[#allocation10 + $0x48] sm:$0xff]
    %v8551 = vld [vmem:[#allocation10 + $0x50] sm:$0xff]
    %v8552 = vld [vmem:[#allocation10 + $0x58] sm:$0xff]
    %v8553 = vld [vmem:[#allocation10 + $0x60] sm:$0xff]
    %v8554 = vld [vmem:[#allocation10 + $0x68] sm:$0xff]
    %v8555 = vld [vmem:[#allocation10 + $0x70] sm:$0xff]
    %v8556 = vld [vmem:[#allocation10 + $0x78] sm:$0xff]
    %v8557 = vld [vmem:[#allocation10 + $0x80] sm:$0xff]
    %v8558 = vld [vmem:[#allocation10 + $0x88] sm:$0xff]
    %v8559 = vld [vmem:[#allocation10 + $0x90] sm:$0xff]
    %v8560 = vld [vmem:[#allocation10 + $0x98] sm:$0xff]
    %v8561 = vld [vmem:[#allocation10 + $0xa0] sm:$0xff]
    %v8562 = vld [vmem:[#allocation10 + $0xa8] sm:$0xff]
    %v8563 = vld [vmem:[#allocation10 + $0xb0] sm:$0xff]
    %v8564 = vld [vmem:[#allocation10 + $0xb8] sm:$0xff]
    %v8565 = vld [vmem:[#allocation10 + $0xc0] sm:$0xff]
    %v8566 = vld [vmem:[#allocation10 + $0xc8] sm:$0xff]
    %v8567 = vld [vmem:[#allocation10 + $0xd0] sm:$0xff]
    %v8568 = vld [vmem:[#allocation10 + $0xd8] sm:$0xff]
    %v8569 = vld [vmem:[#allocation10 + $0xe0] sm:$0xff]
    %v8570 = vld [vmem:[#allocation10 + $0xe8] sm:$0xff]
    %v8571 = vld [vmem:[#allocation10 + $0xf0] sm:$0xff]
    %v8572 = vld [vmem:[#allocation10 + $0xf8] sm:$0xff]
    %v8573 = vpack.c.bf16 %v8538, %v8537
    %v8574 = vld [vmem:[#allocation12] sm:$0xff]
    %v8575 = vld [vmem:[#allocation12 + $0x8] sm:$0xff]
    %v8576 = vld [vmem:[#allocation12 + $0x10] sm:$0xff]
    %v8577 = vld [vmem:[#allocation12 + $0x18] sm:$0xff]
    %v8578 = vld [vmem:[#allocation12 + $0x20] sm:$0xff]
    %v8579 = vld [vmem:[#allocation12 + $0x28] sm:$0xff]
    %v8580 = vld [vmem:[#allocation12 + $0x30] sm:$0xff]
    %v8581 = vld [vmem:[#allocation12 + $0x38] sm:$0xff]
    %v8582 = vld [vmem:[#allocation12 + $0x40] sm:$0xff]
    %v8583 = vld [vmem:[#allocation12 + $0x48] sm:$0xff]
    %v8584 = vld [vmem:[#allocation12 + $0x50] sm:$0xff]
    %v8585 = vld [vmem:[#allocation12 + $0x58] sm:$0xff]
    %v8586 = vld [vmem:[#allocation12 + $0x60] sm:$0xff]
    %v8587 = vld [vmem:[#allocation12 + $0x68] sm:$0xff]
    %v8588 = vld [vmem:[#allocation12 + $0x70] sm:$0xff]
    %v8589 = vld [vmem:[#allocation12 + $0x78] sm:$0xff]
    %v8590 = vld [vmem:[#allocation12 + $0x80] sm:$0xff]
    %v8591 = vld [vmem:[#allocation12 + $0x88] sm:$0xff]
    %v8592 = vld [vmem:[#allocation12 + $0x90] sm:$0xff]
    %v8593 = vld [vmem:[#allocation12 + $0x98] sm:$0xff]
    %v8594 = vld [vmem:[#allocation12 + $0xa0] sm:$0xff]
    %v8595 = vld [vmem:[#allocation12 + $0xa8] sm:$0xff]
    %v8596 = vld [vmem:[#allocation12 + $0xb0] sm:$0xff]
    %v8597 = vld [vmem:[#allocation12 + $0xb8] sm:$0xff]
    %v8598 = vld [vmem:[#allocation12 + $0xc0] sm:$0xff]
    %v8599 = vld [vmem:[#allocation12 + $0xc8] sm:$0xff]
    %v8600 = vld [vmem:[#allocation12 + $0xd0] sm:$0xff]
    %v8601 = vld [vmem:[#allocation12 + $0xd8] sm:$0xff]
    %v8602 = vld [vmem:[#allocation12 + $0xe0] sm:$0xff]
    %v8603 = vld [vmem:[#allocation12 + $0xe8] sm:$0xff]
    %v8604 = vld [vmem:[#allocation12 + $0xf0] sm:$0xff]
    %v8605 = vld [vmem:[#allocation12 + $0xf8] sm:$0xff]
    %v8638 = vunpack.c.l.b16 %v8574
    %v8639 = vunpack.c.h.b16 %v8574
    %v8640 = vunpack.c.l.b16 %v8575
    %v8641 = vunpack.c.h.b16 %v8575
    %v8642 = vunpack.c.l.b16 %v8576
    %v8643 = vunpack.c.h.b16 %v8576
    %v8644 = vunpack.c.l.b16 %v8577
    %v8645 = vunpack.c.h.b16 %v8577
    %v8646 = vunpack.c.l.b16 %v8578
    %v8647 = vunpack.c.h.b16 %v8578
    %v8648 = vunpack.c.l.b16 %v8579
    %v8649 = vunpack.c.h.b16 %v8579
    %v8650 = vunpack.c.l.b16 %v8580
    %v8651 = vunpack.c.h.b16 %v8580
    %v8652 = vunpack.c.l.b16 %v8581
    %v8653 = vunpack.c.h.b16 %v8581
    %v8654 = vunpack.c.l.b16 %v8582
    %v8655 = vunpack.c.h.b16 %v8582
    %v8656 = vunpack.c.l.b16 %v8583
    %v8657 = vunpack.c.h.b16 %v8583
    %v8658 = vunpack.c.l.b16 %v8584
    %v8659 = vunpack.c.h.b16 %v8584
    %v8660 = vunpack.c.l.b16 %v8585
    %v8661 = vunpack.c.h.b16 %v8585
    %v8662 = vunpack.c.l.b16 %v8586
    %v8663 = vunpack.c.h.b16 %v8586
    %v8664 = vunpack.c.l.b16 %v8587
    %v8665 = vunpack.c.h.b16 %v8587
    %v8666 = vunpack.c.l.b16 %v8588
    %v8667 = vunpack.c.h.b16 %v8588
    %v8668 = vunpack.c.l.b16 %v8589
    %v8669 = vunpack.c.h.b16 %v8589
    %v8670 = vunpack.c.l.b16 %v8590
    %v8671 = vunpack.c.h.b16 %v8590
    %v8672 = vunpack.c.l.b16 %v8591
    %v8673 = vunpack.c.h.b16 %v8591
    %v8674 = vunpack.c.l.b16 %v8592
    %v8675 = vunpack.c.h.b16 %v8592
    %v8676 = vunpack.c.l.b16 %v8593
    %v8677 = vunpack.c.h.b16 %v8593
    %v8678 = vunpack.c.l.b16 %v8594
    %v8679 = vunpack.c.h.b16 %v8594
    %v8680 = vunpack.c.l.b16 %v8595
    %v8681 = vunpack.c.h.b16 %v8595
    %v8682 = vunpack.c.l.b16 %v8596
    %v8683 = vunpack.c.h.b16 %v8596
    %v8684 = vunpack.c.l.b16 %v8597
    %v8685 = vunpack.c.h.b16 %v8597
    %v8686 = vunpack.c.l.b16 %v8598
    %v8687 = vunpack.c.h.b16 %v8598
    %v8688 = vunpack.c.l.b16 %v8599
    %v8689 = vunpack.c.h.b16 %v8599
    %v8690 = vunpack.c.l.b16 %v8600
    %v8691 = vunpack.c.h.b16 %v8600
    %v8692 = vunpack.c.l.b16 %v8601
    %v8693 = vunpack.c.h.b16 %v8601
    %v8694 = vunpack.c.l.b16 %v8602
    %v8695 = vunpack.c.h.b16 %v8602
    %v8696 = vunpack.c.l.b16 %v8603
    %v8697 = vunpack.c.h.b16 %v8603
    %v8698 = vunpack.c.l.b16 %v8604
    %v8699 = vunpack.c.h.b16 %v8604
    %v8700 = vunpack.c.l.b16 %v8605
    %v8701 = vunpack.c.h.b16 %v8605
    %v8702 = vpack.c.b16 %v8642, %v8638
    %v8703 = vpack.c.b16 %v8643, %v8639
    %v8704 = vpack.c.b16 %v8644, %v8640
    %v8705 = vpack.c.b16 %v8645, %v8641
    %v8706 = vpack.c.b16 %v8650, %v8646
    %v8707 = vpack.c.b16 %v8651, %v8647
    %v8708 = vpack.c.b16 %v8652, %v8648
    %v8709 = vpack.c.b16 %v8653, %v8649
    %v8710 = vpack.c.b16 %v8658, %v8654
    %v8711 = vpack.c.b16 %v8659, %v8655
    %v8712 = vpack.c.b16 %v8660, %v8656
    %v8713 = vpack.c.b16 %v8661, %v8657
    %v8714 = vpack.c.b16 %v8666, %v8662
    %v8715 = vpack.c.b16 %v8667, %v8663
    %v8716 = vpack.c.b16 %v8668, %v8664
    %v8717 = vpack.c.b16 %v8669, %v8665
    %v8718 = vpack.c.b16 %v8674, %v8670
    %v8719 = vpack.c.b16 %v8675, %v8671
    %v8720 = vpack.c.b16 %v8676, %v8672
    %v8721 = vpack.c.b16 %v8677, %v8673
    %v8722 = vpack.c.b16 %v8682, %v8678
    %v8723 = vpack.c.b16 %v8683, %v8679
    %v8724 = vpack.c.b16 %v8684, %v8680
    %v8725 = vpack.c.b16 %v8685, %v8681
    %v8726 = vpack.c.b16 %v8690, %v8686
    %v8727 = vpack.c.b16 %v8691, %v8687
    %v8728 = vpack.c.b16 %v8692, %v8688
    %v8729 = vpack.c.b16 %v8693, %v8689
    %v8730 = vpack.c.b16 %v8698, %v8694
    %v8731 = vpack.c.b16 %v8699, %v8695
    %v8732 = vpack.c.b16 %v8700, %v8696
    %v8733 = vpack.c.b16 %v8701, %v8697
    %8766 = vmatprep.subr.bf16.mxu0 %v8703
    %8767 = vmatpush1.bf16.msra.mxu0 %v8702
    %8768 = vmatprep.subr.bf16.mxu0 %v8707
    %8769 = vmatpush1.bf16.msra.mxu0 %v8706
    %8770 = vmatprep.subr.bf16.mxu0 %v8711
    %8771 = vmatpush1.bf16.msra.mxu0 %v8710
    %8772 = vmatprep.subr.bf16.mxu0 %v8715
    %8773 = vmatpush1.bf16.msra.mxu0 %v8714
    %8774 = vmatprep.subr.bf16.mxu0 %v8719
    %8775 = vmatpush1.bf16.msra.mxu0 %v8718
    %8776 = vmatprep.subr.bf16.mxu0 %v8723
    %8777 = vmatpush1.bf16.msra.mxu0 %v8722
    %8778 = vmatprep.subr.bf16.mxu0 %v8727
    %8779 = vmatpush1.bf16.msra.mxu0 %v8726
    %8780 = vmatprep.subr.bf16.mxu0 %v8731
    %8781 = vmatpush1.bf16.msra.mxu0 %v8730
    %8782 = vmatprep.subr.bf16.mxu0 0
    %8783 = vmatpush1.bf16.msra.mxu0 0
    %8784 = vmatprep.subr.bf16.mxu0 0
    %8785 = vmatpush1.bf16.msra.mxu0 0
    %8786 = vmatprep.subr.bf16.mxu0 0
    %8787 = vmatpush1.bf16.msra.mxu0 0
    %8788 = vmatprep.subr.bf16.mxu0 0
    %8789 = vmatpush1.bf16.msra.mxu0 0
    %8790 = vmatprep.subr.bf16.mxu0 0
    %8791 = vmatpush1.bf16.msra.mxu0 0
    %8792 = vmatprep.subr.bf16.mxu0 0
    %8793 = vmatpush1.bf16.msra.mxu0 0
    %8794 = vmatprep.subr.bf16.mxu0 0
    %8795 = vmatpush1.bf16.msra.mxu0 0
    %8796 = vmatprep.subr.bf16.mxu0 0
    %8797 = vmatpush1.bf16.msra.mxu0 0
    %8798 = vmatprep.mubr.bf16.mxu0 0
    %8799 = vmatmul.mubr.bf16.gmra.mrb[0].mxu0 %v8573
    %v8800 = vpop.f32.mrb[0].mxu0
    %v8801 = vadd.f32 0.0, %v8800
    %v8802 = vpop.f32.mrb[0].mxu0
    %v8803 = vadd.f32 0.0, %v8802
    %v8804 = vpop.f32.mrb[0].mxu0
    %v8805 = vadd.f32 0.0, %v8804
    %v8806 = vpop.f32.mrb[0].mxu0
    %v8807 = vadd.f32 0.0, %v8806
    %8808 = vdwg.mxu0
    %8809 = vmatprep.subr.bf16.mxu0 %v8705
    %8810 = vmatpush1.bf16.msra.mxu0 %v8704
    %8811 = vmatprep.subr.bf16.mxu0 %v8709
    %8812 = vmatpush1.bf16.msra.mxu0 %v8708
    %8813 = vmatprep.subr.bf16.mxu0 %v8713
    %8814 = vmatpush1.bf16.msra.mxu0 %v8712
    %8815 = vmatprep.subr.bf16.mxu0 %v8717
    %8816 = vmatpush1.bf16.msra.mxu0 %v8716
    %8817 = vmatprep.subr.bf16.mxu0 %v8721
    %8818 = vmatpush1.bf16.msra.mxu0 %v8720
    %8819 = vmatprep.subr.bf16.mxu0 %v8725
    %8820 = vmatpush1.bf16.msra.mxu0 %v8724
    %8821 = vmatprep.subr.bf16.mxu0 %v8729
    %8822 = vmatpush1.bf16.msra.mxu0 %v8728
    %8823 = vmatprep.subr.bf16.mxu0 %v8733
    %8824 = vmatpush1.bf16.msra.mxu0 %v8732
    %8825 = vmatprep.subr.bf16.mxu0 0
    %8826 = vmatpush1.bf16.msra.mxu0 0
    %8827 = vmatprep.subr.bf16.mxu0 0
    %8828 = vmatpush1.bf16.msra.mxu0 0
    %8829 = vmatprep.subr.bf16.mxu0 0
    %8830 = vmatpush1.bf16.msra.mxu0 0
    %8831 = vmatprep.subr.bf16.mxu0 0
    %8832 = vmatpush1.bf16.msra.mxu0 0
    %8833 = vmatprep.subr.bf16.mxu0 0
    %8834 = vmatpush1.bf16.msra.mxu0 0
    %8835 = vmatprep.subr.bf16.mxu0 0
    %8836 = vmatpush1.bf16.msra.mxu0 0
    %8837 = vmatprep.subr.bf16.mxu0 0
    %8838 = vmatpush1.bf16.msra.mxu0 0
    %8839 = vmatprep.subr.bf16.mxu0 0
    %8840 = vmatpush1.bf16.msra.mxu0 0
    %8841 = vmatprep.mubr.bf16.mxu0 0
    %8842 = vmatmul.mubr.bf16.gmra.mrb[0].mxu0 %v8573
    %v8843 = vpop.f32.mrb[0].mxu0
    %v8844 = vadd.f32 0.0, %v8843
    %v8845 = vpop.f32.mrb[0].mxu0
    %v8846 = vadd.f32 0.0, %v8845
    %v8847 = vpop.f32.mrb[0].mxu0
    %v8848 = vadd.f32 0.0, %v8847
    %v8849 = vpop.f32.mrb[0].mxu0
    %v8850 = vadd.f32 0.0, %v8849
    %8851 = vdwg.mxu0
    %v8884 = vunpack.c.l.b16 %v8541
    %v8885 = vunpack.c.h.b16 %v8541
    %v8886 = vunpack.c.l.b16 %v8542
    %v8887 = vunpack.c.h.b16 %v8542
    %v8888 = vunpack.c.l.b16 %v8543
    %v8889 = vunpack.c.h.b16 %v8543
    %v8890 = vunpack.c.l.b16 %v8544
    %v8891 = vunpack.c.h.b16 %v8544
    %v8892 = vunpack.c.l.b16 %v8545
    %v8893 = vunpack.c.h.b16 %v8545
    %v8894 = vunpack.c.l.b16 %v8546
    %v8895 = vunpack.c.h.b16 %v8546
    %v8896 = vunpack.c.l.b16 %v8547
    %v8897 = vunpack.c.h.b16 %v8547
    %v8898 = vunpack.c.l.b16 %v8548
    %v8899 = vunpack.c.h.b16 %v8548
    %v8900 = vunpack.c.l.b16 %v8549
    %v8901 = vunpack.c.h.b16 %v8549
    %v8902 = vunpack.c.l.b16 %v8550
    %v8903 = vunpack.c.h.b16 %v8550
    %v8904 = vunpack.c.l.b16 %v8551
    %v8905 = vunpack.c.h.b16 %v8551
    %v8906 = vunpack.c.l.b16 %v8552
    %v8907 = vunpack.c.h.b16 %v8552
    %v8908 = vunpack.c.l.b16 %v8553
    %v8909 = vunpack.c.h.b16 %v8553
    %v8910 = vunpack.c.l.b16 %v8554
    %v8911 = vunpack.c.h.b16 %v8554
    %v8912 = vunpack.c.l.b16 %v8555
    %v8913 = vunpack.c.h.b16 %v8555
    %v8914 = vunpack.c.l.b16 %v8556
    %v8915 = vunpack.c.h.b16 %v8556
    %v8916 = vunpack.c.l.b16 %v8557
    %v8917 = vunpack.c.h.b16 %v8557
    %v8918 = vunpack.c.l.b16 %v8558
    %v8919 = vunpack.c.h.b16 %v8558
    %v8920 = vunpack.c.l.b16 %v8559
    %v8921 = vunpack.c.h.b16 %v8559
    %v8922 = vunpack.c.l.b16 %v8560
    %v8923 = vunpack.c.h.b16 %v8560
    %v8924 = vunpack.c.l.b16 %v8561
    %v8925 = vunpack.c.h.b16 %v8561
    %v8926 = vunpack.c.l.b16 %v8562
    %v8927 = vunpack.c.h.b16 %v8562
    %v8928 = vunpack.c.l.b16 %v8563
    %v8929 = vunpack.c.h.b16 %v8563
    %v8930 = vunpack.c.l.b16 %v8564
    %v8931 = vunpack.c.h.b16 %v8564
    %v8932 = vunpack.c.l.b16 %v8565
    %v8933 = vunpack.c.h.b16 %v8565
    %v8934 = vunpack.c.l.b16 %v8566
    %v8935 = vunpack.c.h.b16 %v8566
    %v8936 = vunpack.c.l.b16 %v8567
    %v8937 = vunpack.c.h.b16 %v8567
    %v8938 = vunpack.c.l.b16 %v8568
    %v8939 = vunpack.c.h.b16 %v8568
    %v8940 = vunpack.c.l.b16 %v8569
    %v8941 = vunpack.c.h.b16 %v8569
    %v8942 = vunpack.c.l.b16 %v8570
    %v8943 = vunpack.c.h.b16 %v8570
    %v8944 = vunpack.c.l.b16 %v8571
    %v8945 = vunpack.c.h.b16 %v8571
    %v8946 = vunpack.c.l.b16 %v8572
    %v8947 = vunpack.c.h.b16 %v8572
    %v8948 = vpack.c.b16 %v8888, %v8884
    %v8949 = vpack.c.b16 %v8889, %v8885
    %v8950 = vpack.c.b16 %v8890, %v8886
    %v8951 = vpack.c.b16 %v8891, %v8887
    %v8952 = vpack.c.b16 %v8896, %v8892
    %v8953 = vpack.c.b16 %v8897, %v8893
    %v8954 = vpack.c.b16 %v8898, %v8894
    %v8955 = vpack.c.b16 %v8899, %v8895
    %v8956 = vpack.c.b16 %v8904, %v8900
    %v8957 = vpack.c.b16 %v8905, %v8901
    %v8958 = vpack.c.b16 %v8906, %v8902
    %v8959 = vpack.c.b16 %v8907, %v8903
    %v8960 = vpack.c.b16 %v8912, %v8908
    %v8961 = vpack.c.b16 %v8913, %v8909
    %v8962 = vpack.c.b16 %v8914, %v8910
    %v8963 = vpack.c.b16 %v8915, %v8911
    %v8964 = vpack.c.b16 %v8920, %v8916
    %v8965 = vpack.c.b16 %v8921, %v8917
    %v8966 = vpack.c.b16 %v8922, %v8918
    %v8967 = vpack.c.b16 %v8923, %v8919
    %v8968 = vpack.c.b16 %v8928, %v8924
    %v8969 = vpack.c.b16 %v8929, %v8925
    %v8970 = vpack.c.b16 %v8930, %v8926
    %v8971 = vpack.c.b16 %v8931, %v8927
    %v8972 = vpack.c.b16 %v8936, %v8932
    %v8973 = vpack.c.b16 %v8937, %v8933
    %v8974 = vpack.c.b16 %v8938, %v8934
    %v8975 = vpack.c.b16 %v8939, %v8935
    %v8976 = vpack.c.b16 %v8944, %v8940
    %v8977 = vpack.c.b16 %v8945, %v8941
    %v8978 = vpack.c.b16 %v8946, %v8942
    %v8979 = vpack.c.b16 %v8947, %v8943
    %9012 = vmatprep.subr.bf16.mxu0 %v8949
    %9013 = vmatpush1.bf16.msra.mxu0 %v8948
    %9014 = vmatprep.subr.bf16.mxu0 %v8953
    %9015 = vmatpush1.bf16.msra.mxu0 %v8952
    %9016 = vmatprep.subr.bf16.mxu0 %v8957
    %9017 = vmatpush1.bf16.msra.mxu0 %v8956
    %9018 = vmatprep.subr.bf16.mxu0 %v8961
    %9019 = vmatpush1.bf16.msra.mxu0 %v8960
    %9020 = vmatprep.subr.bf16.mxu0 %v8965
    %9021 = vmatpush1.bf16.msra.mxu0 %v8964
    %9022 = vmatprep.subr.bf16.mxu0 %v8969
    %9023 = vmatpush1.bf16.msra.mxu0 %v8968
    %9024 = vmatprep.subr.bf16.mxu0 %v8973
    %9025 = vmatpush1.bf16.msra.mxu0 %v8972
    %9026 = vmatprep.subr.bf16.mxu0 %v8977
    %9027 = vmatpush1.bf16.msra.mxu0 %v8976
    %9028 = vmatprep.subr.bf16.mxu0 0
    %9029 = vmatpush1.bf16.msra.mxu0 0
    %9030 = vmatprep.subr.bf16.mxu0 0
    %9031 = vmatpush1.bf16.msra.mxu0 0
    %9032 = vmatprep.subr.bf16.mxu0 0
    %9033 = vmatpush1.bf16.msra.mxu0 0
    %9034 = vmatprep.subr.bf16.mxu0 0
    %9035 = vmatpush1.bf16.msra.mxu0 0
    %9036 = vmatprep.subr.bf16.mxu0 0
    %9037 = vmatpush1.bf16.msra.mxu0 0
    %9038 = vmatprep.subr.bf16.mxu0 0
    %9039 = vmatpush1.bf16.msra.mxu0 0
    %9040 = vmatprep.subr.bf16.mxu0 0
    %9041 = vmatpush1.bf16.msra.mxu0 0
    %9042 = vmatprep.subr.bf16.mxu0 0
    %9043 = vmatpush1.bf16.msra.mxu0 0
    %9044 = vmatprep.mubr.bf16.mxu0 0
    %9045 = vmatmul.mubr.bf16.gmra.mrb[0].mxu0 %v8536
    %v9046 = vpop.f32.mrb[0].mxu0
    %v9047 = vadd.f32 %v8801, %v9046
    %v9048 = vpop.f32.mrb[0].mxu0
    %v9049 = vadd.f32 %v8803, %v9048
    %v9050 = vpop.f32.mrb[0].mxu0
    %v9051 = vadd.f32 %v8805, %v9050
    %v9052 = vpop.f32.mrb[0].mxu0
    %v9053 = vadd.f32 %v8807, %v9052
    %9054 = vdwg.mxu0
    %9055 = vmatprep.subr.bf16.mxu0 %v8951
    %9056 = vmatpush1.bf16.msra.mxu0 %v8950
    %9057 = vmatprep.subr.bf16.mxu0 %v8955
    %9058 = vmatpush1.bf16.msra.mxu0 %v8954
    %9059 = vmatprep.subr.bf16.mxu0 %v8959
    %9060 = vmatpush1.bf16.msra.mxu0 %v8958
    %9061 = vmatprep.subr.bf16.mxu0 %v8963
    %9062 = vmatpush1.bf16.msra.mxu0 %v8962
    %9063 = vmatprep.subr.bf16.mxu0 %v8967
    %9064 = vmatpush1.bf16.msra.mxu0 %v8966
    %9065 = vmatprep.subr.bf16.mxu0 %v8971
    %9066 = vmatpush1.bf16.msra.mxu0 %v8970
    %9067 = vmatprep.subr.bf16.mxu0 %v8975
    %9068 = vmatpush1.bf16.msra.mxu0 %v8974
    %9069 = vmatprep.subr.bf16.mxu0 %v8979
    %9070 = vmatpush1.bf16.msra.mxu0 %v8978
    %9071 = vmatprep.subr.bf16.mxu0 0
    %9072 = vmatpush1.bf16.msra.mxu0 0
    %9073 = vmatprep.subr.bf16.mxu0 0
    %9074 = vmatpush1.bf16.msra.mxu0 0
    %9075 = vmatprep.subr.bf16.mxu0 0
    %9076 = vmatpush1.bf16.msra.mxu0 0
    %9077 = vmatprep.subr.bf16.mxu0 0
    %9078 = vmatpush1.bf16.msra.mxu0 0
    %9079 = vmatprep.subr.bf16.mxu0 0
    %9080 = vmatpush1.bf16.msra.mxu0 0
    %9081 = vmatprep.subr.bf16.mxu0 0
    %9082 = vmatpush1.bf16.msra.mxu0 0
    %9083 = vmatprep.subr.bf16.mxu0 0
    %9084 = vmatpush1.bf16.msra.mxu0 0
    %9085 = vmatprep.subr.bf16.mxu0 0
    %9086 = vmatpush1.bf16.msra.mxu0 0
    %9087 = vmatprep.mubr.bf16.mxu0 0
    %9088 = vmatmul.mubr.bf16.gmra.mrb[0].mxu0 %v8536
    %v9089 = vpop.f32.mrb[0].mxu0
    %v9090 = vadd.f32 %v8844, %v9089
    %v9091 = vpop.f32.mrb[0].mxu0
    %v9092 = vadd.f32 %v8846, %v9091
    %v9093 = vpop.f32.mrb[0].mxu0
    %v9094 = vadd.f32 %v8848, %v9093
    %v9095 = vpop.f32.mrb[0].mxu0
    %v9096 = vadd.f32 %v8850, %v9095
    %9097 = vdwg.mxu0
    %v9098 = vld [vmem:[%s6] sm:$0xf]
    %v9100 = vlaneseq
    %v9101 = vshrl.u32 %v9100, 7
    %v9102 = vsub.s32 0, %v9101
    %v9103 = vrot.slane %v9098, %v9102
    %v9104 = vlaneseq
    %v9105 = vshrl.u32 %v9104, 7
    %v9106 = vsub.s32 1, %v9105
    %v9107 = vrot.slane %v9098, %v9106
    %v9108 = vlaneseq
    %v9109 = vshrl.u32 %v9108, 7
    %v9110 = vsub.s32 2, %v9109
    %v9111 = vrot.slane %v9098, %v9110
    %v9112 = vlaneseq
    %v9113 = vshrl.u32 %v9112, 7
    %v9114 = vsub.s32 3, %v9113
    %v9115 = vrot.slane %v9098, %v9114
    %v9120 = vadd.f32 %v9047, %v9103
    %v9121 = vadd.f32 %v9049, %v9107
    %v9122 = vadd.f32 %v9090, %v9111
    %v9123 = vadd.f32 %v9092, %v9115
    %v9124 = vadd.f32 %v9051, %v9103
    %v9125 = vadd.f32 %v9053, %v9107
    %v9126 = vadd.f32 %v9094, %v9111
    %v9127 = vadd.f32 %v9096, %v9115
    %v9128 = vxor.u32 %v9120, 2147483648
    %v9129 = vxor.u32 %v9124, 2147483648
    %v9130 = vmul.f32 %v9128, 1.442695
    %v9131 = vpow.pop %v9130
    %v9132 = vmul.f32 %v9129, 1.442695
    %v9133 = vpow.pop %v9132
    %v9134 = vadd.f32 %v9131, 1.0
    %v9135 = vadd.f32 %v9133, 1.0
    %v9136 = vrcp.pop %v9134
    %v9137 = vmul.f32 1.0, %v9136
    %v9138 = vrcp.pop %v9135
    %v9139 = vmul.f32 1.0, %v9138
    %v9140 = vxor.u32 %v9121, 2147483648
    %v9141 = vxor.u32 %v9125, 2147483648
    %v9142 = vmul.f32 %v9140, 1.442695
    %v9143 = vpow.pop %v9142
    %v9144 = vmul.f32 %v9141, 1.442695
    %v9145 = vpow.pop %v9144
    %v9146 = vadd.f32 %v9143, 1.0
    %v9147 = vadd.f32 %v9145, 1.0
    %v9148 = vrcp.pop %v9146
    %v9149 = vmul.f32 1.0, %v9148
    %v9150 = vrcp.pop %v9147
    %v9151 = vmul.f32 1.0, %v9150
    %v9152 = vtanh.pop %v9122
    %v9153 = vtanh.pop %v9126
    %v9154 = vxor.u32 %v9123, 2147483648
    %v9155 = vxor.u32 %v9127, 2147483648
    %v9156 = vmul.f32 %v9154, 1.442695
    %v9157 = vpow.pop %v9156
    %v9158 = vmul.f32 %v9155, 1.442695
    %v9159 = vpow.pop %v9158
    %v9160 = vadd.f32 %v9157, 1.0
    %v9161 = vadd.f32 %v9159, 1.0
    %v9162 = vrcp.pop %v9160
    %v9163 = vmul.f32 1.0, %v9162
    %v9164 = vrcp.pop %v9161
    %v9165 = vmul.f32 1.0, %v9164
    %v9166 = vmul.f32 %v9149, %v8539
    %v9167 = vmul.f32 %v9151, %v8540
    %v9168 = vmul.f32 %v9137, %v9152
    %v9169 = vmul.f32 %v9139, %v9153
    %v9170 = vadd.f32 %v9166, %v9168
    %v9171 = vadd.f32 %v9167, %v9169
    %v9172 = vtanh.pop %v9170
    %v9173 = vtanh.pop %v9171
    %v9174 = vmul.f32 %v9163, %v9172
    %v9175 = vmul.f32 %v9165, %v9173
    %9176 = vst [vmem:[%s759] sm:$0xff] %v9174
    %9177 = vst [vmem:[%s759 + $0x8] sm:$0xff] %v9175
    %9178 = vst [vmem:[%s762] sm:$0xff] %v9170
    %9179 = vst [vmem:[%s762 + $0x8] sm:$0xff] %v9171
    %s9180 = scalar_lea.vmem [#allocation4], 56
    %v9181 = vld [vmem:[%s9180] sm:$0xf]
    %v9182 = vld [vmem:[%s9180 + $0x4] sm:$0xf]
    %v9183 = vld [vmem:[#allocation2] sm:$0xff]
    %v9184 = vld [vmem:[#allocation2 + $0x8] sm:$0xff]
    %v9185 = vld [vmem:[#allocation3] sm:$0xff]
    %v9186 = vld [vmem:[#allocation3 + $0x8] sm:$0xff]
    %v9187 = vld [vmem:[#allocation7] sm:$0xff]
    %v9188 = vld [vmem:[#allocation7 + $0x8] sm:$0xff]
    %v9189 = vld [vmem:[#allocation7 + $0x10] sm:$0xff]
    %v9190 = vld [vmem:[#allocation7 + $0x18] sm:$0xff]
    %v9191 = vld [vmem:[#allocation7 + $0x20] sm:$0xff]
    %v9192 = vld [vmem:[#allocation7 + $0x28] sm:$0xff]
    %v9193 = vld [vmem:[#allocation7 + $0x30] sm:$0xff]
    %v9194 = vld [vmem:[#allocation7 + $0x38] sm:$0xff]
    %v9195 = vld [vmem:[#allocation7 + $0x40] sm:$0xff]
    %v9196 = vld [vmem:[#allocation7 + $0x48] sm:$0xff]
    %v9197 = vld [vmem:[#allocation7 + $0x50] sm:$0xff]
    %v9198 = vld [vmem:[#allocation7 + $0x58] sm:$0xff]
    %v9199 = vld [vmem:[#allocation7 + $0x60] sm:$0xff]
    %v9200 = vld [vmem:[#allocation7 + $0x68] sm:$0xff]
    %v9201 = vld [vmem:[#allocation7 + $0x70] sm:$0xff]
    %v9202 = vld [vmem:[#allocation7 + $0x78] sm:$0xff]
    %v9203 = vld [vmem:[#allocation7 + $0x80] sm:$0xff]
    %v9204 = vld [vmem:[#allocation7 + $0x88] sm:$0xff]
    %v9205 = vld [vmem:[#allocation7 + $0x90] sm:$0xff]
    %v9206 = vld [vmem:[#allocation7 + $0x98] sm:$0xff]
    %v9207 = vld [vmem:[#allocation7 + $0xa0] sm:$0xff]
    %v9208 = vld [vmem:[#allocation7 + $0xa8] sm:$0xff]
    %v9209 = vld [vmem:[#allocation7 + $0xb0] sm:$0xff]
    %v9210 = vld [vmem:[#allocation7 + $0xb8] sm:$0xff]
    %v9211 = vld [vmem:[#allocation7 + $0xc0] sm:$0xff]
    %v9212 = vld [vmem:[#allocation7 + $0xc8] sm:$0xff]
    %v9213 = vld [vmem:[#allocation7 + $0xd0] sm:$0xff]
    %v9214 = vld [vmem:[#allocation7 + $0xd8] sm:$0xff]
    %v9215 = vld [vmem:[#allocation7 + $0xe0] sm:$0xff]
    %v9216 = vld [vmem:[#allocation7 + $0xe8] sm:$0xff]
    %v9217 = vld [vmem:[#allocation7 + $0xf0] sm:$0xff]
    %v9218 = vld [vmem:[#allocation7 + $0xf8] sm:$0xff]
    %v9219 = vpack.c.bf16 %v9184, %v9183
    %v9220 = vld [vmem:[#allocation9] sm:$0xff]
    %v9221 = vld [vmem:[#allocation9 + $0x8] sm:$0xff]
    %v9222 = vld [vmem:[#allocation9 + $0x10] sm:$0xff]
    %v9223 = vld [vmem:[#allocation9 + $0x18] sm:$0xff]
    %v9224 = vld [vmem:[#allocation9 + $0x20] sm:$0xff]
    %v9225 = vld [vmem:[#allocation9 + $0x28] sm:$0xff]
    %v9226 = vld [vmem:[#allocation9 + $0x30] sm:$0xff]
    %v9227 = vld [vmem:[#allocation9 + $0x38] sm:$0xff]
    %v9228 = vld [vmem:[#allocation9 + $0x40] sm:$0xff]
    %v9229 = vld [vmem:[#allocation9 + $0x48] sm:$0xff]
    %v9230 = vld [vmem:[#allocation9 + $0x50] sm:$0xff]
    %v9231 = vld [vmem:[#allocation9 + $0x58] sm:$0xff]
    %v9232 = vld [vmem:[#allocation9 + $0x60] sm:$0xff]
    %v9233 = vld [vmem:[#allocation9 + $0x68] sm:$0xff]
    %v9234 = vld [vmem:[#allocation9 + $0x70] sm:$0xff]
    %v9235 = vld [vmem:[#allocation9 + $0x78] sm:$0xff]
    %v9236 = vld [vmem:[#allocation9 + $0x80] sm:$0xff]
    %v9237 = vld [vmem:[#allocation9 + $0x88] sm:$0xff]
    %v9238 = vld [vmem:[#allocation9 + $0x90] sm:$0xff]
    %v9239 = vld [vmem:[#allocation9 + $0x98] sm:$0xff]
    %v9240 = vld [vmem:[#allocation9 + $0xa0] sm:$0xff]
    %v9241 = vld [vmem:[#allocation9 + $0xa8] sm:$0xff]
    %v9242 = vld [vmem:[#allocation9 + $0xb0] sm:$0xff]
    %v9243 = vld [vmem:[#allocation9 + $0xb8] sm:$0xff]
    %v9244 = vld [vmem:[#allocation9 + $0xc0] sm:$0xff]
    %v9245 = vld [vmem:[#allocation9 + $0xc8] sm:$0xff]
    %v9246 = vld [vmem:[#allocation9 + $0xd0] sm:$0xff]
    %v9247 = vld [vmem:[#allocation9 + $0xd8] sm:$0xff]
    %v9248 = vld [vmem:[#allocation9 + $0xe0] sm:$0xff]
    %v9249 = vld [vmem:[#allocation9 + $0xe8] sm:$0xff]
    %v9250 = vld [vmem:[#allocation9 + $0xf0] sm:$0xff]
    %v9251 = vld [vmem:[#allocation9 + $0xf8] sm:$0xff]
    %v9284 = vunpack.c.l.b16 %v9220
    %v9285 = vunpack.c.h.b16 %v9220
    %v9286 = vunpack.c.l.b16 %v9221
    %v9287 = vunpack.c.h.b16 %v9221
    %v9288 = vunpack.c.l.b16 %v9222
    %v9289 = vunpack.c.h.b16 %v9222
    %v9290 = vunpack.c.l.b16 %v9223
    %v9291 = vunpack.c.h.b16 %v9223
    %v9292 = vunpack.c.l.b16 %v9224
    %v9293 = vunpack.c.h.b16 %v9224
    %v9294 = vunpack.c.l.b16 %v9225
    %v9295 = vunpack.c.h.b16 %v9225
    %v9296 = vunpack.c.l.b16 %v9226
    %v9297 = vunpack.c.h.b16 %v9226
    %v9298 = vunpack.c.l.b16 %v9227
    %v9299 = vunpack.c.h.b16 %v9227
    %v9300 = vunpack.c.l.b16 %v9228
    %v9301 = vunpack.c.h.b16 %v9228
    %v9302 = vunpack.c.l.b16 %v9229
    %v9303 = vunpack.c.h.b16 %v9229
    %v9304 = vunpack.c.l.b16 %v9230
    %v9305 = vunpack.c.h.b16 %v9230
    %v9306 = vunpack.c.l.b16 %v9231
    %v9307 = vunpack.c.h.b16 %v9231
    %v9308 = vunpack.c.l.b16 %v9232
    %v9309 = vunpack.c.h.b16 %v9232
    %v9310 = vunpack.c.l.b16 %v9233
    %v9311 = vunpack.c.h.b16 %v9233
    %v9312 = vunpack.c.l.b16 %v9234
    %v9313 = vunpack.c.h.b16 %v9234
    %v9314 = vunpack.c.l.b16 %v9235
    %v9315 = vunpack.c.h.b16 %v9235
    %v9316 = vunpack.c.l.b16 %v9236
    %v9317 = vunpack.c.h.b16 %v9236
    %v9318 = vunpack.c.l.b16 %v9237
    %v9319 = vunpack.c.h.b16 %v9237
    %v9320 = vunpack.c.l.b16 %v9238
    %v9321 = vunpack.c.h.b16 %v9238
    %v9322 = vunpack.c.l.b16 %v9239
    %v9323 = vunpack.c.h.b16 %v9239
    %v9324 = vunpack.c.l.b16 %v9240
    %v9325 = vunpack.c.h.b16 %v9240
    %v9326 = vunpack.c.l.b16 %v9241
    %v9327 = vunpack.c.h.b16 %v9241
    %v9328 = vunpack.c.l.b16 %v9242
    %v9329 = vunpack.c.h.b16 %v9242
    %v9330 = vunpack.c.l.b16 %v9243
    %v9331 = vunpack.c.h.b16 %v9243
    %v9332 = vunpack.c.l.b16 %v9244
    %v9333 = vunpack.c.h.b16 %v9244
    %v9334 = vunpack.c.l.b16 %v9245
    %v9335 = vunpack.c.h.b16 %v9245
    %v9336 = vunpack.c.l.b16 %v9246
    %v9337 = vunpack.c.h.b16 %v9246
    %v9338 = vunpack.c.l.b16 %v9247
    %v9339 = vunpack.c.h.b16 %v9247
    %v9340 = vunpack.c.l.b16 %v9248
    %v9341 = vunpack.c.h.b16 %v9248
    %v9342 = vunpack.c.l.b16 %v9249
    %v9343 = vunpack.c.h.b16 %v9249
    %v9344 = vunpack.c.l.b16 %v9250
    %v9345 = vunpack.c.h.b16 %v9250
    %v9346 = vunpack.c.l.b16 %v9251
    %v9347 = vunpack.c.h.b16 %v9251
    %v9348 = vpack.c.b16 %v9288, %v9284
    %v9349 = vpack.c.b16 %v9289, %v9285
    %v9350 = vpack.c.b16 %v9290, %v9286
    %v9351 = vpack.c.b16 %v9291, %v9287
    %v9352 = vpack.c.b16 %v9296, %v9292
    %v9353 = vpack.c.b16 %v9297, %v9293
    %v9354 = vpack.c.b16 %v9298, %v9294
    %v9355 = vpack.c.b16 %v9299, %v9295
    %v9356 = vpack.c.b16 %v9304, %v9300
    %v9357 = vpack.c.b16 %v9305, %v9301
    %v9358 = vpack.c.b16 %v9306, %v9302
    %v9359 = vpack.c.b16 %v9307, %v9303
    %v9360 = vpack.c.b16 %v9312, %v9308
    %v9361 = vpack.c.b16 %v9313, %v9309
    %v9362 = vpack.c.b16 %v9314, %v9310
    %v9363 = vpack.c.b16 %v9315, %v9311
    %v9364 = vpack.c.b16 %v9320, %v9316
    %v9365 = vpack.c.b16 %v9321, %v9317
    %v9366 = vpack.c.b16 %v9322, %v9318
    %v9367 = vpack.c.b16 %v9323, %v9319
    %v9368 = vpack.c.b16 %v9328, %v9324
    %v9369 = vpack.c.b16 %v9329, %v9325
    %v9370 = vpack.c.b16 %v9330, %v9326
    %v9371 = vpack.c.b16 %v9331, %v9327
    %v9372 = vpack.c.b16 %v9336, %v9332
    %v9373 = vpack.c.b16 %v9337, %v9333
    %v9374 = vpack.c.b16 %v9338, %v9334
    %v9375 = vpack.c.b16 %v9339, %v9335
    %v9376 = vpack.c.b16 %v9344, %v9340
    %v9377 = vpack.c.b16 %v9345, %v9341
    %v9378 = vpack.c.b16 %v9346, %v9342
    %v9379 = vpack.c.b16 %v9347, %v9343
    %9412 = vmatprep.subr.bf16.mxu0 %v9349
    %9413 = vmatpush1.bf16.msra.mxu0 %v9348
    %9414 = vmatprep.subr.bf16.mxu0 %v9353
    %9415 = vmatpush1.bf16.msra.mxu0 %v9352
    %9416 = vmatprep.subr.bf16.mxu0 %v9357
    %9417 = vmatpush1.bf16.msra.mxu0 %v9356
    %9418 = vmatprep.subr.bf16.mxu0 %v9361
    %9419 = vmatpush1.bf16.msra.mxu0 %v9360
    %9420 = vmatprep.subr.bf16.mxu0 %v9365
    %9421 = vmatpush1.bf16.msra.mxu0 %v9364
    %9422 = vmatprep.subr.bf16.mxu0 %v9369
    %9423 = vmatpush1.bf16.msra.mxu0 %v9368
    %9424 = vmatprep.subr.bf16.mxu0 %v9373
    %9425 = vmatpush1.bf16.msra.mxu0 %v9372
    %9426 = vmatprep.subr.bf16.mxu0 %v9377
    %9427 = vmatpush1.bf16.msra.mxu0 %v9376
    %9428 = vmatprep.subr.bf16.mxu0 0
    %9429 = vmatpush1.bf16.msra.mxu0 0
    %9430 = vmatprep.subr.bf16.mxu0 0
    %9431 = vmatpush1.bf16.msra.mxu0 0
    %9432 = vmatprep.subr.bf16.mxu0 0
    %9433 = vmatpush1.bf16.msra.mxu0 0
    %9434 = vmatprep.subr.bf16.mxu0 0
    %9435 = vmatpush1.bf16.msra.mxu0 0
    %9436 = vmatprep.subr.bf16.mxu0 0
    %9437 = vmatpush1.bf16.msra.mxu0 0
    %9438 = vmatprep.subr.bf16.mxu0 0
    %9439 = vmatpush1.bf16.msra.mxu0 0
    %9440 = vmatprep.subr.bf16.mxu0 0
    %9441 = vmatpush1.bf16.msra.mxu0 0
    %9442 = vmatprep.subr.bf16.mxu0 0
    %9443 = vmatpush1.bf16.msra.mxu0 0
    %9444 = vmatprep.mubr.bf16.mxu0 0
    %9445 = vmatmul.mubr.bf16.gmra.mrb[0].mxu0 %v9219
    %v9446 = vpop.f32.mrb[0].mxu0
    %v9447 = vadd.f32 0.0, %v9446
    %v9448 = vpop.f32.mrb[0].mxu0
    %v9449 = vadd.f32 0.0, %v9448
    %v9450 = vpop.f32.mrb[0].mxu0
    %v9451 = vadd.f32 0.0, %v9450
    %v9452 = vpop.f32.mrb[0].mxu0
    %v9453 = vadd.f32 0.0, %v9452
    %9454 = vdwg.mxu0
    %9455 = vmatprep.subr.bf16.mxu0 %v9351
    %9456 = vmatpush1.bf16.msra.mxu0 %v9350
    %9457 = vmatprep.subr.bf16.mxu0 %v9355
    %9458 = vmatpush1.bf16.msra.mxu0 %v9354
    %9459 = vmatprep.subr.bf16.mxu0 %v9359
    %9460 = vmatpush1.bf16.msra.mxu0 %v9358
    %9461 = vmatprep.subr.bf16.mxu0 %v9363
    %9462 = vmatpush1.bf16.msra.mxu0 %v9362
    %9463 = vmatprep.subr.bf16.mxu0 %v9367
    %9464 = vmatpush1.bf16.msra.mxu0 %v9366
    %9465 = vmatprep.subr.bf16.mxu0 %v9371
    %9466 = vmatpush1.bf16.msra.mxu0 %v9370
    %9467 = vmatprep.subr.bf16.mxu0 %v9375
    %9468 = vmatpush1.bf16.msra.mxu0 %v9374
    %9469 = vmatprep.subr.bf16.mxu0 %v9379
    %9470 = vmatpush1.bf16.msra.mxu0 %v9378
    %9471 = vmatprep.subr.bf16.mxu0 0
    %9472 = vmatpush1.bf16.msra.mxu0 0
    %9473 = vmatprep.subr.bf16.mxu0 0
    %9474 = vmatpush1.bf16.msra.mxu0 0
    %9475 = vmatprep.subr.bf16.mxu0 0
    %9476 = vmatpush1.bf16.msra.mxu0 0
    %9477 = vmatprep.subr.bf16.mxu0 0
    %9478 = vmatpush1.bf16.msra.mxu0 0
    %9479 = vmatprep.subr.bf16.mxu0 0
    %9480 = vmatpush1.bf16.msra.mxu0 0
    %9481 = vmatprep.subr.bf16.mxu0 0
    %9482 = vmatpush1.bf16.msra.mxu0 0
    %9483 = vmatprep.subr.bf16.mxu0 0
    %9484 = vmatpush1.bf16.msra.mxu0 0
    %9485 = vmatprep.subr.bf16.mxu0 0
    %9486 = vmatpush1.bf16.msra.mxu0 0
    %9487 = vmatprep.mubr.bf16.mxu0 0
    %9488 = vmatmul.mubr.bf16.gmra.mrb[0].mxu0 %v9219
    %v9489 = vpop.f32.mrb[0].mxu0
    %v9490 = vadd.f32 0.0, %v9489
    %v9491 = vpop.f32.mrb[0].mxu0
    %v9492 = vadd.f32 0.0, %v9491
    %v9493 = vpop.f32.mrb[0].mxu0
    %v9494 = vadd.f32 0.0, %v9493
    %v9495 = vpop.f32.mrb[0].mxu0
    %v9496 = vadd.f32 0.0, %v9495
    %9497 = vdwg.mxu0
    %v9500 = vunpack.c.l.b16 %v9181
    %v9501 = vunpack.c.l.b16 %v9182
    %v9502 = vpack.c.b16 %v9501, %v9500
    %v9536 = vunpack.c.l.b16 %v9187
    %v9537 = vunpack.c.h.b16 %v9187
    %v9538 = vunpack.c.l.b16 %v9188
    %v9539 = vunpack.c.h.b16 %v9188
    %v9540 = vunpack.c.l.b16 %v9189
    %v9541 = vunpack.c.h.b16 %v9189
    %v9542 = vunpack.c.l.b16 %v9190
    %v9543 = vunpack.c.h.b16 %v9190
    %v9544 = vunpack.c.l.b16 %v9191
    %v9545 = vunpack.c.h.b16 %v9191
    %v9546 = vunpack.c.l.b16 %v9192
    %v9547 = vunpack.c.h.b16 %v9192
    %v9548 = vunpack.c.l.b16 %v9193
    %v9549 = vunpack.c.h.b16 %v9193
    %v9550 = vunpack.c.l.b16 %v9194
    %v9551 = vunpack.c.h.b16 %v9194
    %v9552 = vunpack.c.l.b16 %v9195
    %v9553 = vunpack.c.h.b16 %v9195
    %v9554 = vunpack.c.l.b16 %v9196
    %v9555 = vunpack.c.h.b16 %v9196
    %v9556 = vunpack.c.l.b16 %v9197
    %v9557 = vunpack.c.h.b16 %v9197
    %v9558 = vunpack.c.l.b16 %v9198
    %v9559 = vunpack.c.h.b16 %v9198
    %v9560 = vunpack.c.l.b16 %v9199
    %v9561 = vunpack.c.h.b16 %v9199
    %v9562 = vunpack.c.l.b16 %v9200
    %v9563 = vunpack.c.h.b16 %v9200
    %v9564 = vunpack.c.l.b16 %v9201
    %v9565 = vunpack.c.h.b16 %v9201
    %v9566 = vunpack.c.l.b16 %v9202
    %v9567 = vunpack.c.h.b16 %v9202
    %v9568 = vunpack.c.l.b16 %v9203
    %v9569 = vunpack.c.h.b16 %v9203
    %v9570 = vunpack.c.l.b16 %v9204
    %v9571 = vunpack.c.h.b16 %v9204
    %v9572 = vunpack.c.l.b16 %v9205
    %v9573 = vunpack.c.h.b16 %v9205
    %v9574 = vunpack.c.l.b16 %v9206
    %v9575 = vunpack.c.h.b16 %v9206
    %v9576 = vunpack.c.l.b16 %v9207
    %v9577 = vunpack.c.h.b16 %v9207
    %v9578 = vunpack.c.l.b16 %v9208
    %v9579 = vunpack.c.h.b16 %v9208
    %v9580 = vunpack.c.l.b16 %v9209
    %v9581 = vunpack.c.h.b16 %v9209
    %v9582 = vunpack.c.l.b16 %v9210
    %v9583 = vunpack.c.h.b16 %v9210
    %v9584 = vunpack.c.l.b16 %v9211
    %v9585 = vunpack.c.h.b16 %v9211
    %v9586 = vunpack.c.l.b16 %v9212
    %v9587 = vunpack.c.h.b16 %v9212
    %v9588 = vunpack.c.l.b16 %v9213
    %v9589 = vunpack.c.h.b16 %v9213
    %v9590 = vunpack.c.l.b16 %v9214
    %v9591 = vunpack.c.h.b16 %v9214
    %v9592 = vunpack.c.l.b16 %v9215
    %v9593 = vunpack.c.h.b16 %v9215
    %v9594 = vunpack.c.l.b16 %v9216
    %v9595 = vunpack.c.h.b16 %v9216
    %v9596 = vunpack.c.l.b16 %v9217
    %v9597 = vunpack.c.h.b16 %v9217
    %v9598 = vunpack.c.l.b16 %v9218
    %v9599 = vunpack.c.h.b16 %v9218
    %v9600 = vpack.c.b16 %v9540, %v9536
    %v9601 = vpack.c.b16 %v9541, %v9537
    %v9602 = vpack.c.b16 %v9542, %v9538
    %v9603 = vpack.c.b16 %v9543, %v9539
    %v9604 = vpack.c.b16 %v9548, %v9544
    %v9605 = vpack.c.b16 %v9549, %v9545
    %v9606 = vpack.c.b16 %v9550, %v9546
    %v9607 = vpack.c.b16 %v9551, %v9547
    %v9608 = vpack.c.b16 %v9556, %v9552
    %v9609 = vpack.c.b16 %v9557, %v9553
    %v9610 = vpack.c.b16 %v9558, %v9554
    %v9611 = vpack.c.b16 %v9559, %v9555
    %v9612 = vpack.c.b16 %v9564, %v9560
    %v9613 = vpack.c.b16 %v9565, %v9561
    %v9614 = vpack.c.b16 %v9566, %v9562
    %v9615 = vpack.c.b16 %v9567, %v9563
    %v9616 = vpack.c.b16 %v9572, %v9568
    %v9617 = vpack.c.b16 %v9573, %v9569
    %v9618 = vpack.c.b16 %v9574, %v9570
    %v9619 = vpack.c.b16 %v9575, %v9571
    %v9620 = vpack.c.b16 %v9580, %v9576
    %v9621 = vpack.c.b16 %v9581, %v9577
    %v9622 = vpack.c.b16 %v9582, %v9578
    %v9623 = vpack.c.b16 %v9583, %v9579
    %v9624 = vpack.c.b16 %v9588, %v9584
    %v9625 = vpack.c.b16 %v9589, %v9585
    %v9626 = vpack.c.b16 %v9590, %v9586
    %v9627 = vpack.c.b16 %v9591, %v9587
    %v9628 = vpack.c.b16 %v9596, %v9592
    %v9629 = vpack.c.b16 %v9597, %v9593
    %v9630 = vpack.c.b16 %v9598, %v9594
    %v9631 = vpack.c.b16 %v9599, %v9595
    %9664 = vmatprep.subr.bf16.mxu0 %v9601
    %9665 = vmatpush1.bf16.msra.mxu0 %v9600
    %9666 = vmatprep.subr.bf16.mxu0 %v9605
    %9667 = vmatpush1.bf16.msra.mxu0 %v9604
    %9668 = vmatprep.subr.bf16.mxu0 %v9609
    %9669 = vmatpush1.bf16.msra.mxu0 %v9608
    %9670 = vmatprep.subr.bf16.mxu0 %v9613
    %9671 = vmatpush1.bf16.msra.mxu0 %v9612
    %9672 = vmatprep.subr.bf16.mxu0 %v9617
    %9673 = vmatpush1.bf16.msra.mxu0 %v9616
    %9674 = vmatprep.subr.bf16.mxu0 %v9621
    %9675 = vmatpush1.bf16.msra.mxu0 %v9620
    %9676 = vmatprep.subr.bf16.mxu0 %v9625
    %9677 = vmatpush1.bf16.msra.mxu0 %v9624
    %9678 = vmatprep.subr.bf16.mxu0 %v9629
    %9679 = vmatpush1.bf16.msra.mxu0 %v9628
    %9680 = vmatprep.subr.bf16.mxu0 0
    %9681 = vmatpush1.bf16.msra.mxu0 0
    %9682 = vmatprep.subr.bf16.mxu0 0
    %9683 = vmatpush1.bf16.msra.mxu0 0
    %9684 = vmatprep.subr.bf16.mxu0 0
    %9685 = vmatpush1.bf16.msra.mxu0 0
    %9686 = vmatprep.subr.bf16.mxu0 0
    %9687 = vmatpush1.bf16.msra.mxu0 0
    %9688 = vmatprep.subr.bf16.mxu0 0
    %9689 = vmatpush1.bf16.msra.mxu0 0
    %9690 = vmatprep.subr.bf16.mxu0 0
    %9691 = vmatpush1.bf16.msra.mxu0 0
    %9692 = vmatprep.subr.bf16.mxu0 0
    %9693 = vmatpush1.bf16.msra.mxu0 0
    %9694 = vmatprep.subr.bf16.mxu0 0
    %9695 = vmatpush1.bf16.msra.mxu0 0
    %9696 = vmatprep.mubr.bf16.mxu0 0
    %9697 = vmatmul.mubr.bf16.gmra.mrb[0].mxu0 %v9502
    %v9698 = vpop.f32.mrb[0].mxu0
    %v9699 = vadd.f32 %v9447, %v9698
    %v9700 = vpop.f32.mrb[0].mxu0
    %v9701 = vadd.f32 %v9449, %v9700
    %v9702 = vpop.f32.mrb[0].mxu0
    %v9703 = vadd.f32 %v9451, %v9702
    %v9704 = vpop.f32.mrb[0].mxu0
    %v9705 = vadd.f32 %v9453, %v9704
    %9706 = vdwg.mxu0
    %9707 = vmatprep.subr.bf16.mxu0 %v9603
    %9708 = vmatpush1.bf16.msra.mxu0 %v9602
    %9709 = vmatprep.subr.bf16.mxu0 %v9607
    %9710 = vmatpush1.bf16.msra.mxu0 %v9606
    %9711 = vmatprep.subr.bf16.mxu0 %v9611
    %9712 = vmatpush1.bf16.msra.mxu0 %v9610
    %9713 = vmatprep.subr.bf16.mxu0 %v9615
    %9714 = vmatpush1.bf16.msra.mxu0 %v9614
    %9715 = vmatprep.subr.bf16.mxu0 %v9619
    %9716 = vmatpush1.bf16.msra.mxu0 %v9618
    %9717 = vmatprep.subr.bf16.mxu0 %v9623
    %9718 = vmatpush1.bf16.msra.mxu0 %v9622
    %9719 = vmatprep.subr.bf16.mxu0 %v9627
    %9720 = vmatpush1.bf16.msra.mxu0 %v9626
    %9721 = vmatprep.subr.bf16.mxu0 %v9631
    %9722 = vmatpush1.bf16.msra.mxu0 %v9630
    %9723 = vmatprep.subr.bf16.mxu0 0
    %9724 = vmatpush1.bf16.msra.mxu0 0
    %9725 = vmatprep.subr.bf16.mxu0 0
    %9726 = vmatpush1.bf16.msra.mxu0 0
    %9727 = vmatprep.subr.bf16.mxu0 0
    %9728 = vmatpush1.bf16.msra.mxu0 0
    %9729 = vmatprep.subr.bf16.mxu0 0
    %9730 = vmatpush1.bf16.msra.mxu0 0
    %9731 = vmatprep.subr.bf16.mxu0 0
    %9732 = vmatpush1.bf16.msra.mxu0 0
    %9733 = vmatprep.subr.bf16.mxu0 0
    %9734 = vmatpush1.bf16.msra.mxu0 0
    %9735 = vmatprep.subr.bf16.mxu0 0
    %9736 = vmatpush1.bf16.msra.mxu0 0
    %9737 = vmatprep.subr.bf16.mxu0 0
    %9738 = vmatpush1.bf16.msra.mxu0 0
    %9739 = vmatprep.mubr.bf16.mxu0 0
    %9740 = vmatmul.mubr.bf16.gmra.mrb[0].mxu0 %v9502
    %v9741 = vpop.f32.mrb[0].mxu0
    %v9742 = vadd.f32 %v9490, %v9741
    %v9743 = vpop.f32.mrb[0].mxu0
    %v9744 = vadd.f32 %v9492, %v9743
    %v9745 = vpop.f32.mrb[0].mxu0
    %v9746 = vadd.f32 %v9494, %v9745
    %v9747 = vpop.f32.mrb[0].mxu0
    %v9748 = vadd.f32 %v9496, %v9747
    %9749 = vdwg.mxu0
    %v9750 = vld [vmem:[%s3] sm:$0xf]
    %v9752 = vlaneseq
    %v9753 = vshrl.u32 %v9752, 7
    %v9754 = vsub.s32 0, %v9753
    %v9755 = vrot.slane %v9750, %v9754
    %v9756 = vlaneseq
    %v9757 = vshrl.u32 %v9756, 7
    %v9758 = vsub.s32 1, %v9757
    %v9759 = vrot.slane %v9750, %v9758
    %v9760 = vlaneseq
    %v9761 = vshrl.u32 %v9760, 7
    %v9762 = vsub.s32 2, %v9761
    %v9763 = vrot.slane %v9750, %v9762
    %v9764 = vlaneseq
    %v9765 = vshrl.u32 %v9764, 7
    %v9766 = vsub.s32 3, %v9765
    %v9767 = vrot.slane %v9750, %v9766
    %v9772 = vadd.f32 %v9699, %v9755
    %v9773 = vadd.f32 %v9701, %v9759
    %v9774 = vadd.f32 %v9742, %v9763
    %v9775 = vadd.f32 %v9744, %v9767
    %v9776 = vadd.f32 %v9703, %v9755
    %v9777 = vadd.f32 %v9705, %v9759
    %v9778 = vadd.f32 %v9746, %v9763
    %v9779 = vadd.f32 %v9748, %v9767
    %v9780 = vxor.u32 %v9772, 2147483648
    %v9781 = vxor.u32 %v9776, 2147483648
    %v9782 = vmul.f32 %v9780, 1.442695
    %v9783 = vpow.pop %v9782
    %v9784 = vmul.f32 %v9781, 1.442695
    %v9785 = vpow.pop %v9784
    %v9786 = vadd.f32 %v9783, 1.0
    %v9787 = vadd.f32 %v9785, 1.0
    %v9788 = vrcp.pop %v9786
    %v9789 = vmul.f32 1.0, %v9788
    %v9790 = vrcp.pop %v9787
    %v9791 = vmul.f32 1.0, %v9790
    %v9792 = vxor.u32 %v9773, 2147483648
    %v9793 = vxor.u32 %v9777, 2147483648
    %v9794 = vmul.f32 %v9792, 1.442695
    %v9795 = vpow.pop %v9794
    %v9796 = vmul.f32 %v9793, 1.442695
    %v9797 = vpow.pop %v9796
    %v9798 = vadd.f32 %v9795, 1.0
    %v9799 = vadd.f32 %v9797, 1.0
    %v9800 = vrcp.pop %v9798
    %v9801 = vmul.f32 1.0, %v9800
    %v9802 = vrcp.pop %v9799
    %v9803 = vmul.f32 1.0, %v9802
    %v9804 = vtanh.pop %v9774
    %v9805 = vtanh.pop %v9778
    %v9806 = vxor.u32 %v9775, 2147483648
    %v9807 = vxor.u32 %v9779, 2147483648
    %v9808 = vmul.f32 %v9806, 1.442695
    %v9809 = vpow.pop %v9808
    %v9810 = vmul.f32 %v9807, 1.442695
    %v9811 = vpow.pop %v9810
    %v9812 = vadd.f32 %v9809, 1.0
    %v9813 = vadd.f32 %v9811, 1.0
    %v9814 = vrcp.pop %v9812
    %v9815 = vmul.f32 1.0, %v9814
    %v9816 = vrcp.pop %v9813
    %v9817 = vmul.f32 1.0, %v9816
    %v9818 = vmul.f32 %v9801, %v9185
    %v9819 = vmul.f32 %v9803, %v9186
    %v9820 = vmul.f32 %v9789, %v9804
    %v9821 = vmul.f32 %v9791, %v9805
    %v9822 = vadd.f32 %v9818, %v9820
    %v9823 = vadd.f32 %v9819, %v9821
    %v9824 = vtanh.pop %v9822
    %v9825 = vtanh.pop %v9823
    %v9826 = vmul.f32 %v9815, %v9824
    %v9827 = vmul.f32 %v9817, %v9825
    %9828 = vst [vmem:[#allocation2] sm:$0xff] %v9826
    %9829 = vst [vmem:[#allocation2 + $0x8] sm:$0xff] %v9827
    %9830 = vst [vmem:[#allocation3] sm:$0xff] %v9822
    %9831 = vst [vmem:[#allocation3 + $0x8] sm:$0xff] %v9823
    %v9832 = vpack.c.bf16 %v9827, %v9826
    %v9833 = vld [vmem:[%s759] sm:$0xff]
    %v9834 = vld [vmem:[%s759 + $0x8] sm:$0xff]
    %v9835 = vld [vmem:[%s762] sm:$0xff]
    %v9836 = vld [vmem:[%s762 + $0x8] sm:$0xff]
    %v9837 = vld [vmem:[#allocation10] sm:$0xff]
    %v9838 = vld [vmem:[#allocation10 + $0x8] sm:$0xff]
    %v9839 = vld [vmem:[#allocation10 + $0x10] sm:$0xff]
    %v9840 = vld [vmem:[#allocation10 + $0x18] sm:$0xff]
    %v9841 = vld [vmem:[#allocation10 + $0x20] sm:$0xff]
    %v9842 = vld [vmem:[#allocation10 + $0x28] sm:$0xff]
    %v9843 = vld [vmem:[#allocation10 + $0x30] sm:$0xff]
    %v9844 = vld [vmem:[#allocation10 + $0x38] sm:$0xff]
    %v9845 = vld [vmem:[#allocation10 + $0x40] sm:$0xff]
    %v9846 = vld [vmem:[#allocation10 + $0x48] sm:$0xff]
    %v9847 = vld [vmem:[#allocation10 + $0x50] sm:$0xff]
    %v9848 = vld [vmem:[#allocation10 + $0x58] sm:$0xff]
    %v9849 = vld [vmem:[#allocation10 + $0x60] sm:$0xff]
    %v9850 = vld [vmem:[#allocation10 + $0x68] sm:$0xff]
    %v9851 = vld [vmem:[#allocation10 + $0x70] sm:$0xff]
    %v9852 = vld [vmem:[#allocation10 + $0x78] sm:$0xff]
    %v9853 = vld [vmem:[#allocation10 + $0x80] sm:$0xff]
    %v9854 = vld [vmem:[#allocation10 + $0x88] sm:$0xff]
    %v9855 = vld [vmem:[#allocation10 + $0x90] sm:$0xff]
    %v9856 = vld [vmem:[#allocation10 + $0x98] sm:$0xff]
    %v9857 = vld [vmem:[#allocation10 + $0xa0] sm:$0xff]
    %v9858 = vld [vmem:[#allocation10 + $0xa8] sm:$0xff]
    %v9859 = vld [vmem:[#allocation10 + $0xb0] sm:$0xff]
    %v9860 = vld [vmem:[#allocation10 + $0xb8] sm:$0xff]
    %v9861 = vld [vmem:[#allocation10 + $0xc0] sm:$0xff]
    %v9862 = vld [vmem:[#allocation10 + $0xc8] sm:$0xff]
    %v9863 = vld [vmem:[#allocation10 + $0xd0] sm:$0xff]
    %v9864 = vld [vmem:[#allocation10 + $0xd8] sm:$0xff]
    %v9865 = vld [vmem:[#allocation10 + $0xe0] sm:$0xff]
    %v9866 = vld [vmem:[#allocation10 + $0xe8] sm:$0xff]
    %v9867 = vld [vmem:[#allocation10 + $0xf0] sm:$0xff]
    %v9868 = vld [vmem:[#allocation10 + $0xf8] sm:$0xff]
    %v9869 = vpack.c.bf16 %v9834, %v9833
    %v9870 = vld [vmem:[#allocation12] sm:$0xff]
    %v9871 = vld [vmem:[#allocation12 + $0x8] sm:$0xff]
    %v9872 = vld [vmem:[#allocation12 + $0x10] sm:$0xff]
    %v9873 = vld [vmem:[#allocation12 + $0x18] sm:$0xff]
    %v9874 = vld [vmem:[#allocation12 + $0x20] sm:$0xff]
    %v9875 = vld [vmem:[#allocation12 + $0x28] sm:$0xff]
    %v9876 = vld [vmem:[#allocation12 + $0x30] sm:$0xff]
    %v9877 = vld [vmem:[#allocation12 + $0x38] sm:$0xff]
    %v9878 = vld [vmem:[#allocation12 + $0x40] sm:$0xff]
    %v9879 = vld [vmem:[#allocation12 + $0x48] sm:$0xff]
    %v9880 = vld [vmem:[#allocation12 + $0x50] sm:$0xff]
    %v9881 = vld [vmem:[#allocation12 + $0x58] sm:$0xff]
    %v9882 = vld [vmem:[#allocation12 + $0x60] sm:$0xff]
    %v9883 = vld [vmem:[#allocation12 + $0x68] sm:$0xff]
    %v9884 = vld [vmem:[#allocation12 + $0x70] sm:$0xff]
    %v9885 = vld [vmem:[#allocation12 + $0x78] sm:$0xff]
    %v9886 = vld [vmem:[#allocation12 + $0x80] sm:$0xff]
    %v9887 = vld [vmem:[#allocation12 + $0x88] sm:$0xff]
    %v9888 = vld [vmem:[#allocation12 + $0x90] sm:$0xff]
    %v9889 = vld [vmem:[#allocation12 + $0x98] sm:$0xff]
    %v9890 = vld [vmem:[#allocation12 + $0xa0] sm:$0xff]
    %v9891 = vld [vmem:[#allocation12 + $0xa8] sm:$0xff]
    %v9892 = vld [vmem:[#allocation12 + $0xb0] sm:$0xff]
    %v9893 = vld [vmem:[#allocation12 + $0xb8] sm:$0xff]
    %v9894 = vld [vmem:[#allocation12 + $0xc0] sm:$0xff]
    %v9895 = vld [vmem:[#allocation12 + $0xc8] sm:$0xff]
    %v9896 = vld [vmem:[#allocation12 + $0xd0] sm:$0xff]
    %v9897 = vld [vmem:[#allocation12 + $0xd8] sm:$0xff]
    %v9898 = vld [vmem:[#allocation12 + $0xe0] sm:$0xff]
    %v9899 = vld [vmem:[#allocation12 + $0xe8] sm:$0xff]
    %v9900 = vld [vmem:[#allocation12 + $0xf0] sm:$0xff]
    %v9901 = vld [vmem:[#allocation12 + $0xf8] sm:$0xff]
    %v9934 = vunpack.c.l.b16 %v9870
    %v9935 = vunpack.c.h.b16 %v9870
    %v9936 = vunpack.c.l.b16 %v9871
    %v9937 = vunpack.c.h.b16 %v9871
    %v9938 = vunpack.c.l.b16 %v9872
    %v9939 = vunpack.c.h.b16 %v9872
    %v9940 = vunpack.c.l.b16 %v9873
    %v9941 = vunpack.c.h.b16 %v9873
    %v9942 = vunpack.c.l.b16 %v9874
    %v9943 = vunpack.c.h.b16 %v9874
    %v9944 = vunpack.c.l.b16 %v9875
    %v9945 = vunpack.c.h.b16 %v9875
    %v9946 = vunpack.c.l.b16 %v9876
    %v9947 = vunpack.c.h.b16 %v9876
    %v9948 = vunpack.c.l.b16 %v9877
    %v9949 = vunpack.c.h.b16 %v9877
    %v9950 = vunpack.c.l.b16 %v9878
    %v9951 = vunpack.c.h.b16 %v9878
    %v9952 = vunpack.c.l.b16 %v9879
    %v9953 = vunpack.c.h.b16 %v9879
    %v9954 = vunpack.c.l.b16 %v9880
    %v9955 = vunpack.c.h.b16 %v9880
    %v9956 = vunpack.c.l.b16 %v9881
    %v9957 = vunpack.c.h.b16 %v9881
    %v9958 = vunpack.c.l.b16 %v9882
    %v9959 = vunpack.c.h.b16 %v9882
    %v9960 = vunpack.c.l.b16 %v9883
    %v9961 = vunpack.c.h.b16 %v9883
    %v9962 = vunpack.c.l.b16 %v9884
    %v9963 = vunpack.c.h.b16 %v9884
    %v9964 = vunpack.c.l.b16 %v9885
    %v9965 = vunpack.c.h.b16 %v9885
    %v9966 = vunpack.c.l.b16 %v9886
    %v9967 = vunpack.c.h.b16 %v9886
    %v9968 = vunpack.c.l.b16 %v9887
    %v9969 = vunpack.c.h.b16 %v9887
    %v9970 = vunpack.c.l.b16 %v9888
    %v9971 = vunpack.c.h.b16 %v9888
    %v9972 = vunpack.c.l.b16 %v9889
    %v9973 = vunpack.c.h.b16 %v9889
    %v9974 = vunpack.c.l.b16 %v9890
    %v9975 = vunpack.c.h.b16 %v9890
    %v9976 = vunpack.c.l.b16 %v9891
    %v9977 = vunpack.c.h.b16 %v9891
    %v9978 = vunpack.c.l.b16 %v9892
    %v9979 = vunpack.c.h.b16 %v9892
    %v9980 = vunpack.c.l.b16 %v9893
    %v9981 = vunpack.c.h.b16 %v9893
    %v9982 = vunpack.c.l.b16 %v9894
    %v9983 = vunpack.c.h.b16 %v9894
    %v9984 = vunpack.c.l.b16 %v9895
    %v9985 = vunpack.c.h.b16 %v9895
    %v9986 = vunpack.c.l.b16 %v9896
    %v9987 = vunpack.c.h.b16 %v9896
    %v9988 = vunpack.c.l.b16 %v9897
    %v9989 = vunpack.c.h.b16 %v9897
    %v9990 = vunpack.c.l.b16 %v9898
    %v9991 = vunpack.c.h.b16 %v9898
    %v9992 = vunpack.c.l.b16 %v9899
    %v9993 = vunpack.c.h.b16 %v9899
    %v9994 = vunpack.c.l.b16 %v9900
    %v9995 = vunpack.c.h.b16 %v9900
    %v9996 = vunpack.c.l.b16 %v9901
    %v9997 = vunpack.c.h.b16 %v9901
    %v9998 = vpack.c.b16 %v9938, %v9934
    %v9999 = vpack.c.b16 %v9939, %v9935
    %v10000 = vpack.c.b16 %v9940, %v9936
    %v10001 = vpack.c.b16 %v9941, %v9937
    %v10002 = vpack.c.b16 %v9946, %v9942
    %v10003 = vpack.c.b16 %v9947, %v9943
    %v10004 = vpack.c.b16 %v9948, %v9944
    %v10005 = vpack.c.b16 %v9949, %v9945
    %v10006 = vpack.c.b16 %v9954, %v9950
    %v10007 = vpack.c.b16 %v9955, %v9951
    %v10008 = vpack.c.b16 %v9956, %v9952
    %v10009 = vpack.c.b16 %v9957, %v9953
    %v10010 = vpack.c.b16 %v9962, %v9958
    %v10011 = vpack.c.b16 %v9963, %v9959
    %v10012 = vpack.c.b16 %v9964, %v9960
    %v10013 = vpack.c.b16 %v9965, %v9961
    %v10014 = vpack.c.b16 %v9970, %v9966
    %v10015 = vpack.c.b16 %v9971, %v9967
    %v10016 = vpack.c.b16 %v9972, %v9968
    %v10017 = vpack.c.b16 %v9973, %v9969
    %v10018 = vpack.c.b16 %v9978, %v9974
    %v10019 = vpack.c.b16 %v9979, %v9975
    %v10020 = vpack.c.b16 %v9980, %v9976
    %v10021 = vpack.c.b16 %v9981, %v9977
    %v10022 = vpack.c.b16 %v9986, %v9982
    %v10023 = vpack.c.b16 %v9987, %v9983
    %v10024 = vpack.c.b16 %v9988, %v9984
    %v10025 = vpack.c.b16 %v9989, %v9985
    %v10026 = vpack.c.b16 %v9994, %v9990
    %v10027 = vpack.c.b16 %v9995, %v9991
    %v10028 = vpack.c.b16 %v9996, %v9992
    %v10029 = vpack.c.b16 %v9997, %v9993
    %10062 = vmatprep.subr.bf16.mxu0 %v9999
    %10063 = vmatpush1.bf16.msra.mxu0 %v9998
    %10064 = vmatprep.subr.bf16.mxu0 %v10003
    %10065 = vmatpush1.bf16.msra.mxu0 %v10002
    %10066 = vmatprep.subr.bf16.mxu0 %v10007
    %10067 = vmatpush1.bf16.msra.mxu0 %v10006
    %10068 = vmatprep.subr.bf16.mxu0 %v10011
    %10069 = vmatpush1.bf16.msra.mxu0 %v10010
    %10070 = vmatprep.subr.bf16.mxu0 %v10015
    %10071 = vmatpush1.bf16.msra.mxu0 %v10014
    %10072 = vmatprep.subr.bf16.mxu0 %v10019
    %10073 = vmatpush1.bf16.msra.mxu0 %v10018
    %10074 = vmatprep.subr.bf16.mxu0 %v10023
    %10075 = vmatpush1.bf16.msra.mxu0 %v10022
    %10076 = vmatprep.subr.bf16.mxu0 %v10027
    %10077 = vmatpush1.bf16.msra.mxu0 %v10026
    %10078 = vmatprep.subr.bf16.mxu0 0
    %10079 = vmatpush1.bf16.msra.mxu0 0
    %10080 = vmatprep.subr.bf16.mxu0 0
    %10081 = vmatpush1.bf16.msra.mxu0 0
    %10082 = vmatprep.subr.bf16.mxu0 0
    %10083 = vmatpush1.bf16.msra.mxu0 0
    %10084 = vmatprep.subr.bf16.mxu0 0
    %10085 = vmatpush1.bf16.msra.mxu0 0
    %10086 = vmatprep.subr.bf16.mxu0 0
    %10087 = vmatpush1.bf16.msra.mxu0 0
    %10088 = vmatprep.subr.bf16.mxu0 0
    %10089 = vmatpush1.bf16.msra.mxu0 0
    %10090 = vmatprep.subr.bf16.mxu0 0
    %10091 = vmatpush1.bf16.msra.mxu0 0
    %10092 = vmatprep.subr.bf16.mxu0 0
    %10093 = vmatpush1.bf16.msra.mxu0 0
    %10094 = vmatprep.mubr.bf16.mxu0 0
    %10095 = vmatmul.mubr.bf16.gmra.mrb[0].mxu0 %v9869
    %v10096 = vpop.f32.mrb[0].mxu0
    %v10097 = vadd.f32 0.0, %v10096
    %v10098 = vpop.f32.mrb[0].mxu0
    %v10099 = vadd.f32 0.0, %v10098
    %v10100 = vpop.f32.mrb[0].mxu0
    %v10101 = vadd.f32 0.0, %v10100
    %v10102 = vpop.f32.mrb[0].mxu0
    %v10103 = vadd.f32 0.0, %v10102
    %10104 = vdwg.mxu0
    %10105 = vmatprep.subr.bf16.mxu0 %v10001
    %10106 = vmatpush1.bf16.msra.mxu0 %v10000
    %10107 = vmatprep.subr.bf16.mxu0 %v10005
    %10108 = vmatpush1.bf16.msra.mxu0 %v10004
    %10109 = vmatprep.subr.bf16.mxu0 %v10009
    %10110 = vmatpush1.bf16.msra.mxu0 %v10008
    %10111 = vmatprep.subr.bf16.mxu0 %v10013
    %10112 = vmatpush1.bf16.msra.mxu0 %v10012
    %10113 = vmatprep.subr.bf16.mxu0 %v10017
    %10114 = vmatpush1.bf16.msra.mxu0 %v10016
    %10115 = vmatprep.subr.bf16.mxu0 %v10021
    %10116 = vmatpush1.bf16.msra.mxu0 %v10020
    %10117 = vmatprep.subr.bf16.mxu0 %v10025
    %10118 = vmatpush1.bf16.msra.mxu0 %v10024
    %10119 = vmatprep.subr.bf16.mxu0 %v10029
    %10120 = vmatpush1.bf16.msra.mxu0 %v10028
    %10121 = vmatprep.subr.bf16.mxu0 0
    %10122 = vmatpush1.bf16.msra.mxu0 0
    %10123 = vmatprep.subr.bf16.mxu0 0
    %10124 = vmatpush1.bf16.msra.mxu0 0
    %10125 = vmatprep.subr.bf16.mxu0 0
    %10126 = vmatpush1.bf16.msra.mxu0 0
    %10127 = vmatprep.subr.bf16.mxu0 0
    %10128 = vmatpush1.bf16.msra.mxu0 0
    %10129 = vmatprep.subr.bf16.mxu0 0
    %10130 = vmatpush1.bf16.msra.mxu0 0
    %10131 = vmatprep.subr.bf16.mxu0 0
    %10132 = vmatpush1.bf16.msra.mxu0 0
    %10133 = vmatprep.subr.bf16.mxu0 0
    %10134 = vmatpush1.bf16.msra.mxu0 0
    %10135 = vmatprep.subr.bf16.mxu0 0
    %10136 = vmatpush1.bf16.msra.mxu0 0
    %10137 = vmatprep.mubr.bf16.mxu0 0
    %10138 = vmatmul.mubr.bf16.gmra.mrb[0].mxu0 %v9869
    %v10139 = vpop.f32.mrb[0].mxu0
    %v10140 = vadd.f32 0.0, %v10139
    %v10141 = vpop.f32.mrb[0].mxu0
    %v10142 = vadd.f32 0.0, %v10141
    %v10143 = vpop.f32.mrb[0].mxu0
    %v10144 = vadd.f32 0.0, %v10143
    %v10145 = vpop.f32.mrb[0].mxu0
    %v10146 = vadd.f32 0.0, %v10145
    %10147 = vdwg.mxu0
    %v10180 = vunpack.c.l.b16 %v9837
    %v10181 = vunpack.c.h.b16 %v9837
    %v10182 = vunpack.c.l.b16 %v9838
    %v10183 = vunpack.c.h.b16 %v9838
    %v10184 = vunpack.c.l.b16 %v9839
    %v10185 = vunpack.c.h.b16 %v9839
    %v10186 = vunpack.c.l.b16 %v9840
    %v10187 = vunpack.c.h.b16 %v9840
    %v10188 = vunpack.c.l.b16 %v9841
    %v10189 = vunpack.c.h.b16 %v9841
    %v10190 = vunpack.c.l.b16 %v9842
    %v10191 = vunpack.c.h.b16 %v9842
    %v10192 = vunpack.c.l.b16 %v9843
    %v10193 = vunpack.c.h.b16 %v9843
    %v10194 = vunpack.c.l.b16 %v9844
    %v10195 = vunpack.c.h.b16 %v9844
    %v10196 = vunpack.c.l.b16 %v9845
    %v10197 = vunpack.c.h.b16 %v9845
    %v10198 = vunpack.c.l.b16 %v9846
    %v10199 = vunpack.c.h.b16 %v9846
    %v10200 = vunpack.c.l.b16 %v9847
    %v10201 = vunpack.c.h.b16 %v9847
    %v10202 = vunpack.c.l.b16 %v9848
    %v10203 = vunpack.c.h.b16 %v9848
    %v10204 = vunpack.c.l.b16 %v9849
    %v10205 = vunpack.c.h.b16 %v9849
    %v10206 = vunpack.c.l.b16 %v9850
    %v10207 = vunpack.c.h.b16 %v9850
    %v10208 = vunpack.c.l.b16 %v9851
    %v10209 = vunpack.c.h.b16 %v9851
    %v10210 = vunpack.c.l.b16 %v9852
    %v10211 = vunpack.c.h.b16 %v9852
    %v10212 = vunpack.c.l.b16 %v9853
    %v10213 = vunpack.c.h.b16 %v9853
    %v10214 = vunpack.c.l.b16 %v9854
    %v10215 = vunpack.c.h.b16 %v9854
    %v10216 = vunpack.c.l.b16 %v9855
    %v10217 = vunpack.c.h.b16 %v9855
    %v10218 = vunpack.c.l.b16 %v9856
    %v10219 = vunpack.c.h.b16 %v9856
    %v10220 = vunpack.c.l.b16 %v9857
    %v10221 = vunpack.c.h.b16 %v9857
    %v10222 = vunpack.c.l.b16 %v9858
    %v10223 = vunpack.c.h.b16 %v9858
    %v10224 = vunpack.c.l.b16 %v9859
    %v10225 = vunpack.c.h.b16 %v9859
    %v10226 = vunpack.c.l.b16 %v9860
    %v10227 = vunpack.c.h.b16 %v9860
    %v10228 = vunpack.c.l.b16 %v9861
    %v10229 = vunpack.c.h.b16 %v9861
    %v10230 = vunpack.c.l.b16 %v9862
    %v10231 = vunpack.c.h.b16 %v9862
    %v10232 = vunpack.c.l.b16 %v9863
    %v10233 = vunpack.c.h.b16 %v9863
    %v10234 = vunpack.c.l.b16 %v9864
    %v10235 = vunpack.c.h.b16 %v9864
    %v10236 = vunpack.c.l.b16 %v9865
    %v10237 = vunpack.c.h.b16 %v9865
    %v10238 = vunpack.c.l.b16 %v9866
    %v10239 = vunpack.c.h.b16 %v9866
    %v10240 = vunpack.c.l.b16 %v9867
    %v10241 = vunpack.c.h.b16 %v9867
    %v10242 = vunpack.c.l.b16 %v9868
    %v10243 = vunpack.c.h.b16 %v9868
    %v10244 = vpack.c.b16 %v10184, %v10180
    %v10245 = vpack.c.b16 %v10185, %v10181
    %v10246 = vpack.c.b16 %v10186, %v10182
    %v10247 = vpack.c.b16 %v10187, %v10183
    %v10248 = vpack.c.b16 %v10192, %v10188
    %v10249 = vpack.c.b16 %v10193, %v10189
    %v10250 = vpack.c.b16 %v10194, %v10190
    %v10251 = vpack.c.b16 %v10195, %v10191
    %v10252 = vpack.c.b16 %v10200, %v10196
    %v10253 = vpack.c.b16 %v10201, %v10197
    %v10254 = vpack.c.b16 %v10202, %v10198
    %v10255 = vpack.c.b16 %v10203, %v10199
    %v10256 = vpack.c.b16 %v10208, %v10204
    %v10257 = vpack.c.b16 %v10209, %v10205
    %v10258 = vpack.c.b16 %v10210, %v10206
    %v10259 = vpack.c.b16 %v10211, %v10207
    %v10260 = vpack.c.b16 %v10216, %v10212
    %v10261 = vpack.c.b16 %v10217, %v10213
    %v10262 = vpack.c.b16 %v10218, %v10214
    %v10263 = vpack.c.b16 %v10219, %v10215
    %v10264 = vpack.c.b16 %v10224, %v10220
    %v10265 = vpack.c.b16 %v10225, %v10221
    %v10266 = vpack.c.b16 %v10226, %v10222
    %v10267 = vpack.c.b16 %v10227, %v10223
    %v10268 = vpack.c.b16 %v10232, %v10228
    %v10269 = vpack.c.b16 %v10233, %v10229
    %v10270 = vpack.c.b16 %v10234, %v10230
    %v10271 = vpack.c.b16 %v10235, %v10231
    %v10272 = vpack.c.b16 %v10240, %v10236
    %v10273 = vpack.c.b16 %v10241, %v10237
    %v10274 = vpack.c.b16 %v10242, %v10238
    %v10275 = vpack.c.b16 %v10243, %v10239
    %10308 = vmatprep.subr.bf16.mxu0 %v10245
    %10309 = vmatpush1.bf16.msra.mxu0 %v10244
    %10310 = vmatprep.subr.bf16.mxu0 %v10249
    %10311 = vmatpush1.bf16.msra.mxu0 %v10248
    %10312 = vmatprep.subr.bf16.mxu0 %v10253
    %10313 = vmatpush1.bf16.msra.mxu0 %v10252
    %10314 = vmatprep.subr.bf16.mxu0 %v10257
    %10315 = vmatpush1.bf16.msra.mxu0 %v10256
    %10316 = vmatprep.subr.bf16.mxu0 %v10261
    %10317 = vmatpush1.bf16.msra.mxu0 %v10260
    %10318 = vmatprep.subr.bf16.mxu0 %v10265
    %10319 = vmatpush1.bf16.msra.mxu0 %v10264
    %10320 = vmatprep.subr.bf16.mxu0 %v10269
    %10321 = vmatpush1.bf16.msra.mxu0 %v10268
    %10322 = vmatprep.subr.bf16.mxu0 %v10273
    %10323 = vmatpush1.bf16.msra.mxu0 %v10272
    %10324 = vmatprep.subr.bf16.mxu0 0
    %10325 = vmatpush1.bf16.msra.mxu0 0
    %10326 = vmatprep.subr.bf16.mxu0 0
    %10327 = vmatpush1.bf16.msra.mxu0 0
    %10328 = vmatprep.subr.bf16.mxu0 0
    %10329 = vmatpush1.bf16.msra.mxu0 0
    %10330 = vmatprep.subr.bf16.mxu0 0
    %10331 = vmatpush1.bf16.msra.mxu0 0
    %10332 = vmatprep.subr.bf16.mxu0 0
    %10333 = vmatpush1.bf16.msra.mxu0 0
    %10334 = vmatprep.subr.bf16.mxu0 0
    %10335 = vmatpush1.bf16.msra.mxu0 0
    %10336 = vmatprep.subr.bf16.mxu0 0
    %10337 = vmatpush1.bf16.msra.mxu0 0
    %10338 = vmatprep.subr.bf16.mxu0 0
    %10339 = vmatpush1.bf16.msra.mxu0 0
    %10340 = vmatprep.mubr.bf16.mxu0 0
    %10341 = vmatmul.mubr.bf16.gmra.mrb[0].mxu0 %v9832
    %v10342 = vpop.f32.mrb[0].mxu0
    %v10343 = vadd.f32 %v10097, %v10342
    %v10344 = vpop.f32.mrb[0].mxu0
    %v10345 = vadd.f32 %v10099, %v10344
    %v10346 = vpop.f32.mrb[0].mxu0
    %v10347 = vadd.f32 %v10101, %v10346
    %v10348 = vpop.f32.mrb[0].mxu0
    %v10349 = vadd.f32 %v10103, %v10348
    %10350 = vdwg.mxu0
    %10351 = vmatprep.subr.bf16.mxu0 %v10247
    %10352 = vmatpush1.bf16.msra.mxu0 %v10246
    %10353 = vmatprep.subr.bf16.mxu0 %v10251
    %10354 = vmatpush1.bf16.msra.mxu0 %v10250
    %10355 = vmatprep.subr.bf16.mxu0 %v10255
    %10356 = vmatpush1.bf16.msra.mxu0 %v10254
    %10357 = vmatprep.subr.bf16.mxu0 %v10259
    %10358 = vmatpush1.bf16.msra.mxu0 %v10258
    %10359 = vmatprep.subr.bf16.mxu0 %v10263
    %10360 = vmatpush1.bf16.msra.mxu0 %v10262
    %10361 = vmatprep.subr.bf16.mxu0 %v10267
    %10362 = vmatpush1.bf16.msra.mxu0 %v10266
    %10363 = vmatprep.subr.bf16.mxu0 %v10271
    %10364 = vmatpush1.bf16.msra.mxu0 %v10270
    %10365 = vmatprep.subr.bf16.mxu0 %v10275
    %10366 = vmatpush1.bf16.msra.mxu0 %v10274
    %10367 = vmatprep.subr.bf16.mxu0 0
    %10368 = vmatpush1.bf16.msra.mxu0 0
    %10369 = vmatprep.subr.bf16.mxu0 0
    %10370 = vmatpush1.bf16.msra.mxu0 0
    %10371 = vmatprep.subr.bf16.mxu0 0
    %10372 = vmatpush1.bf16.msra.mxu0 0
    %10373 = vmatprep.subr.bf16.mxu0 0
    %10374 = vmatpush1.bf16.msra.mxu0 0
    %10375 = vmatprep.subr.bf16.mxu0 0
    %10376 = vmatpush1.bf16.msra.mxu0 0
    %10377 = vmatprep.subr.bf16.mxu0 0
    %10378 = vmatpush1.bf16.msra.mxu0 0
    %10379 = vmatprep.subr.bf16.mxu0 0
    %10380 = vmatpush1.bf16.msra.mxu0 0
    %10381 = vmatprep.subr.bf16.mxu0 0
    %10382 = vmatpush1.bf16.msra.mxu0 0
    %10383 = vmatprep.mubr.bf16.mxu0 0
    %10384 = vmatmul.mubr.bf16.gmra.mrb[0].mxu0 %v9832
    %v10385 = vpop.f32.mrb[0].mxu0
    %v10386 = vadd.f32 %v10140, %v10385
    %v10387 = vpop.f32.mrb[0].mxu0
    %v10388 = vadd.f32 %v10142, %v10387
    %v10389 = vpop.f32.mrb[0].mxu0
    %v10390 = vadd.f32 %v10144, %v10389
    %v10391 = vpop.f32.mrb[0].mxu0
    %v10392 = vadd.f32 %v10146, %v10391
    %10393 = vdwg.mxu0
    %v10394 = vld [vmem:[%s6] sm:$0xf]
    %v10396 = vlaneseq
    %v10397 = vshrl.u32 %v10396, 7
    %v10398 = vsub.s32 0, %v10397
    %v10399 = vrot.slane %v10394, %v10398
    %v10400 = vlaneseq
    %v10401 = vshrl.u32 %v10400, 7
    %v10402 = vsub.s32 1, %v10401
    %v10403 = vrot.slane %v10394, %v10402
    %v10404 = vlaneseq
    %v10405 = vshrl.u32 %v10404, 7
    %v10406 = vsub.s32 2, %v10405
    %v10407 = vrot.slane %v10394, %v10406
    %v10408 = vlaneseq
    %v10409 = vshrl.u32 %v10408, 7
    %v10410 = vsub.s32 3, %v10409
    %v10411 = vrot.slane %v10394, %v10410
    %v10416 = vadd.f32 %v10343, %v10399
    %v10417 = vadd.f32 %v10345, %v10403
    %v10418 = vadd.f32 %v10386, %v10407
    %v10419 = vadd.f32 %v10388, %v10411
    %v10420 = vadd.f32 %v10347, %v10399
    %v10421 = vadd.f32 %v10349, %v10403
    %v10422 = vadd.f32 %v10390, %v10407
    %v10423 = vadd.f32 %v10392, %v10411
    %v10424 = vxor.u32 %v10416, 2147483648
    %v10425 = vxor.u32 %v10420, 2147483648
    %v10426 = vmul.f32 %v10424, 1.442695
    %v10427 = vpow.pop %v10426
    %v10428 = vmul.f32 %v10425, 1.442695
    %v10429 = vpow.pop %v10428
    %v10430 = vadd.f32 %v10427, 1.0
    %v10431 = vadd.f32 %v10429, 1.0
    %v10432 = vrcp.pop %v10430
    %v10433 = vmul.f32 1.0, %v10432
    %v10434 = vrcp.pop %v10431
    %v10435 = vmul.f32 1.0, %v10434
    %v10436 = vxor.u32 %v10417, 2147483648
    %v10437 = vxor.u32 %v10421, 2147483648
    %v10438 = vmul.f32 %v10436, 1.442695
    %v10439 = vpow.pop %v10438
    %v10440 = vmul.f32 %v10437, 1.442695
    %v10441 = vpow.pop %v10440
    %v10442 = vadd.f32 %v10439, 1.0
    %v10443 = vadd.f32 %v10441, 1.0
    %v10444 = vrcp.pop %v10442
    %v10445 = vmul.f32 1.0, %v10444
    %v10446 = vrcp.pop %v10443
    %v10447 = vmul.f32 1.0, %v10446
    %v10448 = vtanh.pop %v10418
    %v10449 = vtanh.pop %v10422
    %v10450 = vxor.u32 %v10419, 2147483648
    %v10451 = vxor.u32 %v10423, 2147483648
    %v10452 = vmul.f32 %v10450, 1.442695
    %v10453 = vpow.pop %v10452
    %v10454 = vmul.f32 %v10451, 1.442695
    %v10455 = vpow.pop %v10454
    %v10456 = vadd.f32 %v10453, 1.0
    %v10457 = vadd.f32 %v10455, 1.0
    %v10458 = vrcp.pop %v10456
    %v10459 = vmul.f32 1.0, %v10458
    %v10460 = vrcp.pop %v10457
    %v10461 = vmul.f32 1.0, %v10460
    %v10462 = vmul.f32 %v10445, %v9835
    %v10463 = vmul.f32 %v10447, %v9836
    %v10464 = vmul.f32 %v10433, %v10448
    %v10465 = vmul.f32 %v10435, %v10449
    %v10466 = vadd.f32 %v10462, %v10464
    %v10467 = vadd.f32 %v10463, %v10465
    %v10468 = vtanh.pop %v10466
    %v10469 = vtanh.pop %v10467
    %v10470 = vmul.f32 %v10459, %v10468
    %v10471 = vmul.f32 %v10461, %v10469
    %10472 = vst [vmem:[%s759] sm:$0xff] %v10470
    %10473 = vst [vmem:[%s759 + $0x8] sm:$0xff] %v10471
    %10474 = vst [vmem:[%s762] sm:$0xff] %v10466
    %10475 = vst [vmem:[%s762 + $0x8] sm:$0xff] %v10467
    %v10476 = vld [vmem:[#allocation2] sm:$0xff]
    %v10477 = vld [vmem:[#allocation2 + $0x8] sm:$0xff]
    %v10478 = vld [vmem:[#allocation2 + $0x10] sm:$0xff]
    %v10479 = vld [vmem:[#allocation2 + $0x18] sm:$0xff]
    %10480 = vst [vmem:[#allocation13] sm:$0xff] %v10476
    %10481 = vst [vmem:[#allocation13 + $0x8] sm:$0xff] %v10477
    %10482 = vst [vmem:[#allocation13 + $0x10] sm:$0xff] %v10478
    %10483 = vst [vmem:[#allocation13 + $0x18] sm:$0xff] %v10479
    %v10484 = vld [vmem:[#allocation3] sm:$0xff]
    %v10485 = vld [vmem:[#allocation3 + $0x8] sm:$0xff]
    %v10486 = vld [vmem:[#allocation3 + $0x10] sm:$0xff]
    %v10487 = vld [vmem:[#allocation3 + $0x18] sm:$0xff]
    %10488 = vst [vmem:[#allocation14] sm:$0xff] %v10484
    %10489 = vst [vmem:[#allocation14 + $0x8] sm:$0xff] %v10485
    %10490 = vst [vmem:[#allocation14 + $0x10] sm:$0xff] %v10486
    %10491 = vst [vmem:[#allocation14 + $0x18] sm:$0xff] %v10487
    // Predicated region
    $region50: #{tpu_custom_call.1} parent=1 // pred_check
      _
    $region51: #{tpu_custom_call.1} parent=1 // pred_check_branch
      %10493 = sbr.rel (0) target = $region53
    $region52: #{tpu_custom_call.1} parent=1 // pred_region
      %s10495 = ssub.s32 512, 512
      %10496 = vsyncadd [#allocation6], %s10495
      %s10497 = sshll.u32 [#allocation13], 4
      %s10498 = int_to_ptr.vmem [resolvable:$true] %s10497
      %10503 = dma.vmem_to_hbm [thread:$0]  %s10498, 512, %s7, [#allocation6], 128, 128, 8
    $region53: #{tpu_custom_call.1} parent=1 // pred_fallthru
      _
    // Predicated region
    $region54: #{tpu_custom_call.1} parent=1 // pred_check
      _
    $region55: #{tpu_custom_call.1} parent=1 // pred_check_branch
      %10505 = sbr.rel (0) target = $region57
    $region56: #{tpu_custom_call.1} parent=1 // pred_region
      %s10507 = ssub.s32 512, 512
      %10508 = vsyncadd [#allocation15], %s10507
      %s10509 = sshll.u32 [#allocation14], 4
      %s10510 = int_to_ptr.vmem [resolvable:$true] %s10509
      %10515 = dma.vmem_to_hbm [thread:$0]  %s10510, 512, %s8, [#allocation15], 128, 128, 8
    $region57: #{tpu_custom_call.1} parent=1 // pred_fallthru
      _
    // Predicated region
    $region58: #{tpu_custom_call.1} parent=1 // pred_check
      _
    $region59: #{tpu_custom_call.1} parent=1 // pred_check_branch
      %10517 = sbr.rel (0) target = $region61
    $region60: #{tpu_custom_call.1} parent=1 // pred_region
      %10518 = dma.done [#allocation6], 512
    $region61: #{tpu_custom_call.1} parent=1 // pred_fallthru
      _
    // Predicated region
    $region62: #{tpu_custom_call.1} parent=1 // pred_check
      _
    $region63: #{tpu_custom_call.1} parent=1 // pred_check_branch
      %10520 = sbr.rel (0) target = $region65
    $region64: #{tpu_custom_call.1} parent=1 // pred_region
      %10521 = dma.done [#allocation15], 512
    $region65: #{tpu_custom_call.1} parent=1 // pred_fallthru
      _
    %10522 = vsyncpa [#allocation5], 1
    %10523 = vsyncpa [#allocation8], 1
    %10524 = vsyncpa [#allocation11], 1
    %10525 = vsyncpa [#allocation6], 1
    %10526 = vsyncpa [#allocation15], 1

</llo_original>
